<compile_context>
chip_gen: v7x
topology: tpu7x:2x2x1
jax: 0.10.0
libtpu: 0.0.40
codegen_flags: <defaults>
</compile_context>

<pallas_src>
import functools
import math

import jax
import jax.numpy as jnp
from jax import lax
from jax.experimental import pallas as pl
from jax.experimental.pallas import tpu as pltpu


# ----------------------------------------------------------------------------
# VMEM budget: valid on v7x (64 MiB physical) as well as v5e/v6e (128 MiB).
# ----------------------------------------------------------------------------
def _vmem_limit_bytes():
    try:
        cap = int(pltpu.get_tpu_info().vmem_capacity_bytes)
    except Exception:
        cap = 64 << 20                      # conservative fallback (v7x-sized)
    return int(max(32 << 20, min(cap // 2, 96 << 20)))


_VMEM_LIMIT = _vmem_limit_bytes()


# ----------------------------------------------------------------------------
# Kernel A: ConvTranspose2d(k=2, s=2) + BN + PReLU  (pre-interleave form)
# ----------------------------------------------------------------------------
def _upconv_kernel(x_ref, w_ref, shift_ref, alpha_ref, o_ref):
    # x_ref:     (N, Hs, Ws, Cin)    bf16
    # w_ref:     (Cin, 4*Cout)       bf16 (BN scale folded in)
    # shift_ref: (1, 4*Cout)         f32  (BN shift + conv bias, tiled per tap)
    # alpha_ref: (1, 4*Cout)         f32
    # o_ref:     (N, Hs, Ws, 4*Cout) bf16 — columns ordered (dy, dx, cout)
    n, hs, ws, cin = x_ref.shape
    xm = x_ref[...].reshape(n * hs * ws, cin)          # batch folded into M
    y = jnp.dot(xm, w_ref[...], preferred_element_type=jnp.float32)
    y = y + shift_ref[...]
    y = jnp.where(y >= 0.0, y, alpha_ref[...] * y)
    o_ref[...] = y.reshape(o_ref.shape).astype(o_ref.dtype)   # 128-lane dense


def upconv_bn_prelu(x, p, eps=1e-5):
    """x: [N, Hs, Ws, Cin] -> up: [N, 2Hs, 2Ws, Cout] bf16."""
    n, hs, ws, cin = x.shape
    cout = p["w"].shape[1]                       # torch layout (Cin, Cout, 2, 2)
    scale = p["gamma"] / jnp.sqrt(p["var"] + eps)
    shift = p["beta"] + scale * (p["b"] - p["mean"])
    wmat = jnp.transpose(p["w"], (0, 2, 3, 1)).reshape(cin, 4 * cout)
    wmat = (wmat * jnp.tile(scale, 4)[None, :]).astype(jnp.bfloat16)
    shift4 = jnp.tile(shift, 4).reshape(1, 4 * cout).astype(jnp.float32)
    alpha4 = jnp.tile(p["alpha"], 4).reshape(1, 4 * cout).astype(jnp.float32)

    y = pl.pallas_call(
        _upconv_kernel,
        out_shape=jax.ShapeDtypeStruct((n, hs, ws, 4 * cout), jnp.bfloat16),
        grid=(1,),
        in_specs=[
            pl.BlockSpec((n, hs, ws, cin), lambda i: (0, 0, 0, 0)),
            pl.BlockSpec((cin, 4 * cout), lambda i: (0, 0)),
            pl.BlockSpec((1, 4 * cout), lambda i: (0, 0)),
            pl.BlockSpec((1, 4 * cout), lambda i: (0, 0)),
        ],
        out_specs=pl.BlockSpec((n, hs, ws, 4 * cout), lambda i: (0, 0, 0, 0)),
        compiler_params=pltpu.CompilerParams(
            dimension_semantics=("arbitrary",),
            vmem_limit_bytes=_VMEM_LIMIT,
        ),
    )(x.astype(jnp.bfloat16), wmat, shift4, alpha4)

    # Tiny XLA glue (bf16): interleave the (dy, dx) taps into the 2x grid.
    y = y.reshape(n, hs, ws, 2, 2, cout)
    up = jnp.transpose(y, (0, 1, 3, 2, 4, 5)).reshape(n, 2 * hs, 2 * ws, cout)
    return up


# ----------------------------------------------------------------------------
# Kernel B: whole conv block (layers x [5x5 conv + BN + PReLU]) with the skip
# "concat" packed into the layer-0 contraction, plus the residual (+ up).
# Each 5x5 conv = 5 row-group matmuls of depth K = 5*Cin built from a
# kw-expanded VMEM patch buffer (one pass of shifted copies per layer).
# ----------------------------------------------------------------------------
def _make_upblock_kernel(h, w, c_out, c_br, layers):
    hp, wp = h + 4, w + 4
    k_up = 5 * c_out                      # lane offset of the bridge K block

    def build_xw(xw_ref, src, base, cs):
        # src: (hp, wp, cs) f32 value.  Writes the 5 kw-shifted slabs so that
        # xw[r, j, base + kw*cs + c] == src[r, j + kw, c]  (full-sublane,
        # lane-offset stores; the only misaligned slicing is on f32 values).
        for kw in range(5):
            xw_ref[:, :, base + kw * cs: base + (kw + 1) * cs] = (
                src[:, kw:kw + w, :].astype(xw_ref.dtype))

    def conv5x5(xw_ref, w_ref):
        # 5 row-group matmuls: K = 5*Cin per dot (vs 25 dots of K = Cin).
        k = w_ref.shape[1]
        acc = jnp.zeros((h * w, c_out), jnp.float32)
        for kh in range(5):
            a = xw_ref[kh:kh + h, :, 0:k].reshape(h * w, k)     # free reshape
            acc = acc + jnp.dot(a, w_ref[kh],
                                preferred_element_type=jnp.float32)
        return acc

    def kernel(*refs):
        up_pad, br_pad = refs[0], refs[1]
        w0, s0, a0 = refs[2], refs[3], refs[4]
        extra = refs[5:5 + 3 * (layers - 1)]
        o_ref = refs[5 + 3 * (layers - 1)]
        xw_ref = refs[6 + 3 * (layers - 1)]         # (hp, w, 5*(c_out+c_br)) bf16
        act_ref = refs[7 + 3 * (layers - 1)]        # (hp, wp, c_out) f32 halo

        # Layer 0: conv over cat([up, bridge]) — both sources packed into K.
        upv = up_pad[0].astype(jnp.float32)          # aligned bf16 load, 1 cast
        brv = br_pad[0].astype(jnp.float32)
        build_xw(xw_ref, upv, 0, c_out)
        build_xw(xw_ref, brv, k_up, c_br)
        y = conv5x5(xw_ref, w0) + s0[...]
        y = jnp.where(y >= 0.0, y, a0[...] * y)

        if layers > 1:
            # Zero the padded activation once per image (interior is fully
            # overwritten each layer; only the 2-wide halo must stay zero).
            act_ref[...] = jnp.zeros_like(act_ref)
        for li in range(layers - 1):
            w_i, s_i, a_i = extra[3 * li], extra[3 * li + 1], extra[3 * li + 2]
            act_ref[2:2 + h, 2:2 + w, :] = y.reshape(h, w, c_out)
            build_xw(xw_ref, act_ref[...], 0, c_out)
            y = conv5x5(xw_ref, w_i) + s_i[...]
            y = jnp.where(y >= 0.0, y, a_i[...] * y)

        # Residual: out = convb(cat([up, bridge])) + up  (from the halo tile).
        up_res = upv[2:2 + h, 2:2 + w, :].reshape(h * w, c_out)
        y = y + up_res
        o_ref[...] = y.reshape(1, h, w, c_out).astype(o_ref.dtype)

    return kernel


def conv_block_with_residual(up, bridge, conv_params, eps=1e-5):
    """up: [N,H,W,Cout] bf16, bridge: [N,H,W,Cbr] -> [N,H,W,Cout] f32."""
    n, h, w, c_out = up.shape
    c_br = bridge.shape[-1]
    layers = len(conv_params)
    hp, wp = h + 4, w + 4

    up_pad = jnp.pad(up.astype(jnp.bfloat16), ((0, 0), (2, 2), (2, 2), (0, 0)))
    br_pad = jnp.pad(bridge.astype(jnp.bfloat16),
                     ((0, 0), (2, 2), (2, 2), (0, 0)))

    def fold5(p, split=None):
        cout = p["w"].shape[0]
        scale = p["gamma"] / jnp.sqrt(p["var"] + eps)
        shift = p["beta"] + scale * (p["b"] - p["mean"])
        wt = jnp.transpose(p["w"], (2, 3, 1, 0)) * scale     # (5,5,cin,cout), BN folded
        if split is None:
            wk = wt.reshape(5, -1, cout)                     # rows = (kw, cin)
        else:                                                # layer 0: up block then bridge block
            wk = jnp.concatenate(
                [wt[:, :, :split, :].reshape(5, -1, cout),
                 wt[:, :, split:, :].reshape(5, -1, cout)], axis=1)
        return (wk.astype(jnp.bfloat16),
                shift.reshape(1, cout).astype(jnp.float32),
                p["alpha"].reshape(1, cout).astype(jnp.float32))

    w0, s0, a0 = fold5(conv_params[0], split=c_out)
    k0 = w0.shape[1]                                # 5*(c_out + c_br)

    inputs = [up_pad, br_pad, w0, s0, a0]
    in_specs = [
        pl.BlockSpec((1, hp, wp, c_out), lambda i: (i, 0, 0, 0)),
        pl.BlockSpec((1, hp, wp, c_br), lambda i: (i, 0, 0, 0)),
        pl.BlockSpec((5, k0, c_out), lambda i: (0, 0, 0)),
        pl.BlockSpec((1, c_out), lambda i: (0, 0)),
        pl.BlockSpec((1, c_out), lambda i: (0, 0)),
    ]
    for p in conv_params[1:]:
        wt, sh, al = fold5(p)
        inputs += [wt, sh, al]
        in_specs += [
            pl.BlockSpec((5, 5 * c_out, c_out), lambda i: (0, 0, 0)),
            pl.BlockSpec((1, c_out), lambda i: (0, 0)),
            pl.BlockSpec((1, c_out), lambda i: (0, 0)),
        ]

    kernel = _make_upblock_kernel(h, w, c_out, c_br, layers)
    out = pl.pallas_call(
        kernel,
        out_shape=jax.ShapeDtypeStruct((n, h, w, c_out), jnp.float32),
        grid=(n,),
        in_specs=in_specs,
        out_specs=pl.BlockSpec((1, h, w, c_out), lambda i: (i, 0, 0, 0)),
        scratch_shapes=[
            pltpu.VMEM((hp, w, k0), jnp.bfloat16),      # kw-expanded patch rows
            pltpu.VMEM((hp, wp, c_out), jnp.float32),   # padded activation (halo)
        ],
        compiler_params=pltpu.CompilerParams(
            dimension_semantics=("parallel",),
            vmem_limit_bytes=_VMEM_LIMIT,
        ),
    )(*inputs)
    return out


# ----------------------------------------------------------------------------
# VNetUpBlock forward (NCHW in / NCHW out, matching the PyTorch module)
# ----------------------------------------------------------------------------
def vnet_up_block_forward(x_nchw, bridge_nchw, params):
    x = jnp.transpose(x_nchw, (0, 2, 3, 1))                   # NCHW -> NHWC
    br = jnp.transpose(bridge_nchw, (0, 2, 3, 1))
    up = upconv_bn_prelu(x, params["up"])                      # Kernel A (bf16)
    out = conv_block_with_residual(up, br, params["convb"])    # Kernel B
    return jnp.transpose(out, (0, 3, 1, 2))                    # NHWC -> NCHW


# ----------------------------------------------------------------------------
# Deterministic parameter init (PyTorch layouts)
# ----------------------------------------------------------------------------
def _init_layer(key, cin, cout, k, transpose=False):
    k1, k2, k3, k4 = jax.random.split(key, 4)
    fan_in = cin * k * k
    wshape = (cin, cout, k, k) if transpose else (cout, cin, k, k)
    return dict(
        w=jax.random.normal(k1, wshape, jnp.float32) / math.sqrt(fan_in),
        b=0.01 * jax.random.normal(k2, (cout,), jnp.float32),
        gamma=1.0 + 0.1 * jax.random.normal(k3, (cout,), jnp.float32),
        beta=0.05 * jax.random.normal(k4, (cout,), jnp.float32),
        mean=jnp.zeros((cout,), jnp.float32),
        var=jnp.ones((cout,), jnp.float32),
        alpha=jnp.full((cout,), 0.25, jnp.float32),            # PReLU default
    )


def init_up_block_params(key, in_ch, br_ch, out_ch, layers):
    keys = jax.random.split(key, layers + 1)
    convb = []
    for i in range(layers):
        cin = out_ch + br_ch if i == 0 else out_ch
        convb.append(_init_layer(keys[i + 1], cin, out_ch, 5))
    return {"up": _init_layer(keys[0], in_ch, out_ch, 2, transpose=True),
            "convb": convb}


# ----------------------------------------------------------------------------
# Pure-JAX f32 reference (independent path: lax conv / einsum, unfolded BN)
# ----------------------------------------------------------------------------
def _bn_prelu_ref(y, p, eps=1e-5):
    y = (y - p["mean"]) * (p["gamma"] / jnp.sqrt(p["var"] + eps)) + p["beta"]
    return jnp.where(y >= 0.0, y, p["alpha"] * y)


def reference_up_block(x_nchw, bridge_nchw, params, eps=1e-5):
    x = jnp.transpose(x_nchw, (0, 2, 3, 1)).astype(jnp.float32)
    br = jnp.transpose(bridge_nchw, (0, 2, 3, 1)).astype(jnp.float32)
    p = params["up"]
    n, hs, ws, _ = x.shape
    cout = p["w"].shape[1]
    t = jnp.einsum("nhwi,iouv->nhuwvo", x, p["w"], precision=lax.Precision.HIGHEST)
    up = t.reshape(n, 2 * hs, 2 * ws, cout) + p["b"]
    up = _bn_prelu_ref(up, p, eps)
    out = jnp.concatenate([up, br], axis=-1)
    for pc in params["convb"]:
        wk = jnp.transpose(pc["w"], (2, 3, 1, 0))              # HWIO
        out = lax.conv_general_dilated(
            out, wk, window_strides=(1, 1), padding=((2, 2), (2, 2)),
            dimension_numbers=("NHWC", "HWIO", "NHWC"),
            precision=lax.Precision.HIGHEST) + pc["b"]
        out = _bn_prelu_ref(out, pc, eps)
    out = out + up
    return jnp.transpose(out, (0, 3, 1, 2))


# ----------------------------------------------------------------------------
if __name__ == "__main__":
    key = jax.random.PRNGKey(0)
    kp, kx, kb = jax.random.split(key, 3)

    IN_CH, BR_CH, OUT_CH, LAYERS = 32, 16, 32, 2
    N, HS, WS = 2, 8, 8                     # decoder feature is half-resolution

    params = init_up_block_params(kp, IN_CH, BR_CH, OUT_CH, LAYERS)
    x = jax.random.normal(kx, (N, IN_CH, HS, WS), jnp.float32)
    bridge = jax.random.normal(kb, (N, BR_CH, 2 * HS, 2 * WS), jnp.float32)

    fwd = jax.jit(functools.partial(vnet_up_block_forward, params=params))
    out = fwd(x, bridge)
    jax.block_until_ready(out)

    assert out.shape == (N, OUT_CH, 2 * HS, 2 * WS), out.shape
    assert bool(jnp.all(jnp.isfinite(out)))

    ref = reference_up_block(x, bridge, params)
    rel_l2 = float(jnp.linalg.norm(out - ref) / (jnp.linalg.norm(ref) + 1e-6))
    assert rel_l2 < 5e-2, f"relative L2 error too large: {rel_l2}"

    print("KERNEL_OK")
</pallas_src>

<mosaic_0001>
module attributes {stable_mosaic.version = 11 : i64} {
  func.func @_upconv_kernel(%arg0: i32, %arg1: memref<2x8x8x32xbf16, #tpu.memory_space<vmem>>, %arg2: memref<32x128xbf16, #tpu.memory_space<vmem>>, %arg3: memref<1x128xf32, #tpu.memory_space<vmem>>, %arg4: memref<1x128xf32, #tpu.memory_space<vmem>>, %arg5: memref<2x8x8x128xbf16, #tpu.memory_space<vmem>>) attributes {dimension_semantics = [#tpu.dimension_semantics<arbitrary>], iteration_bounds = array<i64: 1>, scalar_prefetch = 0 : i64, scratch_operands = 0 : i64, tpu.core_type = #tpu.core_type<tc>, window_params = [{pipeline_mode = #tpu.pipeline_mode<synchronous>, transform_indices = @transform_0, window_bounds = array<i64: 2, 8, 8, 32>}, {pipeline_mode = #tpu.pipeline_mode<synchronous>, transform_indices = @transform_1, window_bounds = array<i64: 32, 128>}, {pipeline_mode = #tpu.pipeline_mode<synchronous>, transform_indices = @transform_2, window_bounds = array<i64: 1, 128>}, {pipeline_mode = #tpu.pipeline_mode<synchronous>, transform_indices = @transform_3, window_bounds = array<i64: 1, 128>}, {pipeline_mode = #tpu.pipeline_mode<synchronous>, transform_indices = @transform_4, window_bounds = array<i64: 2, 8, 8, 128>}]} {
    %c0 = arith.constant 0 : index
    %c0_0 = arith.constant 0 : index
    %c0_1 = arith.constant 0 : index
    %c0_2 = arith.constant 0 : index
    %0 = vector.load %arg1[%c0, %c0_0, %c0_1, %c0_2] : memref<2x8x8x32xbf16, #tpu.memory_space<vmem>>, vector<2x8x8x32xbf16>
    %1 = vector.shape_cast %0 : vector<2x8x8x32xbf16> to vector<128x32xbf16>
    %c0_3 = arith.constant 0 : index
    %c0_4 = arith.constant 0 : index
    %2 = vector.load %arg2[%c0_3, %c0_4] : memref<32x128xbf16, #tpu.memory_space<vmem>>, vector<32x128xbf16>
    %cst = arith.constant dense<0.000000e+00> : vector<128x128xf32>
    %3 = tpu.matmul %1, %2, %cst {dimension_numbers = #tpu.dot_dimension_numbers<[1], [0], [0], [1], [0, 0, 1, 1], [], []>} : vector<128x32xbf16>, vector<32x128xbf16>, vector<128x128xf32> -> vector<128x128xf32>
    %c0_5 = arith.constant 0 : index
    %c0_6 = arith.constant 0 : index
    %4 = vector.load %arg3[%c0_5, %c0_6] : memref<1x128xf32, #tpu.memory_space<vmem>>, vector<1x128xf32>
    %5 = vector.broadcast %4 : vector<1x128xf32> to vector<128x128xf32>
    %6 = arith.addf %3, %5 : vector<128x128xf32>
    %cst_7 = arith.constant 0.000000e+00 : f32
    %7 = vector.broadcast %cst_7 : f32 to vector<128x128xf32>
    %8 = arith.cmpf oge, %6, %7 : vector<128x128xf32>
    %c0_8 = arith.constant 0 : index
    %c0_9 = arith.constant 0 : index
    %9 = vector.load %arg4[%c0_8, %c0_9] : memref<1x128xf32, #tpu.memory_space<vmem>>, vector<1x128xf32>
    %10 = vector.broadcast %9 : vector<1x128xf32> to vector<128x128xf32>
    %11 = arith.mulf %10, %6 : vector<128x128xf32>
    %12 = arith.select %8, %6, %11 : vector<128x128xi1>, vector<128x128xf32>
    %13 = vector.shape_cast %12 : vector<128x128xf32> to vector<2x8x8x128xf32>
    %14 = arith.truncf %13 : vector<2x8x8x128xf32> to vector<2x8x8x128xbf16>
    %c0_10 = arith.constant 0 : index
    %c0_11 = arith.constant 0 : index
    %c0_12 = arith.constant 0 : index
    %c0_13 = arith.constant 0 : index
    %15 = vector.load %arg5[%c0_10, %c0_11, %c0_12, %c0_13] : memref<2x8x8x128xbf16, #tpu.memory_space<vmem>>, vector<2x8x8x128xbf16>
    tpu.vector_store %arg5[%c0_10, %c0_11, %c0_12, %c0_13], %14 {strides = array<i32>} : memref<2x8x8x128xbf16, #tpu.memory_space<vmem>>, vector<2x8x8x128xbf16>,
    return
  }
  func.func @transform_0(%arg0: i32) -> (i32, i32, i32, i32) {
    %c0_i32 = arith.constant 0 : i32
    %c0_i32_0 = arith.constant 0 : i32
    %c0_i32_1 = arith.constant 0 : i32
    %c0_i32_2 = arith.constant 0 : i32
    %c0_i32_3 = arith.constant 0 : i32
    return %c0_i32, %c0_i32_0, %c0_i32_1, %c0_i32_2 : i32, i32, i32, i32
  }
  func.func @transform_1(%arg0: i32) -> (i32, i32) {
    %c0_i32 = arith.constant 0 : i32
    %c0_i32_0 = arith.constant 0 : i32
    %c0_i32_1 = arith.constant 0 : i32
    return %c0_i32, %c0_i32_0 : i32, i32
  }
  func.func @transform_2(%arg0: i32) -> (i32, i32) {
    %c0_i32 = arith.constant 0 : i32
    %c0_i32_0 = arith.constant 0 : i32
    %c0_i32_1 = arith.constant 0 : i32
    return %c0_i32, %c0_i32_0 : i32, i32
  }
  func.func @transform_3(%arg0: i32) -> (i32, i32) {
    %c0_i32 = arith.constant 0 : i32
    %c0_i32_0 = arith.constant 0 : i32
    %c0_i32_1 = arith.constant 0 : i32
    return %c0_i32, %c0_i32_0 : i32, i32
  }
  func.func @transform_4(%arg0: i32) -> (i32, i32, i32, i32) {
    %c0_i32 = arith.constant 0 : i32
    %c0_i32_0 = arith.constant 0 : i32
    %c0_i32_1 = arith.constant 0 : i32
    %c0_i32_2 = arith.constant 0 : i32
    %c0_i32_3 = arith.constant 0 : i32
    return %c0_i32, %c0_i32_0, %c0_i32_1, %c0_i32_2 : i32, i32, i32, i32
  }
}

module attributes {stable_mosaic.version = 11 : i64} {
  func.func @kernel(%arg0: i32, %arg1: memref<1x20x20x32xbf16, #tpu.memory_space<vmem>>, %arg2: memref<1x20x20x16xbf16, #tpu.memory_space<vmem>>, %arg3: memref<5x240x32xbf16, #tpu.memory_space<vmem>>, %arg4: memref<1x32xf32, #tpu.memory_space<vmem>>, %arg5: memref<1x32xf32, #tpu.memory_space<vmem>>, %arg6: memref<5x160x32xbf16, #tpu.memory_space<vmem>>, %arg7: memref<1x32xf32, #tpu.memory_space<vmem>>, %arg8: memref<1x32xf32, #tpu.memory_space<vmem>>, %arg9: memref<1x16x16x32xf32, #tpu.memory_space<vmem>>, %arg10: memref<20x16x240xbf16, #tpu.memory_space<vmem>>, %arg11: memref<20x20x32xf32, #tpu.memory_space<vmem>>) attributes {dimension_semantics = [#tpu.dimension_semantics<parallel>], iteration_bounds = array<i64: 2>, scalar_prefetch = 0 : i64, scratch_operands = 2 : i64, tpu.core_type = #tpu.core_type<tc>, window_params = [{transform_indices = @transform_0, window_bounds = array<i64: 1, 20, 20, 32>}, {transform_indices = @transform_1, window_bounds = array<i64: 1, 20, 20, 16>}, {pipeline_mode = #tpu.pipeline_mode<synchronous>, transform_indices = @transform_2, window_bounds = array<i64: 5, 240, 32>}, {pipeline_mode = #tpu.pipeline_mode<synchronous>, transform_indices = @transform_3, window_bounds = array<i64: 1, 32>}, {pipeline_mode = #tpu.pipeline_mode<synchronous>, transform_indices = @transform_4, window_bounds = array<i64: 1, 32>}, {pipeline_mode = #tpu.pipeline_mode<synchronous>, transform_indices = @transform_5, window_bounds = array<i64: 5, 160, 32>}, {pipeline_mode = #tpu.pipeline_mode<synchronous>, transform_indices = @transform_6, window_bounds = array<i64: 1, 32>}, {pipeline_mode = #tpu.pipeline_mode<synchronous>, transform_indices = @transform_7, window_bounds = array<i64: 1, 32>}, {transform_indices = @transform_8, window_bounds = array<i64: 1, 16, 16, 32>}]} {
    %c0 = arith.constant 0 : index
    %c0_0 = arith.constant 0 : index
    %c0_1 = arith.constant 0 : index
    %c0_2 = arith.constant 0 : index
    %0 = vector.load %arg1[%c0, %c0_0, %c0_1, %c0_2] : memref<1x20x20x32xbf16, #tpu.memory_space<vmem>>, vector<1x20x20x32xbf16>
    %1 = vector.shape_cast %0 : vector<1x20x20x32xbf16> to vector<20x20x32xbf16>
    %2 = arith.extf %1 : vector<20x20x32xbf16> to vector<20x20x32xf32>
    %c0_3 = arith.constant 0 : index
    %c0_4 = arith.constant 0 : index
    %c0_5 = arith.constant 0 : index
    %c0_6 = arith.constant 0 : index
    %3 = vector.load %arg2[%c0_3, %c0_4, %c0_5, %c0_6] : memref<1x20x20x16xbf16, #tpu.memory_space<vmem>>, vector<1x20x20x16xbf16>
    %4 = vector.shape_cast %3 : vector<1x20x20x16xbf16> to vector<20x20x16xbf16>
    %5 = arith.extf %4 : vector<20x20x16xbf16> to vector<20x20x16xf32>
    %6 = vector.extract_strided_slice %2 {offsets = [0, 0, 0], sizes = [20, 16, 32], strides = [1, 1, 1]} : vector<20x20x32xf32> to vector<20x16x32xf32>
    %7 = arith.truncf %6 : vector<20x16x32xf32> to vector<20x16x32xbf16>
    %c0_7 = arith.constant 0 : index
    %c0_8 = arith.constant 0 : index
    %c0_9 = arith.constant 0 : index
    %8 = vector.load %arg10[%c0_7, %c0_8, %c0_9] : memref<20x16x240xbf16, #tpu.memory_space<vmem>>, vector<20x16x32xbf16>
    tpu.vector_store %arg10[%c0_7, %c0_8, %c0_9], %7 {strides = array<i32>} : memref<20x16x240xbf16, #tpu.memory_space<vmem>>, vector<20x16x32xbf16>,
    %9 = vector.extract_strided_slice %2 {offsets = [0, 1, 0], sizes = [20, 16, 32], strides = [1, 1, 1]} : vector<20x20x32xf32> to vector<20x16x32xf32>
    %10 = arith.truncf %9 : vector<20x16x32xf32> to vector<20x16x32xbf16>
    %c0_10 = arith.constant 0 : index
    %c0_11 = arith.constant 0 : index
    %c32 = arith.constant 32 : index
    %11 = vector.load %arg10[%c0_10, %c0_11, %c32] : memref<20x16x240xbf16, #tpu.memory_space<vmem>>, vector<20x16x32xbf16>
    tpu.vector_store %arg10[%c0_10, %c0_11, %c32], %10 {strides = array<i32>} : memref<20x16x240xbf16, #tpu.memory_space<vmem>>, vector<20x16x32xbf16>,
    %12 = vector.extract_strided_slice %2 {offsets = [0, 2, 0], sizes = [20, 16, 32], strides = [1, 1, 1]} : vector<20x20x32xf32> to vector<20x16x32xf32>
    %13 = arith.truncf %12 : vector<20x16x32xf32> to vector<20x16x32xbf16>
    %c0_12 = arith.constant 0 : index
    %c0_13 = arith.constant 0 : index
    %c64 = arith.constant 64 : index
    %14 = vector.load %arg10[%c0_12, %c0_13, %c64] : memref<20x16x240xbf16, #tpu.memory_space<vmem>>, vector<20x16x32xbf16>
    tpu.vector_store %arg10[%c0_12, %c0_13, %c64], %13 {strides = array<i32>} : memref<20x16x240xbf16, #tpu.memory_space<vmem>>, vector<20x16x32xbf16>,
    %15 = vector.extract_strided_slice %2 {offsets = [0, 3, 0], sizes = [20, 16, 32], strides = [1, 1, 1]} : vector<20x20x32xf32> to vector<20x16x32xf32>
    %16 = arith.truncf %15 : vector<20x16x32xf32> to vector<20x16x32xbf16>
    %c0_14 = arith.constant 0 : index
    %c0_15 = arith.constant 0 : index
    %c96 = arith.constant 96 : index
    %17 = vector.load %arg10[%c0_14, %c0_15, %c96] : memref<20x16x240xbf16, #tpu.memory_space<vmem>>, vector<20x16x32xbf16>
    tpu.vector_store %arg10[%c0_14, %c0_15, %c96], %16 {strides = array<i32>} : memref<20x16x240xbf16, #tpu.memory_space<vmem>>, vector<20x16x32xbf16>,
    %18 = vector.extract_strided_slice %2 {offsets = [0, 4, 0], sizes = [20, 16, 32], strides = [1, 1, 1]} : vector<20x20x32xf32> to vector<20x16x32xf32>
    %19 = arith.truncf %18 : vector<20x16x32xf32> to vector<20x16x32xbf16>
    %c0_16 = arith.constant 0 : index
    %c0_17 = arith.constant 0 : index
    %c128 = arith.constant 128 : index
    %20 = vector.load %arg10[%c0_16, %c0_17, %c128] : memref<20x16x240xbf16, #tpu.memory_space<vmem>>, vector<20x16x32xbf16>
    tpu.vector_store %arg10[%c0_16, %c0_17, %c128], %19 {strides = array<i32>} : memref<20x16x240xbf16, #tpu.memory_space<vmem>>, vector<20x16x32xbf16>,
    %21 = vector.extract_strided_slice %5 {offsets = [0, 0, 0], sizes = [20, 16, 16], strides = [1, 1, 1]} : vector<20x20x16xf32> to vector<20x16x16xf32>
    %22 = arith.truncf %21 : vector<20x16x16xf32> to vector<20x16x16xbf16>
    %c0_18 = arith.constant 0 : index
    %c0_19 = arith.constant 0 : index
    %c160 = arith.constant 160 : index
    %23 = vector.load %arg10[%c0_18, %c0_19, %c160] : memref<20x16x240xbf16, #tpu.memory_space<vmem>>, vector<20x16x16xbf16>
    tpu.vector_store %arg10[%c0_18, %c0_19, %c160], %22 {strides = array<i32>} : memref<20x16x240xbf16, #tpu.memory_space<vmem>>, vector<20x16x16xbf16>,
    %24 = vector.extract_strided_slice %5 {offsets = [0, 1, 0], sizes = [20, 16, 16], strides = [1, 1, 1]} : vector<20x20x16xf32> to vector<20x16x16xf32>
    %25 = arith.truncf %24 : vector<20x16x16xf32> to vector<20x16x16xbf16>
    %c0_20 = arith.constant 0 : index
    %c0_21 = arith.constant 0 : index
    %c176 = arith.constant 176 : index
    %26 = vector.load %arg10[%c0_20, %c0_21, %c176] : memref<20x16x240xbf16, #tpu.memory_space<vmem>>, vector<20x16x16xbf16>
    tpu.vector_store %arg10[%c0_20, %c0_21, %c176], %25 {strides = array<i32>} : memref<20x16x240xbf16, #tpu.memory_space<vmem>>, vector<20x16x16xbf16>,
    %27 = vector.extract_strided_slice %5 {offsets = [0, 2, 0], sizes = [20, 16, 16], strides = [1, 1, 1]} : vector<20x20x16xf32> to vector<20x16x16xf32>
    %28 = arith.truncf %27 : vector<20x16x16xf32> to vector<20x16x16xbf16>
    %c0_22 = arith.constant 0 : index
    %c0_23 = arith.constant 0 : index
    %c192 = arith.constant 192 : index
    %29 = vector.load %arg10[%c0_22, %c0_23, %c192] : memref<20x16x240xbf16, #tpu.memory_space<vmem>>, vector<20x16x16xbf16>
    tpu.vector_store %arg10[%c0_22, %c0_23, %c192], %28 {strides = array<i32>} : memref<20x16x240xbf16, #tpu.memory_space<vmem>>, vector<20x16x16xbf16>,
    %30 = vector.extract_strided_slice %5 {offsets = [0, 3, 0], sizes = [20, 16, 16], strides = [1, 1, 1]} : vector<20x20x16xf32> to vector<20x16x16xf32>
    %31 = arith.truncf %30 : vector<20x16x16xf32> to vector<20x16x16xbf16>
    %c0_24 = arith.constant 0 : index
    %c0_25 = arith.constant 0 : index
    %c208 = arith.constant 208 : index
    %32 = vector.load %arg10[%c0_24, %c0_25, %c208] : memref<20x16x240xbf16, #tpu.memory_space<vmem>>, vector<20x16x16xbf16>
    tpu.vector_store %arg10[%c0_24, %c0_25, %c208], %31 {strides = array<i32>} : memref<20x16x240xbf16, #tpu.memory_space<vmem>>, vector<20x16x16xbf16>,
    %33 = vector.extract_strided_slice %5 {offsets = [0, 4, 0], sizes = [20, 16, 16], strides = [1, 1, 1]} : vector<20x20x16xf32> to vector<20x16x16xf32>
    %34 = arith.truncf %33 : vector<20x16x16xf32> to vector<20x16x16xbf16>
    %c0_26 = arith.constant 0 : index
    %c0_27 = arith.constant 0 : index
    %c224 = arith.constant 224 : index
    %35 = vector.load %arg10[%c0_26, %c0_27, %c224] : memref<20x16x240xbf16, #tpu.memory_space<vmem>>, vector<20x16x16xbf16>
    tpu.vector_store %arg10[%c0_26, %c0_27, %c224], %34 {strides = array<i32>} : memref<20x16x240xbf16, #tpu.memory_space<vmem>>, vector<20x16x16xbf16>,
    %cst = arith.constant 0.000000e+00 : f32
    %36 = vector.broadcast %cst : f32 to vector<256x32xf32>
    %c0_28 = arith.constant 0 : index
    %c0_29 = arith.constant 0 : index
    %c0_30 = arith.constant 0 : index
    %37 = vector.load %arg10[%c0_28, %c0_29, %c0_30] : memref<20x16x240xbf16, #tpu.memory_space<vmem>>, vector<16x16x240xbf16>
    %38 = vector.shape_cast %37 : vector<16x16x240xbf16> to vector<256x240xbf16>
    %c0_31 = arith.constant 0 : index
    %c0_32 = arith.constant 0 : index
    %c0_33 = arith.constant 0 : index
    %39 = vector.load %arg3[%c0_31, %c0_32, %c0_33] : memref<5x240x32xbf16, #tpu.memory_space<vmem>>, vector<1x240x32xbf16>
    %40 = vector.shape_cast %39 : vector<1x240x32xbf16> to vector<240x32xbf16>
    %cst_34 = arith.constant dense<0.000000e+00> : vector<256x32xf32>
    %41 = tpu.matmul %38, %40, %cst_34 {dimension_numbers = #tpu.dot_dimension_numbers<[1], [0], [0], [1], [0, 0, 1, 1], [], []>} : vector<256x240xbf16>, vector<240x32xbf16>, vector<256x32xf32> -> vector<256x32xf32>
    %42 = arith.addf %36, %41 : vector<256x32xf32>
    %c1 = arith.constant 1 : index
    %c0_35 = arith.constant 0 : index
    %c0_36 = arith.constant 0 : index
    %43 = vector.load %arg10[%c1, %c0_35, %c0_36] : memref<20x16x240xbf16, #tpu.memory_space<vmem>>, vector<16x16x240xbf16>
    %44 = vector.shape_cast %43 : vector<16x16x240xbf16> to vector<256x240xbf16>
    %c1_37 = arith.constant 1 : index
    %c0_38 = arith.constant 0 : index
    %c0_39 = arith.constant 0 : index
    %45 = vector.load %arg3[%c1_37, %c0_38, %c0_39] : memref<5x240x32xbf16, #tpu.memory_space<vmem>>, vector<1x240x32xbf16>
    %46 = vector.shape_cast %45 : vector<1x240x32xbf16> to vector<240x32xbf16>
    %cst_40 = arith.constant dense<0.000000e+00> : vector<256x32xf32>
    %47 = tpu.matmul %44, %46, %cst_40 {dimension_numbers = #tpu.dot_dimension_numbers<[1], [0], [0], [1], [0, 0, 1, 1], [], []>} : vector<256x240xbf16>, vector<240x32xbf16>, vector<256x32xf32> -> vector<256x32xf32>
    %48 = arith.addf %42, %47 : vector<256x32xf32>
    %c2 = arith.constant 2 : index
    %c0_41 = arith.constant 0 : index
    %c0_42 = arith.constant 0 : index
    %49 = vector.load %arg10[%c2, %c0_41, %c0_42] : memref<20x16x240xbf16, #tpu.memory_space<vmem>>, vector<16x16x240xbf16>
    %50 = vector.shape_cast %49 : vector<16x16x240xbf16> to vector<256x240xbf16>
    %c2_43 = arith.constant 2 : index
    %c0_44 = arith.constant 0 : index
    %c0_45 = arith.constant 0 : index
    %51 = vector.load %arg3[%c2_43, %c0_44, %c0_45] : memref<5x240x32xbf16, #tpu.memory_space<vmem>>, vector<1x240x32xbf16>
    %52 = vector.shape_cast %51 : vector<1x240x32xbf16> to vector<240x32xbf16>
    %cst_46 = arith.constant dense<0.000000e+00> : vector<256x32xf32>
    %53 = tpu.matmul %50, %52, %cst_46 {dimension_numbers = #tpu.dot_dimension_numbers<[1], [0], [0], [1], [0, 0, 1, 1], [], []>} : vector<256x240xbf16>, vector<240x32xbf16>, vector<256x32xf32> -> vector<256x32xf32>
    %54 = arith.addf %48, %53 : vector<256x32xf32>
    %c3 = arith.constant 3 : index
    %c0_47 = arith.constant 0 : index
    %c0_48 = arith.constant 0 : index
    %55 = vector.load %arg10[%c3, %c0_47, %c0_48] : memref<20x16x240xbf16, #tpu.memory_space<vmem>>, vector<16x16x240xbf16>
    %56 = vector.shape_cast %55 : vector<16x16x240xbf16> to vector<256x240xbf16>
    %c3_49 = arith.constant 3 : index
    %c0_50 = arith.constant 0 : index
    %c0_51 = arith.constant 0 : index
    %57 = vector.load %arg3[%c3_49, %c0_50, %c0_51] : memref<5x240x32xbf16, #tpu.memory_space<vmem>>, vector<1x240x32xbf16>
    %58 = vector.shape_cast %57 : vector<1x240x32xbf16> to vector<240x32xbf16>
    %cst_52 = arith.constant dense<0.000000e+00> : vector<256x32xf32>
    %59 = tpu.matmul %56, %58, %cst_52 {dimension_numbers = #tpu.dot_dimension_numbers<[1], [0], [0], [1], [0, 0, 1, 1], [], []>} : vector<256x240xbf16>, vector<240x32xbf16>, vector<256x32xf32> -> vector<256x32xf32>
    %60 = arith.addf %54, %59 : vector<256x32xf32>
    %c4 = arith.constant 4 : index
    %c0_53 = arith.constant 0 : index
    %c0_54 = arith.constant 0 : index
    %61 = vector.load %arg10[%c4, %c0_53, %c0_54] : memref<20x16x240xbf16, #tpu.memory_space<vmem>>, vector<16x16x240xbf16>
    %62 = vector.shape_cast %61 : vector<16x16x240xbf16> to vector<256x240xbf16>
    %c4_55 = arith.constant 4 : index
    %c0_56 = arith.constant 0 : index
    %c0_57 = arith.constant 0 : index
    %63 = vector.load %arg3[%c4_55, %c0_56, %c0_57] : memref<5x240x32xbf16, #tpu.memory_space<vmem>>, vector<1x240x32xbf16>
    %64 = vector.shape_cast %63 : vector<1x240x32xbf16> to vector<240x32xbf16>
    %cst_58 = arith.constant dense<0.000000e+00> : vector<256x32xf32>
    %65 = tpu.matmul %62, %64, %cst_58 {dimension_numbers = #tpu.dot_dimension_numbers<[1], [0], [0], [1], [0, 0, 1, 1], [], []>} : vector<256x240xbf16>, vector<240x32xbf16>, vector<256x32xf32> -> vector<256x32xf32>
    %66 = arith.addf %60, %65 : vector<256x32xf32>
    %c0_59 = arith.constant 0 : index
    %c0_60 = arith.constant 0 : index
    %67 = vector.load %arg4[%c0_59, %c0_60] : memref<1x32xf32, #tpu.memory_space<vmem>>, vector<1x32xf32>
    %68 = vector.broadcast %67 : vector<1x32xf32> to vector<256x32xf32>
    %69 = arith.addf %66, %68 : vector<256x32xf32>
    %cst_61 = arith.constant 0.000000e+00 : f32
    %70 = vector.broadcast %cst_61 : f32 to vector<256x32xf32>
    %71 = arith.cmpf oge, %69, %70 : vector<256x32xf32>
    %c0_62 = arith.constant 0 : index
    %c0_63 = arith.constant 0 : index
    %72 = vector.load %arg5[%c0_62, %c0_63] : memref<1x32xf32, #tpu.memory_space<vmem>>, vector<1x32xf32>
    %73 = vector.broadcast %72 : vector<1x32xf32> to vector<256x32xf32>
    %74 = arith.mulf %73, %69 : vector<256x32xf32>
    %75 = arith.select %71, %69, %74 : vector<256x32xi1>, vector<256x32xf32>
    %cst_64 = arith.constant 0.000000e+00 : f32
    %76 = vector.broadcast %cst_64 : f32 to vector<20x20x32xf32>
    %c0_65 = arith.constant 0 : index
    %c0_66 = arith.constant 0 : index
    %c0_67 = arith.constant 0 : index
    %77 = vector.load %arg11[%c0_65, %c0_66, %c0_67] : memref<20x20x32xf32, #tpu.memory_space<vmem>>, vector<20x20x32xf32>
    tpu.vector_store %arg11[%c0_65, %c0_66, %c0_67], %76 {strides = array<i32>} : memref<20x20x32xf32, #tpu.memory_space<vmem>>, vector<20x20x32xf32>,
    %78 = vector.shape_cast %75 : vector<256x32xf32> to vector<16x16x32xf32>
    %c2_68 = arith.constant 2 : index
    %c2_69 = arith.constant 2 : index
    %c0_70 = arith.constant 0 : index
    %79 = vector.load %arg11[%c2_68, %c2_69, %c0_70] : memref<20x20x32xf32, #tpu.memory_space<vmem>>, vector<16x16x32xf32>
    tpu.vector_store %arg11[%c2_68, %c2_69, %c0_70], %78 {strides = array<i32>} : memref<20x20x32xf32, #tpu.memory_space<vmem>>, vector<16x16x32xf32>,
    %c0_71 = arith.constant 0 : index
    %c0_72 = arith.constant 0 : index
    %c0_73 = arith.constant 0 : index
    %80 = vector.load %arg11[%c0_71, %c0_72, %c0_73] : memref<20x20x32xf32, #tpu.memory_space<vmem>>, vector<20x20x32xf32>
    %81 = vector.extract_strided_slice %80 {offsets = [0, 0, 0], sizes = [20, 16, 32], strides = [1, 1, 1]} : vector<20x20x32xf32> to vector<20x16x32xf32>
    %82 = arith.truncf %81 : vector<20x16x32xf32> to vector<20x16x32xbf16>
    %c0_74 = arith.constant 0 : index
    %c0_75 = arith.constant 0 : index
    %c0_76 = arith.constant 0 : index
    %83 = vector.load %arg10[%c0_74, %c0_75, %c0_76] : memref<20x16x240xbf16, #tpu.memory_space<vmem>>, vector<20x16x32xbf16>
    tpu.vector_store %arg10[%c0_74, %c0_75, %c0_76], %82 {strides = array<i32>} : memref<20x16x240xbf16, #tpu.memory_space<vmem>>, vector<20x16x32xbf16>,
    %84 = vector.extract_strided_slice %80 {offsets = [0, 1, 0], sizes = [20, 16, 32], strides = [1, 1, 1]} : vector<20x20x32xf32> to vector<20x16x32xf32>
    %85 = arith.truncf %84 : vector<20x16x32xf32> to vector<20x16x32xbf16>
    %c0_77 = arith.constant 0 : index
    %c0_78 = arith.constant 0 : index
    %c32_79 = arith.constant 32 : index
    %86 = vector.load %arg10[%c0_77, %c0_78, %c32_79] : memref<20x16x240xbf16, #tpu.memory_space<vmem>>, vector<20x16x32xbf16>
    tpu.vector_store %arg10[%c0_77, %c0_78, %c32_79], %85 {strides = array<i32>} : memref<20x16x240xbf16, #tpu.memory_space<vmem>>, vector<20x16x32xbf16>,
    %87 = vector.extract_strided_slice %80 {offsets = [0, 2, 0], sizes = [20, 16, 32], strides = [1, 1, 1]} : vector<20x20x32xf32> to vector<20x16x32xf32>
    %88 = arith.truncf %87 : vector<20x16x32xf32> to vector<20x16x32xbf16>
    %c0_80 = arith.constant 0 : index
    %c0_81 = arith.constant 0 : index
    %c64_82 = arith.constant 64 : index
    %89 = vector.load %arg10[%c0_80, %c0_81, %c64_82] : memref<20x16x240xbf16, #tpu.memory_space<vmem>>, vector<20x16x32xbf16>
    tpu.vector_store %arg10[%c0_80, %c0_81, %c64_82], %88 {strides = array<i32>} : memref<20x16x240xbf16, #tpu.memory_space<vmem>>, vector<20x16x32xbf16>,
    %90 = vector.extract_strided_slice %80 {offsets = [0, 3, 0], sizes = [20, 16, 32], strides = [1, 1, 1]} : vector<20x20x32xf32> to vector<20x16x32xf32>
    %91 = arith.truncf %90 : vector<20x16x32xf32> to vector<20x16x32xbf16>
    %c0_83 = arith.constant 0 : index
    %c0_84 = arith.constant 0 : index
    %c96_85 = arith.constant 96 : index
    %92 = vector.load %arg10[%c0_83, %c0_84, %c96_85] : memref<20x16x240xbf16, #tpu.memory_space<vmem>>, vector<20x16x32xbf16>
    tpu.vector_store %arg10[%c0_83, %c0_84, %c96_85], %91 {strides = array<i32>} : memref<20x16x240xbf16, #tpu.memory_space<vmem>>, vector<20x16x32xbf16>,
    %93 = vector.extract_strided_slice %80 {offsets = [0, 4, 0], sizes = [20, 16, 32], strides = [1, 1, 1]} : vector<20x20x32xf32> to vector<20x16x32xf32>
    %94 = arith.truncf %93 : vector<20x16x32xf32> to vector<20x16x32xbf16>
    %c0_86 = arith.constant 0 : index
    %c0_87 = arith.constant 0 : index
    %c128_88 = arith.constant 128 : index
    %95 = vector.load %arg10[%c0_86, %c0_87, %c128_88] : memref<20x16x240xbf16, #tpu.memory_space<vmem>>, vector<20x16x32xbf16>
    tpu.vector_store %arg10[%c0_86, %c0_87, %c128_88], %94 {strides = array<i32>} : memref<20x16x240xbf16, #tpu.memory_space<vmem>>, vector<20x16x32xbf16>,
    %cst_89 = arith.constant 0.000000e+00 : f32
    %96 = vector.broadcast %cst_89 : f32 to vector<256x32xf32>
    %c0_90 = arith.constant 0 : index
    %c0_91 = arith.constant 0 : index
    %c0_92 = arith.constant 0 : index
    %97 = vector.load %arg10[%c0_90, %c0_91, %c0_92] : memref<20x16x240xbf16, #tpu.memory_space<vmem>>, vector<16x16x160xbf16>
    %98 = vector.shape_cast %97 : vector<16x16x160xbf16> to vector<256x160xbf16>
    %c0_93 = arith.constant 0 : index
    %c0_94 = arith.constant 0 : index
    %c0_95 = arith.constant 0 : index
    %99 = vector.load %arg6[%c0_93, %c0_94, %c0_95] : memref<5x160x32xbf16, #tpu.memory_space<vmem>>, vector<1x160x32xbf16>
    %100 = vector.shape_cast %99 : vector<1x160x32xbf16> to vector<160x32xbf16>
    %cst_96 = arith.constant dense<0.000000e+00> : vector<256x32xf32>
    %101 = tpu.matmul %98, %100, %cst_96 {dimension_numbers = #tpu.dot_dimension_numbers<[1], [0], [0], [1], [0, 0, 1, 1], [], []>} : vector<256x160xbf16>, vector<160x32xbf16>, vector<256x32xf32> -> vector<256x32xf32>
    %102 = arith.addf %96, %101 : vector<256x32xf32>
    %c1_97 = arith.constant 1 : index
    %c0_98 = arith.constant 0 : index
    %c0_99 = arith.constant 0 : index
    %103 = vector.load %arg10[%c1_97, %c0_98, %c0_99] : memref<20x16x240xbf16, #tpu.memory_space<vmem>>, vector<16x16x160xbf16>
    %104 = vector.shape_cast %103 : vector<16x16x160xbf16> to vector<256x160xbf16>
    %c1_100 = arith.constant 1 : index
    %c0_101 = arith.constant 0 : index
    %c0_102 = arith.constant 0 : index
    %105 = vector.load %arg6[%c1_100, %c0_101, %c0_102] : memref<5x160x32xbf16, #tpu.memory_space<vmem>>, vector<1x160x32xbf16>
    %106 = vector.shape_cast %105 : vector<1x160x32xbf16> to vector<160x32xbf16>
    %cst_103 = arith.constant dense<0.000000e+00> : vector<256x32xf32>
    %107 = tpu.matmul %104, %106, %cst_103 {dimension_numbers = #tpu.dot_dimension_numbers<[1], [0], [0], [1], [0, 0, 1, 1], [], []>} : vector<256x160xbf16>, vector<160x32xbf16>, vector<256x32xf32> -> vector<256x32xf32>
    %108 = arith.addf %102, %107 : vector<256x32xf32>
    %c2_104 = arith.constant 2 : index
    %c0_105 = arith.constant 0 : index
    %c0_106 = arith.constant 0 : index
    %109 = vector.load %arg10[%c2_104, %c0_105, %c0_106] : memref<20x16x240xbf16, #tpu.memory_space<vmem>>, vector<16x16x160xbf16>
    %110 = vector.shape_cast %109 : vector<16x16x160xbf16> to vector<256x160xbf16>
    %c2_107 = arith.constant 2 : index
    %c0_108 = arith.constant 0 : index
    %c0_109 = arith.constant 0 : index
    %111 = vector.load %arg6[%c2_107, %c0_108, %c0_109] : memref<5x160x32xbf16, #tpu.memory_space<vmem>>, vector<1x160x32xbf16>
    %112 = vector.shape_cast %111 : vector<1x160x32xbf16> to vector<160x32xbf16>
    %cst_110 = arith.constant dense<0.000000e+00> : vector<256x32xf32>
    %113 = tpu.matmul %110, %112, %cst_110 {dimension_numbers = #tpu.dot_dimension_numbers<[1], [0], [0], [1], [0, 0, 1, 1], [], []>} : vector<256x160xbf16>, vector<160x32xbf16>, vector<256x32xf32> -> vector<256x32xf32>
    %114 = arith.addf %108, %113 : vector<256x32xf32>
    %c3_111 = arith.constant 3 : index
    %c0_112 = arith.constant 0 : index
    %c0_113 = arith.constant 0 : index
    %115 = vector.load %arg10[%c3_111, %c0_112, %c0_113] : memref<20x16x240xbf16, #tpu.memory_space<vmem>>, vector<16x16x160xbf16>
    %116 = vector.shape_cast %115 : vector<16x16x160xbf16> to vector<256x160xbf16>
    %c3_114 = arith.constant 3 : index
    %c0_115 = arith.constant 0 : index
    %c0_116 = arith.constant 0 : index
    %117 = vector.load %arg6[%c3_114, %c0_115, %c0_116] : memref<5x160x32xbf16, #tpu.memory_space<vmem>>, vector<1x160x32xbf16>
    %118 = vector.shape_cast %117 : vector<1x160x32xbf16> to vector<160x32xbf16>
    %cst_117 = arith.constant dense<0.000000e+00> : vector<256x32xf32>
    %119 = tpu.matmul %116, %118, %cst_117 {dimension_numbers = #tpu.dot_dimension_numbers<[1], [0], [0], [1], [0, 0, 1, 1], [], []>} : vector<256x160xbf16>, vector<160x32xbf16>, vector<256x32xf32> -> vector<256x32xf32>
    %120 = arith.addf %114, %119 : vector<256x32xf32>
    %c4_118 = arith.constant 4 : index
    %c0_119 = arith.constant 0 : index
    %c0_120 = arith.constant 0 : index
    %121 = vector.load %arg10[%c4_118, %c0_119, %c0_120] : memref<20x16x240xbf16, #tpu.memory_space<vmem>>, vector<16x16x160xbf16>
    %122 = vector.shape_cast %121 : vector<16x16x160xbf16> to vector<256x160xbf16>
    %c4_121 = arith.constant 4 : index
    %c0_122 = arith.constant 0 : index
    %c0_123 = arith.constant 0 : index
    %123 = vector.load %arg6[%c4_121, %c0_122, %c0_123] : memref<5x160x32xbf16, #tpu.memory_space<vmem>>, vector<1x160x32xbf16>
    %124 = vector.shape_cast %123 : vector<1x160x32xbf16> to vector<160x32xbf16>
    %cst_124 = arith.constant dense<0.000000e+00> : vector<256x32xf32>
    %125 = tpu.matmul %122, %124, %cst_124 {dimension_numbers = #tpu.dot_dimension_numbers<[1], [0], [0], [1], [0, 0, 1, 1], [], []>} : vector<256x160xbf16>, vector<160x32xbf16>, vector<256x32xf32> -> vector<256x32xf32>
    %126 = arith.addf %120, %125 : vector<256x32xf32>
    %c0_125 = arith.constant 0 : index
    %c0_126 = arith.constant 0 : index
    %127 = vector.load %arg7[%c0_125, %c0_126] : memref<1x32xf32, #tpu.memory_space<vmem>>, vector<1x32xf32>
    %128 = vector.broadcast %127 : vector<1x32xf32> to vector<256x32xf32>
    %129 = arith.addf %126, %128 : vector<256x32xf32>
    %cst_127 = arith.constant 0.000000e+00 : f32
    %130 = vector.broadcast %cst_127 : f32 to vector<256x32xf32>
    %131 = arith.cmpf oge, %129, %130 : vector<256x32xf32>
    %c0_128 = arith.constant 0 : index
    %c0_129 = arith.constant 0 : index
    %132 = vector.load %arg8[%c0_128, %c0_129] : memref<1x32xf32, #tpu.memory_space<vmem>>, vector<1x32xf32>
    %133 = vector.broadcast %132 : vector<1x32xf32> to vector<256x32xf32>
    %134 = arith.mulf %133, %129 : vector<256x32xf32>
    %135 = arith.select %131, %129, %134 : vector<256x32xi1>, vector<256x32xf32>
    %136 = vector.extract_strided_slice %2 {offsets = [2, 2, 0], sizes = [16, 16, 32], strides = [1, 1, 1]} : vector<20x20x32xf32> to vector<16x16x32xf32>
    %137 = vector.shape_cast %136 : vector<16x16x32xf32> to vector<256x32xf32>
    %138 = arith.addf %135, %137 : vector<256x32xf32>
    %139 = vector.shape_cast %138 : vector<256x32xf32> to vector<1x16x16x32xf32>
    %c0_130 = arith.constant 0 : index
    %c0_131 = arith.constant 0 : index
    %c0_132 = arith.constant 0 : index
    %c0_133 = arith.constant 0 : index
    %140 = vector.load %arg9[%c0_130, %c0_131, %c0_132, %c0_133] : memref<1x16x16x32xf32, #tpu.memory_space<vmem>>, vector<1x16x16x32xf32>
    tpu.vector_store %arg9[%c0_130, %c0_131, %c0_132, %c0_133], %139 {strides = array<i32>} : memref<1x16x16x32xf32, #tpu.memory_space<vmem>>, vector<1x16x16x32xf32>,
    return
  }
  func.func @transform_0(%arg0: i32) -> (i32, i32, i32, i32) {
    %c0_i32 = arith.constant 0 : i32
    %c0_i32_0 = arith.constant 0 : i32
    %c0_i32_1 = arith.constant 0 : i32
    %c0_i32_2 = arith.constant 0 : i32
    return %arg0, %c0_i32, %c0_i32_0, %c0_i32_1 : i32, i32, i32, i32
  }
  func.func @transform_1(%arg0: i32) -> (i32, i32, i32, i32) {
    %c0_i32 = arith.constant 0 : i32
    %c0_i32_0 = arith.constant 0 : i32
    %c0_i32_1 = arith.constant 0 : i32
    %c0_i32_2 = arith.constant 0 : i32
    return %arg0, %c0_i32, %c0_i32_0, %c0_i32_1 : i32, i32, i32, i32
  }
  func.func @transform_2(%arg0: i32) -> (i32, i32, i32) {
    %c0_i32 = arith.constant 0 : i32
    %c0_i32_0 = arith.constant 0 : i32
    %c0_i32_1 = arith.constant 0 : i32
    %c0_i32_2 = arith.constant 0 : i32
    return %c0_i32, %c0_i32_0, %c0_i32_1 : i32, i32, i32
  }
  func.func @transform_3(%arg0: i32) -> (i32, i32) {
    %c0_i32 = arith.constant 0 : i32
    %c0_i32_0 = arith.constant 0 : i32
    %c0_i32_1 = arith.constant 0 : i32
    return %c0_i32, %c0_i32_0 : i32, i32
  }
  func.func @transform_4(%arg0: i32) -> (i32, i32) {
    %c0_i32 = arith.constant 0 : i32
    %c0_i32_0 = arith.constant 0 : i32
    %c0_i32_1 = arith.constant 0 : i32
    return %c0_i32, %c0_i32_0 : i32, i32
  }
  func.func @transform_5(%arg0: i32) -> (i32, i32, i32) {
    %c0_i32 = arith.constant 0 : i32
    %c0_i32_0 = arith.constant 0 : i32
    %c0_i32_1 = arith.constant 0 : i32
    %c0_i32_2 = arith.constant 0 : i32
    return %c0_i32, %c0_i32_0, %c0_i32_1 : i32, i32, i32
  }
  func.func @transform_6(%arg0: i32) -> (i32, i32) {
    %c0_i32 = arith.constant 0 : i32
    %c0_i32_0 = arith.constant 0 : i32
    %c0_i32_1 = arith.constant 0 : i32
    return %c0_i32, %c0_i32_0 : i32, i32
  }
  func.func @transform_7(%arg0: i32) -> (i32, i32) {
    %c0_i32 = arith.constant 0 : i32
    %c0_i32_0 = arith.constant 0 : i32
    %c0_i32_1 = arith.constant 0 : i32
    return %c0_i32, %c0_i32_0 : i32, i32
  }
  func.func @transform_8(%arg0: i32) -> (i32, i32, i32, i32) {
    %c0_i32 = arith.constant 0 : i32
    %c0_i32_0 = arith.constant 0 : i32
    %c0_i32_1 = arith.constant 0 : i32
    %c0_i32_2 = arith.constant 0 : i32
    return %arg0, %c0_i32, %c0_i32_0, %c0_i32_1 : i32, i32, i32, i32
  }
}

</mosaic_0001>

<llo_original>
// kernel: tile.12
$region0: #{tile.12}
  #allocation0 [shape = 's32[1]{0}', space=sflag, size = 0x4, scoped, tag = 'scoped memory for tile.12']
  %s0 = inlined_call_operand.vmem [shape: f32[32], index: 0, kind: input, shape index: {}]
  %s1 = inlined_call_operand.vmem [shape: f32[4,32], index: 1, kind: output, shape index: {}]
  // Predicated region
  $region2: #{tile.12} parent=0 // pred_check
    _
  $region3: #{tile.12} parent=0 // pred_check_branch
    %3 = sbr.rel (0) target = $region5
  $region4: #{tile.12} parent=0 // pred_region
    _
  $region5: #{tile.12} parent=0 // pred_fallthru
    _
  %v4 = vld [vmem:[%s0] ss:$0 sm:$0xff]
  %5 = vst [vmem:[%s1] sm:$0xf] %v4

// kernel: mul.10
$region0: #{mul.10}
  %s0 = inlined_call_operand.vmem [shape: f32[4,32], index: 0, kind: input, shape index: {}]
  %s1 = inlined_call_operand.vmem [shape: f32[128], index: 1, kind: output, shape index: {}]
  $region1: #{mul.10} parent=0
    #allocation0 [shape = 'u8[4096]{0}', space=vmem, size = 0x1000, scoped, tag = 'scoped mem for output reshape']
    #allocation1 [shape = 'u8[4096]{0}', space=vmem, size = 0x1000, scoped, tag = 'scoped mem for input reshape']
    %s3 = sshllo.u32 0, 4
    %v4 = vld [vmem:[%s0] sm:%s3]
    %5 = vst [vmem:[#allocation1] sm:%s3] %v4
    %v6 = vld [vmem:[#allocation1] sm:$0x1]
    %vm7 = vcmask 261120
    %8 = vst.msk [vmem:[#allocation0] sm:$0x1] %vm7, %v6
    %s9 = scalar_lea.vmem [#allocation1], 3
    %v10 = vld [vmem:[%s9] sm:$0x1]
    %11 = vrot.lane.b32.xlu0 %v10, 96
    %v12 = vpop.permute.xlu0 %11
    %vm13 = vcmask 1048320
    %14 = vst.msk [vmem:[#allocation0] sm:$0x1] %vm13, %v12
    %s15 = scalar_lea.vmem [#allocation1], 2
    %v16 = vld [vmem:[%s15] sm:$0x1]
    %17 = vrot.lane.b32.xlu0 %v16, 64
    %v18 = vpop.permute.xlu0 %17
    %vm19 = vcmask 785920
    %20 = vst.msk [vmem:[#allocation0] sm:$0x1] %vm19, %v18
    %s21 = scalar_lea.vmem [#allocation1], 1
    %v22 = vld [vmem:[%s21] sm:$0x1]
    %23 = vrot.lane.b32.xlu0 %v22, 32
    %v24 = vpop.permute.xlu0 %23
    %vm25 = vcmask 523520
    %26 = vst.msk [vmem:[#allocation0] sm:$0x1] %vm25, %v24
    %s28 = sshllo.u32 0, 1
    %v30 = vld [vmem:[#allocation0] sm:%s28]
    %s31 = sshllo.u32 0, 1
    %32 = vst [vmem:[%s1] sm:%s31] %v30

// kernel: tile.17
$region0: #{tile.17}
  %s0 = inlined_call_operand.vmem [shape: f32[4,32], index: 0, kind: input, shape index: {}]
  %s1 = inlined_call_operand.vmem [shape: f32[1,128], index: 1, kind: output, shape index: {}]
  $region1: #{tile.17} parent=0
    #allocation0 [shape = 'u8[4096]{0}', space=vmem, size = 0x1000, scoped, tag = 'scoped mem for output reshape']
    #allocation1 [shape = 'u8[4096]{0}', space=vmem, size = 0x1000, scoped, tag = 'scoped mem for input reshape']
    %s3 = sshllo.u32 0, 4
    %v4 = vld [vmem:[%s0] sm:%s3]
    %5 = vst [vmem:[#allocation1] sm:%s3] %v4
    %v6 = vld [vmem:[#allocation1] sm:$0x1]
    %vm7 = vcmask 261120
    %8 = vst.msk [vmem:[#allocation0] sm:$0x1] %vm7, %v6
    %s9 = scalar_lea.vmem [#allocation1], 3
    %v10 = vld [vmem:[%s9] sm:$0x1]
    %11 = vrot.lane.b32.xlu0 %v10, 96
    %v12 = vpop.permute.xlu0 %11
    %vm13 = vcmask 1048320
    %14 = vst.msk [vmem:[#allocation0] sm:$0x1] %vm13, %v12
    %s15 = scalar_lea.vmem [#allocation1], 2
    %v16 = vld [vmem:[%s15] sm:$0x1]
    %17 = vrot.lane.b32.xlu0 %v16, 64
    %v18 = vpop.permute.xlu0 %17
    %vm19 = vcmask 785920
    %20 = vst.msk [vmem:[#allocation0] sm:$0x1] %vm19, %v18
    %s21 = scalar_lea.vmem [#allocation1], 1
    %v22 = vld [vmem:[%s21] sm:$0x1]
    %23 = vrot.lane.b32.xlu0 %v22, 32
    %v24 = vpop.permute.xlu0 %23
    %vm25 = vcmask 523520
    %26 = vst.msk [vmem:[#allocation0] sm:$0x1] %vm25, %v24
    %s28 = sshllo.u32 0, 1
    %v30 = vld [vmem:[#allocation0] sm:%s28]
    %s31 = sshllo.u32 0, 1
    %32 = vst [vmem:[%s1] sm:%s31] %v30

// kernel: tile.9
$region0: #{tile.9}
  #allocation0 [shape = 's32[1]{0}', space=sflag, size = 0x4, scoped, tag = 'scoped memory for tile.9']
  %s0 = inlined_call_operand.<no memory space> [shape: f32[], index: 0, kind: input, shape index: {}]
  %s1 = inlined_call_operand.vmem [shape: f32[1,128], index: 1, kind: output, shape index: {}]
  %v2 = vstv %s0
  %3 = vst [vmem:[%s1] sm:$0x1] %v2

// kernel: vnet_up_block_forward.2
$region0: #{vnet_up_block_forward.2}
  #allocation0 [shape = 'u32[]', space=smem, size = 0x4, offset = 0x4, fixed_abs, tag = 'smem constant byte address 0x4 - core index']
  #allocation1 [shape = 'u32[144,128]{1,0:T(1,128)}', space=vmem, size = 0x12000, scoped, tag = 'internal scratch']
  %s0 = inlined_call_operand.vmem [shape: bf16[2,8,8,32], index: 0, kind: input, shape index: {}]
  %s1 = inlined_call_operand.vmem [shape: bf16[32,128], index: 1, kind: input, shape index: {}]
  %s2 = inlined_call_operand.vmem [shape: f32[1,128], index: 2, kind: input, shape index: {}]
  %s3 = inlined_call_operand.vmem [shape: f32[1,128], index: 3, kind: input, shape index: {}]
  %s4 = inlined_call_operand.vmem [shape: bf16[2,8,8,128], index: 4, kind: output, shape index: {}]
  %s5 = sld [smem:[#allocation0]]
  $region26: #{vnet_up_block_forward.2} parent=0
    _
  %s7 = ssub.s32 1, %s5
  %s8 = scalar_select 0, %s7, %s5
  // Predicated region
  $region2: #{vnet_up_block_forward.2} parent=0 // pred_check
    _
  $region3: #{vnet_up_block_forward.2} parent=0 // pred_check_branch
    %10 = sbr.rel (0) target = $region5
  $region4: #{vnet_up_block_forward.2} parent=0 // pred_region
    _
  $region5: #{vnet_up_block_forward.2} parent=0 // pred_fallthru
    _
  // Predicated region
  $region6: #{vnet_up_block_forward.2} parent=0 // pred_check
    _
  $region7: #{vnet_up_block_forward.2} parent=0 // pred_check_branch
    %12 = sbr.rel (0) target = $region9
  $region8: #{vnet_up_block_forward.2} parent=0 // pred_region
    _
  $region9: #{vnet_up_block_forward.2} parent=0 // pred_fallthru
    _
  // Predicated region
  $region10: #{vnet_up_block_forward.2} parent=0 // pred_check
    _
  $region11: #{vnet_up_block_forward.2} parent=0 // pred_check_branch
    %14 = sbr.rel (0) target = $region13
  $region12: #{vnet_up_block_forward.2} parent=0 // pred_region
    _
  $region13: #{vnet_up_block_forward.2} parent=0 // pred_fallthru
    _
  // Predicated region
  $region14: #{vnet_up_block_forward.2} parent=0 // pred_check
    _
  $region15: #{vnet_up_block_forward.2} parent=0 // pred_check_branch
    %16 = sbr.rel (0) target = $region17
  $region16: #{vnet_up_block_forward.2} parent=0 // pred_region
    _
  $region17: #{vnet_up_block_forward.2} parent=0 // pred_fallthru
    _
  %v18 = vld [vmem:[%s0] sm:$0xf]
  %v19 = vld [vmem:[%s0 + $0x4] sm:$0xf]
  %v20 = vld [vmem:[%s0 + $0x8] sm:$0xf]
  %v21 = vld [vmem:[%s0 + $0xc] sm:$0xf]
  %v22 = vld [vmem:[%s0 + $0x10] sm:$0xf]
  %v23 = vld [vmem:[%s0 + $0x14] sm:$0xf]
  %v24 = vld [vmem:[%s0 + $0x18] sm:$0xf]
  %v25 = vld [vmem:[%s0 + $0x1c] sm:$0xf]
  %v26 = vld [vmem:[%s0 + $0x20] sm:$0xf]
  %v27 = vld [vmem:[%s0 + $0x24] sm:$0xf]
  %v28 = vld [vmem:[%s0 + $0x28] sm:$0xf]
  %v29 = vld [vmem:[%s0 + $0x2c] sm:$0xf]
  %v30 = vld [vmem:[%s0 + $0x30] sm:$0xf]
  %v31 = vld [vmem:[%s0 + $0x34] sm:$0xf]
  %v32 = vld [vmem:[%s0 + $0x38] sm:$0xf]
  %v33 = vld [vmem:[%s0 + $0x3c] sm:$0xf]
  %v34 = vld [vmem:[%s1] sm:$0xf]
  %v35 = vld [vmem:[%s1 + $0x4] sm:$0xf]
  %v36 = vld [vmem:[%s1 + $0x8] sm:$0xf]
  %v37 = vld [vmem:[%s1 + $0xc] sm:$0xf]
  %v38 = vld [vmem:[%s2] sm:$0x1]
  %v40 = vlaneseq
  %v41 = vshrl.u32 %v40, 7
  %v42 = vsub.s32 0, %v41
  %v43 = vrot.slane %v38, %v42
  %v61 = vunpack.c.l.b16 %v18
  %v62 = vunpack.c.l.b16 %v19
  %v63 = vunpack.c.l.b16 %v20
  %v64 = vunpack.c.l.b16 %v21
  %v65 = vunpack.c.l.b16 %v22
  %v66 = vunpack.c.l.b16 %v23
  %v67 = vunpack.c.l.b16 %v24
  %v68 = vunpack.c.l.b16 %v25
  %v69 = vunpack.c.l.b16 %v26
  %v70 = vunpack.c.l.b16 %v27
  %v71 = vunpack.c.l.b16 %v28
  %v72 = vunpack.c.l.b16 %v29
  %v73 = vunpack.c.l.b16 %v30
  %v74 = vunpack.c.l.b16 %v31
  %v75 = vunpack.c.l.b16 %v32
  %v76 = vunpack.c.l.b16 %v33
  %v77 = vpack.c.b16 %v62, %v61
  %v78 = vpack.c.b16 %v64, %v63
  %v79 = vpack.c.b16 %v66, %v65
  %v80 = vpack.c.b16 %v68, %v67
  %v81 = vpack.c.b16 %v70, %v69
  %v82 = vpack.c.b16 %v72, %v71
  %v83 = vpack.c.b16 %v74, %v73
  %v84 = vpack.c.b16 %v76, %v75
  %v89 = vunpack.c.l.b16 %v34
  %v90 = vunpack.c.l.b16 %v35
  %v91 = vunpack.c.l.b16 %v36
  %v92 = vunpack.c.l.b16 %v37
  %v93 = vpack.c.b16 %v90, %v89
  %v94 = vpack.c.b16 %v92, %v91
  %vm97 = vcmask 261120
  %v99 = vsel %vm97, %v77, 0
  %v102 = vsel %vm97, %v78, 0
  %v105 = vsel %vm97, %v79, 0
  %v108 = vsel %vm97, %v80, 0
  %v111 = vsel %vm97, %v81, 0
  %v114 = vsel %vm97, %v82, 0
  %v117 = vsel %vm97, %v83, 0
  %v120 = vsel %vm97, %v84, 0
  %122 = vmatprep.subr.bf16.mxu0 0
  %123 = vmatpush1.bf16.msra.mxu0 %v93
  %124 = vmatprep.subr.bf16.mxu0 0
  %125 = vmatpush1.bf16.msra.mxu0 %v94
  %126 = vmatprep.subr.bf16.mxu0 0
  %127 = vmatpush1.bf16.msra.mxu0 0
  %128 = vmatprep.subr.bf16.mxu0 0
  %129 = vmatpush1.bf16.msra.mxu0 0
  %130 = vmatprep.subr.bf16.mxu0 0
  %131 = vmatpush1.bf16.msra.mxu0 0
  %132 = vmatprep.subr.bf16.mxu0 0
  %133 = vmatpush1.bf16.msra.mxu0 0
  %134 = vmatprep.subr.bf16.mxu0 0
  %135 = vmatpush1.bf16.msra.mxu0 0
  %136 = vmatprep.subr.bf16.mxu0 0
  %137 = vmatpush1.bf16.msra.mxu0 0
  %138 = vmatprep.subr.bf16.mxu0 0
  %139 = vmatpush1.bf16.msra.mxu0 0
  %140 = vmatprep.subr.bf16.mxu0 0
  %141 = vmatpush1.bf16.msra.mxu0 0
  %142 = vmatprep.subr.bf16.mxu0 0
  %143 = vmatpush1.bf16.msra.mxu0 0
  %144 = vmatprep.subr.bf16.mxu0 0
  %145 = vmatpush1.bf16.msra.mxu0 0
  %146 = vmatprep.subr.bf16.mxu0 0
  %147 = vmatpush1.bf16.msra.mxu0 0
  %148 = vmatprep.subr.bf16.mxu0 0
  %149 = vmatpush1.bf16.msra.mxu0 0
  %150 = vmatprep.subr.bf16.mxu0 0
  %151 = vmatpush1.bf16.msra.mxu0 0
  %152 = vmatprep.subr.bf16.mxu0 0
  %153 = vmatpush1.bf16.msra.mxu0 0
  %154 = vmatprep.mubr.bf16.mxu0 0
  %155 = vmatmul.mubr.bf16.gmra.mrb[0].mxu0 %v99
  %v156 = vpop.f32.mrb[0].mxu0
  %v157 = vadd.f32 %v43, %v156
  %v158 = vpop.f32.mrb[0].mxu0
  %v159 = vpop.f32.mrb[0].mxu0
  %v160 = vadd.f32 %v43, %v159
  %v161 = vpop.f32.mrb[0].mxu0
  %162 = vmatprep.mubr.bf16.mxu0 0
  %163 = vmatmul.mubr.bf16.gmra.mrb[0].mxu0 %v102
  %v164 = vpop.f32.mrb[0].mxu0
  %v165 = vadd.f32 %v43, %v164
  %v166 = vpop.f32.mrb[0].mxu0
  %v167 = vpop.f32.mrb[0].mxu0
  %v168 = vadd.f32 %v43, %v167
  %v169 = vpop.f32.mrb[0].mxu0
  %170 = vmatprep.mubr.bf16.mxu0 0
  %171 = vmatmul.mubr.bf16.gmra.mrb[0].mxu0 %v105
  %v172 = vpop.f32.mrb[0].mxu0
  %v173 = vadd.f32 %v43, %v172
  %v174 = vpop.f32.mrb[0].mxu0
  %v175 = vpop.f32.mrb[0].mxu0
  %v176 = vadd.f32 %v43, %v175
  %v177 = vpop.f32.mrb[0].mxu0
  %178 = vmatprep.mubr.bf16.mxu0 0
  %179 = vmatmul.mubr.bf16.gmra.mrb[0].mxu0 %v108
  %v180 = vpop.f32.mrb[0].mxu0
  %v181 = vadd.f32 %v43, %v180
  %v182 = vpop.f32.mrb[0].mxu0
  %v183 = vpop.f32.mrb[0].mxu0
  %v184 = vadd.f32 %v43, %v183
  %v185 = vpop.f32.mrb[0].mxu0
  %186 = vmatprep.mubr.bf16.mxu0 0
  %187 = vmatmul.mubr.bf16.gmra.mrb[0].mxu0 %v111
  %v188 = vpop.f32.mrb[0].mxu0
  %v189 = vadd.f32 %v43, %v188
  %v190 = vpop.f32.mrb[0].mxu0
  %v191 = vpop.f32.mrb[0].mxu0
  %v192 = vadd.f32 %v43, %v191
  %v193 = vpop.f32.mrb[0].mxu0
  %194 = vmatprep.mubr.bf16.mxu0 0
  %195 = vmatmul.mubr.bf16.gmra.mrb[0].mxu0 %v114
  %v196 = vpop.f32.mrb[0].mxu0
  %v197 = vadd.f32 %v43, %v196
  %v198 = vpop.f32.mrb[0].mxu0
  %v199 = vpop.f32.mrb[0].mxu0
  %v200 = vadd.f32 %v43, %v199
  %v201 = vpop.f32.mrb[0].mxu0
  %202 = vmatprep.mubr.bf16.mxu0 0
  %203 = vmatmul.mubr.bf16.gmra.mrb[0].mxu0 %v117
  %v204 = vpop.f32.mrb[0].mxu0
  %v205 = vadd.f32 %v43, %v204
  %v206 = vpop.f32.mrb[0].mxu0
  %v207 = vpop.f32.mrb[0].mxu0
  %v208 = vadd.f32 %v43, %v207
  %v209 = vpop.f32.mrb[0].mxu0
  %210 = vmatprep.mubr.bf16.mxu0 0
  %211 = vmatmul.mubr.bf16.gmra.mrb[0].mxu0 %v120
  %v212 = vpop.f32.mrb[0].mxu0
  %v213 = vadd.f32 %v43, %v212
  %v214 = vpop.f32.mrb[0].mxu0
  %v215 = vpop.f32.mrb[0].mxu0
  %v216 = vadd.f32 %v43, %v215
  %v217 = vpop.f32.mrb[0].mxu0
  %218 = vdwg.mxu0
  %vm219 = vcmp.ge.f32.partialorder %v157, 0.0
  %vm220 = vcmp.ge.f32.partialorder %v160, 0.0
  %vm221 = vcmp.ge.f32.partialorder %v165, 0.0
  %vm222 = vcmp.ge.f32.partialorder %v168, 0.0
  %vm223 = vcmp.ge.f32.partialorder %v173, 0.0
  %vm224 = vcmp.ge.f32.partialorder %v176, 0.0
  %vm225 = vcmp.ge.f32.partialorder %v181, 0.0
  %vm226 = vcmp.ge.f32.partialorder %v184, 0.0
  %vm227 = vcmp.ge.f32.partialorder %v189, 0.0
  %vm228 = vcmp.ge.f32.partialorder %v192, 0.0
  %vm229 = vcmp.ge.f32.partialorder %v197, 0.0
  %vm230 = vcmp.ge.f32.partialorder %v200, 0.0
  %vm231 = vcmp.ge.f32.partialorder %v205, 0.0
  %vm232 = vcmp.ge.f32.partialorder %v208, 0.0
  %vm233 = vcmp.ge.f32.partialorder %v213, 0.0
  %vm234 = vcmp.ge.f32.partialorder %v216, 0.0
  %v235 = vld [vmem:[%s3] sm:$0x1]
  %v237 = vlaneseq
  %v238 = vshrl.u32 %v237, 7
  %v239 = vsub.s32 0, %v238
  %v240 = vrot.slane %v235, %v239
  %v242 = vmul.f32 %v240, %v157
  %v243 = vmul.f32 %v240, %v160
  %v244 = vmul.f32 %v240, %v165
  %v245 = vmul.f32 %v240, %v168
  %v246 = vmul.f32 %v240, %v173
  %v247 = vmul.f32 %v240, %v176
  %v248 = vmul.f32 %v240, %v181
  %v249 = vmul.f32 %v240, %v184
  %v250 = vmul.f32 %v240, %v189
  %v251 = vmul.f32 %v240, %v192
  %v252 = vmul.f32 %v240, %v197
  %v253 = vmul.f32 %v240, %v200
  %v254 = vmul.f32 %v240, %v205
  %v255 = vmul.f32 %v240, %v208
  %v256 = vmul.f32 %v240, %v213
  %v257 = vmul.f32 %v240, %v216
  %v258 = vsel %vm219, %v157, %v242
  %v259 = vsel %vm220, %v160, %v243
  %v260 = vsel %vm221, %v165, %v244
  %v261 = vsel %vm222, %v168, %v245
  %v262 = vsel %vm223, %v173, %v246
  %v263 = vsel %vm224, %v176, %v247
  %v264 = vsel %vm225, %v181, %v248
  %v265 = vsel %vm226, %v184, %v249
  %v266 = vsel %vm227, %v189, %v250
  %v267 = vsel %vm228, %v192, %v251
  %v268 = vsel %vm229, %v197, %v252
  %v269 = vsel %vm230, %v200, %v253
  %v270 = vsel %vm231, %v205, %v254
  %v271 = vsel %vm232, %v208, %v255
  %v272 = vsel %vm233, %v213, %v256
  %v273 = vsel %vm234, %v216, %v257
  %v274 = vpack.c.bf16 %v258, %v258
  %v275 = vpack.c.bf16 %v259, %v259
  %v276 = vpack.c.bf16 %v260, %v260
  %v277 = vpack.c.bf16 %v261, %v261
  %v278 = vpack.c.bf16 %v262, %v262
  %v279 = vpack.c.bf16 %v263, %v263
  %v280 = vpack.c.bf16 %v264, %v264
  %v281 = vpack.c.bf16 %v265, %v265
  %v282 = vpack.c.bf16 %v266, %v266
  %v283 = vpack.c.bf16 %v267, %v267
  %v284 = vpack.c.bf16 %v268, %v268
  %v285 = vpack.c.bf16 %v269, %v269
  %v286 = vpack.c.bf16 %v270, %v270
  %v287 = vpack.c.bf16 %v271, %v271
  %v288 = vpack.c.bf16 %v272, %v272
  %v289 = vpack.c.bf16 %v273, %v273
  %290 = vst [vmem:[%s4] sm:$0xf] %v274
  %291 = vst [vmem:[%s4 + $0x4] sm:$0xf] %v275
  %292 = vst [vmem:[%s4 + $0x8] sm:$0xf] %v276
  %293 = vst [vmem:[%s4 + $0xc] sm:$0xf] %v277
  %294 = vst [vmem:[%s4 + $0x10] sm:$0xf] %v278
  %295 = vst [vmem:[%s4 + $0x14] sm:$0xf] %v279
  %296 = vst [vmem:[%s4 + $0x18] sm:$0xf] %v280
  %297 = vst [vmem:[%s4 + $0x1c] sm:$0xf] %v281
  %298 = vst [vmem:[%s4 + $0x20] sm:$0xf] %v282
  %299 = vst [vmem:[%s4 + $0x24] sm:$0xf] %v283
  %300 = vst [vmem:[%s4 + $0x28] sm:$0xf] %v284
  %301 = vst [vmem:[%s4 + $0x2c] sm:$0xf] %v285
  %302 = vst [vmem:[%s4 + $0x30] sm:$0xf] %v286
  %303 = vst [vmem:[%s4 + $0x34] sm:$0xf] %v287
  %304 = vst [vmem:[%s4 + $0x38] sm:$0xf] %v288
  %305 = vst [vmem:[%s4 + $0x3c] sm:$0xf] %v289
  // Predicated region
  $region18: #{vnet_up_block_forward.2} parent=0 // pred_check
    _
  $region19: #{vnet_up_block_forward.2} parent=0 // pred_check_branch
    %307 = sbr.rel (0) target = $region21
  $region20: #{vnet_up_block_forward.2} parent=0 // pred_region
    _
  $region21: #{vnet_up_block_forward.2} parent=0 // pred_fallthru
    _
  // Predicated region
  $region22: #{vnet_up_block_forward.2} parent=0 // pred_check
    _
  $region23: #{vnet_up_block_forward.2} parent=0 // pred_check_branch
    %309 = sbr.rel (0) target = $region25
  $region24: #{vnet_up_block_forward.2} parent=0 // pred_region
    _
  $region25: #{vnet_up_block_forward.2} parent=0 // pred_fallthru
    _

// kernel: vnet_up_block_forward.3
$region0: #{vnet_up_block_forward.3}
  #allocation0 [shape = 'u32[]', space=smem, size = 0x4, offset = 0x4, fixed_abs, tag = 'smem constant byte address 0x4 - core index']
  #allocation1 [shape = 'u32[144,128]{1,0:T(1,128)}', space=vmem, size = 0x12000, scoped, tag = 'internal scratch']
  #allocation2 [shape = 'bf16[20,16,240]{2,1,0:T(16,128)(2,1)}', space=vmem, size = 0x28000, scoped, tag = 'scratch operand']
  #allocation3 [shape = 'f32[20,20,32]{2,1,0:T(8,128)}', space=vmem, size = 0x3c000, scoped, tag = 'scratch operand']
  %s0 = inlined_call_operand.vmem [shape: bf16[2,20,20,32], index: 0, kind: input, shape index: {}]
  %s1 = inlined_call_operand.vmem [shape: bf16[2,20,20,16], index: 1, kind: input, shape index: {}]
  %s2 = inlined_call_operand.vmem [shape: bf16[5,240,32], index: 2, kind: input, shape index: {}]
  %s3 = inlined_call_operand.vmem [shape: f32[1,32], index: 3, kind: input, shape index: {}]
  %s4 = inlined_call_operand.vmem [shape: f32[1,32], index: 4, kind: input, shape index: {}, may-alias: {4,7}]
  %s5 = inlined_call_operand.vmem [shape: bf16[5,160,32], index: 5, kind: input, shape index: {}]
  %s6 = inlined_call_operand.vmem [shape: f32[1,32], index: 6, kind: input, shape index: {}]
  %s7 = inlined_call_operand.vmem [shape: f32[1,32], index: 7, kind: input, shape index: {}, may-alias: {4,7}]
  %s8 = inlined_call_operand.hbm [shape: f32[2,16,16,32], index: 8, kind: output, shape index: {}]
  %s9 = sld [smem:[#allocation0]]
  $region65: #{vnet_up_block_forward.3} parent=0
    _
  %s11 = ssub.s32 1, %s9
  %s12 = scalar_select 0, %s11, %s9
  $region1: #{vnet_up_block_forward.3} parent=0
    #allocation4 [shape = 'u8[262144]{0}', space=vmem, size = 0x40000, scoped, tag = 'output window, operand 0']
    #allocation5 [shape = 's32[2]{0}', space=sflag, size = 0x8, scoped, tag = 'scoped memory for vnet_up_block_forward.3']
    %13 = vsyncpa [#allocation5], 0
    %s14 = scalar_lea.sflag [#allocation5], 1
    %15 = vsyncpa %s14, 0
    loop: start=0, step=1, limit=4
    $region2: #{vnet_up_block_forward.3} parent=1 // loop_pre_header
      _
    $region3: #{vnet_up_block_forward.3} parent=1 // loop_header
      %s17 = sphi 0, %s21
      %p18 = scmp.ge.s32.totalorder %s17, 4
      %s27 = sphi 0, %s29
      %s30 = sphi 0, %s27
      %s31 = sphi 0, %s30
      %s47 = sphi 0, %s31
      %s53 = sphi 0, %s55
      %s56 = sphi 0, %s53
      %s57 = sphi 0, %s56
      %s73 = sphi 0, %s57
      %s77 = sphi 0, %s77
      %s79 = sphi 0, %s77
      %s80 = sphi 0, %s79
      %s94 = sphi 0, %s80
      %s98 = sphi 0, %s98
      %s100 = sphi 0, %s98
      %s101 = sphi 0, %s100
      %s115 = sphi 0, %s101
      %s119 = sphi 0, %s119
      %s121 = sphi 0, %s119
      %s122 = sphi 0, %s121
      %s136 = sphi 0, %s122
      %s140 = sphi 0, %s140
      %s142 = sphi 0, %s140
      %s143 = sphi 0, %s142
      %s157 = sphi 0, %s143
      %s161 = sphi 0, %s161
      %s163 = sphi 0, %s161
      %s164 = sphi 0, %s163
      %s178 = sphi 0, %s164
      %s182 = sphi 0, %s182
      %s184 = sphi 0, %s182
      %s185 = sphi 0, %s184
      %s199 = sphi 0, %s185
      %s205 = sphi 0, %s207
      %s208 = sphi 0, %s205
      %s209 = sphi 0, %s208
      %s225 = sphi 0, %s209
    $region4: #{vnet_up_block_forward.3} parent=1 // loop_header_branch
      %20 = sbr.rel (%p18) target = $region8
    $region5: #{vnet_up_block_forward.3} parent=1 // loop_body
      %s22 = ssub.s32 %s17, 1
      %s23 = ssub.s32 %s17, 2
      %s24 = sadd.s32 %s17, 1
      %s25 = ssub.s32 %s17, %s24
      %p26 = scmp.eq.s32.totalorder %s25, 0
      %s28 = sadd.s32 %s27, 1
      %s29 = scalar_select %p26, %s27, %s28
      %p32 = pneg %p26
      %p33 = scmp.eq.s32.totalorder %s17, 1
      %p34 = por %p32, %p33
      %p35 = scmp.ne.s32.totalorder %s27, %s30
      %p36 = scmp.eq.s32.totalorder %s17, 0
      %p37 = por %p35, %p36
      %p38 = scmp.ne.s32.totalorder %s27, %s30
      %p39 = scmp.eq.s32.totalorder %s22, 1
      %p40 = por %p38, %p39
      %p41 = scmp.ne.s32.totalorder %s30, %s31
      %p42 = scmp.eq.s32.totalorder %s22, 0
      %p43 = por %p41, %p42
      %p44 = scmp.ne.s32.totalorder %s30, %s31
      %p45 = scmp.eq.s32.totalorder %s23, 1
      %p46 = por %p44, %p45
      %p48 = scmp.ne.s32.totalorder %s31, %s47
      %p49 = scmp.eq.s32.totalorder %s23, 0
      %p50 = por %p48, %p49
      %s51 = ssub.s32 %s17, %s24
      %p52 = scmp.eq.s32.totalorder %s51, 0
      %s54 = sadd.s32 %s53, 1
      %s55 = scalar_select %p52, %s53, %s54
      %p58 = pneg %p52
      %p59 = scmp.eq.s32.totalorder %s17, 1
      %p60 = por %p58, %p59
      %p61 = scmp.ne.s32.totalorder %s53, %s56
      %p62 = scmp.eq.s32.totalorder %s17, 0
      %p63 = por %p61, %p62
      %p64 = scmp.ne.s32.totalorder %s53, %s56
      %p65 = scmp.eq.s32.totalorder %s22, 1
      %p66 = por %p64, %p65
      %p67 = scmp.ne.s32.totalorder %s56, %s57
      %p68 = scmp.eq.s32.totalorder %s22, 0
      %p69 = por %p67, %p68
      %p70 = scmp.ne.s32.totalorder %s56, %s57
      %p71 = scmp.eq.s32.totalorder %s23, 1
      %p72 = por %p70, %p71
      %p74 = scmp.ne.s32.totalorder %s57, %s73
      %p75 = scmp.eq.s32.totalorder %s23, 0
      %p76 = por %p74, %p75
      %s78 = sadd.s32 %s77, 1
      %p81 = scmp.eq.s32.totalorder %s17, 1
      %p82 = scmp.ne.s32.totalorder %s77, %s79
      %p83 = scmp.eq.s32.totalorder %s17, 0
      %p84 = por %p82, %p83
      %p85 = scmp.ne.s32.totalorder %s77, %s79
      %p86 = scmp.eq.s32.totalorder %s22, 1
      %p87 = por %p85, %p86
      %p88 = scmp.ne.s32.totalorder %s79, %s80
      %p89 = scmp.eq.s32.totalorder %s22, 0
      %p90 = por %p88, %p89
      %p91 = scmp.ne.s32.totalorder %s79, %s80
      %p92 = scmp.eq.s32.totalorder %s23, 1
      %p93 = por %p91, %p92
      %p95 = scmp.ne.s32.totalorder %s80, %s94
      %p96 = scmp.eq.s32.totalorder %s23, 0
      %p97 = por %p95, %p96
      %s99 = sadd.s32 %s98, 1
      %p102 = scmp.eq.s32.totalorder %s17, 1
      %p103 = scmp.ne.s32.totalorder %s98, %s100
      %p104 = scmp.eq.s32.totalorder %s17, 0
      %p105 = por %p103, %p104
      %p106 = scmp.ne.s32.totalorder %s98, %s100
      %p107 = scmp.eq.s32.totalorder %s22, 1
      %p108 = por %p106, %p107
      %p109 = scmp.ne.s32.totalorder %s100, %s101
      %p110 = scmp.eq.s32.totalorder %s22, 0
      %p111 = por %p109, %p110
      %p112 = scmp.ne.s32.totalorder %s100, %s101
      %p113 = scmp.eq.s32.totalorder %s23, 1
      %p114 = por %p112, %p113
      %p116 = scmp.ne.s32.totalorder %s101, %s115
      %p117 = scmp.eq.s32.totalorder %s23, 0
      %p118 = por %p116, %p117
      %s120 = sadd.s32 %s119, 1
      %p123 = scmp.eq.s32.totalorder %s17, 1
      %p124 = scmp.ne.s32.totalorder %s119, %s121
      %p125 = scmp.eq.s32.totalorder %s17, 0
      %p126 = por %p124, %p125
      %p127 = scmp.ne.s32.totalorder %s119, %s121
      %p128 = scmp.eq.s32.totalorder %s22, 1
      %p129 = por %p127, %p128
      %p130 = scmp.ne.s32.totalorder %s121, %s122
      %p131 = scmp.eq.s32.totalorder %s22, 0
      %p132 = por %p130, %p131
      %p133 = scmp.ne.s32.totalorder %s121, %s122
      %p134 = scmp.eq.s32.totalorder %s23, 1
      %p135 = por %p133, %p134
      %p137 = scmp.ne.s32.totalorder %s122, %s136
      %p138 = scmp.eq.s32.totalorder %s23, 0
      %p139 = por %p137, %p138
      %s141 = sadd.s32 %s140, 1
      %p144 = scmp.eq.s32.totalorder %s17, 1
      %p145 = scmp.ne.s32.totalorder %s140, %s142
      %p146 = scmp.eq.s32.totalorder %s17, 0
      %p147 = por %p145, %p146
      %p148 = scmp.ne.s32.totalorder %s140, %s142
      %p149 = scmp.eq.s32.totalorder %s22, 1
      %p150 = por %p148, %p149
      %p151 = scmp.ne.s32.totalorder %s142, %s143
      %p152 = scmp.eq.s32.totalorder %s22, 0
      %p153 = por %p151, %p152
      %p154 = scmp.ne.s32.totalorder %s142, %s143
      %p155 = scmp.eq.s32.totalorder %s23, 1
      %p156 = por %p154, %p155
      %p158 = scmp.ne.s32.totalorder %s143, %s157
      %p159 = scmp.eq.s32.totalorder %s23, 0
      %p160 = por %p158, %p159
      %s162 = sadd.s32 %s161, 1
      %p165 = scmp.eq.s32.totalorder %s17, 1
      %p166 = scmp.ne.s32.totalorder %s161, %s163
      %p167 = scmp.eq.s32.totalorder %s17, 0
      %p168 = por %p166, %p167
      %p169 = scmp.ne.s32.totalorder %s161, %s163
      %p170 = scmp.eq.s32.totalorder %s22, 1
      %p171 = por %p169, %p170
      %p172 = scmp.ne.s32.totalorder %s163, %s164
      %p173 = scmp.eq.s32.totalorder %s22, 0
      %p174 = por %p172, %p173
      %p175 = scmp.ne.s32.totalorder %s163, %s164
      %p176 = scmp.eq.s32.totalorder %s23, 1
      %p177 = por %p175, %p176
      %p179 = scmp.ne.s32.totalorder %s164, %s178
      %p180 = scmp.eq.s32.totalorder %s23, 0
      %p181 = por %p179, %p180
      %s183 = sadd.s32 %s182, 1
      %p186 = scmp.eq.s32.totalorder %s17, 1
      %p187 = scmp.ne.s32.totalorder %s182, %s184
      %p188 = scmp.eq.s32.totalorder %s17, 0
      %p189 = por %p187, %p188
      %p190 = scmp.ne.s32.totalorder %s182, %s184
      %p191 = scmp.eq.s32.totalorder %s22, 1
      %p192 = por %p190, %p191
      %p193 = scmp.ne.s32.totalorder %s184, %s185
      %p194 = scmp.eq.s32.totalorder %s22, 0
      %p195 = por %p193, %p194
      %p196 = scmp.ne.s32.totalorder %s184, %s185
      %p197 = scmp.eq.s32.totalorder %s23, 1
      %p198 = por %p196, %p197
      %p200 = scmp.ne.s32.totalorder %s185, %s199
      %p201 = scmp.eq.s32.totalorder %s23, 0
      %p202 = por %p200, %p201
      %s203 = ssub.s32 %s17, %s24
      %p204 = scmp.eq.s32.totalorder %s203, 0
      %s206 = sadd.s32 %s205, 1
      %s207 = scalar_select %p204, %s205, %s206
      %p210 = pneg %p204
      %p211 = scmp.eq.s32.totalorder %s17, 1
      %p212 = por %p210, %p211
      %p213 = scmp.ne.s32.totalorder %s205, %s208
      %p214 = scmp.eq.s32.totalorder %s17, 0
      %p215 = por %p213, %p214
      %p216 = scmp.ne.s32.totalorder %s205, %s208
      %p217 = scmp.eq.s32.totalorder %s22, 1
      %p218 = por %p216, %p217
      %p219 = scmp.ne.s32.totalorder %s208, %s209
      %p220 = scmp.eq.s32.totalorder %s22, 0
      %p221 = por %p219, %p220
      %p222 = scmp.ne.s32.totalorder %s208, %s209
      %p223 = scmp.eq.s32.totalorder %s23, 1
      %p224 = por %p222, %p223
      %p226 = scmp.ne.s32.totalorder %s209, %s225
      %p227 = scmp.eq.s32.totalorder %s23, 0
      %p228 = por %p226, %p227
      %p229 = scmp.le.s32.totalorder 1, %s17
      %p230 = scmp.lt.s32.totalorder %s17, 3
      %p231 = pnand %p229, %p230
      %p232 = pneg %p231
      // Predicated region
      $region9: #{vnet_up_block_forward.3} parent=5 // pred_check
        _
      $region10: #{vnet_up_block_forward.3} parent=5 // pred_check_branch
        %234 = sbr.rel (%p231) target = $region12
      $region11: #{vnet_up_block_forward.3} parent=5 // pred_region
        %s235 = ssub.s32 %s17, 1
        // Predicated region
        $region13: #{vnet_up_block_forward.3} parent=11 // pred_check
          %p236 = pneg %p90
        $region14: #{vnet_up_block_forward.3} parent=11 // pred_check_branch
          %238 = sbr.rel (%p236) target = $region16
        $region15: #{vnet_up_block_forward.3} parent=11 // pred_region
          _
        $region16: #{vnet_up_block_forward.3} parent=11 // pred_fallthru
          _
        // Predicated region
        $region17: #{vnet_up_block_forward.3} parent=11 // pred_check
          %p239 = pneg %p111
        $region18: #{vnet_up_block_forward.3} parent=11 // pred_check_branch
          %241 = sbr.rel (%p239) target = $region20
        $region19: #{vnet_up_block_forward.3} parent=11 // pred_region
          _
        $region20: #{vnet_up_block_forward.3} parent=11 // pred_fallthru
          _
        // Predicated region
        $region21: #{vnet_up_block_forward.3} parent=11 // pred_check
          %p242 = pneg %p132
        $region22: #{vnet_up_block_forward.3} parent=11 // pred_check_branch
          %244 = sbr.rel (%p242) target = $region24
        $region23: #{vnet_up_block_forward.3} parent=11 // pred_region
          _
        $region24: #{vnet_up_block_forward.3} parent=11 // pred_fallthru
          _
        // Predicated region
        $region25: #{vnet_up_block_forward.3} parent=11 // pred_check
          %p245 = pneg %p153
        $region26: #{vnet_up_block_forward.3} parent=11 // pred_check_branch
          %247 = sbr.rel (%p245) target = $region28
        $region27: #{vnet_up_block_forward.3} parent=11 // pred_region
          _
        $region28: #{vnet_up_block_forward.3} parent=11 // pred_fallthru
          _
        // Predicated region
        $region29: #{vnet_up_block_forward.3} parent=11 // pred_check
          %p248 = pneg %p174
        $region30: #{vnet_up_block_forward.3} parent=11 // pred_check_branch
          %250 = sbr.rel (%p248) target = $region32
        $region31: #{vnet_up_block_forward.3} parent=11 // pred_region
          _
        $region32: #{vnet_up_block_forward.3} parent=11 // pred_fallthru
          _
        // Predicated region
        $region33: #{vnet_up_block_forward.3} parent=11 // pred_check
          %p251 = pneg %p195
        $region34: #{vnet_up_block_forward.3} parent=11 // pred_check_branch
          %253 = sbr.rel (%p251) target = $region36
        $region35: #{vnet_up_block_forward.3} parent=11 // pred_region
          _
        $region36: #{vnet_up_block_forward.3} parent=11 // pred_fallthru
          _
      $region12: #{vnet_up_block_forward.3} parent=5 // pred_fallthru
        _
      %p254 = scmp.lt.s32.totalorder %s17, 2
      // Predicated region
      $region37: #{vnet_up_block_forward.3} parent=5 // pred_check
        %p255 = pneg %p254
      $region38: #{vnet_up_block_forward.3} parent=5 // pred_check_branch
        %257 = sbr.rel (%p255) target = $region40
      $region39: #{vnet_up_block_forward.3} parent=5 // pred_region
        // Predicated region
        $region41: #{vnet_up_block_forward.3} parent=39 // pred_check
          %p258 = pneg %p37
        $region42: #{vnet_up_block_forward.3} parent=39 // pred_check_branch
          %260 = sbr.rel (%p258) target = $region44
        $region43: #{vnet_up_block_forward.3} parent=39 // pred_region
          %p261 = scmp.lt.s32.totalorder %s17, 1
          %s262 = scalar_select %p261, %s17, 1
          %s263 = smul.addr %s262, 60
          %s264 = smul.addr %s263, 4
          %s265 = scalar_lea.vmem %s0, %s264
        $region44: #{vnet_up_block_forward.3} parent=39 // pred_fallthru
          _
        // Predicated region
        $region45: #{vnet_up_block_forward.3} parent=39 // pred_check
          %p266 = pneg %p63
        $region46: #{vnet_up_block_forward.3} parent=39 // pred_check_branch
          %268 = sbr.rel (%p266) target = $region48
        $region47: #{vnet_up_block_forward.3} parent=39 // pred_region
          %p269 = scmp.lt.s32.totalorder %s17, 1
          %s270 = scalar_select %p269, %s17, 1
          %s271 = smul.addr %s270, 60
          %s272 = smul.addr %s271, 4
          %s273 = scalar_lea.vmem %s1, %s272
        $region48: #{vnet_up_block_forward.3} parent=39 // pred_fallthru
          _
      $region40: #{vnet_up_block_forward.3} parent=5 // pred_fallthru
        _
      %p274 = scmp.le.s32.totalorder 1, %s17
      %p275 = scmp.lt.s32.totalorder %s17, 3
      %p276 = pnand %p274, %p275
      %p277 = pneg %p276
      // Predicated region
      $region49: #{vnet_up_block_forward.3} parent=5 // pred_check
        _
      $region50: #{vnet_up_block_forward.3} parent=5 // pred_check_branch
        %279 = sbr.rel (%p276) target = $region52
      $region51: #{vnet_up_block_forward.3} parent=5 // pred_region
        %s280 = ssub.s32 %s17, 1
        %p281 = scmp.lt.s32.totalorder %s22, 1
        %s282 = scalar_select %p281, %s22, 1
        %s283 = smul.addr %s282, 60
        %s284 = smul.addr %s283, 4
        %s285 = scalar_lea.vmem %s0, %s284
        %p286 = pneg %p43
        %p287 = pneg %p40
        %p288 = scmp.lt.s32.totalorder %s22, 1
        %s289 = scalar_select %p288, %s22, 1
        %s290 = smul.addr %s289, 60
        %s291 = smul.addr %s290, 4
        %s292 = scalar_lea.vmem %s1, %s291
        %p293 = pneg %p69
        %p294 = pneg %p66
        %p295 = pneg %p90
        %p296 = pneg %p87
        %p297 = pneg %p111
        %p298 = pneg %p108
        %p299 = pneg %p132
        %p300 = pneg %p129
        %p301 = pneg %p153
        %p302 = pneg %p150
        %p303 = pneg %p174
        %p304 = pneg %p171
        %p305 = pneg %p195
        %p306 = pneg %p192
        %p307 = pneg %p221
        %p308 = pneg %p218
        %s309 = sand.u32 %s208, 1
        %s310 = scalar_lea.sflag [#allocation5], %s309
        %s311 = sand.u32 %s208, 1
        %s312 = smul.addr %s311, 256
        %s313 = scalar_lea.vmem [#allocation4], %s312
        %p314 = scmp.lt.s32.totalorder %s22, 1
        %s315 = scalar_select %p314, %s22, 1
        %s316 = smul.addr %s315, 60
        %s317 = smul.addr %s316, 4
        %s318 = scalar_lea.vmem %s0, %s317
        %p319 = scmp.lt.s32.totalorder %s22, 1
        %s320 = scalar_select %p319, %s22, 1
        %s321 = smul.addr %s320, 60
        %s322 = smul.addr %s321, 4
        %s323 = scalar_lea.vmem %s1, %s322
        %v325 = vld [vmem:[%s318] sm:$0xf]
        %v326 = vld [vmem:[%s318 + $0x4] sm:$0xf]
        %v327 = vld [vmem:[%s318 + $0x8] sm:$0x3]
        %v328 = vld [vmem:[%s318 + $0xc] sm:$0xf]
        %v329 = vld [vmem:[%s318 + $0x10] sm:$0xf]
        %v330 = vld [vmem:[%s318 + $0x14] sm:$0x3]
        %v331 = vld [vmem:[%s318 + $0x18] sm:$0xf]
        %v332 = vld [vmem:[%s318 + $0x1c] sm:$0xf]
        %v333 = vld [vmem:[%s318 + $0x20] sm:$0x3]
        %v334 = vld [vmem:[%s318 + $0x24] sm:$0xf]
        %v335 = vld [vmem:[%s318 + $0x28] sm:$0xf]
        %v336 = vld [vmem:[%s318 + $0x2c] sm:$0x3]
        %v337 = vld [vmem:[%s318 + $0x30] sm:$0xf]
        %v338 = vld [vmem:[%s318 + $0x34] sm:$0xf]
        %v339 = vld [vmem:[%s318 + $0x38] sm:$0x3]
        %v340 = vld [vmem:[%s318 + $0x3c] sm:$0xf]
        %v341 = vld [vmem:[%s318 + $0x40] sm:$0xf]
        %v342 = vld [vmem:[%s318 + $0x44] sm:$0x3]
        %v343 = vld [vmem:[%s318 + $0x48] sm:$0xf]
        %v344 = vld [vmem:[%s318 + $0x4c] sm:$0xf]
        %v345 = vld [vmem:[%s318 + $0x50] sm:$0x3]
        %v346 = vld [vmem:[%s318 + $0x54] sm:$0xf]
        %v347 = vld [vmem:[%s318 + $0x58] sm:$0xf]
        %v348 = vld [vmem:[%s318 + $0x5c] sm:$0x3]
        %v349 = vld [vmem:[%s318 + $0x60] sm:$0xf]
        %v350 = vld [vmem:[%s318 + $0x64] sm:$0xf]
        %v351 = vld [vmem:[%s318 + $0x68] sm:$0x3]
        %v352 = vld [vmem:[%s318 + $0x6c] sm:$0xf]
        %v353 = vld [vmem:[%s318 + $0x70] sm:$0xf]
        %v354 = vld [vmem:[%s318 + $0x74] sm:$0x3]
        %v355 = vld [vmem:[%s318 + $0x78] sm:$0xf]
        %v356 = vld [vmem:[%s318 + $0x7c] sm:$0xf]
        %v357 = vld [vmem:[%s318 + $0x80] sm:$0x3]
        %v358 = vld [vmem:[%s318 + $0x84] sm:$0xf]
        %v359 = vld [vmem:[%s318 + $0x88] sm:$0xf]
        %v360 = vld [vmem:[%s318 + $0x8c] sm:$0x3]
        %v361 = vld [vmem:[%s318 + $0x90] sm:$0xf]
        %v362 = vld [vmem:[%s318 + $0x94] sm:$0xf]
        %v363 = vld [vmem:[%s318 + $0x98] sm:$0x3]
        %v364 = vld [vmem:[%s318 + $0x9c] sm:$0xf]
        %v365 = vld [vmem:[%s318 + $0xa0] sm:$0xf]
        %v366 = vld [vmem:[%s318 + $0xa4] sm:$0x3]
        %v367 = vld [vmem:[%s318 + $0xa8] sm:$0xf]
        %v368 = vld [vmem:[%s318 + $0xac] sm:$0xf]
        %v369 = vld [vmem:[%s318 + $0xb0] sm:$0x3]
        %v370 = vld [vmem:[%s318 + $0xb4] sm:$0xf]
        %v371 = vld [vmem:[%s318 + $0xb8] sm:$0xf]
        %v372 = vld [vmem:[%s318 + $0xbc] sm:$0x3]
        %v373 = vld [vmem:[%s318 + $0xc0] sm:$0xf]
        %v374 = vld [vmem:[%s318 + $0xc4] sm:$0xf]
        %v375 = vld [vmem:[%s318 + $0xc8] sm:$0x3]
        %v376 = vld [vmem:[%s318 + $0xcc] sm:$0xf]
        %v377 = vld [vmem:[%s318 + $0xd0] sm:$0xf]
        %v378 = vld [vmem:[%s318 + $0xd4] sm:$0x3]
        %v379 = vld [vmem:[%s318 + $0xd8] sm:$0xf]
        %v380 = vld [vmem:[%s318 + $0xdc] sm:$0xf]
        %v381 = vld [vmem:[%s318 + $0xe0] sm:$0x3]
        %v382 = vld [vmem:[%s318 + $0xe4] sm:$0xf]
        %v383 = vld [vmem:[%s318 + $0xe8] sm:$0xf]
        %v384 = vld [vmem:[%s318 + $0xec] sm:$0x3]
        %v385 = vunpack.c.l.bf16 %v325
        %v386 = vunpack.c.l.bf16 %v326
        %v387 = vunpack.c.l.bf16 %v327
        %v388 = vunpack.c.l.bf16 %v328
        %v389 = vunpack.c.l.bf16 %v329
        %v390 = vunpack.c.l.bf16 %v330
        %v391 = vunpack.c.l.bf16 %v331
        %v392 = vunpack.c.l.bf16 %v332
        %v393 = vunpack.c.l.bf16 %v333
        %v394 = vunpack.c.l.bf16 %v334
        %v395 = vunpack.c.l.bf16 %v335
        %v396 = vunpack.c.l.bf16 %v336
        %v397 = vunpack.c.l.bf16 %v337
        %v398 = vunpack.c.l.bf16 %v338
        %v399 = vunpack.c.l.bf16 %v339
        %v400 = vunpack.c.l.bf16 %v340
        %v401 = vunpack.c.l.bf16 %v341
        %v402 = vunpack.c.l.bf16 %v342
        %v403 = vunpack.c.l.bf16 %v343
        %v404 = vunpack.c.l.bf16 %v344
        %v405 = vunpack.c.l.bf16 %v345
        %v406 = vunpack.c.l.bf16 %v346
        %v407 = vunpack.c.l.bf16 %v347
        %v408 = vunpack.c.l.bf16 %v348
        %v409 = vunpack.c.l.bf16 %v349
        %v410 = vunpack.c.l.bf16 %v350
        %v411 = vunpack.c.l.bf16 %v351
        %v412 = vunpack.c.l.bf16 %v352
        %v413 = vunpack.c.l.bf16 %v353
        %v414 = vunpack.c.l.bf16 %v354
        %v415 = vunpack.c.l.bf16 %v355
        %v416 = vunpack.c.l.bf16 %v356
        %v417 = vunpack.c.l.bf16 %v357
        %v418 = vunpack.c.l.bf16 %v358
        %v419 = vunpack.c.l.bf16 %v359
        %v420 = vunpack.c.l.bf16 %v360
        %v421 = vunpack.c.l.bf16 %v361
        %v422 = vunpack.c.l.bf16 %v362
        %v423 = vunpack.c.l.bf16 %v363
        %v424 = vunpack.c.l.bf16 %v364
        %v425 = vunpack.c.l.bf16 %v365
        %v426 = vunpack.c.l.bf16 %v366
        %v427 = vunpack.c.l.bf16 %v367
        %v428 = vunpack.c.l.bf16 %v368
        %v429 = vunpack.c.l.bf16 %v369
        %v430 = vunpack.c.l.bf16 %v370
        %v431 = vunpack.c.l.bf16 %v371
        %v432 = vunpack.c.l.bf16 %v372
        %v433 = vunpack.c.l.bf16 %v373
        %v434 = vunpack.c.l.bf16 %v374
        %v435 = vunpack.c.l.bf16 %v375
        %v436 = vunpack.c.l.bf16 %v376
        %v437 = vunpack.c.l.bf16 %v377
        %v438 = vunpack.c.l.bf16 %v378
        %v439 = vunpack.c.l.bf16 %v379
        %v440 = vunpack.c.l.bf16 %v380
        %v441 = vunpack.c.l.bf16 %v381
        %v442 = vunpack.c.l.bf16 %v382
        %v443 = vunpack.c.l.bf16 %v383
        %v444 = vunpack.c.l.bf16 %v384
        %v445 = vld [vmem:[%s323] sm:$0xf]
        %v446 = vld [vmem:[%s323 + $0x4] sm:$0xf]
        %v447 = vld [vmem:[%s323 + $0x8] sm:$0x3]
        %v448 = vld [vmem:[%s323 + $0xc] sm:$0xf]
        %v449 = vld [vmem:[%s323 + $0x10] sm:$0xf]
        %v450 = vld [vmem:[%s323 + $0x14] sm:$0x3]
        %v451 = vld [vmem:[%s323 + $0x18] sm:$0xf]
        %v452 = vld [vmem:[%s323 + $0x1c] sm:$0xf]
        %v453 = vld [vmem:[%s323 + $0x20] sm:$0x3]
        %v454 = vld [vmem:[%s323 + $0x24] sm:$0xf]
        %v455 = vld [vmem:[%s323 + $0x28] sm:$0xf]
        %v456 = vld [vmem:[%s323 + $0x2c] sm:$0x3]
        %v457 = vld [vmem:[%s323 + $0x30] sm:$0xf]
        %v458 = vld [vmem:[%s323 + $0x34] sm:$0xf]
        %v459 = vld [vmem:[%s323 + $0x38] sm:$0x3]
        %v460 = vld [vmem:[%s323 + $0x3c] sm:$0xf]
        %v461 = vld [vmem:[%s323 + $0x40] sm:$0xf]
        %v462 = vld [vmem:[%s323 + $0x44] sm:$0x3]
        %v463 = vld [vmem:[%s323 + $0x48] sm:$0xf]
        %v464 = vld [vmem:[%s323 + $0x4c] sm:$0xf]
        %v465 = vld [vmem:[%s323 + $0x50] sm:$0x3]
        %v466 = vld [vmem:[%s323 + $0x54] sm:$0xf]
        %v467 = vld [vmem:[%s323 + $0x58] sm:$0xf]
        %v468 = vld [vmem:[%s323 + $0x5c] sm:$0x3]
        %v469 = vld [vmem:[%s323 + $0x60] sm:$0xf]
        %v470 = vld [vmem:[%s323 + $0x64] sm:$0xf]
        %v471 = vld [vmem:[%s323 + $0x68] sm:$0x3]
        %v472 = vld [vmem:[%s323 + $0x6c] sm:$0xf]
        %v473 = vld [vmem:[%s323 + $0x70] sm:$0xf]
        %v474 = vld [vmem:[%s323 + $0x74] sm:$0x3]
        %v475 = vld [vmem:[%s323 + $0x78] sm:$0xf]
        %v476 = vld [vmem:[%s323 + $0x7c] sm:$0xf]
        %v477 = vld [vmem:[%s323 + $0x80] sm:$0x3]
        %v478 = vld [vmem:[%s323 + $0x84] sm:$0xf]
        %v479 = vld [vmem:[%s323 + $0x88] sm:$0xf]
        %v480 = vld [vmem:[%s323 + $0x8c] sm:$0x3]
        %v481 = vld [vmem:[%s323 + $0x90] sm:$0xf]
        %v482 = vld [vmem:[%s323 + $0x94] sm:$0xf]
        %v483 = vld [vmem:[%s323 + $0x98] sm:$0x3]
        %v484 = vld [vmem:[%s323 + $0x9c] sm:$0xf]
        %v485 = vld [vmem:[%s323 + $0xa0] sm:$0xf]
        %v486 = vld [vmem:[%s323 + $0xa4] sm:$0x3]
        %v487 = vld [vmem:[%s323 + $0xa8] sm:$0xf]
        %v488 = vld [vmem:[%s323 + $0xac] sm:$0xf]
        %v489 = vld [vmem:[%s323 + $0xb0] sm:$0x3]
        %v490 = vld [vmem:[%s323 + $0xb4] sm:$0xf]
        %v491 = vld [vmem:[%s323 + $0xb8] sm:$0xf]
        %v492 = vld [vmem:[%s323 + $0xbc] sm:$0x3]
        %v493 = vld [vmem:[%s323 + $0xc0] sm:$0xf]
        %v494 = vld [vmem:[%s323 + $0xc4] sm:$0xf]
        %v495 = vld [vmem:[%s323 + $0xc8] sm:$0x3]
        %v496 = vld [vmem:[%s323 + $0xcc] sm:$0xf]
        %v497 = vld [vmem:[%s323 + $0xd0] sm:$0xf]
        %v498 = vld [vmem:[%s323 + $0xd4] sm:$0x3]
        %v499 = vld [vmem:[%s323 + $0xd8] sm:$0xf]
        %v500 = vld [vmem:[%s323 + $0xdc] sm:$0xf]
        %v501 = vld [vmem:[%s323 + $0xe0] sm:$0x3]
        %v502 = vld [vmem:[%s323 + $0xe4] sm:$0xf]
        %v503 = vld [vmem:[%s323 + $0xe8] sm:$0xf]
        %v504 = vld [vmem:[%s323 + $0xec] sm:$0x3]
        %v505 = vunpack.c.l.bf16 %v445
        %v506 = vunpack.c.l.bf16 %v446
        %v507 = vunpack.c.l.bf16 %v447
        %v508 = vunpack.c.l.bf16 %v448
        %v509 = vunpack.c.l.bf16 %v449
        %v510 = vunpack.c.l.bf16 %v450
        %v511 = vunpack.c.l.bf16 %v451
        %v512 = vunpack.c.l.bf16 %v452
        %v513 = vunpack.c.l.bf16 %v453
        %v514 = vunpack.c.l.bf16 %v454
        %v515 = vunpack.c.l.bf16 %v455
        %v516 = vunpack.c.l.bf16 %v456
        %v517 = vunpack.c.l.bf16 %v457
        %v518 = vunpack.c.l.bf16 %v458
        %v519 = vunpack.c.l.bf16 %v459
        %v520 = vunpack.c.l.bf16 %v460
        %v521 = vunpack.c.l.bf16 %v461
        %v522 = vunpack.c.l.bf16 %v462
        %v523 = vunpack.c.l.bf16 %v463
        %v524 = vunpack.c.l.bf16 %v464
        %v525 = vunpack.c.l.bf16 %v465
        %v526 = vunpack.c.l.bf16 %v466
        %v527 = vunpack.c.l.bf16 %v467
        %v528 = vunpack.c.l.bf16 %v468
        %v529 = vunpack.c.l.bf16 %v469
        %v530 = vunpack.c.l.bf16 %v470
        %v531 = vunpack.c.l.bf16 %v471
        %v532 = vunpack.c.l.bf16 %v472
        %v533 = vunpack.c.l.bf16 %v473
        %v534 = vunpack.c.l.bf16 %v474
        %v535 = vunpack.c.l.bf16 %v475
        %v536 = vunpack.c.l.bf16 %v476
        %v537 = vunpack.c.l.bf16 %v477
        %v538 = vunpack.c.l.bf16 %v478
        %v539 = vunpack.c.l.bf16 %v479
        %v540 = vunpack.c.l.bf16 %v480
        %v541 = vunpack.c.l.bf16 %v481
        %v542 = vunpack.c.l.bf16 %v482
        %v543 = vunpack.c.l.bf16 %v483
        %v544 = vunpack.c.l.bf16 %v484
        %v545 = vunpack.c.l.bf16 %v485
        %v546 = vunpack.c.l.bf16 %v486
        %v547 = vunpack.c.l.bf16 %v487
        %v548 = vunpack.c.l.bf16 %v488
        %v549 = vunpack.c.l.bf16 %v489
        %v550 = vunpack.c.l.bf16 %v490
        %v551 = vunpack.c.l.bf16 %v491
        %v552 = vunpack.c.l.bf16 %v492
        %v553 = vunpack.c.l.bf16 %v493
        %v554 = vunpack.c.l.bf16 %v494
        %v555 = vunpack.c.l.bf16 %v495
        %v556 = vunpack.c.l.bf16 %v496
        %v557 = vunpack.c.l.bf16 %v497
        %v558 = vunpack.c.l.bf16 %v498
        %v559 = vunpack.c.l.bf16 %v499
        %v560 = vunpack.c.l.bf16 %v500
        %v561 = vunpack.c.l.bf16 %v501
        %v562 = vunpack.c.l.bf16 %v502
        %v563 = vunpack.c.l.bf16 %v503
        %v564 = vunpack.c.l.bf16 %v504
        %v565 = vpack.c.bf16 %v386, %v385
        %v566 = vpack.c.bf16 %v389, %v388
        %v567 = vpack.c.bf16 %v392, %v391
        %v568 = vpack.c.bf16 %v395, %v394
        %v569 = vpack.c.bf16 %v398, %v397
        %v570 = vpack.c.bf16 %v401, %v400
        %v571 = vpack.c.bf16 %v404, %v403
        %v572 = vpack.c.bf16 %v407, %v406
        %v573 = vpack.c.bf16 %v410, %v409
        %v574 = vpack.c.bf16 %v413, %v412
        %v575 = vpack.c.bf16 %v416, %v415
        %v576 = vpack.c.bf16 %v419, %v418
        %v577 = vpack.c.bf16 %v422, %v421
        %v578 = vpack.c.bf16 %v425, %v424
        %v579 = vpack.c.bf16 %v428, %v427
        %v580 = vpack.c.bf16 %v431, %v430
        %v581 = vpack.c.bf16 %v434, %v433
        %v582 = vpack.c.bf16 %v437, %v436
        %v583 = vpack.c.bf16 %v440, %v439
        %v584 = vpack.c.bf16 %v443, %v442
        %vm585 = vcmask 261120
        %586 = vst.msk [vmem:[#allocation2] sm:$0xff] %vm585, %v565
        %587 = vst.msk [vmem:[#allocation2 + $0x10] sm:$0xff] %vm585, %v566
        %588 = vst.msk [vmem:[#allocation2 + $0x20] sm:$0xff] %vm585, %v567
        %589 = vst.msk [vmem:[#allocation2 + $0x30] sm:$0xff] %vm585, %v568
        %590 = vst.msk [vmem:[#allocation2 + $0x40] sm:$0xff] %vm585, %v569
        %591 = vst.msk [vmem:[#allocation2 + $0x50] sm:$0xff] %vm585, %v570
        %592 = vst.msk [vmem:[#allocation2 + $0x60] sm:$0xff] %vm585, %v571
        %593 = vst.msk [vmem:[#allocation2 + $0x70] sm:$0xff] %vm585, %v572
        %594 = vst.msk [vmem:[#allocation2 + $0x80] sm:$0xff] %vm585, %v573
        %595 = vst.msk [vmem:[#allocation2 + $0x90] sm:$0xff] %vm585, %v574
        %596 = vst.msk [vmem:[#allocation2 + $0xa0] sm:$0xff] %vm585, %v575
        %597 = vst.msk [vmem:[#allocation2 + $0xb0] sm:$0xff] %vm585, %v576
        %598 = vst.msk [vmem:[#allocation2 + $0xc0] sm:$0xff] %vm585, %v577
        %599 = vst.msk [vmem:[#allocation2 + $0xd0] sm:$0xff] %vm585, %v578
        %600 = vst.msk [vmem:[#allocation2 + $0xe0] sm:$0xff] %vm585, %v579
        %601 = vst.msk [vmem:[#allocation2 + $0xf0] sm:$0xff] %vm585, %v580
        %602 = vst.msk [vmem:[#allocation2 + $0x100] sm:$0xff] %vm585, %v581
        %603 = vst.msk [vmem:[#allocation2 + $0x110] sm:$0xff] %vm585, %v582
        %604 = vst.msk [vmem:[#allocation2 + $0x120] sm:$0xff] %vm585, %v583
        %605 = vst.msk [vmem:[#allocation2 + $0x130] sm:$0xff] %vm585, %v584
        %v606 = vpack.c.bf16 %v387, %v387
        %v607 = vpack.c.bf16 %v390, %v390
        %v608 = vpack.c.bf16 %v393, %v393
        %v609 = vpack.c.bf16 %v396, %v396
        %v610 = vpack.c.bf16 %v399, %v399
        %v611 = vpack.c.bf16 %v402, %v402
        %v612 = vpack.c.bf16 %v405, %v405
        %v613 = vpack.c.bf16 %v408, %v408
        %v614 = vpack.c.bf16 %v411, %v411
        %v615 = vpack.c.bf16 %v414, %v414
        %v616 = vpack.c.bf16 %v417, %v417
        %v617 = vpack.c.bf16 %v420, %v420
        %v618 = vpack.c.bf16 %v423, %v423
        %v619 = vpack.c.bf16 %v426, %v426
        %v620 = vpack.c.bf16 %v429, %v429
        %v621 = vpack.c.bf16 %v432, %v432
        %v622 = vpack.c.bf16 %v435, %v435
        %v623 = vpack.c.bf16 %v438, %v438
        %v624 = vpack.c.bf16 %v441, %v441
        %v625 = vpack.c.bf16 %v444, %v444
        %vm626 = vsmask.f32 7424
        %v628 = vshrl.u32 %v565, 16
        %v630 = vshll.u32 %v565, 16
        %v632 = vrot.slane %v630, 1
        %v633 = vor.u32 %v628, %v632
        %v635 = vshll.u32 %v606, 16
        %v637 = vrot.slane %v635, 1
        %v638 = vsel %vm626, %v633, %v637
        %v640 = vshrl.u32 %v566, 16
        %v642 = vshll.u32 %v566, 16
        %v644 = vrot.slane %v642, 1
        %v645 = vor.u32 %v640, %v644
        %v647 = vshll.u32 %v607, 16
        %v649 = vrot.slane %v647, 1
        %v650 = vsel %vm626, %v645, %v649
        %v652 = vshrl.u32 %v567, 16
        %v654 = vshll.u32 %v567, 16
        %v656 = vrot.slane %v654, 1
        %v657 = vor.u32 %v652, %v656
        %v659 = vshll.u32 %v608, 16
        %v661 = vrot.slane %v659, 1
        %v662 = vsel %vm626, %v657, %v661
        %v664 = vshrl.u32 %v568, 16
        %v666 = vshll.u32 %v568, 16
        %v668 = vrot.slane %v666, 1
        %v669 = vor.u32 %v664, %v668
        %v671 = vshll.u32 %v609, 16
        %v673 = vrot.slane %v671, 1
        %v674 = vsel %vm626, %v669, %v673
        %v676 = vshrl.u32 %v569, 16
        %v678 = vshll.u32 %v569, 16
        %v680 = vrot.slane %v678, 1
        %v681 = vor.u32 %v676, %v680
        %v683 = vshll.u32 %v610, 16
        %v685 = vrot.slane %v683, 1
        %v686 = vsel %vm626, %v681, %v685
        %v688 = vshrl.u32 %v570, 16
        %v690 = vshll.u32 %v570, 16
        %v692 = vrot.slane %v690, 1
        %v693 = vor.u32 %v688, %v692
        %v695 = vshll.u32 %v611, 16
        %v697 = vrot.slane %v695, 1
        %v698 = vsel %vm626, %v693, %v697
        %v700 = vshrl.u32 %v571, 16
        %v702 = vshll.u32 %v571, 16
        %v704 = vrot.slane %v702, 1
        %v705 = vor.u32 %v700, %v704
        %v707 = vshll.u32 %v612, 16
        %v709 = vrot.slane %v707, 1
        %v710 = vsel %vm626, %v705, %v709
        %v712 = vshrl.u32 %v572, 16
        %v714 = vshll.u32 %v572, 16
        %v716 = vrot.slane %v714, 1
        %v717 = vor.u32 %v712, %v716
        %v719 = vshll.u32 %v613, 16
        %v721 = vrot.slane %v719, 1
        %v722 = vsel %vm626, %v717, %v721
        %v724 = vshrl.u32 %v573, 16
        %v726 = vshll.u32 %v573, 16
        %v728 = vrot.slane %v726, 1
        %v729 = vor.u32 %v724, %v728
        %v731 = vshll.u32 %v614, 16
        %v733 = vrot.slane %v731, 1
        %v734 = vsel %vm626, %v729, %v733
        %v736 = vshrl.u32 %v574, 16
        %v738 = vshll.u32 %v574, 16
        %v740 = vrot.slane %v738, 1
        %v741 = vor.u32 %v736, %v740
        %v743 = vshll.u32 %v615, 16
        %v745 = vrot.slane %v743, 1
        %v746 = vsel %vm626, %v741, %v745
        %v748 = vshrl.u32 %v575, 16
        %v750 = vshll.u32 %v575, 16
        %v752 = vrot.slane %v750, 1
        %v753 = vor.u32 %v748, %v752
        %v755 = vshll.u32 %v616, 16
        %v757 = vrot.slane %v755, 1
        %v758 = vsel %vm626, %v753, %v757
        %v760 = vshrl.u32 %v576, 16
        %v762 = vshll.u32 %v576, 16
        %v764 = vrot.slane %v762, 1
        %v765 = vor.u32 %v760, %v764
        %v767 = vshll.u32 %v617, 16
        %v769 = vrot.slane %v767, 1
        %v770 = vsel %vm626, %v765, %v769
        %v772 = vshrl.u32 %v577, 16
        %v774 = vshll.u32 %v577, 16
        %v776 = vrot.slane %v774, 1
        %v777 = vor.u32 %v772, %v776
        %v779 = vshll.u32 %v618, 16
        %v781 = vrot.slane %v779, 1
        %v782 = vsel %vm626, %v777, %v781
        %v784 = vshrl.u32 %v578, 16
        %v786 = vshll.u32 %v578, 16
        %v788 = vrot.slane %v786, 1
        %v789 = vor.u32 %v784, %v788
        %v791 = vshll.u32 %v619, 16
        %v793 = vrot.slane %v791, 1
        %v794 = vsel %vm626, %v789, %v793
        %v796 = vshrl.u32 %v579, 16
        %v798 = vshll.u32 %v579, 16
        %v800 = vrot.slane %v798, 1
        %v801 = vor.u32 %v796, %v800
        %v803 = vshll.u32 %v620, 16
        %v805 = vrot.slane %v803, 1
        %v806 = vsel %vm626, %v801, %v805
        %v808 = vshrl.u32 %v580, 16
        %v810 = vshll.u32 %v580, 16
        %v812 = vrot.slane %v810, 1
        %v813 = vor.u32 %v808, %v812
        %v815 = vshll.u32 %v621, 16
        %v817 = vrot.slane %v815, 1
        %v818 = vsel %vm626, %v813, %v817
        %v820 = vshrl.u32 %v581, 16
        %v822 = vshll.u32 %v581, 16
        %v824 = vrot.slane %v822, 1
        %v825 = vor.u32 %v820, %v824
        %v827 = vshll.u32 %v622, 16
        %v829 = vrot.slane %v827, 1
        %v830 = vsel %vm626, %v825, %v829
        %v832 = vshrl.u32 %v582, 16
        %v834 = vshll.u32 %v582, 16
        %v836 = vrot.slane %v834, 1
        %v837 = vor.u32 %v832, %v836
        %v839 = vshll.u32 %v623, 16
        %v841 = vrot.slane %v839, 1
        %v842 = vsel %vm626, %v837, %v841
        %v844 = vshrl.u32 %v583, 16
        %v846 = vshll.u32 %v583, 16
        %v848 = vrot.slane %v846, 1
        %v849 = vor.u32 %v844, %v848
        %v851 = vshll.u32 %v624, 16
        %v853 = vrot.slane %v851, 1
        %v854 = vsel %vm626, %v849, %v853
        %v856 = vshrl.u32 %v584, 16
        %v858 = vshll.u32 %v584, 16
        %v860 = vrot.slane %v858, 1
        %v861 = vor.u32 %v856, %v860
        %v863 = vshll.u32 %v625, 16
        %v865 = vrot.slane %v863, 1
        %v866 = vsel %vm626, %v861, %v865
        %867 = vrot.lane.b32.xlu0 %v638, 32
        %v868 = vpop.permute.xlu0 %867
        %869 = vrot.lane.b32.xlu0 %v650, 32
        %v870 = vpop.permute.xlu0 %869
        %871 = vrot.lane.b32.xlu0 %v662, 32
        %v872 = vpop.permute.xlu0 %871
        %873 = vrot.lane.b32.xlu0 %v674, 32
        %v874 = vpop.permute.xlu0 %873
        %875 = vrot.lane.b32.xlu0 %v686, 32
        %v876 = vpop.permute.xlu0 %875
        %877 = vrot.lane.b32.xlu0 %v698, 32
        %v878 = vpop.permute.xlu0 %877
        %879 = vrot.lane.b32.xlu0 %v710, 32
        %v880 = vpop.permute.xlu0 %879
        %881 = vrot.lane.b32.xlu0 %v722, 32
        %v882 = vpop.permute.xlu0 %881
        %883 = vrot.lane.b32.xlu0 %v734, 32
        %v884 = vpop.permute.xlu0 %883
        %885 = vrot.lane.b32.xlu0 %v746, 32
        %v886 = vpop.permute.xlu0 %885
        %887 = vrot.lane.b32.xlu0 %v758, 32
        %v888 = vpop.permute.xlu0 %887
        %889 = vrot.lane.b32.xlu0 %v770, 32
        %v890 = vpop.permute.xlu0 %889
        %891 = vrot.lane.b32.xlu0 %v782, 32
        %v892 = vpop.permute.xlu0 %891
        %893 = vrot.lane.b32.xlu0 %v794, 32
        %v894 = vpop.permute.xlu0 %893
        %895 = vrot.lane.b32.xlu0 %v806, 32
        %v896 = vpop.permute.xlu0 %895
        %897 = vrot.lane.b32.xlu0 %v818, 32
        %v898 = vpop.permute.xlu0 %897
        %899 = vrot.lane.b32.xlu0 %v830, 32
        %v900 = vpop.permute.xlu0 %899
        %901 = vrot.lane.b32.xlu0 %v842, 32
        %v902 = vpop.permute.xlu0 %901
        %903 = vrot.lane.b32.xlu0 %v854, 32
        %v904 = vpop.permute.xlu0 %903
        %905 = vrot.lane.b32.xlu0 %v866, 32
        %v906 = vpop.permute.xlu0 %905
        %vm927 = vcmask 523520
        %928 = vst.msk [vmem:[#allocation2] sm:$0xff] %vm927, %v868
        %929 = vst.msk [vmem:[#allocation2 + $0x10] sm:$0xff] %vm927, %v870
        %930 = vst.msk [vmem:[#allocation2 + $0x20] sm:$0xff] %vm927, %v872
        %931 = vst.msk [vmem:[#allocation2 + $0x30] sm:$0xff] %vm927, %v874
        %932 = vst.msk [vmem:[#allocation2 + $0x40] sm:$0xff] %vm927, %v876
        %933 = vst.msk [vmem:[#allocation2 + $0x50] sm:$0xff] %vm927, %v878
        %934 = vst.msk [vmem:[#allocation2 + $0x60] sm:$0xff] %vm927, %v880
        %935 = vst.msk [vmem:[#allocation2 + $0x70] sm:$0xff] %vm927, %v882
        %936 = vst.msk [vmem:[#allocation2 + $0x80] sm:$0xff] %vm927, %v884
        %937 = vst.msk [vmem:[#allocation2 + $0x90] sm:$0xff] %vm927, %v886
        %938 = vst.msk [vmem:[#allocation2 + $0xa0] sm:$0xff] %vm927, %v888
        %939 = vst.msk [vmem:[#allocation2 + $0xb0] sm:$0xff] %vm927, %v890
        %940 = vst.msk [vmem:[#allocation2 + $0xc0] sm:$0xff] %vm927, %v892
        %941 = vst.msk [vmem:[#allocation2 + $0xd0] sm:$0xff] %vm927, %v894
        %942 = vst.msk [vmem:[#allocation2 + $0xe0] sm:$0xff] %vm927, %v896
        %943 = vst.msk [vmem:[#allocation2 + $0xf0] sm:$0xff] %vm927, %v898
        %944 = vst.msk [vmem:[#allocation2 + $0x100] sm:$0xff] %vm927, %v900
        %945 = vst.msk [vmem:[#allocation2 + $0x110] sm:$0xff] %vm927, %v902
        %946 = vst.msk [vmem:[#allocation2 + $0x120] sm:$0xff] %vm927, %v904
        %947 = vst.msk [vmem:[#allocation2 + $0x130] sm:$0xff] %vm927, %v906
        %vm988 = vcmask 1046528
        %v989 = vrot.slane %v565, 1
        %v990 = vrot.slane %v606, 1
        %v991 = vsel %vm988, %v989, %v990
        %v992 = vrot.slane %v566, 1
        %v993 = vrot.slane %v607, 1
        %v994 = vsel %vm988, %v992, %v993
        %v995 = vrot.slane %v567, 1
        %v996 = vrot.slane %v608, 1
        %v997 = vsel %vm988, %v995, %v996
        %v998 = vrot.slane %v568, 1
        %v999 = vrot.slane %v609, 1
        %v1000 = vsel %vm988, %v998, %v999
        %v1001 = vrot.slane %v569, 1
        %v1002 = vrot.slane %v610, 1
        %v1003 = vsel %vm988, %v1001, %v1002
        %v1004 = vrot.slane %v570, 1
        %v1005 = vrot.slane %v611, 1
        %v1006 = vsel %vm988, %v1004, %v1005
        %v1007 = vrot.slane %v571, 1
        %v1008 = vrot.slane %v612, 1
        %v1009 = vsel %vm988, %v1007, %v1008
        %v1010 = vrot.slane %v572, 1
        %v1011 = vrot.slane %v613, 1
        %v1012 = vsel %vm988, %v1010, %v1011
        %v1013 = vrot.slane %v573, 1
        %v1014 = vrot.slane %v614, 1
        %v1015 = vsel %vm988, %v1013, %v1014
        %v1016 = vrot.slane %v574, 1
        %v1017 = vrot.slane %v615, 1
        %v1018 = vsel %vm988, %v1016, %v1017
        %v1019 = vrot.slane %v575, 1
        %v1020 = vrot.slane %v616, 1
        %v1021 = vsel %vm988, %v1019, %v1020
        %v1022 = vrot.slane %v576, 1
        %v1023 = vrot.slane %v617, 1
        %v1024 = vsel %vm988, %v1022, %v1023
        %v1025 = vrot.slane %v577, 1
        %v1026 = vrot.slane %v618, 1
        %v1027 = vsel %vm988, %v1025, %v1026
        %v1028 = vrot.slane %v578, 1
        %v1029 = vrot.slane %v619, 1
        %v1030 = vsel %vm988, %v1028, %v1029
        %v1031 = vrot.slane %v579, 1
        %v1032 = vrot.slane %v620, 1
        %v1033 = vsel %vm988, %v1031, %v1032
        %v1034 = vrot.slane %v580, 1
        %v1035 = vrot.slane %v621, 1
        %v1036 = vsel %vm988, %v1034, %v1035
        %v1037 = vrot.slane %v581, 1
        %v1038 = vrot.slane %v622, 1
        %v1039 = vsel %vm988, %v1037, %v1038
        %v1040 = vrot.slane %v582, 1
        %v1041 = vrot.slane %v623, 1
        %v1042 = vsel %vm988, %v1040, %v1041
        %v1043 = vrot.slane %v583, 1
        %v1044 = vrot.slane %v624, 1
        %v1045 = vsel %vm988, %v1043, %v1044
        %v1046 = vrot.slane %v584, 1
        %v1047 = vrot.slane %v625, 1
        %v1048 = vsel %vm988, %v1046, %v1047
        %1049 = vrot.lane.b32.xlu0 %v991, 64
        %v1050 = vpop.permute.xlu0 %1049
        %1051 = vrot.lane.b32.xlu0 %v994, 64
        %v1052 = vpop.permute.xlu0 %1051
        %1053 = vrot.lane.b32.xlu0 %v997, 64
        %v1054 = vpop.permute.xlu0 %1053
        %1055 = vrot.lane.b32.xlu0 %v1000, 64
        %v1056 = vpop.permute.xlu0 %1055
        %1057 = vrot.lane.b32.xlu0 %v1003, 64
        %v1058 = vpop.permute.xlu0 %1057
        %1059 = vrot.lane.b32.xlu0 %v1006, 64
        %v1060 = vpop.permute.xlu0 %1059
        %1061 = vrot.lane.b32.xlu0 %v1009, 64
        %v1062 = vpop.permute.xlu0 %1061
        %1063 = vrot.lane.b32.xlu0 %v1012, 64
        %v1064 = vpop.permute.xlu0 %1063
        %1065 = vrot.lane.b32.xlu0 %v1015, 64
        %v1066 = vpop.permute.xlu0 %1065
        %1067 = vrot.lane.b32.xlu0 %v1018, 64
        %v1068 = vpop.permute.xlu0 %1067
        %1069 = vrot.lane.b32.xlu0 %v1021, 64
        %v1070 = vpop.permute.xlu0 %1069
        %1071 = vrot.lane.b32.xlu0 %v1024, 64
        %v1072 = vpop.permute.xlu0 %1071
        %1073 = vrot.lane.b32.xlu0 %v1027, 64
        %v1074 = vpop.permute.xlu0 %1073
        %1075 = vrot.lane.b32.xlu0 %v1030, 64
        %v1076 = vpop.permute.xlu0 %1075
        %1077 = vrot.lane.b32.xlu0 %v1033, 64
        %v1078 = vpop.permute.xlu0 %1077
        %1079 = vrot.lane.b32.xlu0 %v1036, 64
        %v1080 = vpop.permute.xlu0 %1079
        %1081 = vrot.lane.b32.xlu0 %v1039, 64
        %v1082 = vpop.permute.xlu0 %1081
        %1083 = vrot.lane.b32.xlu0 %v1042, 64
        %v1084 = vpop.permute.xlu0 %1083
        %1085 = vrot.lane.b32.xlu0 %v1045, 64
        %v1086 = vpop.permute.xlu0 %1085
        %1087 = vrot.lane.b32.xlu0 %v1048, 64
        %v1088 = vpop.permute.xlu0 %1087
        %vm1109 = vcmask 785920
        %1110 = vst.msk [vmem:[#allocation2] sm:$0xff] %vm1109, %v1050
        %1111 = vst.msk [vmem:[#allocation2 + $0x10] sm:$0xff] %vm1109, %v1052
        %1112 = vst.msk [vmem:[#allocation2 + $0x20] sm:$0xff] %vm1109, %v1054
        %1113 = vst.msk [vmem:[#allocation2 + $0x30] sm:$0xff] %vm1109, %v1056
        %1114 = vst.msk [vmem:[#allocation2 + $0x40] sm:$0xff] %vm1109, %v1058
        %1115 = vst.msk [vmem:[#allocation2 + $0x50] sm:$0xff] %vm1109, %v1060
        %1116 = vst.msk [vmem:[#allocation2 + $0x60] sm:$0xff] %vm1109, %v1062
        %1117 = vst.msk [vmem:[#allocation2 + $0x70] sm:$0xff] %vm1109, %v1064
        %1118 = vst.msk [vmem:[#allocation2 + $0x80] sm:$0xff] %vm1109, %v1066
        %1119 = vst.msk [vmem:[#allocation2 + $0x90] sm:$0xff] %vm1109, %v1068
        %1120 = vst.msk [vmem:[#allocation2 + $0xa0] sm:$0xff] %vm1109, %v1070
        %1121 = vst.msk [vmem:[#allocation2 + $0xb0] sm:$0xff] %vm1109, %v1072
        %1122 = vst.msk [vmem:[#allocation2 + $0xc0] sm:$0xff] %vm1109, %v1074
        %1123 = vst.msk [vmem:[#allocation2 + $0xd0] sm:$0xff] %vm1109, %v1076
        %1124 = vst.msk [vmem:[#allocation2 + $0xe0] sm:$0xff] %vm1109, %v1078
        %1125 = vst.msk [vmem:[#allocation2 + $0xf0] sm:$0xff] %vm1109, %v1080
        %1126 = vst.msk [vmem:[#allocation2 + $0x100] sm:$0xff] %vm1109, %v1082
        %1127 = vst.msk [vmem:[#allocation2 + $0x110] sm:$0xff] %vm1109, %v1084
        %1128 = vst.msk [vmem:[#allocation2 + $0x120] sm:$0xff] %vm1109, %v1086
        %1129 = vst.msk [vmem:[#allocation2 + $0x130] sm:$0xff] %vm1109, %v1088
        %vm1130 = vsmask.f32 6400
        %v1131 = vrot.slane %v628, 1
        %v1132 = vrot.slane %v630, 2
        %v1133 = vor.u32 %v1131, %v1132
        %v1134 = vshrl.u32 %v606, 16
        %v1136 = vrot.slane %v1134, 1
        %v1137 = vrot.slane %v635, 2
        %v1138 = vor.u32 %v1136, %v1137
        %v1139 = vsel %vm1130, %v1133, %v1138
        %v1140 = vrot.slane %v640, 1
        %v1141 = vrot.slane %v642, 2
        %v1142 = vor.u32 %v1140, %v1141
        %v1143 = vshrl.u32 %v607, 16
        %v1145 = vrot.slane %v1143, 1
        %v1146 = vrot.slane %v647, 2
        %v1147 = vor.u32 %v1145, %v1146
        %v1148 = vsel %vm1130, %v1142, %v1147
        %v1149 = vrot.slane %v652, 1
        %v1150 = vrot.slane %v654, 2
        %v1151 = vor.u32 %v1149, %v1150
        %v1152 = vshrl.u32 %v608, 16
        %v1154 = vrot.slane %v1152, 1
        %v1155 = vrot.slane %v659, 2
        %v1156 = vor.u32 %v1154, %v1155
        %v1157 = vsel %vm1130, %v1151, %v1156
        %v1158 = vrot.slane %v664, 1
        %v1159 = vrot.slane %v666, 2
        %v1160 = vor.u32 %v1158, %v1159
        %v1161 = vshrl.u32 %v609, 16
        %v1163 = vrot.slane %v1161, 1
        %v1164 = vrot.slane %v671, 2
        %v1165 = vor.u32 %v1163, %v1164
        %v1166 = vsel %vm1130, %v1160, %v1165
        %v1167 = vrot.slane %v676, 1
        %v1168 = vrot.slane %v678, 2
        %v1169 = vor.u32 %v1167, %v1168
        %v1170 = vshrl.u32 %v610, 16
        %v1172 = vrot.slane %v1170, 1
        %v1173 = vrot.slane %v683, 2
        %v1174 = vor.u32 %v1172, %v1173
        %v1175 = vsel %vm1130, %v1169, %v1174
        %v1176 = vrot.slane %v688, 1
        %v1177 = vrot.slane %v690, 2
        %v1178 = vor.u32 %v1176, %v1177
        %v1179 = vshrl.u32 %v611, 16
        %v1181 = vrot.slane %v1179, 1
        %v1182 = vrot.slane %v695, 2
        %v1183 = vor.u32 %v1181, %v1182
        %v1184 = vsel %vm1130, %v1178, %v1183
        %v1185 = vrot.slane %v700, 1
        %v1186 = vrot.slane %v702, 2
        %v1187 = vor.u32 %v1185, %v1186
        %v1188 = vshrl.u32 %v612, 16
        %v1190 = vrot.slane %v1188, 1
        %v1191 = vrot.slane %v707, 2
        %v1192 = vor.u32 %v1190, %v1191
        %v1193 = vsel %vm1130, %v1187, %v1192
        %v1194 = vrot.slane %v712, 1
        %v1195 = vrot.slane %v714, 2
        %v1196 = vor.u32 %v1194, %v1195
        %v1197 = vshrl.u32 %v613, 16
        %v1199 = vrot.slane %v1197, 1
        %v1200 = vrot.slane %v719, 2
        %v1201 = vor.u32 %v1199, %v1200
        %v1202 = vsel %vm1130, %v1196, %v1201
        %v1203 = vrot.slane %v724, 1
        %v1204 = vrot.slane %v726, 2
        %v1205 = vor.u32 %v1203, %v1204
        %v1206 = vshrl.u32 %v614, 16
        %v1208 = vrot.slane %v1206, 1
        %v1209 = vrot.slane %v731, 2
        %v1210 = vor.u32 %v1208, %v1209
        %v1211 = vsel %vm1130, %v1205, %v1210
        %v1212 = vrot.slane %v736, 1
        %v1213 = vrot.slane %v738, 2
        %v1214 = vor.u32 %v1212, %v1213
        %v1215 = vshrl.u32 %v615, 16
        %v1217 = vrot.slane %v1215, 1
        %v1218 = vrot.slane %v743, 2
        %v1219 = vor.u32 %v1217, %v1218
        %v1220 = vsel %vm1130, %v1214, %v1219
        %v1221 = vrot.slane %v748, 1
        %v1222 = vrot.slane %v750, 2
        %v1223 = vor.u32 %v1221, %v1222
        %v1224 = vshrl.u32 %v616, 16
        %v1226 = vrot.slane %v1224, 1
        %v1227 = vrot.slane %v755, 2
        %v1228 = vor.u32 %v1226, %v1227
        %v1229 = vsel %vm1130, %v1223, %v1228
        %v1230 = vrot.slane %v760, 1
        %v1231 = vrot.slane %v762, 2
        %v1232 = vor.u32 %v1230, %v1231
        %v1233 = vshrl.u32 %v617, 16
        %v1235 = vrot.slane %v1233, 1
        %v1236 = vrot.slane %v767, 2
        %v1237 = vor.u32 %v1235, %v1236
        %v1238 = vsel %vm1130, %v1232, %v1237
        %v1239 = vrot.slane %v772, 1
        %v1240 = vrot.slane %v774, 2
        %v1241 = vor.u32 %v1239, %v1240
        %v1242 = vshrl.u32 %v618, 16
        %v1244 = vrot.slane %v1242, 1
        %v1245 = vrot.slane %v779, 2
        %v1246 = vor.u32 %v1244, %v1245
        %v1247 = vsel %vm1130, %v1241, %v1246
        %v1248 = vrot.slane %v784, 1
        %v1249 = vrot.slane %v786, 2
        %v1250 = vor.u32 %v1248, %v1249
        %v1251 = vshrl.u32 %v619, 16
        %v1253 = vrot.slane %v1251, 1
        %v1254 = vrot.slane %v791, 2
        %v1255 = vor.u32 %v1253, %v1254
        %v1256 = vsel %vm1130, %v1250, %v1255
        %v1257 = vrot.slane %v796, 1
        %v1258 = vrot.slane %v798, 2
        %v1259 = vor.u32 %v1257, %v1258
        %v1260 = vshrl.u32 %v620, 16
        %v1262 = vrot.slane %v1260, 1
        %v1263 = vrot.slane %v803, 2
        %v1264 = vor.u32 %v1262, %v1263
        %v1265 = vsel %vm1130, %v1259, %v1264
        %v1266 = vrot.slane %v808, 1
        %v1267 = vrot.slane %v810, 2
        %v1268 = vor.u32 %v1266, %v1267
        %v1269 = vshrl.u32 %v621, 16
        %v1271 = vrot.slane %v1269, 1
        %v1272 = vrot.slane %v815, 2
        %v1273 = vor.u32 %v1271, %v1272
        %v1274 = vsel %vm1130, %v1268, %v1273
        %v1275 = vrot.slane %v820, 1
        %v1276 = vrot.slane %v822, 2
        %v1277 = vor.u32 %v1275, %v1276
        %v1278 = vshrl.u32 %v622, 16
        %v1280 = vrot.slane %v1278, 1
        %v1281 = vrot.slane %v827, 2
        %v1282 = vor.u32 %v1280, %v1281
        %v1283 = vsel %vm1130, %v1277, %v1282
        %v1284 = vrot.slane %v832, 1
        %v1285 = vrot.slane %v834, 2
        %v1286 = vor.u32 %v1284, %v1285
        %v1287 = vshrl.u32 %v623, 16
        %v1289 = vrot.slane %v1287, 1
        %v1290 = vrot.slane %v839, 2
        %v1291 = vor.u32 %v1289, %v1290
        %v1292 = vsel %vm1130, %v1286, %v1291
        %v1293 = vrot.slane %v844, 1
        %v1294 = vrot.slane %v846, 2
        %v1295 = vor.u32 %v1293, %v1294
        %v1296 = vshrl.u32 %v624, 16
        %v1298 = vrot.slane %v1296, 1
        %v1299 = vrot.slane %v851, 2
        %v1300 = vor.u32 %v1298, %v1299
        %v1301 = vsel %vm1130, %v1295, %v1300
        %v1302 = vrot.slane %v856, 1
        %v1303 = vrot.slane %v858, 2
        %v1304 = vor.u32 %v1302, %v1303
        %v1305 = vshrl.u32 %v625, 16
        %v1307 = vrot.slane %v1305, 1
        %v1308 = vrot.slane %v863, 2
        %v1309 = vor.u32 %v1307, %v1308
        %v1310 = vsel %vm1130, %v1304, %v1309
        %1311 = vrot.lane.b32.xlu0 %v1139, 96
        %v1312 = vpop.permute.xlu0 %1311
        %1313 = vrot.lane.b32.xlu0 %v1148, 96
        %v1314 = vpop.permute.xlu0 %1313
        %1315 = vrot.lane.b32.xlu0 %v1157, 96
        %v1316 = vpop.permute.xlu0 %1315
        %1317 = vrot.lane.b32.xlu0 %v1166, 96
        %v1318 = vpop.permute.xlu0 %1317
        %1319 = vrot.lane.b32.xlu0 %v1175, 96
        %v1320 = vpop.permute.xlu0 %1319
        %1321 = vrot.lane.b32.xlu0 %v1184, 96
        %v1322 = vpop.permute.xlu0 %1321
        %1323 = vrot.lane.b32.xlu0 %v1193, 96
        %v1324 = vpop.permute.xlu0 %1323
        %1325 = vrot.lane.b32.xlu0 %v1202, 96
        %v1326 = vpop.permute.xlu0 %1325
        %1327 = vrot.lane.b32.xlu0 %v1211, 96
        %v1328 = vpop.permute.xlu0 %1327
        %1329 = vrot.lane.b32.xlu0 %v1220, 96
        %v1330 = vpop.permute.xlu0 %1329
        %1331 = vrot.lane.b32.xlu0 %v1229, 96
        %v1332 = vpop.permute.xlu0 %1331
        %1333 = vrot.lane.b32.xlu0 %v1238, 96
        %v1334 = vpop.permute.xlu0 %1333
        %1335 = vrot.lane.b32.xlu0 %v1247, 96
        %v1336 = vpop.permute.xlu0 %1335
        %1337 = vrot.lane.b32.xlu0 %v1256, 96
        %v1338 = vpop.permute.xlu0 %1337
        %1339 = vrot.lane.b32.xlu0 %v1265, 96
        %v1340 = vpop.permute.xlu0 %1339
        %1341 = vrot.lane.b32.xlu0 %v1274, 96
        %v1342 = vpop.permute.xlu0 %1341
        %1343 = vrot.lane.b32.xlu0 %v1283, 96
        %v1344 = vpop.permute.xlu0 %1343
        %1345 = vrot.lane.b32.xlu0 %v1292, 96
        %v1346 = vpop.permute.xlu0 %1345
        %1347 = vrot.lane.b32.xlu0 %v1301, 96
        %v1348 = vpop.permute.xlu0 %1347
        %1349 = vrot.lane.b32.xlu0 %v1310, 96
        %v1350 = vpop.permute.xlu0 %1349
        %vm1371 = vcmask 1048320
        %1372 = vst.msk [vmem:[#allocation2] sm:$0xff] %vm1371, %v1312
        %1373 = vst.msk [vmem:[#allocation2 + $0x10] sm:$0xff] %vm1371, %v1314
        %1374 = vst.msk [vmem:[#allocation2 + $0x20] sm:$0xff] %vm1371, %v1316
        %1375 = vst.msk [vmem:[#allocation2 + $0x30] sm:$0xff] %vm1371, %v1318
        %1376 = vst.msk [vmem:[#allocation2 + $0x40] sm:$0xff] %vm1371, %v1320
        %1377 = vst.msk [vmem:[#allocation2 + $0x50] sm:$0xff] %vm1371, %v1322
        %1378 = vst.msk [vmem:[#allocation2 + $0x60] sm:$0xff] %vm1371, %v1324
        %1379 = vst.msk [vmem:[#allocation2 + $0x70] sm:$0xff] %vm1371, %v1326
        %1380 = vst.msk [vmem:[#allocation2 + $0x80] sm:$0xff] %vm1371, %v1328
        %1381 = vst.msk [vmem:[#allocation2 + $0x90] sm:$0xff] %vm1371, %v1330
        %1382 = vst.msk [vmem:[#allocation2 + $0xa0] sm:$0xff] %vm1371, %v1332
        %1383 = vst.msk [vmem:[#allocation2 + $0xb0] sm:$0xff] %vm1371, %v1334
        %1384 = vst.msk [vmem:[#allocation2 + $0xc0] sm:$0xff] %vm1371, %v1336
        %1385 = vst.msk [vmem:[#allocation2 + $0xd0] sm:$0xff] %vm1371, %v1338
        %1386 = vst.msk [vmem:[#allocation2 + $0xe0] sm:$0xff] %vm1371, %v1340
        %1387 = vst.msk [vmem:[#allocation2 + $0xf0] sm:$0xff] %vm1371, %v1342
        %1388 = vst.msk [vmem:[#allocation2 + $0x100] sm:$0xff] %vm1371, %v1344
        %1389 = vst.msk [vmem:[#allocation2 + $0x110] sm:$0xff] %vm1371, %v1346
        %1390 = vst.msk [vmem:[#allocation2 + $0x120] sm:$0xff] %vm1371, %v1348
        %1391 = vst.msk [vmem:[#allocation2 + $0x130] sm:$0xff] %vm1371, %v1350
        %vm1392 = vcmask 1045504
        %v1393 = vrot.slane %v565, 2
        %v1394 = vrot.slane %v606, 2
        %v1395 = vsel %vm1392, %v1393, %v1394
        %v1396 = vrot.slane %v566, 2
        %v1397 = vrot.slane %v607, 2
        %v1398 = vsel %vm1392, %v1396, %v1397
        %v1399 = vrot.slane %v567, 2
        %v1400 = vrot.slane %v608, 2
        %v1401 = vsel %vm1392, %v1399, %v1400
        %v1402 = vrot.slane %v568, 2
        %v1403 = vrot.slane %v609, 2
        %v1404 = vsel %vm1392, %v1402, %v1403
        %v1405 = vrot.slane %v569, 2
        %v1406 = vrot.slane %v610, 2
        %v1407 = vsel %vm1392, %v1405, %v1406
        %v1408 = vrot.slane %v570, 2
        %v1409 = vrot.slane %v611, 2
        %v1410 = vsel %vm1392, %v1408, %v1409
        %v1411 = vrot.slane %v571, 2
        %v1412 = vrot.slane %v612, 2
        %v1413 = vsel %vm1392, %v1411, %v1412
        %v1414 = vrot.slane %v572, 2
        %v1415 = vrot.slane %v613, 2
        %v1416 = vsel %vm1392, %v1414, %v1415
        %v1417 = vrot.slane %v573, 2
        %v1418 = vrot.slane %v614, 2
        %v1419 = vsel %vm1392, %v1417, %v1418
        %v1420 = vrot.slane %v574, 2
        %v1421 = vrot.slane %v615, 2
        %v1422 = vsel %vm1392, %v1420, %v1421
        %v1423 = vrot.slane %v575, 2
        %v1424 = vrot.slane %v616, 2
        %v1425 = vsel %vm1392, %v1423, %v1424
        %v1426 = vrot.slane %v576, 2
        %v1427 = vrot.slane %v617, 2
        %v1428 = vsel %vm1392, %v1426, %v1427
        %v1429 = vrot.slane %v577, 2
        %v1430 = vrot.slane %v618, 2
        %v1431 = vsel %vm1392, %v1429, %v1430
        %v1432 = vrot.slane %v578, 2
        %v1433 = vrot.slane %v619, 2
        %v1434 = vsel %vm1392, %v1432, %v1433
        %v1435 = vrot.slane %v579, 2
        %v1436 = vrot.slane %v620, 2
        %v1437 = vsel %vm1392, %v1435, %v1436
        %v1438 = vrot.slane %v580, 2
        %v1439 = vrot.slane %v621, 2
        %v1440 = vsel %vm1392, %v1438, %v1439
        %v1441 = vrot.slane %v581, 2
        %v1442 = vrot.slane %v622, 2
        %v1443 = vsel %vm1392, %v1441, %v1442
        %v1444 = vrot.slane %v582, 2
        %v1445 = vrot.slane %v623, 2
        %v1446 = vsel %vm1392, %v1444, %v1445
        %v1447 = vrot.slane %v583, 2
        %v1448 = vrot.slane %v624, 2
        %v1449 = vsel %vm1392, %v1447, %v1448
        %v1450 = vrot.slane %v584, 2
        %v1451 = vrot.slane %v625, 2
        %v1452 = vsel %vm1392, %v1450, %v1451
        %1473 = vst.msk [vmem:[#allocation2 + $0x8] sm:$0xff] %vm585, %v1395
        %1474 = vst.msk [vmem:[#allocation2 + $0x18] sm:$0xff] %vm585, %v1398
        %1475 = vst.msk [vmem:[#allocation2 + $0x28] sm:$0xff] %vm585, %v1401
        %1476 = vst.msk [vmem:[#allocation2 + $0x38] sm:$0xff] %vm585, %v1404
        %1477 = vst.msk [vmem:[#allocation2 + $0x48] sm:$0xff] %vm585, %v1407
        %1478 = vst.msk [vmem:[#allocation2 + $0x58] sm:$0xff] %vm585, %v1410
        %1479 = vst.msk [vmem:[#allocation2 + $0x68] sm:$0xff] %vm585, %v1413
        %1480 = vst.msk [vmem:[#allocation2 + $0x78] sm:$0xff] %vm585, %v1416
        %1481 = vst.msk [vmem:[#allocation2 + $0x88] sm:$0xff] %vm585, %v1419
        %1482 = vst.msk [vmem:[#allocation2 + $0x98] sm:$0xff] %vm585, %v1422
        %1483 = vst.msk [vmem:[#allocation2 + $0xa8] sm:$0xff] %vm585, %v1425
        %1484 = vst.msk [vmem:[#allocation2 + $0xb8] sm:$0xff] %vm585, %v1428
        %1485 = vst.msk [vmem:[#allocation2 + $0xc8] sm:$0xff] %vm585, %v1431
        %1486 = vst.msk [vmem:[#allocation2 + $0xd8] sm:$0xff] %vm585, %v1434
        %1487 = vst.msk [vmem:[#allocation2 + $0xe8] sm:$0xff] %vm585, %v1437
        %1488 = vst.msk [vmem:[#allocation2 + $0xf8] sm:$0xff] %vm585, %v1440
        %1489 = vst.msk [vmem:[#allocation2 + $0x108] sm:$0xff] %vm585, %v1443
        %1490 = vst.msk [vmem:[#allocation2 + $0x118] sm:$0xff] %vm585, %v1446
        %1491 = vst.msk [vmem:[#allocation2 + $0x128] sm:$0xff] %vm585, %v1449
        %1492 = vst.msk [vmem:[#allocation2 + $0x138] sm:$0xff] %vm585, %v1452
        %v1493 = vpack.c.bf16 %v506, %v505
        %v1494 = vpack.c.bf16 %v509, %v508
        %v1495 = vpack.c.bf16 %v512, %v511
        %v1496 = vpack.c.bf16 %v515, %v514
        %v1497 = vpack.c.bf16 %v518, %v517
        %v1498 = vpack.c.bf16 %v521, %v520
        %v1499 = vpack.c.bf16 %v524, %v523
        %v1500 = vpack.c.bf16 %v527, %v526
        %v1501 = vpack.c.bf16 %v530, %v529
        %v1502 = vpack.c.bf16 %v533, %v532
        %v1503 = vpack.c.bf16 %v536, %v535
        %v1504 = vpack.c.bf16 %v539, %v538
        %v1505 = vpack.c.bf16 %v542, %v541
        %v1506 = vpack.c.bf16 %v545, %v544
        %v1507 = vpack.c.bf16 %v548, %v547
        %v1508 = vpack.c.bf16 %v551, %v550
        %v1509 = vpack.c.bf16 %v554, %v553
        %v1510 = vpack.c.bf16 %v557, %v556
        %v1511 = vpack.c.bf16 %v560, %v559
        %v1512 = vpack.c.bf16 %v563, %v562
        %1533 = vrot.lane.b32.xlu0 %v1493, 32
        %v1534 = vpop.permute.xlu0 %1533
        %1535 = vrot.lane.b32.xlu0 %v1494, 32
        %v1536 = vpop.permute.xlu0 %1535
        %1537 = vrot.lane.b32.xlu0 %v1495, 32
        %v1538 = vpop.permute.xlu0 %1537
        %1539 = vrot.lane.b32.xlu0 %v1496, 32
        %v1540 = vpop.permute.xlu0 %1539
        %1541 = vrot.lane.b32.xlu0 %v1497, 32
        %v1542 = vpop.permute.xlu0 %1541
        %1543 = vrot.lane.b32.xlu0 %v1498, 32
        %v1544 = vpop.permute.xlu0 %1543
        %1545 = vrot.lane.b32.xlu0 %v1499, 32
        %v1546 = vpop.permute.xlu0 %1545
        %1547 = vrot.lane.b32.xlu0 %v1500, 32
        %v1548 = vpop.permute.xlu0 %1547
        %1549 = vrot.lane.b32.xlu0 %v1501, 32
        %v1550 = vpop.permute.xlu0 %1549
        %1551 = vrot.lane.b32.xlu0 %v1502, 32
        %v1552 = vpop.permute.xlu0 %1551
        %1553 = vrot.lane.b32.xlu0 %v1503, 32
        %v1554 = vpop.permute.xlu0 %1553
        %1555 = vrot.lane.b32.xlu0 %v1504, 32
        %v1556 = vpop.permute.xlu0 %1555
        %1557 = vrot.lane.b32.xlu0 %v1505, 32
        %v1558 = vpop.permute.xlu0 %1557
        %1559 = vrot.lane.b32.xlu0 %v1506, 32
        %v1560 = vpop.permute.xlu0 %1559
        %1561 = vrot.lane.b32.xlu0 %v1507, 32
        %v1562 = vpop.permute.xlu0 %1561
        %1563 = vrot.lane.b32.xlu0 %v1508, 32
        %v1564 = vpop.permute.xlu0 %1563
        %1565 = vrot.lane.b32.xlu0 %v1509, 32
        %v1566 = vpop.permute.xlu0 %1565
        %1567 = vrot.lane.b32.xlu0 %v1510, 32
        %v1568 = vpop.permute.xlu0 %1567
        %1569 = vrot.lane.b32.xlu0 %v1511, 32
        %v1570 = vpop.permute.xlu0 %1569
        %1571 = vrot.lane.b32.xlu0 %v1512, 32
        %v1572 = vpop.permute.xlu0 %1571
        %vm1593 = vcmask 392448
        %1594 = vst.msk [vmem:[#allocation2 + $0x8] sm:$0xff] %vm1593, %v1534
        %1595 = vst.msk [vmem:[#allocation2 + $0x18] sm:$0xff] %vm1593, %v1536
        %1596 = vst.msk [vmem:[#allocation2 + $0x28] sm:$0xff] %vm1593, %v1538
        %1597 = vst.msk [vmem:[#allocation2 + $0x38] sm:$0xff] %vm1593, %v1540
        %1598 = vst.msk [vmem:[#allocation2 + $0x48] sm:$0xff] %vm1593, %v1542
        %1599 = vst.msk [vmem:[#allocation2 + $0x58] sm:$0xff] %vm1593, %v1544
        %1600 = vst.msk [vmem:[#allocation2 + $0x68] sm:$0xff] %vm1593, %v1546
        %1601 = vst.msk [vmem:[#allocation2 + $0x78] sm:$0xff] %vm1593, %v1548
        %1602 = vst.msk [vmem:[#allocation2 + $0x88] sm:$0xff] %vm1593, %v1550
        %1603 = vst.msk [vmem:[#allocation2 + $0x98] sm:$0xff] %vm1593, %v1552
        %1604 = vst.msk [vmem:[#allocation2 + $0xa8] sm:$0xff] %vm1593, %v1554
        %1605 = vst.msk [vmem:[#allocation2 + $0xb8] sm:$0xff] %vm1593, %v1556
        %1606 = vst.msk [vmem:[#allocation2 + $0xc8] sm:$0xff] %vm1593, %v1558
        %1607 = vst.msk [vmem:[#allocation2 + $0xd8] sm:$0xff] %vm1593, %v1560
        %1608 = vst.msk [vmem:[#allocation2 + $0xe8] sm:$0xff] %vm1593, %v1562
        %1609 = vst.msk [vmem:[#allocation2 + $0xf8] sm:$0xff] %vm1593, %v1564
        %1610 = vst.msk [vmem:[#allocation2 + $0x108] sm:$0xff] %vm1593, %v1566
        %1611 = vst.msk [vmem:[#allocation2 + $0x118] sm:$0xff] %vm1593, %v1568
        %1612 = vst.msk [vmem:[#allocation2 + $0x128] sm:$0xff] %vm1593, %v1570
        %1613 = vst.msk [vmem:[#allocation2 + $0x138] sm:$0xff] %vm1593, %v1572
        %v1614 = vpack.c.bf16 %v507, %v507
        %v1615 = vpack.c.bf16 %v510, %v510
        %v1616 = vpack.c.bf16 %v513, %v513
        %v1617 = vpack.c.bf16 %v516, %v516
        %v1618 = vpack.c.bf16 %v519, %v519
        %v1619 = vpack.c.bf16 %v522, %v522
        %v1620 = vpack.c.bf16 %v525, %v525
        %v1621 = vpack.c.bf16 %v528, %v528
        %v1622 = vpack.c.bf16 %v531, %v531
        %v1623 = vpack.c.bf16 %v534, %v534
        %v1624 = vpack.c.bf16 %v537, %v537
        %v1625 = vpack.c.bf16 %v540, %v540
        %v1626 = vpack.c.bf16 %v543, %v543
        %v1627 = vpack.c.bf16 %v546, %v546
        %v1628 = vpack.c.bf16 %v549, %v549
        %v1629 = vpack.c.bf16 %v552, %v552
        %v1630 = vpack.c.bf16 %v555, %v555
        %v1631 = vpack.c.bf16 %v558, %v558
        %v1632 = vpack.c.bf16 %v561, %v561
        %v1633 = vpack.c.bf16 %v564, %v564
        %v1635 = vshrl.u32 %v1493, 16
        %v1637 = vshll.u32 %v1493, 16
        %v1639 = vrot.slane %v1637, 1
        %v1640 = vor.u32 %v1635, %v1639
        %v1642 = vshll.u32 %v1614, 16
        %v1644 = vrot.slane %v1642, 1
        %v1645 = vsel %vm626, %v1640, %v1644
        %v1647 = vshrl.u32 %v1494, 16
        %v1649 = vshll.u32 %v1494, 16
        %v1651 = vrot.slane %v1649, 1
        %v1652 = vor.u32 %v1647, %v1651
        %v1654 = vshll.u32 %v1615, 16
        %v1656 = vrot.slane %v1654, 1
        %v1657 = vsel %vm626, %v1652, %v1656
        %v1659 = vshrl.u32 %v1495, 16
        %v1661 = vshll.u32 %v1495, 16
        %v1663 = vrot.slane %v1661, 1
        %v1664 = vor.u32 %v1659, %v1663
        %v1666 = vshll.u32 %v1616, 16
        %v1668 = vrot.slane %v1666, 1
        %v1669 = vsel %vm626, %v1664, %v1668
        %v1671 = vshrl.u32 %v1496, 16
        %v1673 = vshll.u32 %v1496, 16
        %v1675 = vrot.slane %v1673, 1
        %v1676 = vor.u32 %v1671, %v1675
        %v1678 = vshll.u32 %v1617, 16
        %v1680 = vrot.slane %v1678, 1
        %v1681 = vsel %vm626, %v1676, %v1680
        %v1683 = vshrl.u32 %v1497, 16
        %v1685 = vshll.u32 %v1497, 16
        %v1687 = vrot.slane %v1685, 1
        %v1688 = vor.u32 %v1683, %v1687
        %v1690 = vshll.u32 %v1618, 16
        %v1692 = vrot.slane %v1690, 1
        %v1693 = vsel %vm626, %v1688, %v1692
        %v1695 = vshrl.u32 %v1498, 16
        %v1697 = vshll.u32 %v1498, 16
        %v1699 = vrot.slane %v1697, 1
        %v1700 = vor.u32 %v1695, %v1699
        %v1702 = vshll.u32 %v1619, 16
        %v1704 = vrot.slane %v1702, 1
        %v1705 = vsel %vm626, %v1700, %v1704
        %v1707 = vshrl.u32 %v1499, 16
        %v1709 = vshll.u32 %v1499, 16
        %v1711 = vrot.slane %v1709, 1
        %v1712 = vor.u32 %v1707, %v1711
        %v1714 = vshll.u32 %v1620, 16
        %v1716 = vrot.slane %v1714, 1
        %v1717 = vsel %vm626, %v1712, %v1716
        %v1719 = vshrl.u32 %v1500, 16
        %v1721 = vshll.u32 %v1500, 16
        %v1723 = vrot.slane %v1721, 1
        %v1724 = vor.u32 %v1719, %v1723
        %v1726 = vshll.u32 %v1621, 16
        %v1728 = vrot.slane %v1726, 1
        %v1729 = vsel %vm626, %v1724, %v1728
        %v1731 = vshrl.u32 %v1501, 16
        %v1733 = vshll.u32 %v1501, 16
        %v1735 = vrot.slane %v1733, 1
        %v1736 = vor.u32 %v1731, %v1735
        %v1738 = vshll.u32 %v1622, 16
        %v1740 = vrot.slane %v1738, 1
        %v1741 = vsel %vm626, %v1736, %v1740
        %v1743 = vshrl.u32 %v1502, 16
        %v1745 = vshll.u32 %v1502, 16
        %v1747 = vrot.slane %v1745, 1
        %v1748 = vor.u32 %v1743, %v1747
        %v1750 = vshll.u32 %v1623, 16
        %v1752 = vrot.slane %v1750, 1
        %v1753 = vsel %vm626, %v1748, %v1752
        %v1755 = vshrl.u32 %v1503, 16
        %v1757 = vshll.u32 %v1503, 16
        %v1759 = vrot.slane %v1757, 1
        %v1760 = vor.u32 %v1755, %v1759
        %v1762 = vshll.u32 %v1624, 16
        %v1764 = vrot.slane %v1762, 1
        %v1765 = vsel %vm626, %v1760, %v1764
        %v1767 = vshrl.u32 %v1504, 16
        %v1769 = vshll.u32 %v1504, 16
        %v1771 = vrot.slane %v1769, 1
        %v1772 = vor.u32 %v1767, %v1771
        %v1774 = vshll.u32 %v1625, 16
        %v1776 = vrot.slane %v1774, 1
        %v1777 = vsel %vm626, %v1772, %v1776
        %v1779 = vshrl.u32 %v1505, 16
        %v1781 = vshll.u32 %v1505, 16
        %v1783 = vrot.slane %v1781, 1
        %v1784 = vor.u32 %v1779, %v1783
        %v1786 = vshll.u32 %v1626, 16
        %v1788 = vrot.slane %v1786, 1
        %v1789 = vsel %vm626, %v1784, %v1788
        %v1791 = vshrl.u32 %v1506, 16
        %v1793 = vshll.u32 %v1506, 16
        %v1795 = vrot.slane %v1793, 1
        %v1796 = vor.u32 %v1791, %v1795
        %v1798 = vshll.u32 %v1627, 16
        %v1800 = vrot.slane %v1798, 1
        %v1801 = vsel %vm626, %v1796, %v1800
        %v1803 = vshrl.u32 %v1507, 16
        %v1805 = vshll.u32 %v1507, 16
        %v1807 = vrot.slane %v1805, 1
        %v1808 = vor.u32 %v1803, %v1807
        %v1810 = vshll.u32 %v1628, 16
        %v1812 = vrot.slane %v1810, 1
        %v1813 = vsel %vm626, %v1808, %v1812
        %v1815 = vshrl.u32 %v1508, 16
        %v1817 = vshll.u32 %v1508, 16
        %v1819 = vrot.slane %v1817, 1
        %v1820 = vor.u32 %v1815, %v1819
        %v1822 = vshll.u32 %v1629, 16
        %v1824 = vrot.slane %v1822, 1
        %v1825 = vsel %vm626, %v1820, %v1824
        %v1827 = vshrl.u32 %v1509, 16
        %v1829 = vshll.u32 %v1509, 16
        %v1831 = vrot.slane %v1829, 1
        %v1832 = vor.u32 %v1827, %v1831
        %v1834 = vshll.u32 %v1630, 16
        %v1836 = vrot.slane %v1834, 1
        %v1837 = vsel %vm626, %v1832, %v1836
        %v1839 = vshrl.u32 %v1510, 16
        %v1841 = vshll.u32 %v1510, 16
        %v1843 = vrot.slane %v1841, 1
        %v1844 = vor.u32 %v1839, %v1843
        %v1846 = vshll.u32 %v1631, 16
        %v1848 = vrot.slane %v1846, 1
        %v1849 = vsel %vm626, %v1844, %v1848
        %v1851 = vshrl.u32 %v1511, 16
        %v1853 = vshll.u32 %v1511, 16
        %v1855 = vrot.slane %v1853, 1
        %v1856 = vor.u32 %v1851, %v1855
        %v1858 = vshll.u32 %v1632, 16
        %v1860 = vrot.slane %v1858, 1
        %v1861 = vsel %vm626, %v1856, %v1860
        %v1863 = vshrl.u32 %v1512, 16
        %v1865 = vshll.u32 %v1512, 16
        %v1867 = vrot.slane %v1865, 1
        %v1868 = vor.u32 %v1863, %v1867
        %v1870 = vshll.u32 %v1633, 16
        %v1872 = vrot.slane %v1870, 1
        %v1873 = vsel %vm626, %v1868, %v1872
        %1874 = vrot.lane.b32.xlu0 %v1645, 48
        %v1875 = vpop.permute.xlu0 %1874
        %1876 = vrot.lane.b32.xlu0 %v1657, 48
        %v1877 = vpop.permute.xlu0 %1876
        %1878 = vrot.lane.b32.xlu0 %v1669, 48
        %v1879 = vpop.permute.xlu0 %1878
        %1880 = vrot.lane.b32.xlu0 %v1681, 48
        %v1881 = vpop.permute.xlu0 %1880
        %1882 = vrot.lane.b32.xlu0 %v1693, 48
        %v1883 = vpop.permute.xlu0 %1882
        %1884 = vrot.lane.b32.xlu0 %v1705, 48
        %v1885 = vpop.permute.xlu0 %1884
        %1886 = vrot.lane.b32.xlu0 %v1717, 48
        %v1887 = vpop.permute.xlu0 %1886
        %1888 = vrot.lane.b32.xlu0 %v1729, 48
        %v1889 = vpop.permute.xlu0 %1888
        %1890 = vrot.lane.b32.xlu0 %v1741, 48
        %v1891 = vpop.permute.xlu0 %1890
        %1892 = vrot.lane.b32.xlu0 %v1753, 48
        %v1893 = vpop.permute.xlu0 %1892
        %1894 = vrot.lane.b32.xlu0 %v1765, 48
        %v1895 = vpop.permute.xlu0 %1894
        %1896 = vrot.lane.b32.xlu0 %v1777, 48
        %v1897 = vpop.permute.xlu0 %1896
        %1898 = vrot.lane.b32.xlu0 %v1789, 48
        %v1899 = vpop.permute.xlu0 %1898
        %1900 = vrot.lane.b32.xlu0 %v1801, 48
        %v1901 = vpop.permute.xlu0 %1900
        %1902 = vrot.lane.b32.xlu0 %v1813, 48
        %v1903 = vpop.permute.xlu0 %1902
        %1904 = vrot.lane.b32.xlu0 %v1825, 48
        %v1905 = vpop.permute.xlu0 %1904
        %1906 = vrot.lane.b32.xlu0 %v1837, 48
        %v1907 = vpop.permute.xlu0 %1906
        %1908 = vrot.lane.b32.xlu0 %v1849, 48
        %v1909 = vpop.permute.xlu0 %1908
        %1910 = vrot.lane.b32.xlu0 %v1861, 48
        %v1911 = vpop.permute.xlu0 %1910
        %1912 = vrot.lane.b32.xlu0 %v1873, 48
        %v1913 = vpop.permute.xlu0 %1912
        %vm1934 = vcmask 523648
        %1935 = vst.msk [vmem:[#allocation2 + $0x8] sm:$0xff] %vm1934, %v1875
        %1936 = vst.msk [vmem:[#allocation2 + $0x18] sm:$0xff] %vm1934, %v1877
        %1937 = vst.msk [vmem:[#allocation2 + $0x28] sm:$0xff] %vm1934, %v1879
        %1938 = vst.msk [vmem:[#allocation2 + $0x38] sm:$0xff] %vm1934, %v1881
        %1939 = vst.msk [vmem:[#allocation2 + $0x48] sm:$0xff] %vm1934, %v1883
        %1940 = vst.msk [vmem:[#allocation2 + $0x58] sm:$0xff] %vm1934, %v1885
        %1941 = vst.msk [vmem:[#allocation2 + $0x68] sm:$0xff] %vm1934, %v1887
        %1942 = vst.msk [vmem:[#allocation2 + $0x78] sm:$0xff] %vm1934, %v1889
        %1943 = vst.msk [vmem:[#allocation2 + $0x88] sm:$0xff] %vm1934, %v1891
        %1944 = vst.msk [vmem:[#allocation2 + $0x98] sm:$0xff] %vm1934, %v1893
        %1945 = vst.msk [vmem:[#allocation2 + $0xa8] sm:$0xff] %vm1934, %v1895
        %1946 = vst.msk [vmem:[#allocation2 + $0xb8] sm:$0xff] %vm1934, %v1897
        %1947 = vst.msk [vmem:[#allocation2 + $0xc8] sm:$0xff] %vm1934, %v1899
        %1948 = vst.msk [vmem:[#allocation2 + $0xd8] sm:$0xff] %vm1934, %v1901
        %1949 = vst.msk [vmem:[#allocation2 + $0xe8] sm:$0xff] %vm1934, %v1903
        %1950 = vst.msk [vmem:[#allocation2 + $0xf8] sm:$0xff] %vm1934, %v1905
        %1951 = vst.msk [vmem:[#allocation2 + $0x108] sm:$0xff] %vm1934, %v1907
        %1952 = vst.msk [vmem:[#allocation2 + $0x118] sm:$0xff] %vm1934, %v1909
        %1953 = vst.msk [vmem:[#allocation2 + $0x128] sm:$0xff] %vm1934, %v1911
        %1954 = vst.msk [vmem:[#allocation2 + $0x138] sm:$0xff] %vm1934, %v1913
        %v1975 = vrot.slane %v1493, 1
        %v1976 = vrot.slane %v1614, 1
        %v1977 = vsel %vm988, %v1975, %v1976
        %v1978 = vrot.slane %v1494, 1
        %v1979 = vrot.slane %v1615, 1
        %v1980 = vsel %vm988, %v1978, %v1979
        %v1981 = vrot.slane %v1495, 1
        %v1982 = vrot.slane %v1616, 1
        %v1983 = vsel %vm988, %v1981, %v1982
        %v1984 = vrot.slane %v1496, 1
        %v1985 = vrot.slane %v1617, 1
        %v1986 = vsel %vm988, %v1984, %v1985
        %v1987 = vrot.slane %v1497, 1
        %v1988 = vrot.slane %v1618, 1
        %v1989 = vsel %vm988, %v1987, %v1988
        %v1990 = vrot.slane %v1498, 1
        %v1991 = vrot.slane %v1619, 1
        %v1992 = vsel %vm988, %v1990, %v1991
        %v1993 = vrot.slane %v1499, 1
        %v1994 = vrot.slane %v1620, 1
        %v1995 = vsel %vm988, %v1993, %v1994
        %v1996 = vrot.slane %v1500, 1
        %v1997 = vrot.slane %v1621, 1
        %v1998 = vsel %vm988, %v1996, %v1997
        %v1999 = vrot.slane %v1501, 1
        %v2000 = vrot.slane %v1622, 1
        %v2001 = vsel %vm988, %v1999, %v2000
        %v2002 = vrot.slane %v1502, 1
        %v2003 = vrot.slane %v1623, 1
        %v2004 = vsel %vm988, %v2002, %v2003
        %v2005 = vrot.slane %v1503, 1
        %v2006 = vrot.slane %v1624, 1
        %v2007 = vsel %vm988, %v2005, %v2006
        %v2008 = vrot.slane %v1504, 1
        %v2009 = vrot.slane %v1625, 1
        %v2010 = vsel %vm988, %v2008, %v2009
        %v2011 = vrot.slane %v1505, 1
        %v2012 = vrot.slane %v1626, 1
        %v2013 = vsel %vm988, %v2011, %v2012
        %v2014 = vrot.slane %v1506, 1
        %v2015 = vrot.slane %v1627, 1
        %v2016 = vsel %vm988, %v2014, %v2015
        %v2017 = vrot.slane %v1507, 1
        %v2018 = vrot.slane %v1628, 1
        %v2019 = vsel %vm988, %v2017, %v2018
        %v2020 = vrot.slane %v1508, 1
        %v2021 = vrot.slane %v1629, 1
        %v2022 = vsel %vm988, %v2020, %v2021
        %v2023 = vrot.slane %v1509, 1
        %v2024 = vrot.slane %v1630, 1
        %v2025 = vsel %vm988, %v2023, %v2024
        %v2026 = vrot.slane %v1510, 1
        %v2027 = vrot.slane %v1631, 1
        %v2028 = vsel %vm988, %v2026, %v2027
        %v2029 = vrot.slane %v1511, 1
        %v2030 = vrot.slane %v1632, 1
        %v2031 = vsel %vm988, %v2029, %v2030
        %v2032 = vrot.slane %v1512, 1
        %v2033 = vrot.slane %v1633, 1
        %v2034 = vsel %vm988, %v2032, %v2033
        %2035 = vrot.lane.b32.xlu0 %v1977, 64
        %v2036 = vpop.permute.xlu0 %2035
        %2037 = vrot.lane.b32.xlu0 %v1980, 64
        %v2038 = vpop.permute.xlu0 %2037
        %2039 = vrot.lane.b32.xlu0 %v1983, 64
        %v2040 = vpop.permute.xlu0 %2039
        %2041 = vrot.lane.b32.xlu0 %v1986, 64
        %v2042 = vpop.permute.xlu0 %2041
        %2043 = vrot.lane.b32.xlu0 %v1989, 64
        %v2044 = vpop.permute.xlu0 %2043
        %2045 = vrot.lane.b32.xlu0 %v1992, 64
        %v2046 = vpop.permute.xlu0 %2045
        %2047 = vrot.lane.b32.xlu0 %v1995, 64
        %v2048 = vpop.permute.xlu0 %2047
        %2049 = vrot.lane.b32.xlu0 %v1998, 64
        %v2050 = vpop.permute.xlu0 %2049
        %2051 = vrot.lane.b32.xlu0 %v2001, 64
        %v2052 = vpop.permute.xlu0 %2051
        %2053 = vrot.lane.b32.xlu0 %v2004, 64
        %v2054 = vpop.permute.xlu0 %2053
        %2055 = vrot.lane.b32.xlu0 %v2007, 64
        %v2056 = vpop.permute.xlu0 %2055
        %2057 = vrot.lane.b32.xlu0 %v2010, 64
        %v2058 = vpop.permute.xlu0 %2057
        %2059 = vrot.lane.b32.xlu0 %v2013, 64
        %v2060 = vpop.permute.xlu0 %2059
        %2061 = vrot.lane.b32.xlu0 %v2016, 64
        %v2062 = vpop.permute.xlu0 %2061
        %2063 = vrot.lane.b32.xlu0 %v2019, 64
        %v2064 = vpop.permute.xlu0 %2063
        %2065 = vrot.lane.b32.xlu0 %v2022, 64
        %v2066 = vpop.permute.xlu0 %2065
        %2067 = vrot.lane.b32.xlu0 %v2025, 64
        %v2068 = vpop.permute.xlu0 %2067
        %2069 = vrot.lane.b32.xlu0 %v2028, 64
        %v2070 = vpop.permute.xlu0 %2069
        %2071 = vrot.lane.b32.xlu0 %v2031, 64
        %v2072 = vpop.permute.xlu0 %2071
        %2073 = vrot.lane.b32.xlu0 %v2034, 64
        %v2074 = vpop.permute.xlu0 %2073
        %vm2095 = vcmask 654848
        %2096 = vst.msk [vmem:[#allocation2 + $0x8] sm:$0xff] %vm2095, %v2036
        %2097 = vst.msk [vmem:[#allocation2 + $0x18] sm:$0xff] %vm2095, %v2038
        %2098 = vst.msk [vmem:[#allocation2 + $0x28] sm:$0xff] %vm2095, %v2040
        %2099 = vst.msk [vmem:[#allocation2 + $0x38] sm:$0xff] %vm2095, %v2042
        %2100 = vst.msk [vmem:[#allocation2 + $0x48] sm:$0xff] %vm2095, %v2044
        %2101 = vst.msk [vmem:[#allocation2 + $0x58] sm:$0xff] %vm2095, %v2046
        %2102 = vst.msk [vmem:[#allocation2 + $0x68] sm:$0xff] %vm2095, %v2048
        %2103 = vst.msk [vmem:[#allocation2 + $0x78] sm:$0xff] %vm2095, %v2050
        %2104 = vst.msk [vmem:[#allocation2 + $0x88] sm:$0xff] %vm2095, %v2052
        %2105 = vst.msk [vmem:[#allocation2 + $0x98] sm:$0xff] %vm2095, %v2054
        %2106 = vst.msk [vmem:[#allocation2 + $0xa8] sm:$0xff] %vm2095, %v2056
        %2107 = vst.msk [vmem:[#allocation2 + $0xb8] sm:$0xff] %vm2095, %v2058
        %2108 = vst.msk [vmem:[#allocation2 + $0xc8] sm:$0xff] %vm2095, %v2060
        %2109 = vst.msk [vmem:[#allocation2 + $0xd8] sm:$0xff] %vm2095, %v2062
        %2110 = vst.msk [vmem:[#allocation2 + $0xe8] sm:$0xff] %vm2095, %v2064
        %2111 = vst.msk [vmem:[#allocation2 + $0xf8] sm:$0xff] %vm2095, %v2066
        %2112 = vst.msk [vmem:[#allocation2 + $0x108] sm:$0xff] %vm2095, %v2068
        %2113 = vst.msk [vmem:[#allocation2 + $0x118] sm:$0xff] %vm2095, %v2070
        %2114 = vst.msk [vmem:[#allocation2 + $0x128] sm:$0xff] %vm2095, %v2072
        %2115 = vst.msk [vmem:[#allocation2 + $0x138] sm:$0xff] %vm2095, %v2074
        %v2116 = vrot.slane %v1635, 1
        %v2117 = vrot.slane %v1637, 2
        %v2118 = vor.u32 %v2116, %v2117
        %v2119 = vshrl.u32 %v1614, 16
        %v2121 = vrot.slane %v2119, 1
        %v2122 = vrot.slane %v1642, 2
        %v2123 = vor.u32 %v2121, %v2122
        %v2124 = vsel %vm1130, %v2118, %v2123
        %v2125 = vrot.slane %v1647, 1
        %v2126 = vrot.slane %v1649, 2
        %v2127 = vor.u32 %v2125, %v2126
        %v2128 = vshrl.u32 %v1615, 16
        %v2130 = vrot.slane %v2128, 1
        %v2131 = vrot.slane %v1654, 2
        %v2132 = vor.u32 %v2130, %v2131
        %v2133 = vsel %vm1130, %v2127, %v2132
        %v2134 = vrot.slane %v1659, 1
        %v2135 = vrot.slane %v1661, 2
        %v2136 = vor.u32 %v2134, %v2135
        %v2137 = vshrl.u32 %v1616, 16
        %v2139 = vrot.slane %v2137, 1
        %v2140 = vrot.slane %v1666, 2
        %v2141 = vor.u32 %v2139, %v2140
        %v2142 = vsel %vm1130, %v2136, %v2141
        %v2143 = vrot.slane %v1671, 1
        %v2144 = vrot.slane %v1673, 2
        %v2145 = vor.u32 %v2143, %v2144
        %v2146 = vshrl.u32 %v1617, 16
        %v2148 = vrot.slane %v2146, 1
        %v2149 = vrot.slane %v1678, 2
        %v2150 = vor.u32 %v2148, %v2149
        %v2151 = vsel %vm1130, %v2145, %v2150
        %v2152 = vrot.slane %v1683, 1
        %v2153 = vrot.slane %v1685, 2
        %v2154 = vor.u32 %v2152, %v2153
        %v2155 = vshrl.u32 %v1618, 16
        %v2157 = vrot.slane %v2155, 1
        %v2158 = vrot.slane %v1690, 2
        %v2159 = vor.u32 %v2157, %v2158
        %v2160 = vsel %vm1130, %v2154, %v2159
        %v2161 = vrot.slane %v1695, 1
        %v2162 = vrot.slane %v1697, 2
        %v2163 = vor.u32 %v2161, %v2162
        %v2164 = vshrl.u32 %v1619, 16
        %v2166 = vrot.slane %v2164, 1
        %v2167 = vrot.slane %v1702, 2
        %v2168 = vor.u32 %v2166, %v2167
        %v2169 = vsel %vm1130, %v2163, %v2168
        %v2170 = vrot.slane %v1707, 1
        %v2171 = vrot.slane %v1709, 2
        %v2172 = vor.u32 %v2170, %v2171
        %v2173 = vshrl.u32 %v1620, 16
        %v2175 = vrot.slane %v2173, 1
        %v2176 = vrot.slane %v1714, 2
        %v2177 = vor.u32 %v2175, %v2176
        %v2178 = vsel %vm1130, %v2172, %v2177
        %v2179 = vrot.slane %v1719, 1
        %v2180 = vrot.slane %v1721, 2
        %v2181 = vor.u32 %v2179, %v2180
        %v2182 = vshrl.u32 %v1621, 16
        %v2184 = vrot.slane %v2182, 1
        %v2185 = vrot.slane %v1726, 2
        %v2186 = vor.u32 %v2184, %v2185
        %v2187 = vsel %vm1130, %v2181, %v2186
        %v2188 = vrot.slane %v1731, 1
        %v2189 = vrot.slane %v1733, 2
        %v2190 = vor.u32 %v2188, %v2189
        %v2191 = vshrl.u32 %v1622, 16
        %v2193 = vrot.slane %v2191, 1
        %v2194 = vrot.slane %v1738, 2
        %v2195 = vor.u32 %v2193, %v2194
        %v2196 = vsel %vm1130, %v2190, %v2195
        %v2197 = vrot.slane %v1743, 1
        %v2198 = vrot.slane %v1745, 2
        %v2199 = vor.u32 %v2197, %v2198
        %v2200 = vshrl.u32 %v1623, 16
        %v2202 = vrot.slane %v2200, 1
        %v2203 = vrot.slane %v1750, 2
        %v2204 = vor.u32 %v2202, %v2203
        %v2205 = vsel %vm1130, %v2199, %v2204
        %v2206 = vrot.slane %v1755, 1
        %v2207 = vrot.slane %v1757, 2
        %v2208 = vor.u32 %v2206, %v2207
        %v2209 = vshrl.u32 %v1624, 16
        %v2211 = vrot.slane %v2209, 1
        %v2212 = vrot.slane %v1762, 2
        %v2213 = vor.u32 %v2211, %v2212
        %v2214 = vsel %vm1130, %v2208, %v2213
        %v2215 = vrot.slane %v1767, 1
        %v2216 = vrot.slane %v1769, 2
        %v2217 = vor.u32 %v2215, %v2216
        %v2218 = vshrl.u32 %v1625, 16
        %v2220 = vrot.slane %v2218, 1
        %v2221 = vrot.slane %v1774, 2
        %v2222 = vor.u32 %v2220, %v2221
        %v2223 = vsel %vm1130, %v2217, %v2222
        %v2224 = vrot.slane %v1779, 1
        %v2225 = vrot.slane %v1781, 2
        %v2226 = vor.u32 %v2224, %v2225
        %v2227 = vshrl.u32 %v1626, 16
        %v2229 = vrot.slane %v2227, 1
        %v2230 = vrot.slane %v1786, 2
        %v2231 = vor.u32 %v2229, %v2230
        %v2232 = vsel %vm1130, %v2226, %v2231
        %v2233 = vrot.slane %v1791, 1
        %v2234 = vrot.slane %v1793, 2
        %v2235 = vor.u32 %v2233, %v2234
        %v2236 = vshrl.u32 %v1627, 16
        %v2238 = vrot.slane %v2236, 1
        %v2239 = vrot.slane %v1798, 2
        %v2240 = vor.u32 %v2238, %v2239
        %v2241 = vsel %vm1130, %v2235, %v2240
        %v2242 = vrot.slane %v1803, 1
        %v2243 = vrot.slane %v1805, 2
        %v2244 = vor.u32 %v2242, %v2243
        %v2245 = vshrl.u32 %v1628, 16
        %v2247 = vrot.slane %v2245, 1
        %v2248 = vrot.slane %v1810, 2
        %v2249 = vor.u32 %v2247, %v2248
        %v2250 = vsel %vm1130, %v2244, %v2249
        %v2251 = vrot.slane %v1815, 1
        %v2252 = vrot.slane %v1817, 2
        %v2253 = vor.u32 %v2251, %v2252
        %v2254 = vshrl.u32 %v1629, 16
        %v2256 = vrot.slane %v2254, 1
        %v2257 = vrot.slane %v1822, 2
        %v2258 = vor.u32 %v2256, %v2257
        %v2259 = vsel %vm1130, %v2253, %v2258
        %v2260 = vrot.slane %v1827, 1
        %v2261 = vrot.slane %v1829, 2
        %v2262 = vor.u32 %v2260, %v2261
        %v2263 = vshrl.u32 %v1630, 16
        %v2265 = vrot.slane %v2263, 1
        %v2266 = vrot.slane %v1834, 2
        %v2267 = vor.u32 %v2265, %v2266
        %v2268 = vsel %vm1130, %v2262, %v2267
        %v2269 = vrot.slane %v1839, 1
        %v2270 = vrot.slane %v1841, 2
        %v2271 = vor.u32 %v2269, %v2270
        %v2272 = vshrl.u32 %v1631, 16
        %v2274 = vrot.slane %v2272, 1
        %v2275 = vrot.slane %v1846, 2
        %v2276 = vor.u32 %v2274, %v2275
        %v2277 = vsel %vm1130, %v2271, %v2276
        %v2278 = vrot.slane %v1851, 1
        %v2279 = vrot.slane %v1853, 2
        %v2280 = vor.u32 %v2278, %v2279
        %v2281 = vshrl.u32 %v1632, 16
        %v2283 = vrot.slane %v2281, 1
        %v2284 = vrot.slane %v1858, 2
        %v2285 = vor.u32 %v2283, %v2284
        %v2286 = vsel %vm1130, %v2280, %v2285
        %v2287 = vrot.slane %v1863, 1
        %v2288 = vrot.slane %v1865, 2
        %v2289 = vor.u32 %v2287, %v2288
        %v2290 = vshrl.u32 %v1633, 16
        %v2292 = vrot.slane %v2290, 1
        %v2293 = vrot.slane %v1870, 2
        %v2294 = vor.u32 %v2292, %v2293
        %v2295 = vsel %vm1130, %v2289, %v2294
        %2296 = vrot.lane.b32.xlu0 %v2124, 80
        %v2297 = vpop.permute.xlu0 %2296
        %2298 = vrot.lane.b32.xlu0 %v2133, 80
        %v2299 = vpop.permute.xlu0 %2298
        %2300 = vrot.lane.b32.xlu0 %v2142, 80
        %v2301 = vpop.permute.xlu0 %2300
        %2302 = vrot.lane.b32.xlu0 %v2151, 80
        %v2303 = vpop.permute.xlu0 %2302
        %2304 = vrot.lane.b32.xlu0 %v2160, 80
        %v2305 = vpop.permute.xlu0 %2304
        %2306 = vrot.lane.b32.xlu0 %v2169, 80
        %v2307 = vpop.permute.xlu0 %2306
        %2308 = vrot.lane.b32.xlu0 %v2178, 80
        %v2309 = vpop.permute.xlu0 %2308
        %2310 = vrot.lane.b32.xlu0 %v2187, 80
        %v2311 = vpop.permute.xlu0 %2310
        %2312 = vrot.lane.b32.xlu0 %v2196, 80
        %v2313 = vpop.permute.xlu0 %2312
        %2314 = vrot.lane.b32.xlu0 %v2205, 80
        %v2315 = vpop.permute.xlu0 %2314
        %2316 = vrot.lane.b32.xlu0 %v2214, 80
        %v2317 = vpop.permute.xlu0 %2316
        %2318 = vrot.lane.b32.xlu0 %v2223, 80
        %v2319 = vpop.permute.xlu0 %2318
        %2320 = vrot.lane.b32.xlu0 %v2232, 80
        %v2321 = vpop.permute.xlu0 %2320
        %2322 = vrot.lane.b32.xlu0 %v2241, 80
        %v2323 = vpop.permute.xlu0 %2322
        %2324 = vrot.lane.b32.xlu0 %v2250, 80
        %v2325 = vpop.permute.xlu0 %2324
        %2326 = vrot.lane.b32.xlu0 %v2259, 80
        %v2327 = vpop.permute.xlu0 %2326
        %2328 = vrot.lane.b32.xlu0 %v2268, 80
        %v2329 = vpop.permute.xlu0 %2328
        %2330 = vrot.lane.b32.xlu0 %v2277, 80
        %v2331 = vpop.permute.xlu0 %2330
        %2332 = vrot.lane.b32.xlu0 %v2286, 80
        %v2333 = vpop.permute.xlu0 %2332
        %2334 = vrot.lane.b32.xlu0 %v2295, 80
        %v2335 = vpop.permute.xlu0 %2334
        %vm2356 = vcmask 786048
        %2357 = vst.msk [vmem:[#allocation2 + $0x8] sm:$0xff] %vm2356, %v2297
        %2358 = vst.msk [vmem:[#allocation2 + $0x18] sm:$0xff] %vm2356, %v2299
        %2359 = vst.msk [vmem:[#allocation2 + $0x28] sm:$0xff] %vm2356, %v2301
        %2360 = vst.msk [vmem:[#allocation2 + $0x38] sm:$0xff] %vm2356, %v2303
        %2361 = vst.msk [vmem:[#allocation2 + $0x48] sm:$0xff] %vm2356, %v2305
        %2362 = vst.msk [vmem:[#allocation2 + $0x58] sm:$0xff] %vm2356, %v2307
        %2363 = vst.msk [vmem:[#allocation2 + $0x68] sm:$0xff] %vm2356, %v2309
        %2364 = vst.msk [vmem:[#allocation2 + $0x78] sm:$0xff] %vm2356, %v2311
        %2365 = vst.msk [vmem:[#allocation2 + $0x88] sm:$0xff] %vm2356, %v2313
        %2366 = vst.msk [vmem:[#allocation2 + $0x98] sm:$0xff] %vm2356, %v2315
        %2367 = vst.msk [vmem:[#allocation2 + $0xa8] sm:$0xff] %vm2356, %v2317
        %2368 = vst.msk [vmem:[#allocation2 + $0xb8] sm:$0xff] %vm2356, %v2319
        %2369 = vst.msk [vmem:[#allocation2 + $0xc8] sm:$0xff] %vm2356, %v2321
        %2370 = vst.msk [vmem:[#allocation2 + $0xd8] sm:$0xff] %vm2356, %v2323
        %2371 = vst.msk [vmem:[#allocation2 + $0xe8] sm:$0xff] %vm2356, %v2325
        %2372 = vst.msk [vmem:[#allocation2 + $0xf8] sm:$0xff] %vm2356, %v2327
        %2373 = vst.msk [vmem:[#allocation2 + $0x108] sm:$0xff] %vm2356, %v2329
        %2374 = vst.msk [vmem:[#allocation2 + $0x118] sm:$0xff] %vm2356, %v2331
        %2375 = vst.msk [vmem:[#allocation2 + $0x128] sm:$0xff] %vm2356, %v2333
        %2376 = vst.msk [vmem:[#allocation2 + $0x138] sm:$0xff] %vm2356, %v2335
        %v2377 = vrot.slane %v1493, 2
        %v2378 = vrot.slane %v1614, 2
        %v2379 = vsel %vm1392, %v2377, %v2378
        %v2380 = vrot.slane %v1494, 2
        %v2381 = vrot.slane %v1615, 2
        %v2382 = vsel %vm1392, %v2380, %v2381
        %v2383 = vrot.slane %v1495, 2
        %v2384 = vrot.slane %v1616, 2
        %v2385 = vsel %vm1392, %v2383, %v2384
        %v2386 = vrot.slane %v1496, 2
        %v2387 = vrot.slane %v1617, 2
        %v2388 = vsel %vm1392, %v2386, %v2387
        %v2389 = vrot.slane %v1497, 2
        %v2390 = vrot.slane %v1618, 2
        %v2391 = vsel %vm1392, %v2389, %v2390
        %v2392 = vrot.slane %v1498, 2
        %v2393 = vrot.slane %v1619, 2
        %v2394 = vsel %vm1392, %v2392, %v2393
        %v2395 = vrot.slane %v1499, 2
        %v2396 = vrot.slane %v1620, 2
        %v2397 = vsel %vm1392, %v2395, %v2396
        %v2398 = vrot.slane %v1500, 2
        %v2399 = vrot.slane %v1621, 2
        %v2400 = vsel %vm1392, %v2398, %v2399
        %v2401 = vrot.slane %v1501, 2
        %v2402 = vrot.slane %v1622, 2
        %v2403 = vsel %vm1392, %v2401, %v2402
        %v2404 = vrot.slane %v1502, 2
        %v2405 = vrot.slane %v1623, 2
        %v2406 = vsel %vm1392, %v2404, %v2405
        %v2407 = vrot.slane %v1503, 2
        %v2408 = vrot.slane %v1624, 2
        %v2409 = vsel %vm1392, %v2407, %v2408
        %v2410 = vrot.slane %v1504, 2
        %v2411 = vrot.slane %v1625, 2
        %v2412 = vsel %vm1392, %v2410, %v2411
        %v2413 = vrot.slane %v1505, 2
        %v2414 = vrot.slane %v1626, 2
        %v2415 = vsel %vm1392, %v2413, %v2414
        %v2416 = vrot.slane %v1506, 2
        %v2417 = vrot.slane %v1627, 2
        %v2418 = vsel %vm1392, %v2416, %v2417
        %v2419 = vrot.slane %v1507, 2
        %v2420 = vrot.slane %v1628, 2
        %v2421 = vsel %vm1392, %v2419, %v2420
        %v2422 = vrot.slane %v1508, 2
        %v2423 = vrot.slane %v1629, 2
        %v2424 = vsel %vm1392, %v2422, %v2423
        %v2425 = vrot.slane %v1509, 2
        %v2426 = vrot.slane %v1630, 2
        %v2427 = vsel %vm1392, %v2425, %v2426
        %v2428 = vrot.slane %v1510, 2
        %v2429 = vrot.slane %v1631, 2
        %v2430 = vsel %vm1392, %v2428, %v2429
        %v2431 = vrot.slane %v1511, 2
        %v2432 = vrot.slane %v1632, 2
        %v2433 = vsel %vm1392, %v2431, %v2432
        %v2434 = vrot.slane %v1512, 2
        %v2435 = vrot.slane %v1633, 2
        %v2436 = vsel %vm1392, %v2434, %v2435
        %2437 = vrot.lane.b32.xlu0 %v2379, 96
        %v2438 = vpop.permute.xlu0 %2437
        %2439 = vrot.lane.b32.xlu0 %v2382, 96
        %v2440 = vpop.permute.xlu0 %2439
        %2441 = vrot.lane.b32.xlu0 %v2385, 96
        %v2442 = vpop.permute.xlu0 %2441
        %2443 = vrot.lane.b32.xlu0 %v2388, 96
        %v2444 = vpop.permute.xlu0 %2443
        %2445 = vrot.lane.b32.xlu0 %v2391, 96
        %v2446 = vpop.permute.xlu0 %2445
        %2447 = vrot.lane.b32.xlu0 %v2394, 96
        %v2448 = vpop.permute.xlu0 %2447
        %2449 = vrot.lane.b32.xlu0 %v2397, 96
        %v2450 = vpop.permute.xlu0 %2449
        %2451 = vrot.lane.b32.xlu0 %v2400, 96
        %v2452 = vpop.permute.xlu0 %2451
        %2453 = vrot.lane.b32.xlu0 %v2403, 96
        %v2454 = vpop.permute.xlu0 %2453
        %2455 = vrot.lane.b32.xlu0 %v2406, 96
        %v2456 = vpop.permute.xlu0 %2455
        %2457 = vrot.lane.b32.xlu0 %v2409, 96
        %v2458 = vpop.permute.xlu0 %2457
        %2459 = vrot.lane.b32.xlu0 %v2412, 96
        %v2460 = vpop.permute.xlu0 %2459
        %2461 = vrot.lane.b32.xlu0 %v2415, 96
        %v2462 = vpop.permute.xlu0 %2461
        %2463 = vrot.lane.b32.xlu0 %v2418, 96
        %v2464 = vpop.permute.xlu0 %2463
        %2465 = vrot.lane.b32.xlu0 %v2421, 96
        %v2466 = vpop.permute.xlu0 %2465
        %2467 = vrot.lane.b32.xlu0 %v2424, 96
        %v2468 = vpop.permute.xlu0 %2467
        %2469 = vrot.lane.b32.xlu0 %v2427, 96
        %v2470 = vpop.permute.xlu0 %2469
        %2471 = vrot.lane.b32.xlu0 %v2430, 96
        %v2472 = vpop.permute.xlu0 %2471
        %2473 = vrot.lane.b32.xlu0 %v2433, 96
        %v2474 = vpop.permute.xlu0 %2473
        %2475 = vrot.lane.b32.xlu0 %v2436, 96
        %v2476 = vpop.permute.xlu0 %2475
        %vm2497 = vcmask 917248
        %2498 = vst.msk [vmem:[#allocation2 + $0x8] sm:$0xff] %vm2497, %v2438
        %2499 = vst.msk [vmem:[#allocation2 + $0x18] sm:$0xff] %vm2497, %v2440
        %2500 = vst.msk [vmem:[#allocation2 + $0x28] sm:$0xff] %vm2497, %v2442
        %2501 = vst.msk [vmem:[#allocation2 + $0x38] sm:$0xff] %vm2497, %v2444
        %2502 = vst.msk [vmem:[#allocation2 + $0x48] sm:$0xff] %vm2497, %v2446
        %2503 = vst.msk [vmem:[#allocation2 + $0x58] sm:$0xff] %vm2497, %v2448
        %2504 = vst.msk [vmem:[#allocation2 + $0x68] sm:$0xff] %vm2497, %v2450
        %2505 = vst.msk [vmem:[#allocation2 + $0x78] sm:$0xff] %vm2497, %v2452
        %2506 = vst.msk [vmem:[#allocation2 + $0x88] sm:$0xff] %vm2497, %v2454
        %2507 = vst.msk [vmem:[#allocation2 + $0x98] sm:$0xff] %vm2497, %v2456
        %2508 = vst.msk [vmem:[#allocation2 + $0xa8] sm:$0xff] %vm2497, %v2458
        %2509 = vst.msk [vmem:[#allocation2 + $0xb8] sm:$0xff] %vm2497, %v2460
        %2510 = vst.msk [vmem:[#allocation2 + $0xc8] sm:$0xff] %vm2497, %v2462
        %2511 = vst.msk [vmem:[#allocation2 + $0xd8] sm:$0xff] %vm2497, %v2464
        %2512 = vst.msk [vmem:[#allocation2 + $0xe8] sm:$0xff] %vm2497, %v2466
        %2513 = vst.msk [vmem:[#allocation2 + $0xf8] sm:$0xff] %vm2497, %v2468
        %2514 = vst.msk [vmem:[#allocation2 + $0x108] sm:$0xff] %vm2497, %v2470
        %2515 = vst.msk [vmem:[#allocation2 + $0x118] sm:$0xff] %vm2497, %v2472
        %2516 = vst.msk [vmem:[#allocation2 + $0x128] sm:$0xff] %vm2497, %v2474
        %2517 = vst.msk [vmem:[#allocation2 + $0x138] sm:$0xff] %vm2497, %v2476
        %v2518 = vld [vmem:[#allocation2] sm:$0xff]
        %v2519 = vld [vmem:[#allocation2 + $0x8] sm:$0xff]
        %v2520 = vld [vmem:[#allocation2 + $0x10] sm:$0xff]
        %v2521 = vld [vmem:[#allocation2 + $0x18] sm:$0xff]
        %v2522 = vld [vmem:[#allocation2 + $0x20] sm:$0xff]
        %v2523 = vld [vmem:[#allocation2 + $0x28] sm:$0xff]
        %v2524 = vld [vmem:[#allocation2 + $0x30] sm:$0xff]
        %v2525 = vld [vmem:[#allocation2 + $0x38] sm:$0xff]
        %v2526 = vld [vmem:[#allocation2 + $0x40] sm:$0xff]
        %v2527 = vld [vmem:[#allocation2 + $0x48] sm:$0xff]
        %v2528 = vld [vmem:[#allocation2 + $0x50] sm:$0xff]
        %v2529 = vld [vmem:[#allocation2 + $0x58] sm:$0xff]
        %v2530 = vld [vmem:[#allocation2 + $0x60] sm:$0xff]
        %v2531 = vld [vmem:[#allocation2 + $0x68] sm:$0xff]
        %v2532 = vld [vmem:[#allocation2 + $0x70] sm:$0xff]
        %v2533 = vld [vmem:[#allocation2 + $0x78] sm:$0xff]
        %v2534 = vld [vmem:[#allocation2 + $0x80] sm:$0xff]
        %v2535 = vld [vmem:[#allocation2 + $0x88] sm:$0xff]
        %v2536 = vld [vmem:[#allocation2 + $0x90] sm:$0xff]
        %v2537 = vld [vmem:[#allocation2 + $0x98] sm:$0xff]
        %v2538 = vld [vmem:[#allocation2 + $0xa0] sm:$0xff]
        %v2539 = vld [vmem:[#allocation2 + $0xa8] sm:$0xff]
        %v2540 = vld [vmem:[#allocation2 + $0xb0] sm:$0xff]
        %v2541 = vld [vmem:[#allocation2 + $0xb8] sm:$0xff]
        %v2542 = vld [vmem:[#allocation2 + $0xc0] sm:$0xff]
        %v2543 = vld [vmem:[#allocation2 + $0xc8] sm:$0xff]
        %v2544 = vld [vmem:[#allocation2 + $0xd0] sm:$0xff]
        %v2545 = vld [vmem:[#allocation2 + $0xd8] sm:$0xff]
        %v2546 = vld [vmem:[#allocation2 + $0xe0] sm:$0xff]
        %v2547 = vld [vmem:[#allocation2 + $0xe8] sm:$0xff]
        %v2548 = vld [vmem:[#allocation2 + $0xf0] sm:$0xff]
        %v2549 = vld [vmem:[#allocation2 + $0xf8] sm:$0xff]
        %v2550 = vld [vmem:[%s2] sm:$0xf]
        %v2551 = vld [vmem:[%s2 + $0x4] sm:$0xf]
        %v2552 = vld [vmem:[%s2 + $0x8] sm:$0xf]
        %v2553 = vld [vmem:[%s2 + $0xc] sm:$0xf]
        %v2554 = vld [vmem:[%s2 + $0x10] sm:$0xf]
        %v2555 = vld [vmem:[%s2 + $0x14] sm:$0xf]
        %v2556 = vld [vmem:[%s2 + $0x18] sm:$0xf]
        %v2557 = vld [vmem:[%s2 + $0x1c] sm:$0xf]
        %v2558 = vld [vmem:[%s2 + $0x20] sm:$0xf]
        %v2559 = vld [vmem:[%s2 + $0x24] sm:$0xf]
        %v2560 = vld [vmem:[%s2 + $0x28] sm:$0xf]
        %v2561 = vld [vmem:[%s2 + $0x2c] sm:$0xf]
        %v2562 = vld [vmem:[%s2 + $0x30] sm:$0xf]
        %v2563 = vld [vmem:[%s2 + $0x34] sm:$0xf]
        %v2564 = vld [vmem:[%s2 + $0x38] sm:$0xf]
        %v2565 = vld [vmem:[%s2 + $0x3c] sm:$0xf]
        %v2566 = vld [vmem:[%s2 + $0x40] sm:$0xf]
        %v2567 = vld [vmem:[%s2 + $0x44] sm:$0xf]
        %v2568 = vld [vmem:[%s2 + $0x48] sm:$0xf]
        %v2569 = vld [vmem:[%s2 + $0x4c] sm:$0xf]
        %v2570 = vld [vmem:[%s2 + $0x50] sm:$0xf]
        %v2571 = vld [vmem:[%s2 + $0x54] sm:$0xf]
        %v2572 = vld [vmem:[%s2 + $0x58] sm:$0xf]
        %v2573 = vld [vmem:[%s2 + $0x5c] sm:$0xf]
        %v2574 = vld [vmem:[%s2 + $0x60] sm:$0xf]
        %v2575 = vld [vmem:[%s2 + $0x64] sm:$0xf]
        %v2576 = vld [vmem:[%s2 + $0x68] sm:$0xf]
        %v2577 = vld [vmem:[%s2 + $0x6c] sm:$0xf]
        %v2578 = vld [vmem:[%s2 + $0x70] sm:$0xf]
        %v2579 = vld [vmem:[%s2 + $0x74] sm:$0xf]
        %s2580 = scalar_lea.vmem [#allocation2], 16
        %v2581 = vld [vmem:[%s2580] sm:$0xff]
        %v2582 = vld [vmem:[%s2580 + $0x8] sm:$0xff]
        %v2583 = vld [vmem:[%s2580 + $0x10] sm:$0xff]
        %v2584 = vld [vmem:[%s2580 + $0x18] sm:$0xff]
        %v2585 = vld [vmem:[%s2580 + $0x20] sm:$0xff]
        %v2586 = vld [vmem:[%s2580 + $0x28] sm:$0xff]
        %v2587 = vld [vmem:[%s2580 + $0x30] sm:$0xff]
        %v2588 = vld [vmem:[%s2580 + $0x38] sm:$0xff]
        %v2589 = vld [vmem:[%s2580 + $0x40] sm:$0xff]
        %v2590 = vld [vmem:[%s2580 + $0x48] sm:$0xff]
        %v2591 = vld [vmem:[%s2580 + $0x50] sm:$0xff]
        %v2592 = vld [vmem:[%s2580 + $0x58] sm:$0xff]
        %v2593 = vld [vmem:[%s2580 + $0x60] sm:$0xff]
        %v2594 = vld [vmem:[%s2580 + $0x68] sm:$0xff]
        %v2595 = vld [vmem:[%s2580 + $0x70] sm:$0xff]
        %v2596 = vld [vmem:[%s2580 + $0x78] sm:$0xff]
        %v2597 = vld [vmem:[%s2580 + $0x80] sm:$0xff]
        %v2598 = vld [vmem:[%s2580 + $0x88] sm:$0xff]
        %v2599 = vld [vmem:[%s2580 + $0x90] sm:$0xff]
        %v2600 = vld [vmem:[%s2580 + $0x98] sm:$0xff]
        %v2601 = vld [vmem:[%s2580 + $0xa0] sm:$0xff]
        %v2602 = vld [vmem:[%s2580 + $0xa8] sm:$0xff]
        %v2603 = vld [vmem:[%s2580 + $0xb0] sm:$0xff]
        %v2604 = vld [vmem:[%s2580 + $0xb8] sm:$0xff]
        %v2605 = vld [vmem:[%s2580 + $0xc0] sm:$0xff]
        %v2606 = vld [vmem:[%s2580 + $0xc8] sm:$0xff]
        %v2607 = vld [vmem:[%s2580 + $0xd0] sm:$0xff]
        %v2608 = vld [vmem:[%s2580 + $0xd8] sm:$0xff]
        %v2609 = vld [vmem:[%s2580 + $0xe0] sm:$0xff]
        %v2610 = vld [vmem:[%s2580 + $0xe8] sm:$0xff]
        %v2611 = vld [vmem:[%s2580 + $0xf0] sm:$0xff]
        %v2612 = vld [vmem:[%s2580 + $0xf8] sm:$0xff]
        %s2613 = scalar_lea.vmem %s2, 120
        %v2614 = vld [vmem:[%s2613] sm:$0xf]
        %v2615 = vld [vmem:[%s2613 + $0x4] sm:$0xf]
        %v2616 = vld [vmem:[%s2613 + $0x8] sm:$0xf]
        %v2617 = vld [vmem:[%s2613 + $0xc] sm:$0xf]
        %v2618 = vld [vmem:[%s2613 + $0x10] sm:$0xf]
        %v2619 = vld [vmem:[%s2613 + $0x14] sm:$0xf]
        %v2620 = vld [vmem:[%s2613 + $0x18] sm:$0xf]
        %v2621 = vld [vmem:[%s2613 + $0x1c] sm:$0xf]
        %v2622 = vld [vmem:[%s2613 + $0x20] sm:$0xf]
        %v2623 = vld [vmem:[%s2613 + $0x24] sm:$0xf]
        %v2624 = vld [vmem:[%s2613 + $0x28] sm:$0xf]
        %v2625 = vld [vmem:[%s2613 + $0x2c] sm:$0xf]
        %v2626 = vld [vmem:[%s2613 + $0x30] sm:$0xf]
        %v2627 = vld [vmem:[%s2613 + $0x34] sm:$0xf]
        %v2628 = vld [vmem:[%s2613 + $0x38] sm:$0xf]
        %v2629 = vld [vmem:[%s2613 + $0x3c] sm:$0xf]
        %v2630 = vld [vmem:[%s2613 + $0x40] sm:$0xf]
        %v2631 = vld [vmem:[%s2613 + $0x44] sm:$0xf]
        %v2632 = vld [vmem:[%s2613 + $0x48] sm:$0xf]
        %v2633 = vld [vmem:[%s2613 + $0x4c] sm:$0xf]
        %v2634 = vld [vmem:[%s2613 + $0x50] sm:$0xf]
        %v2635 = vld [vmem:[%s2613 + $0x54] sm:$0xf]
        %v2636 = vld [vmem:[%s2613 + $0x58] sm:$0xf]
        %v2637 = vld [vmem:[%s2613 + $0x5c] sm:$0xf]
        %v2638 = vld [vmem:[%s2613 + $0x60] sm:$0xf]
        %v2639 = vld [vmem:[%s2613 + $0x64] sm:$0xf]
        %v2640 = vld [vmem:[%s2613 + $0x68] sm:$0xf]
        %v2641 = vld [vmem:[%s2613 + $0x6c] sm:$0xf]
        %v2642 = vld [vmem:[%s2613 + $0x70] sm:$0xf]
        %v2643 = vld [vmem:[%s2613 + $0x74] sm:$0xf]
        %v2674 = vunpack.c.l.b16 %v2614
        %v2675 = vunpack.c.l.b16 %v2615
        %v2676 = vunpack.c.l.b16 %v2616
        %v2677 = vunpack.c.l.b16 %v2617
        %v2678 = vunpack.c.l.b16 %v2618
        %v2679 = vunpack.c.l.b16 %v2619
        %v2680 = vunpack.c.l.b16 %v2620
        %v2681 = vunpack.c.l.b16 %v2621
        %v2682 = vunpack.c.l.b16 %v2622
        %v2683 = vunpack.c.l.b16 %v2623
        %v2684 = vunpack.c.l.b16 %v2624
        %v2685 = vunpack.c.l.b16 %v2625
        %v2686 = vunpack.c.l.b16 %v2626
        %v2687 = vunpack.c.l.b16 %v2627
        %v2688 = vunpack.c.l.b16 %v2628
        %v2689 = vunpack.c.l.b16 %v2629
        %v2690 = vunpack.c.l.b16 %v2630
        %v2691 = vunpack.c.l.b16 %v2631
        %v2692 = vunpack.c.l.b16 %v2632
        %v2693 = vunpack.c.l.b16 %v2633
        %v2694 = vunpack.c.l.b16 %v2634
        %v2695 = vunpack.c.l.b16 %v2635
        %v2696 = vunpack.c.l.b16 %v2636
        %v2697 = vunpack.c.l.b16 %v2637
        %v2698 = vunpack.c.l.b16 %v2638
        %v2699 = vunpack.c.l.b16 %v2639
        %v2700 = vunpack.c.l.b16 %v2640
        %v2701 = vunpack.c.l.b16 %v2641
        %v2702 = vunpack.c.l.b16 %v2642
        %v2703 = vunpack.c.l.b16 %v2643
        %v2704 = vpack.c.b16 %v2675, %v2674
        %v2705 = vpack.c.b16 %v2677, %v2676
        %v2706 = vpack.c.b16 %v2679, %v2678
        %v2707 = vpack.c.b16 %v2681, %v2680
        %v2708 = vpack.c.b16 %v2683, %v2682
        %v2709 = vpack.c.b16 %v2685, %v2684
        %v2710 = vpack.c.b16 %v2687, %v2686
        %v2711 = vpack.c.b16 %v2689, %v2688
        %v2712 = vpack.c.b16 %v2691, %v2690
        %v2713 = vpack.c.b16 %v2693, %v2692
        %v2714 = vpack.c.b16 %v2695, %v2694
        %v2715 = vpack.c.b16 %v2697, %v2696
        %v2716 = vpack.c.b16 %v2699, %v2698
        %v2717 = vpack.c.b16 %v2701, %v2700
        %v2718 = vpack.c.b16 %v2703, %v2702
        %vm2734 = vcmask 916480
        %v2736 = vsel %vm2734, %v2582, 0
        %v2739 = vsel %vm2734, %v2584, 0
        %v2742 = vsel %vm2734, %v2586, 0
        %v2745 = vsel %vm2734, %v2588, 0
        %v2748 = vsel %vm2734, %v2590, 0
        %v2751 = vsel %vm2734, %v2592, 0
        %v2754 = vsel %vm2734, %v2594, 0
        %v2757 = vsel %vm2734, %v2596, 0
        %v2760 = vsel %vm2734, %v2598, 0
        %v2763 = vsel %vm2734, %v2600, 0
        %v2766 = vsel %vm2734, %v2602, 0
        %v2769 = vsel %vm2734, %v2604, 0
        %v2772 = vsel %vm2734, %v2606, 0
        %v2775 = vsel %vm2734, %v2608, 0
        %v2778 = vsel %vm2734, %v2610, 0
        %v2781 = vsel %vm2734, %v2612, 0
        %2783 = vmatprep.subr.bf16.mxu0 0
        %2784 = vmatpush1.bf16.msra.mxu0 %v2704
        %2785 = vmatprep.subr.bf16.mxu0 0
        %2786 = vmatpush1.bf16.msra.mxu0 %v2705
        %2787 = vmatprep.subr.bf16.mxu0 0
        %2788 = vmatpush1.bf16.msra.mxu0 %v2706
        %2789 = vmatprep.subr.bf16.mxu0 0
        %2790 = vmatpush1.bf16.msra.mxu0 %v2707
        %2791 = vmatprep.subr.bf16.mxu0 0
        %2792 = vmatpush1.bf16.msra.mxu0 %v2708
        %2793 = vmatprep.subr.bf16.mxu0 0
        %2794 = vmatpush1.bf16.msra.mxu0 %v2709
        %2795 = vmatprep.subr.bf16.mxu0 0
        %2796 = vmatpush1.bf16.msra.mxu0 %v2710
        %2797 = vmatprep.subr.bf16.mxu0 0
        %2798 = vmatpush1.bf16.msra.mxu0 %v2711
        %2799 = vmatprep.subr.bf16.mxu0 0
        %2800 = vmatpush1.bf16.msra.mxu0 %v2712
        %2801 = vmatprep.subr.bf16.mxu0 0
        %2802 = vmatpush1.bf16.msra.mxu0 %v2713
        %2803 = vmatprep.subr.bf16.mxu0 0
        %2804 = vmatpush1.bf16.msra.mxu0 %v2714
        %2805 = vmatprep.subr.bf16.mxu0 0
        %2806 = vmatpush1.bf16.msra.mxu0 %v2715
        %2807 = vmatprep.subr.bf16.mxu0 0
        %2808 = vmatpush1.bf16.msra.mxu0 %v2716
        %2809 = vmatprep.subr.bf16.mxu0 0
        %2810 = vmatpush1.bf16.msra.mxu0 %v2717
        %2811 = vmatprep.subr.bf16.mxu0 0
        %2812 = vmatpush1.bf16.msra.mxu0 %v2718
        %2813 = vmatprep.subr.bf16.mxu0 0
        %2814 = vmatpush1.bf16.msra.mxu0 0
        %2815 = vmatprep.mubr.bf16.mxu0 %v2736
        %2816 = vmatmul.mubr.bf16.gmra.mrb[0].mxu0 %v2581
        %v2817 = vpop.f32.mrb[0].mxu0
        %v2818 = vadd.f32 0.0, %v2817
        %v2819 = vpop.f32.mrb[0].mxu0
        %v2820 = vpop.f32.mrb[0].mxu0
        %v2821 = vadd.f32 0.0, %v2820
        %v2822 = vpop.f32.mrb[0].mxu0
        %2823 = vmatprep.mubr.bf16.mxu0 %v2739
        %2824 = vmatmul.mubr.bf16.gmra.mrb[0].mxu0 %v2583
        %v2825 = vpop.f32.mrb[0].mxu0
        %v2826 = vadd.f32 0.0, %v2825
        %v2827 = vpop.f32.mrb[0].mxu0
        %v2828 = vpop.f32.mrb[0].mxu0
        %v2829 = vadd.f32 0.0, %v2828
        %v2830 = vpop.f32.mrb[0].mxu0
        %2831 = vmatprep.mubr.bf16.mxu0 %v2742
        %2832 = vmatmul.mubr.bf16.gmra.mrb[0].mxu0 %v2585
        %v2833 = vpop.f32.mrb[0].mxu0
        %v2834 = vadd.f32 0.0, %v2833
        %v2835 = vpop.f32.mrb[0].mxu0
        %v2836 = vpop.f32.mrb[0].mxu0
        %v2837 = vadd.f32 0.0, %v2836
        %v2838 = vpop.f32.mrb[0].mxu0
        %2839 = vmatprep.mubr.bf16.mxu0 %v2745
        %2840 = vmatmul.mubr.bf16.gmra.mrb[0].mxu0 %v2587
        %v2841 = vpop.f32.mrb[0].mxu0
        %v2842 = vadd.f32 0.0, %v2841
        %v2843 = vpop.f32.mrb[0].mxu0
        %v2844 = vpop.f32.mrb[0].mxu0
        %v2845 = vadd.f32 0.0, %v2844
        %v2846 = vpop.f32.mrb[0].mxu0
        %2847 = vmatprep.mubr.bf16.mxu0 %v2748
        %2848 = vmatmul.mubr.bf16.gmra.mrb[0].mxu0 %v2589
        %v2849 = vpop.f32.mrb[0].mxu0
        %v2850 = vadd.f32 0.0, %v2849
        %v2851 = vpop.f32.mrb[0].mxu0
        %v2852 = vpop.f32.mrb[0].mxu0
        %v2853 = vadd.f32 0.0, %v2852
        %v2854 = vpop.f32.mrb[0].mxu0
        %2855 = vmatprep.mubr.bf16.mxu0 %v2751
        %2856 = vmatmul.mubr.bf16.gmra.mrb[0].mxu0 %v2591
        %v2857 = vpop.f32.mrb[0].mxu0
        %v2858 = vadd.f32 0.0, %v2857
        %v2859 = vpop.f32.mrb[0].mxu0
        %v2860 = vpop.f32.mrb[0].mxu0
        %v2861 = vadd.f32 0.0, %v2860
        %v2862 = vpop.f32.mrb[0].mxu0
        %2863 = vmatprep.mubr.bf16.mxu0 %v2754
        %2864 = vmatmul.mubr.bf16.gmra.mrb[0].mxu0 %v2593
        %v2865 = vpop.f32.mrb[0].mxu0
        %v2866 = vadd.f32 0.0, %v2865
        %v2867 = vpop.f32.mrb[0].mxu0
        %v2868 = vpop.f32.mrb[0].mxu0
        %v2869 = vadd.f32 0.0, %v2868
        %v2870 = vpop.f32.mrb[0].mxu0
        %2871 = vmatprep.mubr.bf16.mxu0 %v2757
        %2872 = vmatmul.mubr.bf16.gmra.mrb[0].mxu0 %v2595
        %v2873 = vpop.f32.mrb[0].mxu0
        %v2874 = vadd.f32 0.0, %v2873
        %v2875 = vpop.f32.mrb[0].mxu0
        %v2876 = vpop.f32.mrb[0].mxu0
        %v2877 = vadd.f32 0.0, %v2876
        %v2878 = vpop.f32.mrb[0].mxu0
        %2879 = vmatprep.mubr.bf16.mxu0 %v2760
        %2880 = vmatmul.mubr.bf16.gmra.mrb[0].mxu0 %v2597
        %v2881 = vpop.f32.mrb[0].mxu0
        %v2882 = vadd.f32 0.0, %v2881
        %v2883 = vpop.f32.mrb[0].mxu0
        %v2884 = vpop.f32.mrb[0].mxu0
        %v2885 = vadd.f32 0.0, %v2884
        %v2886 = vpop.f32.mrb[0].mxu0
        %2887 = vmatprep.mubr.bf16.mxu0 %v2763
        %2888 = vmatmul.mubr.bf16.gmra.mrb[0].mxu0 %v2599
        %v2889 = vpop.f32.mrb[0].mxu0
        %v2890 = vadd.f32 0.0, %v2889
        %v2891 = vpop.f32.mrb[0].mxu0
        %v2892 = vpop.f32.mrb[0].mxu0
        %v2893 = vadd.f32 0.0, %v2892
        %v2894 = vpop.f32.mrb[0].mxu0
        %2895 = vmatprep.mubr.bf16.mxu0 %v2766
        %2896 = vmatmul.mubr.bf16.gmra.mrb[0].mxu0 %v2601
        %v2897 = vpop.f32.mrb[0].mxu0
        %v2898 = vadd.f32 0.0, %v2897
        %v2899 = vpop.f32.mrb[0].mxu0
        %v2900 = vpop.f32.mrb[0].mxu0
        %v2901 = vadd.f32 0.0, %v2900
        %v2902 = vpop.f32.mrb[0].mxu0
        %2903 = vmatprep.mubr.bf16.mxu0 %v2769
        %2904 = vmatmul.mubr.bf16.gmra.mrb[0].mxu0 %v2603
        %v2905 = vpop.f32.mrb[0].mxu0
        %v2906 = vadd.f32 0.0, %v2905
        %v2907 = vpop.f32.mrb[0].mxu0
        %v2908 = vpop.f32.mrb[0].mxu0
        %v2909 = vadd.f32 0.0, %v2908
        %v2910 = vpop.f32.mrb[0].mxu0
        %2911 = vmatprep.mubr.bf16.mxu0 %v2772
        %2912 = vmatmul.mubr.bf16.gmra.mrb[0].mxu0 %v2605
        %v2913 = vpop.f32.mrb[0].mxu0
        %v2914 = vadd.f32 0.0, %v2913
        %v2915 = vpop.f32.mrb[0].mxu0
        %v2916 = vpop.f32.mrb[0].mxu0
        %v2917 = vadd.f32 0.0, %v2916
        %v2918 = vpop.f32.mrb[0].mxu0
        %2919 = vmatprep.mubr.bf16.mxu0 %v2775
        %2920 = vmatmul.mubr.bf16.gmra.mrb[0].mxu0 %v2607
        %v2921 = vpop.f32.mrb[0].mxu0
        %v2922 = vadd.f32 0.0, %v2921
        %v2923 = vpop.f32.mrb[0].mxu0
        %v2924 = vpop.f32.mrb[0].mxu0
        %v2925 = vadd.f32 0.0, %v2924
        %v2926 = vpop.f32.mrb[0].mxu0
        %2927 = vmatprep.mubr.bf16.mxu0 %v2778
        %2928 = vmatmul.mubr.bf16.gmra.mrb[0].mxu0 %v2609
        %v2929 = vpop.f32.mrb[0].mxu0
        %v2930 = vadd.f32 0.0, %v2929
        %v2931 = vpop.f32.mrb[0].mxu0
        %v2932 = vpop.f32.mrb[0].mxu0
        %v2933 = vadd.f32 0.0, %v2932
        %v2934 = vpop.f32.mrb[0].mxu0
        %2935 = vmatprep.mubr.bf16.mxu0 %v2781
        %2936 = vmatmul.mubr.bf16.gmra.mrb[0].mxu0 %v2611
        %v2937 = vpop.f32.mrb[0].mxu0
        %v2938 = vadd.f32 0.0, %v2937
        %v2939 = vpop.f32.mrb[0].mxu0
        %v2940 = vpop.f32.mrb[0].mxu0
        %v2941 = vadd.f32 0.0, %v2940
        %v2942 = vpop.f32.mrb[0].mxu0
        %2943 = vdwg.mxu0
        %v2974 = vunpack.c.l.b16 %v2550
        %v2975 = vunpack.c.l.b16 %v2551
        %v2976 = vunpack.c.l.b16 %v2552
        %v2977 = vunpack.c.l.b16 %v2553
        %v2978 = vunpack.c.l.b16 %v2554
        %v2979 = vunpack.c.l.b16 %v2555
        %v2980 = vunpack.c.l.b16 %v2556
        %v2981 = vunpack.c.l.b16 %v2557
        %v2982 = vunpack.c.l.b16 %v2558
        %v2983 = vunpack.c.l.b16 %v2559
        %v2984 = vunpack.c.l.b16 %v2560
        %v2985 = vunpack.c.l.b16 %v2561
        %v2986 = vunpack.c.l.b16 %v2562
        %v2987 = vunpack.c.l.b16 %v2563
        %v2988 = vunpack.c.l.b16 %v2564
        %v2989 = vunpack.c.l.b16 %v2565
        %v2990 = vunpack.c.l.b16 %v2566
        %v2991 = vunpack.c.l.b16 %v2567
        %v2992 = vunpack.c.l.b16 %v2568
        %v2993 = vunpack.c.l.b16 %v2569
        %v2994 = vunpack.c.l.b16 %v2570
        %v2995 = vunpack.c.l.b16 %v2571
        %v2996 = vunpack.c.l.b16 %v2572
        %v2997 = vunpack.c.l.b16 %v2573
        %v2998 = vunpack.c.l.b16 %v2574
        %v2999 = vunpack.c.l.b16 %v2575
        %v3000 = vunpack.c.l.b16 %v2576
        %v3001 = vunpack.c.l.b16 %v2577
        %v3002 = vunpack.c.l.b16 %v2578
        %v3003 = vunpack.c.l.b16 %v2579
        %v3004 = vpack.c.b16 %v2975, %v2974
        %v3005 = vpack.c.b16 %v2977, %v2976
        %v3006 = vpack.c.b16 %v2979, %v2978
        %v3007 = vpack.c.b16 %v2981, %v2980
        %v3008 = vpack.c.b16 %v2983, %v2982
        %v3009 = vpack.c.b16 %v2985, %v2984
        %v3010 = vpack.c.b16 %v2987, %v2986
        %v3011 = vpack.c.b16 %v2989, %v2988
        %v3012 = vpack.c.b16 %v2991, %v2990
        %v3013 = vpack.c.b16 %v2993, %v2992
        %v3014 = vpack.c.b16 %v2995, %v2994
        %v3015 = vpack.c.b16 %v2997, %v2996
        %v3016 = vpack.c.b16 %v2999, %v2998
        %v3017 = vpack.c.b16 %v3001, %v3000
        %v3018 = vpack.c.b16 %v3003, %v3002
        %v3035 = vsel %vm2734, %v2519, 0
        %v3038 = vsel %vm2734, %v2521, 0
        %v3041 = vsel %vm2734, %v2523, 0
        %v3044 = vsel %vm2734, %v2525, 0
        %v3047 = vsel %vm2734, %v2527, 0
        %v3050 = vsel %vm2734, %v2529, 0
        %v3053 = vsel %vm2734, %v2531, 0
        %v3056 = vsel %vm2734, %v2533, 0
        %v3059 = vsel %vm2734, %v2535, 0
        %v3062 = vsel %vm2734, %v2537, 0
        %v3065 = vsel %vm2734, %v2539, 0
        %v3068 = vsel %vm2734, %v2541, 0
        %v3071 = vsel %vm2734, %v2543, 0
        %v3074 = vsel %vm2734, %v2545, 0
        %v3077 = vsel %vm2734, %v2547, 0
        %v3080 = vsel %vm2734, %v2549, 0
        %3082 = vmatprep.subr.bf16.mxu0 0
        %3083 = vmatpush1.bf16.msra.mxu0 %v3004
        %3084 = vmatprep.subr.bf16.mxu0 0
        %3085 = vmatpush1.bf16.msra.mxu0 %v3005
        %3086 = vmatprep.subr.bf16.mxu0 0
        %3087 = vmatpush1.bf16.msra.mxu0 %v3006
        %3088 = vmatprep.subr.bf16.mxu0 0
        %3089 = vmatpush1.bf16.msra.mxu0 %v3007
        %3090 = vmatprep.subr.bf16.mxu0 0
        %3091 = vmatpush1.bf16.msra.mxu0 %v3008
        %3092 = vmatprep.subr.bf16.mxu0 0
        %3093 = vmatpush1.bf16.msra.mxu0 %v3009
        %3094 = vmatprep.subr.bf16.mxu0 0
        %3095 = vmatpush1.bf16.msra.mxu0 %v3010
        %3096 = vmatprep.subr.bf16.mxu0 0
        %3097 = vmatpush1.bf16.msra.mxu0 %v3011
        %3098 = vmatprep.subr.bf16.mxu0 0
        %3099 = vmatpush1.bf16.msra.mxu0 %v3012
        %3100 = vmatprep.subr.bf16.mxu0 0
        %3101 = vmatpush1.bf16.msra.mxu0 %v3013
        %3102 = vmatprep.subr.bf16.mxu0 0
        %3103 = vmatpush1.bf16.msra.mxu0 %v3014
        %3104 = vmatprep.subr.bf16.mxu0 0
        %3105 = vmatpush1.bf16.msra.mxu0 %v3015
        %3106 = vmatprep.subr.bf16.mxu0 0
        %3107 = vmatpush1.bf16.msra.mxu0 %v3016
        %3108 = vmatprep.subr.bf16.mxu0 0
        %3109 = vmatpush1.bf16.msra.mxu0 %v3017
        %3110 = vmatprep.subr.bf16.mxu0 0
        %3111 = vmatpush1.bf16.msra.mxu0 %v3018
        %3112 = vmatprep.subr.bf16.mxu0 0
        %3113 = vmatpush1.bf16.msra.mxu0 0
        %3114 = vmatprep.mubr.bf16.mxu0 %v3035
        %3115 = vmatmul.mubr.bf16.gmra.mrb[0].mxu0 %v2518
        %v3116 = vpop.f32.mrb[0].mxu0
        %v3117 = vadd.f32 %v2818, %v3116
        %v3118 = vpop.f32.mrb[0].mxu0
        %v3119 = vpop.f32.mrb[0].mxu0
        %v3120 = vadd.f32 %v2821, %v3119
        %v3121 = vpop.f32.mrb[0].mxu0
        %3122 = vmatprep.mubr.bf16.mxu0 %v3038
        %3123 = vmatmul.mubr.bf16.gmra.mrb[0].mxu0 %v2520
        %v3124 = vpop.f32.mrb[0].mxu0
        %v3125 = vadd.f32 %v2826, %v3124
        %v3126 = vpop.f32.mrb[0].mxu0
        %v3127 = vpop.f32.mrb[0].mxu0
        %v3128 = vadd.f32 %v2829, %v3127
        %v3129 = vpop.f32.mrb[0].mxu0
        %3130 = vmatprep.mubr.bf16.mxu0 %v3041
        %3131 = vmatmul.mubr.bf16.gmra.mrb[0].mxu0 %v2522
        %v3132 = vpop.f32.mrb[0].mxu0
        %v3133 = vadd.f32 %v2834, %v3132
        %v3134 = vpop.f32.mrb[0].mxu0
        %v3135 = vpop.f32.mrb[0].mxu0
        %v3136 = vadd.f32 %v2837, %v3135
        %v3137 = vpop.f32.mrb[0].mxu0
        %3138 = vmatprep.mubr.bf16.mxu0 %v3044
        %3139 = vmatmul.mubr.bf16.gmra.mrb[0].mxu0 %v2524
        %v3140 = vpop.f32.mrb[0].mxu0
        %v3141 = vadd.f32 %v2842, %v3140
        %v3142 = vpop.f32.mrb[0].mxu0
        %v3143 = vpop.f32.mrb[0].mxu0
        %v3144 = vadd.f32 %v2845, %v3143
        %v3145 = vpop.f32.mrb[0].mxu0
        %3146 = vmatprep.mubr.bf16.mxu0 %v3047
        %3147 = vmatmul.mubr.bf16.gmra.mrb[0].mxu0 %v2526
        %v3148 = vpop.f32.mrb[0].mxu0
        %v3149 = vadd.f32 %v2850, %v3148
        %v3150 = vpop.f32.mrb[0].mxu0
        %v3151 = vpop.f32.mrb[0].mxu0
        %v3152 = vadd.f32 %v2853, %v3151
        %v3153 = vpop.f32.mrb[0].mxu0
        %3154 = vmatprep.mubr.bf16.mxu0 %v3050
        %3155 = vmatmul.mubr.bf16.gmra.mrb[0].mxu0 %v2528
        %v3156 = vpop.f32.mrb[0].mxu0
        %v3157 = vadd.f32 %v2858, %v3156
        %v3158 = vpop.f32.mrb[0].mxu0
        %v3159 = vpop.f32.mrb[0].mxu0
        %v3160 = vadd.f32 %v2861, %v3159
        %v3161 = vpop.f32.mrb[0].mxu0
        %3162 = vmatprep.mubr.bf16.mxu0 %v3053
        %3163 = vmatmul.mubr.bf16.gmra.mrb[0].mxu0 %v2530
        %v3164 = vpop.f32.mrb[0].mxu0
        %v3165 = vadd.f32 %v2866, %v3164
        %v3166 = vpop.f32.mrb[0].mxu0
        %v3167 = vpop.f32.mrb[0].mxu0
        %v3168 = vadd.f32 %v2869, %v3167
        %v3169 = vpop.f32.mrb[0].mxu0
        %3170 = vmatprep.mubr.bf16.mxu0 %v3056
        %3171 = vmatmul.mubr.bf16.gmra.mrb[0].mxu0 %v2532
        %v3172 = vpop.f32.mrb[0].mxu0
        %v3173 = vadd.f32 %v2874, %v3172
        %v3174 = vpop.f32.mrb[0].mxu0
        %v3175 = vpop.f32.mrb[0].mxu0
        %v3176 = vadd.f32 %v2877, %v3175
        %v3177 = vpop.f32.mrb[0].mxu0
        %3178 = vmatprep.mubr.bf16.mxu0 %v3059
        %3179 = vmatmul.mubr.bf16.gmra.mrb[0].mxu0 %v2534
        %v3180 = vpop.f32.mrb[0].mxu0
        %v3181 = vadd.f32 %v2882, %v3180
        %v3182 = vpop.f32.mrb[0].mxu0
        %v3183 = vpop.f32.mrb[0].mxu0
        %v3184 = vadd.f32 %v2885, %v3183
        %v3185 = vpop.f32.mrb[0].mxu0
        %3186 = vmatprep.mubr.bf16.mxu0 %v3062
        %3187 = vmatmul.mubr.bf16.gmra.mrb[0].mxu0 %v2536
        %v3188 = vpop.f32.mrb[0].mxu0
        %v3189 = vadd.f32 %v2890, %v3188
        %v3190 = vpop.f32.mrb[0].mxu0
        %v3191 = vpop.f32.mrb[0].mxu0
        %v3192 = vadd.f32 %v2893, %v3191
        %v3193 = vpop.f32.mrb[0].mxu0
        %3194 = vmatprep.mubr.bf16.mxu0 %v3065
        %3195 = vmatmul.mubr.bf16.gmra.mrb[0].mxu0 %v2538
        %v3196 = vpop.f32.mrb[0].mxu0
        %v3197 = vadd.f32 %v2898, %v3196
        %v3198 = vpop.f32.mrb[0].mxu0
        %v3199 = vpop.f32.mrb[0].mxu0
        %v3200 = vadd.f32 %v2901, %v3199
        %v3201 = vpop.f32.mrb[0].mxu0
        %3202 = vmatprep.mubr.bf16.mxu0 %v3068
        %3203 = vmatmul.mubr.bf16.gmra.mrb[0].mxu0 %v2540
        %v3204 = vpop.f32.mrb[0].mxu0
        %v3205 = vadd.f32 %v2906, %v3204
        %v3206 = vpop.f32.mrb[0].mxu0
        %v3207 = vpop.f32.mrb[0].mxu0
        %v3208 = vadd.f32 %v2909, %v3207
        %v3209 = vpop.f32.mrb[0].mxu0
        %3210 = vmatprep.mubr.bf16.mxu0 %v3071
        %3211 = vmatmul.mubr.bf16.gmra.mrb[0].mxu0 %v2542
        %v3212 = vpop.f32.mrb[0].mxu0
        %v3213 = vadd.f32 %v2914, %v3212
        %v3214 = vpop.f32.mrb[0].mxu0
        %v3215 = vpop.f32.mrb[0].mxu0
        %v3216 = vadd.f32 %v2917, %v3215
        %v3217 = vpop.f32.mrb[0].mxu0
        %3218 = vmatprep.mubr.bf16.mxu0 %v3074
        %3219 = vmatmul.mubr.bf16.gmra.mrb[0].mxu0 %v2544
        %v3220 = vpop.f32.mrb[0].mxu0
        %v3221 = vadd.f32 %v2922, %v3220
        %v3222 = vpop.f32.mrb[0].mxu0
        %v3223 = vpop.f32.mrb[0].mxu0
        %v3224 = vadd.f32 %v2925, %v3223
        %v3225 = vpop.f32.mrb[0].mxu0
        %3226 = vmatprep.mubr.bf16.mxu0 %v3077
        %3227 = vmatmul.mubr.bf16.gmra.mrb[0].mxu0 %v2546
        %v3228 = vpop.f32.mrb[0].mxu0
        %v3229 = vadd.f32 %v2930, %v3228
        %v3230 = vpop.f32.mrb[0].mxu0
        %v3231 = vpop.f32.mrb[0].mxu0
        %v3232 = vadd.f32 %v2933, %v3231
        %v3233 = vpop.f32.mrb[0].mxu0
        %3234 = vmatprep.mubr.bf16.mxu0 %v3080
        %3235 = vmatmul.mubr.bf16.gmra.mrb[0].mxu0 %v2548
        %v3236 = vpop.f32.mrb[0].mxu0
        %v3237 = vadd.f32 %v2938, %v3236
        %v3238 = vpop.f32.mrb[0].mxu0
        %v3239 = vpop.f32.mrb[0].mxu0
        %v3240 = vadd.f32 %v2941, %v3239
        %v3241 = vpop.f32.mrb[0].mxu0
        %3242 = vdwg.mxu0
        %s3243 = scalar_lea.vmem [#allocation2], 32
        %v3244 = vld [vmem:[%s3243] sm:$0xff]
        %v3245 = vld [vmem:[%s3243 + $0x8] sm:$0xff]
        %v3246 = vld [vmem:[%s3243 + $0x10] sm:$0xff]
        %v3247 = vld [vmem:[%s3243 + $0x18] sm:$0xff]
        %v3248 = vld [vmem:[%s3243 + $0x20] sm:$0xff]
        %v3249 = vld [vmem:[%s3243 + $0x28] sm:$0xff]
        %v3250 = vld [vmem:[%s3243 + $0x30] sm:$0xff]
        %v3251 = vld [vmem:[%s3243 + $0x38] sm:$0xff]
        %v3252 = vld [vmem:[%s3243 + $0x40] sm:$0xff]
        %v3253 = vld [vmem:[%s3243 + $0x48] sm:$0xff]
        %v3254 = vld [vmem:[%s3243 + $0x50] sm:$0xff]
        %v3255 = vld [vmem:[%s3243 + $0x58] sm:$0xff]
        %v3256 = vld [vmem:[%s3243 + $0x60] sm:$0xff]
        %v3257 = vld [vmem:[%s3243 + $0x68] sm:$0xff]
        %v3258 = vld [vmem:[%s3243 + $0x70] sm:$0xff]
        %v3259 = vld [vmem:[%s3243 + $0x78] sm:$0xff]
        %v3260 = vld [vmem:[%s3243 + $0x80] sm:$0xff]
        %v3261 = vld [vmem:[%s3243 + $0x88] sm:$0xff]
        %v3262 = vld [vmem:[%s3243 + $0x90] sm:$0xff]
        %v3263 = vld [vmem:[%s3243 + $0x98] sm:$0xff]
        %v3264 = vld [vmem:[%s3243 + $0xa0] sm:$0xff]
        %v3265 = vld [vmem:[%s3243 + $0xa8] sm:$0xff]
        %v3266 = vld [vmem:[%s3243 + $0xb0] sm:$0xff]
        %v3267 = vld [vmem:[%s3243 + $0xb8] sm:$0xff]
        %v3268 = vld [vmem:[%s3243 + $0xc0] sm:$0xff]
        %v3269 = vld [vmem:[%s3243 + $0xc8] sm:$0xff]
        %v3270 = vld [vmem:[%s3243 + $0xd0] sm:$0xff]
        %v3271 = vld [vmem:[%s3243 + $0xd8] sm:$0xff]
        %v3272 = vld [vmem:[%s3243 + $0xe0] sm:$0xff]
        %v3273 = vld [vmem:[%s3243 + $0xe8] sm:$0xff]
        %v3274 = vld [vmem:[%s3243 + $0xf0] sm:$0xff]
        %v3275 = vld [vmem:[%s3243 + $0xf8] sm:$0xff]
        %s3276 = scalar_lea.vmem %s2, 240
        %v3277 = vld [vmem:[%s3276] sm:$0xf]
        %v3278 = vld [vmem:[%s3276 + $0x4] sm:$0xf]
        %v3279 = vld [vmem:[%s3276 + $0x8] sm:$0xf]
        %v3280 = vld [vmem:[%s3276 + $0xc] sm:$0xf]
        %v3281 = vld [vmem:[%s3276 + $0x10] sm:$0xf]
        %v3282 = vld [vmem:[%s3276 + $0x14] sm:$0xf]
        %v3283 = vld [vmem:[%s3276 + $0x18] sm:$0xf]
        %v3284 = vld [vmem:[%s3276 + $0x1c] sm:$0xf]
        %v3285 = vld [vmem:[%s3276 + $0x20] sm:$0xf]
        %v3286 = vld [vmem:[%s3276 + $0x24] sm:$0xf]
        %v3287 = vld [vmem:[%s3276 + $0x28] sm:$0xf]
        %v3288 = vld [vmem:[%s3276 + $0x2c] sm:$0xf]
        %v3289 = vld [vmem:[%s3276 + $0x30] sm:$0xf]
        %v3290 = vld [vmem:[%s3276 + $0x34] sm:$0xf]
        %v3291 = vld [vmem:[%s3276 + $0x38] sm:$0xf]
        %v3292 = vld [vmem:[%s3276 + $0x3c] sm:$0xf]
        %v3293 = vld [vmem:[%s3276 + $0x40] sm:$0xf]
        %v3294 = vld [vmem:[%s3276 + $0x44] sm:$0xf]
        %v3295 = vld [vmem:[%s3276 + $0x48] sm:$0xf]
        %v3296 = vld [vmem:[%s3276 + $0x4c] sm:$0xf]
        %v3297 = vld [vmem:[%s3276 + $0x50] sm:$0xf]
        %v3298 = vld [vmem:[%s3276 + $0x54] sm:$0xf]
        %v3299 = vld [vmem:[%s3276 + $0x58] sm:$0xf]
        %v3300 = vld [vmem:[%s3276 + $0x5c] sm:$0xf]
        %v3301 = vld [vmem:[%s3276 + $0x60] sm:$0xf]
        %v3302 = vld [vmem:[%s3276 + $0x64] sm:$0xf]
        %v3303 = vld [vmem:[%s3276 + $0x68] sm:$0xf]
        %v3304 = vld [vmem:[%s3276 + $0x6c] sm:$0xf]
        %v3305 = vld [vmem:[%s3276 + $0x70] sm:$0xf]
        %v3306 = vld [vmem:[%s3276 + $0x74] sm:$0xf]
        %v3337 = vunpack.c.l.b16 %v3277
        %v3338 = vunpack.c.l.b16 %v3278
        %v3339 = vunpack.c.l.b16 %v3279
        %v3340 = vunpack.c.l.b16 %v3280
        %v3341 = vunpack.c.l.b16 %v3281
        %v3342 = vunpack.c.l.b16 %v3282
        %v3343 = vunpack.c.l.b16 %v3283
        %v3344 = vunpack.c.l.b16 %v3284
        %v3345 = vunpack.c.l.b16 %v3285
        %v3346 = vunpack.c.l.b16 %v3286
        %v3347 = vunpack.c.l.b16 %v3287
        %v3348 = vunpack.c.l.b16 %v3288
        %v3349 = vunpack.c.l.b16 %v3289
        %v3350 = vunpack.c.l.b16 %v3290
        %v3351 = vunpack.c.l.b16 %v3291
        %v3352 = vunpack.c.l.b16 %v3292
        %v3353 = vunpack.c.l.b16 %v3293
        %v3354 = vunpack.c.l.b16 %v3294
        %v3355 = vunpack.c.l.b16 %v3295
        %v3356 = vunpack.c.l.b16 %v3296
        %v3357 = vunpack.c.l.b16 %v3297
        %v3358 = vunpack.c.l.b16 %v3298
        %v3359 = vunpack.c.l.b16 %v3299
        %v3360 = vunpack.c.l.b16 %v3300
        %v3361 = vunpack.c.l.b16 %v3301
        %v3362 = vunpack.c.l.b16 %v3302
        %v3363 = vunpack.c.l.b16 %v3303
        %v3364 = vunpack.c.l.b16 %v3304
        %v3365 = vunpack.c.l.b16 %v3305
        %v3366 = vunpack.c.l.b16 %v3306
        %v3367 = vpack.c.b16 %v3338, %v3337
        %v3368 = vpack.c.b16 %v3340, %v3339
        %v3369 = vpack.c.b16 %v3342, %v3341
        %v3370 = vpack.c.b16 %v3344, %v3343
        %v3371 = vpack.c.b16 %v3346, %v3345
        %v3372 = vpack.c.b16 %v3348, %v3347
        %v3373 = vpack.c.b16 %v3350, %v3349
        %v3374 = vpack.c.b16 %v3352, %v3351
        %v3375 = vpack.c.b16 %v3354, %v3353
        %v3376 = vpack.c.b16 %v3356, %v3355
        %v3377 = vpack.c.b16 %v3358, %v3357
        %v3378 = vpack.c.b16 %v3360, %v3359
        %v3379 = vpack.c.b16 %v3362, %v3361
        %v3380 = vpack.c.b16 %v3364, %v3363
        %v3381 = vpack.c.b16 %v3366, %v3365
        %v3398 = vsel %vm2734, %v3245, 0
        %v3401 = vsel %vm2734, %v3247, 0
        %v3404 = vsel %vm2734, %v3249, 0
        %v3407 = vsel %vm2734, %v3251, 0
        %v3410 = vsel %vm2734, %v3253, 0
        %v3413 = vsel %vm2734, %v3255, 0
        %v3416 = vsel %vm2734, %v3257, 0
        %v3419 = vsel %vm2734, %v3259, 0
        %v3422 = vsel %vm2734, %v3261, 0
        %v3425 = vsel %vm2734, %v3263, 0
        %v3428 = vsel %vm2734, %v3265, 0
        %v3431 = vsel %vm2734, %v3267, 0
        %v3434 = vsel %vm2734, %v3269, 0
        %v3437 = vsel %vm2734, %v3271, 0
        %v3440 = vsel %vm2734, %v3273, 0
        %v3443 = vsel %vm2734, %v3275, 0
        %3445 = vmatprep.subr.bf16.mxu0 0
        %3446 = vmatpush1.bf16.msra.mxu0 %v3367
        %3447 = vmatprep.subr.bf16.mxu0 0
        %3448 = vmatpush1.bf16.msra.mxu0 %v3368
        %3449 = vmatprep.subr.bf16.mxu0 0
        %3450 = vmatpush1.bf16.msra.mxu0 %v3369
        %3451 = vmatprep.subr.bf16.mxu0 0
        %3452 = vmatpush1.bf16.msra.mxu0 %v3370
        %3453 = vmatprep.subr.bf16.mxu0 0
        %3454 = vmatpush1.bf16.msra.mxu0 %v3371
        %3455 = vmatprep.subr.bf16.mxu0 0
        %3456 = vmatpush1.bf16.msra.mxu0 %v3372
        %3457 = vmatprep.subr.bf16.mxu0 0
        %3458 = vmatpush1.bf16.msra.mxu0 %v3373
        %3459 = vmatprep.subr.bf16.mxu0 0
        %3460 = vmatpush1.bf16.msra.mxu0 %v3374
        %3461 = vmatprep.subr.bf16.mxu0 0
        %3462 = vmatpush1.bf16.msra.mxu0 %v3375
        %3463 = vmatprep.subr.bf16.mxu0 0
        %3464 = vmatpush1.bf16.msra.mxu0 %v3376
        %3465 = vmatprep.subr.bf16.mxu0 0
        %3466 = vmatpush1.bf16.msra.mxu0 %v3377
        %3467 = vmatprep.subr.bf16.mxu0 0
        %3468 = vmatpush1.bf16.msra.mxu0 %v3378
        %3469 = vmatprep.subr.bf16.mxu0 0
        %3470 = vmatpush1.bf16.msra.mxu0 %v3379
        %3471 = vmatprep.subr.bf16.mxu0 0
        %3472 = vmatpush1.bf16.msra.mxu0 %v3380
        %3473 = vmatprep.subr.bf16.mxu0 0
        %3474 = vmatpush1.bf16.msra.mxu0 %v3381
        %3475 = vmatprep.subr.bf16.mxu0 0
        %3476 = vmatpush1.bf16.msra.mxu0 0
        %3477 = vmatprep.mubr.bf16.mxu0 %v3398
        %3478 = vmatmul.mubr.bf16.gmra.mrb[0].mxu0 %v3244
        %v3479 = vpop.f32.mrb[0].mxu0
        %v3480 = vadd.f32 0.0, %v3479
        %v3481 = vpop.f32.mrb[0].mxu0
        %v3482 = vpop.f32.mrb[0].mxu0
        %v3483 = vadd.f32 0.0, %v3482
        %v3484 = vpop.f32.mrb[0].mxu0
        %3485 = vmatprep.mubr.bf16.mxu0 %v3401
        %3486 = vmatmul.mubr.bf16.gmra.mrb[0].mxu0 %v3246
        %v3487 = vpop.f32.mrb[0].mxu0
        %v3488 = vadd.f32 0.0, %v3487
        %v3489 = vpop.f32.mrb[0].mxu0
        %v3490 = vpop.f32.mrb[0].mxu0
        %v3491 = vadd.f32 0.0, %v3490
        %v3492 = vpop.f32.mrb[0].mxu0
        %3493 = vmatprep.mubr.bf16.mxu0 %v3404
        %3494 = vmatmul.mubr.bf16.gmra.mrb[0].mxu0 %v3248
        %v3495 = vpop.f32.mrb[0].mxu0
        %v3496 = vadd.f32 0.0, %v3495
        %v3497 = vpop.f32.mrb[0].mxu0
        %v3498 = vpop.f32.mrb[0].mxu0
        %v3499 = vadd.f32 0.0, %v3498
        %v3500 = vpop.f32.mrb[0].mxu0
        %3501 = vmatprep.mubr.bf16.mxu0 %v3407
        %3502 = vmatmul.mubr.bf16.gmra.mrb[0].mxu0 %v3250
        %v3503 = vpop.f32.mrb[0].mxu0
        %v3504 = vadd.f32 0.0, %v3503
        %v3505 = vpop.f32.mrb[0].mxu0
        %v3506 = vpop.f32.mrb[0].mxu0
        %v3507 = vadd.f32 0.0, %v3506
        %v3508 = vpop.f32.mrb[0].mxu0
        %3509 = vmatprep.mubr.bf16.mxu0 %v3410
        %3510 = vmatmul.mubr.bf16.gmra.mrb[0].mxu0 %v3252
        %v3511 = vpop.f32.mrb[0].mxu0
        %v3512 = vadd.f32 0.0, %v3511
        %v3513 = vpop.f32.mrb[0].mxu0
        %v3514 = vpop.f32.mrb[0].mxu0
        %v3515 = vadd.f32 0.0, %v3514
        %v3516 = vpop.f32.mrb[0].mxu0
        %3517 = vmatprep.mubr.bf16.mxu0 %v3413
        %3518 = vmatmul.mubr.bf16.gmra.mrb[0].mxu0 %v3254
        %v3519 = vpop.f32.mrb[0].mxu0
        %v3520 = vadd.f32 0.0, %v3519
        %v3521 = vpop.f32.mrb[0].mxu0
        %v3522 = vpop.f32.mrb[0].mxu0
        %v3523 = vadd.f32 0.0, %v3522
        %v3524 = vpop.f32.mrb[0].mxu0
        %3525 = vmatprep.mubr.bf16.mxu0 %v3416
        %3526 = vmatmul.mubr.bf16.gmra.mrb[0].mxu0 %v3256
        %v3527 = vpop.f32.mrb[0].mxu0
        %v3528 = vadd.f32 0.0, %v3527
        %v3529 = vpop.f32.mrb[0].mxu0
        %v3530 = vpop.f32.mrb[0].mxu0
        %v3531 = vadd.f32 0.0, %v3530
        %v3532 = vpop.f32.mrb[0].mxu0
        %3533 = vmatprep.mubr.bf16.mxu0 %v3419
        %3534 = vmatmul.mubr.bf16.gmra.mrb[0].mxu0 %v3258
        %v3535 = vpop.f32.mrb[0].mxu0
        %v3536 = vadd.f32 0.0, %v3535
        %v3537 = vpop.f32.mrb[0].mxu0
        %v3538 = vpop.f32.mrb[0].mxu0
        %v3539 = vadd.f32 0.0, %v3538
        %v3540 = vpop.f32.mrb[0].mxu0
        %3541 = vmatprep.mubr.bf16.mxu0 %v3422
        %3542 = vmatmul.mubr.bf16.gmra.mrb[0].mxu0 %v3260
        %v3543 = vpop.f32.mrb[0].mxu0
        %v3544 = vadd.f32 0.0, %v3543
        %v3545 = vpop.f32.mrb[0].mxu0
        %v3546 = vpop.f32.mrb[0].mxu0
        %v3547 = vadd.f32 0.0, %v3546
        %v3548 = vpop.f32.mrb[0].mxu0
        %3549 = vmatprep.mubr.bf16.mxu0 %v3425
        %3550 = vmatmul.mubr.bf16.gmra.mrb[0].mxu0 %v3262
        %v3551 = vpop.f32.mrb[0].mxu0
        %v3552 = vadd.f32 0.0, %v3551
        %v3553 = vpop.f32.mrb[0].mxu0
        %v3554 = vpop.f32.mrb[0].mxu0
        %v3555 = vadd.f32 0.0, %v3554
        %v3556 = vpop.f32.mrb[0].mxu0
        %3557 = vmatprep.mubr.bf16.mxu0 %v3428
        %3558 = vmatmul.mubr.bf16.gmra.mrb[0].mxu0 %v3264
        %v3559 = vpop.f32.mrb[0].mxu0
        %v3560 = vadd.f32 0.0, %v3559
        %v3561 = vpop.f32.mrb[0].mxu0
        %v3562 = vpop.f32.mrb[0].mxu0
        %v3563 = vadd.f32 0.0, %v3562
        %v3564 = vpop.f32.mrb[0].mxu0
        %3565 = vmatprep.mubr.bf16.mxu0 %v3431
        %3566 = vmatmul.mubr.bf16.gmra.mrb[0].mxu0 %v3266
        %v3567 = vpop.f32.mrb[0].mxu0
        %v3568 = vadd.f32 0.0, %v3567
        %v3569 = vpop.f32.mrb[0].mxu0
        %v3570 = vpop.f32.mrb[0].mxu0
        %v3571 = vadd.f32 0.0, %v3570
        %v3572 = vpop.f32.mrb[0].mxu0
        %3573 = vmatprep.mubr.bf16.mxu0 %v3434
        %3574 = vmatmul.mubr.bf16.gmra.mrb[0].mxu0 %v3268
        %v3575 = vpop.f32.mrb[0].mxu0
        %v3576 = vadd.f32 0.0, %v3575
        %v3577 = vpop.f32.mrb[0].mxu0
        %v3578 = vpop.f32.mrb[0].mxu0
        %v3579 = vadd.f32 0.0, %v3578
        %v3580 = vpop.f32.mrb[0].mxu0
        %3581 = vmatprep.mubr.bf16.mxu0 %v3437
        %3582 = vmatmul.mubr.bf16.gmra.mrb[0].mxu0 %v3270
        %v3583 = vpop.f32.mrb[0].mxu0
        %v3584 = vadd.f32 0.0, %v3583
        %v3585 = vpop.f32.mrb[0].mxu0
        %v3586 = vpop.f32.mrb[0].mxu0
        %v3587 = vadd.f32 0.0, %v3586
        %v3588 = vpop.f32.mrb[0].mxu0
        %3589 = vmatprep.mubr.bf16.mxu0 %v3440
        %3590 = vmatmul.mubr.bf16.gmra.mrb[0].mxu0 %v3272
        %v3591 = vpop.f32.mrb[0].mxu0
        %v3592 = vadd.f32 0.0, %v3591
        %v3593 = vpop.f32.mrb[0].mxu0
        %v3594 = vpop.f32.mrb[0].mxu0
        %v3595 = vadd.f32 0.0, %v3594
        %v3596 = vpop.f32.mrb[0].mxu0
        %3597 = vmatprep.mubr.bf16.mxu0 %v3443
        %3598 = vmatmul.mubr.bf16.gmra.mrb[0].mxu0 %v3274
        %v3599 = vpop.f32.mrb[0].mxu0
        %v3600 = vadd.f32 0.0, %v3599
        %v3601 = vpop.f32.mrb[0].mxu0
        %v3602 = vpop.f32.mrb[0].mxu0
        %v3603 = vadd.f32 0.0, %v3602
        %v3604 = vpop.f32.mrb[0].mxu0
        %3605 = vdwg.mxu0
        %v3606 = vadd.f32 %v3117, %v3480
        %v3607 = vadd.f32 %v3120, %v3483
        %v3608 = vadd.f32 %v3125, %v3488
        %v3609 = vadd.f32 %v3128, %v3491
        %v3610 = vadd.f32 %v3133, %v3496
        %v3611 = vadd.f32 %v3136, %v3499
        %v3612 = vadd.f32 %v3141, %v3504
        %v3613 = vadd.f32 %v3144, %v3507
        %v3614 = vadd.f32 %v3149, %v3512
        %v3615 = vadd.f32 %v3152, %v3515
        %v3616 = vadd.f32 %v3157, %v3520
        %v3617 = vadd.f32 %v3160, %v3523
        %v3618 = vadd.f32 %v3165, %v3528
        %v3619 = vadd.f32 %v3168, %v3531
        %v3620 = vadd.f32 %v3173, %v3536
        %v3621 = vadd.f32 %v3176, %v3539
        %v3622 = vadd.f32 %v3181, %v3544
        %v3623 = vadd.f32 %v3184, %v3547
        %v3624 = vadd.f32 %v3189, %v3552
        %v3625 = vadd.f32 %v3192, %v3555
        %v3626 = vadd.f32 %v3197, %v3560
        %v3627 = vadd.f32 %v3200, %v3563
        %v3628 = vadd.f32 %v3205, %v3568
        %v3629 = vadd.f32 %v3208, %v3571
        %v3630 = vadd.f32 %v3213, %v3576
        %v3631 = vadd.f32 %v3216, %v3579
        %v3632 = vadd.f32 %v3221, %v3584
        %v3633 = vadd.f32 %v3224, %v3587
        %v3634 = vadd.f32 %v3229, %v3592
        %v3635 = vadd.f32 %v3232, %v3595
        %v3636 = vadd.f32 %v3237, %v3600
        %v3637 = vadd.f32 %v3240, %v3603
        %s3638 = scalar_lea.vmem [#allocation2], 48
        %v3639 = vld [vmem:[%s3638] sm:$0xff]
        %v3640 = vld [vmem:[%s3638 + $0x8] sm:$0xff]
        %v3641 = vld [vmem:[%s3638 + $0x10] sm:$0xff]
        %v3642 = vld [vmem:[%s3638 + $0x18] sm:$0xff]
        %v3643 = vld [vmem:[%s3638 + $0x20] sm:$0xff]
        %v3644 = vld [vmem:[%s3638 + $0x28] sm:$0xff]
        %v3645 = vld [vmem:[%s3638 + $0x30] sm:$0xff]
        %v3646 = vld [vmem:[%s3638 + $0x38] sm:$0xff]
        %v3647 = vld [vmem:[%s3638 + $0x40] sm:$0xff]
        %v3648 = vld [vmem:[%s3638 + $0x48] sm:$0xff]
        %v3649 = vld [vmem:[%s3638 + $0x50] sm:$0xff]
        %v3650 = vld [vmem:[%s3638 + $0x58] sm:$0xff]
        %v3651 = vld [vmem:[%s3638 + $0x60] sm:$0xff]
        %v3652 = vld [vmem:[%s3638 + $0x68] sm:$0xff]
        %v3653 = vld [vmem:[%s3638 + $0x70] sm:$0xff]
        %v3654 = vld [vmem:[%s3638 + $0x78] sm:$0xff]
        %v3655 = vld [vmem:[%s3638 + $0x80] sm:$0xff]
        %v3656 = vld [vmem:[%s3638 + $0x88] sm:$0xff]
        %v3657 = vld [vmem:[%s3638 + $0x90] sm:$0xff]
        %v3658 = vld [vmem:[%s3638 + $0x98] sm:$0xff]
        %v3659 = vld [vmem:[%s3638 + $0xa0] sm:$0xff]
        %v3660 = vld [vmem:[%s3638 + $0xa8] sm:$0xff]
        %v3661 = vld [vmem:[%s3638 + $0xb0] sm:$0xff]
        %v3662 = vld [vmem:[%s3638 + $0xb8] sm:$0xff]
        %v3663 = vld [vmem:[%s3638 + $0xc0] sm:$0xff]
        %v3664 = vld [vmem:[%s3638 + $0xc8] sm:$0xff]
        %v3665 = vld [vmem:[%s3638 + $0xd0] sm:$0xff]
        %v3666 = vld [vmem:[%s3638 + $0xd8] sm:$0xff]
        %v3667 = vld [vmem:[%s3638 + $0xe0] sm:$0xff]
        %v3668 = vld [vmem:[%s3638 + $0xe8] sm:$0xff]
        %v3669 = vld [vmem:[%s3638 + $0xf0] sm:$0xff]
        %v3670 = vld [vmem:[%s3638 + $0xf8] sm:$0xff]
        %s3671 = scalar_lea.vmem %s2, 360
        %v3672 = vld [vmem:[%s3671] sm:$0xf]
        %v3673 = vld [vmem:[%s3671 + $0x4] sm:$0xf]
        %v3674 = vld [vmem:[%s3671 + $0x8] sm:$0xf]
        %v3675 = vld [vmem:[%s3671 + $0xc] sm:$0xf]
        %v3676 = vld [vmem:[%s3671 + $0x10] sm:$0xf]
        %v3677 = vld [vmem:[%s3671 + $0x14] sm:$0xf]
        %v3678 = vld [vmem:[%s3671 + $0x18] sm:$0xf]
        %v3679 = vld [vmem:[%s3671 + $0x1c] sm:$0xf]
        %v3680 = vld [vmem:[%s3671 + $0x20] sm:$0xf]
        %v3681 = vld [vmem:[%s3671 + $0x24] sm:$0xf]
        %v3682 = vld [vmem:[%s3671 + $0x28] sm:$0xf]
        %v3683 = vld [vmem:[%s3671 + $0x2c] sm:$0xf]
        %v3684 = vld [vmem:[%s3671 + $0x30] sm:$0xf]
        %v3685 = vld [vmem:[%s3671 + $0x34] sm:$0xf]
        %v3686 = vld [vmem:[%s3671 + $0x38] sm:$0xf]
        %v3687 = vld [vmem:[%s3671 + $0x3c] sm:$0xf]
        %v3688 = vld [vmem:[%s3671 + $0x40] sm:$0xf]
        %v3689 = vld [vmem:[%s3671 + $0x44] sm:$0xf]
        %v3690 = vld [vmem:[%s3671 + $0x48] sm:$0xf]
        %v3691 = vld [vmem:[%s3671 + $0x4c] sm:$0xf]
        %v3692 = vld [vmem:[%s3671 + $0x50] sm:$0xf]
        %v3693 = vld [vmem:[%s3671 + $0x54] sm:$0xf]
        %v3694 = vld [vmem:[%s3671 + $0x58] sm:$0xf]
        %v3695 = vld [vmem:[%s3671 + $0x5c] sm:$0xf]
        %v3696 = vld [vmem:[%s3671 + $0x60] sm:$0xf]
        %v3697 = vld [vmem:[%s3671 + $0x64] sm:$0xf]
        %v3698 = vld [vmem:[%s3671 + $0x68] sm:$0xf]
        %v3699 = vld [vmem:[%s3671 + $0x6c] sm:$0xf]
        %v3700 = vld [vmem:[%s3671 + $0x70] sm:$0xf]
        %v3701 = vld [vmem:[%s3671 + $0x74] sm:$0xf]
        %v3732 = vunpack.c.l.b16 %v3672
        %v3733 = vunpack.c.l.b16 %v3673
        %v3734 = vunpack.c.l.b16 %v3674
        %v3735 = vunpack.c.l.b16 %v3675
        %v3736 = vunpack.c.l.b16 %v3676
        %v3737 = vunpack.c.l.b16 %v3677
        %v3738 = vunpack.c.l.b16 %v3678
        %v3739 = vunpack.c.l.b16 %v3679
        %v3740 = vunpack.c.l.b16 %v3680
        %v3741 = vunpack.c.l.b16 %v3681
        %v3742 = vunpack.c.l.b16 %v3682
        %v3743 = vunpack.c.l.b16 %v3683
        %v3744 = vunpack.c.l.b16 %v3684
        %v3745 = vunpack.c.l.b16 %v3685
        %v3746 = vunpack.c.l.b16 %v3686
        %v3747 = vunpack.c.l.b16 %v3687
        %v3748 = vunpack.c.l.b16 %v3688
        %v3749 = vunpack.c.l.b16 %v3689
        %v3750 = vunpack.c.l.b16 %v3690
        %v3751 = vunpack.c.l.b16 %v3691
        %v3752 = vunpack.c.l.b16 %v3692
        %v3753 = vunpack.c.l.b16 %v3693
        %v3754 = vunpack.c.l.b16 %v3694
        %v3755 = vunpack.c.l.b16 %v3695
        %v3756 = vunpack.c.l.b16 %v3696
        %v3757 = vunpack.c.l.b16 %v3697
        %v3758 = vunpack.c.l.b16 %v3698
        %v3759 = vunpack.c.l.b16 %v3699
        %v3760 = vunpack.c.l.b16 %v3700
        %v3761 = vunpack.c.l.b16 %v3701
        %v3762 = vpack.c.b16 %v3733, %v3732
        %v3763 = vpack.c.b16 %v3735, %v3734
        %v3764 = vpack.c.b16 %v3737, %v3736
        %v3765 = vpack.c.b16 %v3739, %v3738
        %v3766 = vpack.c.b16 %v3741, %v3740
        %v3767 = vpack.c.b16 %v3743, %v3742
        %v3768 = vpack.c.b16 %v3745, %v3744
        %v3769 = vpack.c.b16 %v3747, %v3746
        %v3770 = vpack.c.b16 %v3749, %v3748
        %v3771 = vpack.c.b16 %v3751, %v3750
        %v3772 = vpack.c.b16 %v3753, %v3752
        %v3773 = vpack.c.b16 %v3755, %v3754
        %v3774 = vpack.c.b16 %v3757, %v3756
        %v3775 = vpack.c.b16 %v3759, %v3758
        %v3776 = vpack.c.b16 %v3761, %v3760
        %v3793 = vsel %vm2734, %v3640, 0
        %v3796 = vsel %vm2734, %v3642, 0
        %v3799 = vsel %vm2734, %v3644, 0
        %v3802 = vsel %vm2734, %v3646, 0
        %v3805 = vsel %vm2734, %v3648, 0
        %v3808 = vsel %vm2734, %v3650, 0
        %v3811 = vsel %vm2734, %v3652, 0
        %v3814 = vsel %vm2734, %v3654, 0
        %v3817 = vsel %vm2734, %v3656, 0
        %v3820 = vsel %vm2734, %v3658, 0
        %v3823 = vsel %vm2734, %v3660, 0
        %v3826 = vsel %vm2734, %v3662, 0
        %v3829 = vsel %vm2734, %v3664, 0
        %v3832 = vsel %vm2734, %v3666, 0
        %v3835 = vsel %vm2734, %v3668, 0
        %v3838 = vsel %vm2734, %v3670, 0
        %3840 = vmatprep.subr.bf16.mxu0 0
        %3841 = vmatpush1.bf16.msra.mxu0 %v3762
        %3842 = vmatprep.subr.bf16.mxu0 0
        %3843 = vmatpush1.bf16.msra.mxu0 %v3763
        %3844 = vmatprep.subr.bf16.mxu0 0
        %3845 = vmatpush1.bf16.msra.mxu0 %v3764
        %3846 = vmatprep.subr.bf16.mxu0 0
        %3847 = vmatpush1.bf16.msra.mxu0 %v3765
        %3848 = vmatprep.subr.bf16.mxu0 0
        %3849 = vmatpush1.bf16.msra.mxu0 %v3766
        %3850 = vmatprep.subr.bf16.mxu0 0
        %3851 = vmatpush1.bf16.msra.mxu0 %v3767
        %3852 = vmatprep.subr.bf16.mxu0 0
        %3853 = vmatpush1.bf16.msra.mxu0 %v3768
        %3854 = vmatprep.subr.bf16.mxu0 0
        %3855 = vmatpush1.bf16.msra.mxu0 %v3769
        %3856 = vmatprep.subr.bf16.mxu0 0
        %3857 = vmatpush1.bf16.msra.mxu0 %v3770
        %3858 = vmatprep.subr.bf16.mxu0 0
        %3859 = vmatpush1.bf16.msra.mxu0 %v3771
        %3860 = vmatprep.subr.bf16.mxu0 0
        %3861 = vmatpush1.bf16.msra.mxu0 %v3772
        %3862 = vmatprep.subr.bf16.mxu0 0
        %3863 = vmatpush1.bf16.msra.mxu0 %v3773
        %3864 = vmatprep.subr.bf16.mxu0 0
        %3865 = vmatpush1.bf16.msra.mxu0 %v3774
        %3866 = vmatprep.subr.bf16.mxu0 0
        %3867 = vmatpush1.bf16.msra.mxu0 %v3775
        %3868 = vmatprep.subr.bf16.mxu0 0
        %3869 = vmatpush1.bf16.msra.mxu0 %v3776
        %3870 = vmatprep.subr.bf16.mxu0 0
        %3871 = vmatpush1.bf16.msra.mxu0 0
        %3872 = vmatprep.mubr.bf16.mxu0 %v3793
        %3873 = vmatmul.mubr.bf16.gmra.mrb[0].mxu0 %v3639
        %v3874 = vpop.f32.mrb[0].mxu0
        %v3875 = vadd.f32 0.0, %v3874
        %v3876 = vpop.f32.mrb[0].mxu0
        %v3877 = vpop.f32.mrb[0].mxu0
        %v3878 = vadd.f32 0.0, %v3877
        %v3879 = vpop.f32.mrb[0].mxu0
        %3880 = vmatprep.mubr.bf16.mxu0 %v3796
        %3881 = vmatmul.mubr.bf16.gmra.mrb[0].mxu0 %v3641
        %v3882 = vpop.f32.mrb[0].mxu0
        %v3883 = vadd.f32 0.0, %v3882
        %v3884 = vpop.f32.mrb[0].mxu0
        %v3885 = vpop.f32.mrb[0].mxu0
        %v3886 = vadd.f32 0.0, %v3885
        %v3887 = vpop.f32.mrb[0].mxu0
        %3888 = vmatprep.mubr.bf16.mxu0 %v3799
        %3889 = vmatmul.mubr.bf16.gmra.mrb[0].mxu0 %v3643
        %v3890 = vpop.f32.mrb[0].mxu0
        %v3891 = vadd.f32 0.0, %v3890
        %v3892 = vpop.f32.mrb[0].mxu0
        %v3893 = vpop.f32.mrb[0].mxu0
        %v3894 = vadd.f32 0.0, %v3893
        %v3895 = vpop.f32.mrb[0].mxu0
        %3896 = vmatprep.mubr.bf16.mxu0 %v3802
        %3897 = vmatmul.mubr.bf16.gmra.mrb[0].mxu0 %v3645
        %v3898 = vpop.f32.mrb[0].mxu0
        %v3899 = vadd.f32 0.0, %v3898
        %v3900 = vpop.f32.mrb[0].mxu0
        %v3901 = vpop.f32.mrb[0].mxu0
        %v3902 = vadd.f32 0.0, %v3901
        %v3903 = vpop.f32.mrb[0].mxu0
        %3904 = vmatprep.mubr.bf16.mxu0 %v3805
        %3905 = vmatmul.mubr.bf16.gmra.mrb[0].mxu0 %v3647
        %v3906 = vpop.f32.mrb[0].mxu0
        %v3907 = vadd.f32 0.0, %v3906
        %v3908 = vpop.f32.mrb[0].mxu0
        %v3909 = vpop.f32.mrb[0].mxu0
        %v3910 = vadd.f32 0.0, %v3909
        %v3911 = vpop.f32.mrb[0].mxu0
        %3912 = vmatprep.mubr.bf16.mxu0 %v3808
        %3913 = vmatmul.mubr.bf16.gmra.mrb[0].mxu0 %v3649
        %v3914 = vpop.f32.mrb[0].mxu0
        %v3915 = vadd.f32 0.0, %v3914
        %v3916 = vpop.f32.mrb[0].mxu0
        %v3917 = vpop.f32.mrb[0].mxu0
        %v3918 = vadd.f32 0.0, %v3917
        %v3919 = vpop.f32.mrb[0].mxu0
        %3920 = vmatprep.mubr.bf16.mxu0 %v3811
        %3921 = vmatmul.mubr.bf16.gmra.mrb[0].mxu0 %v3651
        %v3922 = vpop.f32.mrb[0].mxu0
        %v3923 = vadd.f32 0.0, %v3922
        %v3924 = vpop.f32.mrb[0].mxu0
        %v3925 = vpop.f32.mrb[0].mxu0
        %v3926 = vadd.f32 0.0, %v3925
        %v3927 = vpop.f32.mrb[0].mxu0
        %3928 = vmatprep.mubr.bf16.mxu0 %v3814
        %3929 = vmatmul.mubr.bf16.gmra.mrb[0].mxu0 %v3653
        %v3930 = vpop.f32.mrb[0].mxu0
        %v3931 = vadd.f32 0.0, %v3930
        %v3932 = vpop.f32.mrb[0].mxu0
        %v3933 = vpop.f32.mrb[0].mxu0
        %v3934 = vadd.f32 0.0, %v3933
        %v3935 = vpop.f32.mrb[0].mxu0
        %3936 = vmatprep.mubr.bf16.mxu0 %v3817
        %3937 = vmatmul.mubr.bf16.gmra.mrb[0].mxu0 %v3655
        %v3938 = vpop.f32.mrb[0].mxu0
        %v3939 = vadd.f32 0.0, %v3938
        %v3940 = vpop.f32.mrb[0].mxu0
        %v3941 = vpop.f32.mrb[0].mxu0
        %v3942 = vadd.f32 0.0, %v3941
        %v3943 = vpop.f32.mrb[0].mxu0
        %3944 = vmatprep.mubr.bf16.mxu0 %v3820
        %3945 = vmatmul.mubr.bf16.gmra.mrb[0].mxu0 %v3657
        %v3946 = vpop.f32.mrb[0].mxu0
        %v3947 = vadd.f32 0.0, %v3946
        %v3948 = vpop.f32.mrb[0].mxu0
        %v3949 = vpop.f32.mrb[0].mxu0
        %v3950 = vadd.f32 0.0, %v3949
        %v3951 = vpop.f32.mrb[0].mxu0
        %3952 = vmatprep.mubr.bf16.mxu0 %v3823
        %3953 = vmatmul.mubr.bf16.gmra.mrb[0].mxu0 %v3659
        %v3954 = vpop.f32.mrb[0].mxu0
        %v3955 = vadd.f32 0.0, %v3954
        %v3956 = vpop.f32.mrb[0].mxu0
        %v3957 = vpop.f32.mrb[0].mxu0
        %v3958 = vadd.f32 0.0, %v3957
        %v3959 = vpop.f32.mrb[0].mxu0
        %3960 = vmatprep.mubr.bf16.mxu0 %v3826
        %3961 = vmatmul.mubr.bf16.gmra.mrb[0].mxu0 %v3661
        %v3962 = vpop.f32.mrb[0].mxu0
        %v3963 = vadd.f32 0.0, %v3962
        %v3964 = vpop.f32.mrb[0].mxu0
        %v3965 = vpop.f32.mrb[0].mxu0
        %v3966 = vadd.f32 0.0, %v3965
        %v3967 = vpop.f32.mrb[0].mxu0
        %3968 = vmatprep.mubr.bf16.mxu0 %v3829
        %3969 = vmatmul.mubr.bf16.gmra.mrb[0].mxu0 %v3663
        %v3970 = vpop.f32.mrb[0].mxu0
        %v3971 = vadd.f32 0.0, %v3970
        %v3972 = vpop.f32.mrb[0].mxu0
        %v3973 = vpop.f32.mrb[0].mxu0
        %v3974 = vadd.f32 0.0, %v3973
        %v3975 = vpop.f32.mrb[0].mxu0
        %3976 = vmatprep.mubr.bf16.mxu0 %v3832
        %3977 = vmatmul.mubr.bf16.gmra.mrb[0].mxu0 %v3665
        %v3978 = vpop.f32.mrb[0].mxu0
        %v3979 = vadd.f32 0.0, %v3978
        %v3980 = vpop.f32.mrb[0].mxu0
        %v3981 = vpop.f32.mrb[0].mxu0
        %v3982 = vadd.f32 0.0, %v3981
        %v3983 = vpop.f32.mrb[0].mxu0
        %3984 = vmatprep.mubr.bf16.mxu0 %v3835
        %3985 = vmatmul.mubr.bf16.gmra.mrb[0].mxu0 %v3667
        %v3986 = vpop.f32.mrb[0].mxu0
        %v3987 = vadd.f32 0.0, %v3986
        %v3988 = vpop.f32.mrb[0].mxu0
        %v3989 = vpop.f32.mrb[0].mxu0
        %v3990 = vadd.f32 0.0, %v3989
        %v3991 = vpop.f32.mrb[0].mxu0
        %3992 = vmatprep.mubr.bf16.mxu0 %v3838
        %3993 = vmatmul.mubr.bf16.gmra.mrb[0].mxu0 %v3669
        %v3994 = vpop.f32.mrb[0].mxu0
        %v3995 = vadd.f32 0.0, %v3994
        %v3996 = vpop.f32.mrb[0].mxu0
        %v3997 = vpop.f32.mrb[0].mxu0
        %v3998 = vadd.f32 0.0, %v3997
        %v3999 = vpop.f32.mrb[0].mxu0
        %4000 = vdwg.mxu0
        %v4001 = vadd.f32 %v3606, %v3875
        %v4002 = vadd.f32 %v3607, %v3878
        %v4003 = vadd.f32 %v3608, %v3883
        %v4004 = vadd.f32 %v3609, %v3886
        %v4005 = vadd.f32 %v3610, %v3891
        %v4006 = vadd.f32 %v3611, %v3894
        %v4007 = vadd.f32 %v3612, %v3899
        %v4008 = vadd.f32 %v3613, %v3902
        %v4009 = vadd.f32 %v3614, %v3907
        %v4010 = vadd.f32 %v3615, %v3910
        %v4011 = vadd.f32 %v3616, %v3915
        %v4012 = vadd.f32 %v3617, %v3918
        %v4013 = vadd.f32 %v3618, %v3923
        %v4014 = vadd.f32 %v3619, %v3926
        %v4015 = vadd.f32 %v3620, %v3931
        %v4016 = vadd.f32 %v3621, %v3934
        %v4017 = vadd.f32 %v3622, %v3939
        %v4018 = vadd.f32 %v3623, %v3942
        %v4019 = vadd.f32 %v3624, %v3947
        %v4020 = vadd.f32 %v3625, %v3950
        %v4021 = vadd.f32 %v3626, %v3955
        %v4022 = vadd.f32 %v3627, %v3958
        %v4023 = vadd.f32 %v3628, %v3963
        %v4024 = vadd.f32 %v3629, %v3966
        %v4025 = vadd.f32 %v3630, %v3971
        %v4026 = vadd.f32 %v3631, %v3974
        %v4027 = vadd.f32 %v3632, %v3979
        %v4028 = vadd.f32 %v3633, %v3982
        %v4029 = vadd.f32 %v3634, %v3987
        %v4030 = vadd.f32 %v3635, %v3990
        %v4031 = vadd.f32 %v3636, %v3995
        %v4032 = vadd.f32 %v3637, %v3998
        %s4033 = scalar_lea.vmem [#allocation2], 64
        %v4034 = vld [vmem:[%s4033] sm:$0xff]
        %v4035 = vld [vmem:[%s4033 + $0x8] sm:$0xff]
        %v4036 = vld [vmem:[%s4033 + $0x10] sm:$0xff]
        %v4037 = vld [vmem:[%s4033 + $0x18] sm:$0xff]
        %v4038 = vld [vmem:[%s4033 + $0x20] sm:$0xff]
        %v4039 = vld [vmem:[%s4033 + $0x28] sm:$0xff]
        %v4040 = vld [vmem:[%s4033 + $0x30] sm:$0xff]
        %v4041 = vld [vmem:[%s4033 + $0x38] sm:$0xff]
        %v4042 = vld [vmem:[%s4033 + $0x40] sm:$0xff]
        %v4043 = vld [vmem:[%s4033 + $0x48] sm:$0xff]
        %v4044 = vld [vmem:[%s4033 + $0x50] sm:$0xff]
        %v4045 = vld [vmem:[%s4033 + $0x58] sm:$0xff]
        %v4046 = vld [vmem:[%s4033 + $0x60] sm:$0xff]
        %v4047 = vld [vmem:[%s4033 + $0x68] sm:$0xff]
        %v4048 = vld [vmem:[%s4033 + $0x70] sm:$0xff]
        %v4049 = vld [vmem:[%s4033 + $0x78] sm:$0xff]
        %v4050 = vld [vmem:[%s4033 + $0x80] sm:$0xff]
        %v4051 = vld [vmem:[%s4033 + $0x88] sm:$0xff]
        %v4052 = vld [vmem:[%s4033 + $0x90] sm:$0xff]
        %v4053 = vld [vmem:[%s4033 + $0x98] sm:$0xff]
        %v4054 = vld [vmem:[%s4033 + $0xa0] sm:$0xff]
        %v4055 = vld [vmem:[%s4033 + $0xa8] sm:$0xff]
        %v4056 = vld [vmem:[%s4033 + $0xb0] sm:$0xff]
        %v4057 = vld [vmem:[%s4033 + $0xb8] sm:$0xff]
        %v4058 = vld [vmem:[%s4033 + $0xc0] sm:$0xff]
        %v4059 = vld [vmem:[%s4033 + $0xc8] sm:$0xff]
        %v4060 = vld [vmem:[%s4033 + $0xd0] sm:$0xff]
        %v4061 = vld [vmem:[%s4033 + $0xd8] sm:$0xff]
        %v4062 = vld [vmem:[%s4033 + $0xe0] sm:$0xff]
        %v4063 = vld [vmem:[%s4033 + $0xe8] sm:$0xff]
        %v4064 = vld [vmem:[%s4033 + $0xf0] sm:$0xff]
        %v4065 = vld [vmem:[%s4033 + $0xf8] sm:$0xff]
        %s4066 = scalar_lea.vmem %s2, 480
        %v4067 = vld [vmem:[%s4066] sm:$0xf]
        %v4068 = vld [vmem:[%s4066 + $0x4] sm:$0xf]
        %v4069 = vld [vmem:[%s4066 + $0x8] sm:$0xf]
        %v4070 = vld [vmem:[%s4066 + $0xc] sm:$0xf]
        %v4071 = vld [vmem:[%s4066 + $0x10] sm:$0xf]
        %v4072 = vld [vmem:[%s4066 + $0x14] sm:$0xf]
        %v4073 = vld [vmem:[%s4066 + $0x18] sm:$0xf]
        %v4074 = vld [vmem:[%s4066 + $0x1c] sm:$0xf]
        %v4075 = vld [vmem:[%s4066 + $0x20] sm:$0xf]
        %v4076 = vld [vmem:[%s4066 + $0x24] sm:$0xf]
        %v4077 = vld [vmem:[%s4066 + $0x28] sm:$0xf]
        %v4078 = vld [vmem:[%s4066 + $0x2c] sm:$0xf]
        %v4079 = vld [vmem:[%s4066 + $0x30] sm:$0xf]
        %v4080 = vld [vmem:[%s4066 + $0x34] sm:$0xf]
        %v4081 = vld [vmem:[%s4066 + $0x38] sm:$0xf]
        %v4082 = vld [vmem:[%s4066 + $0x3c] sm:$0xf]
        %v4083 = vld [vmem:[%s4066 + $0x40] sm:$0xf]
        %v4084 = vld [vmem:[%s4066 + $0x44] sm:$0xf]
        %v4085 = vld [vmem:[%s4066 + $0x48] sm:$0xf]
        %v4086 = vld [vmem:[%s4066 + $0x4c] sm:$0xf]
        %v4087 = vld [vmem:[%s4066 + $0x50] sm:$0xf]
        %v4088 = vld [vmem:[%s4066 + $0x54] sm:$0xf]
        %v4089 = vld [vmem:[%s4066 + $0x58] sm:$0xf]
        %v4090 = vld [vmem:[%s4066 + $0x5c] sm:$0xf]
        %v4091 = vld [vmem:[%s4066 + $0x60] sm:$0xf]
        %v4092 = vld [vmem:[%s4066 + $0x64] sm:$0xf]
        %v4093 = vld [vmem:[%s4066 + $0x68] sm:$0xf]
        %v4094 = vld [vmem:[%s4066 + $0x6c] sm:$0xf]
        %v4095 = vld [vmem:[%s4066 + $0x70] sm:$0xf]
        %v4096 = vld [vmem:[%s4066 + $0x74] sm:$0xf]
        %v4127 = vunpack.c.l.b16 %v4067
        %v4128 = vunpack.c.l.b16 %v4068
        %v4129 = vunpack.c.l.b16 %v4069
        %v4130 = vunpack.c.l.b16 %v4070
        %v4131 = vunpack.c.l.b16 %v4071
        %v4132 = vunpack.c.l.b16 %v4072
        %v4133 = vunpack.c.l.b16 %v4073
        %v4134 = vunpack.c.l.b16 %v4074
        %v4135 = vunpack.c.l.b16 %v4075
        %v4136 = vunpack.c.l.b16 %v4076
        %v4137 = vunpack.c.l.b16 %v4077
        %v4138 = vunpack.c.l.b16 %v4078
        %v4139 = vunpack.c.l.b16 %v4079
        %v4140 = vunpack.c.l.b16 %v4080
        %v4141 = vunpack.c.l.b16 %v4081
        %v4142 = vunpack.c.l.b16 %v4082
        %v4143 = vunpack.c.l.b16 %v4083
        %v4144 = vunpack.c.l.b16 %v4084
        %v4145 = vunpack.c.l.b16 %v4085
        %v4146 = vunpack.c.l.b16 %v4086
        %v4147 = vunpack.c.l.b16 %v4087
        %v4148 = vunpack.c.l.b16 %v4088
        %v4149 = vunpack.c.l.b16 %v4089
        %v4150 = vunpack.c.l.b16 %v4090
        %v4151 = vunpack.c.l.b16 %v4091
        %v4152 = vunpack.c.l.b16 %v4092
        %v4153 = vunpack.c.l.b16 %v4093
        %v4154 = vunpack.c.l.b16 %v4094
        %v4155 = vunpack.c.l.b16 %v4095
        %v4156 = vunpack.c.l.b16 %v4096
        %v4157 = vpack.c.b16 %v4128, %v4127
        %v4158 = vpack.c.b16 %v4130, %v4129
        %v4159 = vpack.c.b16 %v4132, %v4131
        %v4160 = vpack.c.b16 %v4134, %v4133
        %v4161 = vpack.c.b16 %v4136, %v4135
        %v4162 = vpack.c.b16 %v4138, %v4137
        %v4163 = vpack.c.b16 %v4140, %v4139
        %v4164 = vpack.c.b16 %v4142, %v4141
        %v4165 = vpack.c.b16 %v4144, %v4143
        %v4166 = vpack.c.b16 %v4146, %v4145
        %v4167 = vpack.c.b16 %v4148, %v4147
        %v4168 = vpack.c.b16 %v4150, %v4149
        %v4169 = vpack.c.b16 %v4152, %v4151
        %v4170 = vpack.c.b16 %v4154, %v4153
        %v4171 = vpack.c.b16 %v4156, %v4155
        %v4188 = vsel %vm2734, %v4035, 0
        %v4191 = vsel %vm2734, %v4037, 0
        %v4194 = vsel %vm2734, %v4039, 0
        %v4197 = vsel %vm2734, %v4041, 0
        %v4200 = vsel %vm2734, %v4043, 0
        %v4203 = vsel %vm2734, %v4045, 0
        %v4206 = vsel %vm2734, %v4047, 0
        %v4209 = vsel %vm2734, %v4049, 0
        %v4212 = vsel %vm2734, %v4051, 0
        %v4215 = vsel %vm2734, %v4053, 0
        %v4218 = vsel %vm2734, %v4055, 0
        %v4221 = vsel %vm2734, %v4057, 0
        %v4224 = vsel %vm2734, %v4059, 0
        %v4227 = vsel %vm2734, %v4061, 0
        %v4230 = vsel %vm2734, %v4063, 0
        %v4233 = vsel %vm2734, %v4065, 0
        %4235 = vmatprep.subr.bf16.mxu0 0
        %4236 = vmatpush1.bf16.msra.mxu0 %v4157
        %4237 = vmatprep.subr.bf16.mxu0 0
        %4238 = vmatpush1.bf16.msra.mxu0 %v4158
        %4239 = vmatprep.subr.bf16.mxu0 0
        %4240 = vmatpush1.bf16.msra.mxu0 %v4159
        %4241 = vmatprep.subr.bf16.mxu0 0
        %4242 = vmatpush1.bf16.msra.mxu0 %v4160
        %4243 = vmatprep.subr.bf16.mxu0 0
        %4244 = vmatpush1.bf16.msra.mxu0 %v4161
        %4245 = vmatprep.subr.bf16.mxu0 0
        %4246 = vmatpush1.bf16.msra.mxu0 %v4162
        %4247 = vmatprep.subr.bf16.mxu0 0
        %4248 = vmatpush1.bf16.msra.mxu0 %v4163
        %4249 = vmatprep.subr.bf16.mxu0 0
        %4250 = vmatpush1.bf16.msra.mxu0 %v4164
        %4251 = vmatprep.subr.bf16.mxu0 0
        %4252 = vmatpush1.bf16.msra.mxu0 %v4165
        %4253 = vmatprep.subr.bf16.mxu0 0
        %4254 = vmatpush1.bf16.msra.mxu0 %v4166
        %4255 = vmatprep.subr.bf16.mxu0 0
        %4256 = vmatpush1.bf16.msra.mxu0 %v4167
        %4257 = vmatprep.subr.bf16.mxu0 0
        %4258 = vmatpush1.bf16.msra.mxu0 %v4168
        %4259 = vmatprep.subr.bf16.mxu0 0
        %4260 = vmatpush1.bf16.msra.mxu0 %v4169
        %4261 = vmatprep.subr.bf16.mxu0 0
        %4262 = vmatpush1.bf16.msra.mxu0 %v4170
        %4263 = vmatprep.subr.bf16.mxu0 0
        %4264 = vmatpush1.bf16.msra.mxu0 %v4171
        %4265 = vmatprep.subr.bf16.mxu0 0
        %4266 = vmatpush1.bf16.msra.mxu0 0
        %4267 = vmatprep.mubr.bf16.mxu0 %v4188
        %4268 = vmatmul.mubr.bf16.gmra.mrb[0].mxu0 %v4034
        %v4269 = vpop.f32.mrb[0].mxu0
        %v4270 = vadd.f32 0.0, %v4269
        %v4271 = vpop.f32.mrb[0].mxu0
        %v4272 = vpop.f32.mrb[0].mxu0
        %v4273 = vadd.f32 0.0, %v4272
        %v4274 = vpop.f32.mrb[0].mxu0
        %4275 = vmatprep.mubr.bf16.mxu0 %v4191
        %4276 = vmatmul.mubr.bf16.gmra.mrb[0].mxu0 %v4036
        %v4277 = vpop.f32.mrb[0].mxu0
        %v4278 = vadd.f32 0.0, %v4277
        %v4279 = vpop.f32.mrb[0].mxu0
        %v4280 = vpop.f32.mrb[0].mxu0
        %v4281 = vadd.f32 0.0, %v4280
        %v4282 = vpop.f32.mrb[0].mxu0
        %4283 = vmatprep.mubr.bf16.mxu0 %v4194
        %4284 = vmatmul.mubr.bf16.gmra.mrb[0].mxu0 %v4038
        %v4285 = vpop.f32.mrb[0].mxu0
        %v4286 = vadd.f32 0.0, %v4285
        %v4287 = vpop.f32.mrb[0].mxu0
        %v4288 = vpop.f32.mrb[0].mxu0
        %v4289 = vadd.f32 0.0, %v4288
        %v4290 = vpop.f32.mrb[0].mxu0
        %4291 = vmatprep.mubr.bf16.mxu0 %v4197
        %4292 = vmatmul.mubr.bf16.gmra.mrb[0].mxu0 %v4040
        %v4293 = vpop.f32.mrb[0].mxu0
        %v4294 = vadd.f32 0.0, %v4293
        %v4295 = vpop.f32.mrb[0].mxu0
        %v4296 = vpop.f32.mrb[0].mxu0
        %v4297 = vadd.f32 0.0, %v4296
        %v4298 = vpop.f32.mrb[0].mxu0
        %4299 = vmatprep.mubr.bf16.mxu0 %v4200
        %4300 = vmatmul.mubr.bf16.gmra.mrb[0].mxu0 %v4042
        %v4301 = vpop.f32.mrb[0].mxu0
        %v4302 = vadd.f32 0.0, %v4301
        %v4303 = vpop.f32.mrb[0].mxu0
        %v4304 = vpop.f32.mrb[0].mxu0
        %v4305 = vadd.f32 0.0, %v4304
        %v4306 = vpop.f32.mrb[0].mxu0
        %4307 = vmatprep.mubr.bf16.mxu0 %v4203
        %4308 = vmatmul.mubr.bf16.gmra.mrb[0].mxu0 %v4044
        %v4309 = vpop.f32.mrb[0].mxu0
        %v4310 = vadd.f32 0.0, %v4309
        %v4311 = vpop.f32.mrb[0].mxu0
        %v4312 = vpop.f32.mrb[0].mxu0
        %v4313 = vadd.f32 0.0, %v4312
        %v4314 = vpop.f32.mrb[0].mxu0
        %4315 = vmatprep.mubr.bf16.mxu0 %v4206
        %4316 = vmatmul.mubr.bf16.gmra.mrb[0].mxu0 %v4046
        %v4317 = vpop.f32.mrb[0].mxu0
        %v4318 = vadd.f32 0.0, %v4317
        %v4319 = vpop.f32.mrb[0].mxu0
        %v4320 = vpop.f32.mrb[0].mxu0
        %v4321 = vadd.f32 0.0, %v4320
        %v4322 = vpop.f32.mrb[0].mxu0
        %4323 = vmatprep.mubr.bf16.mxu0 %v4209
        %4324 = vmatmul.mubr.bf16.gmra.mrb[0].mxu0 %v4048
        %v4325 = vpop.f32.mrb[0].mxu0
        %v4326 = vadd.f32 0.0, %v4325
        %v4327 = vpop.f32.mrb[0].mxu0
        %v4328 = vpop.f32.mrb[0].mxu0
        %v4329 = vadd.f32 0.0, %v4328
        %v4330 = vpop.f32.mrb[0].mxu0
        %4331 = vmatprep.mubr.bf16.mxu0 %v4212
        %4332 = vmatmul.mubr.bf16.gmra.mrb[0].mxu0 %v4050
        %v4333 = vpop.f32.mrb[0].mxu0
        %v4334 = vadd.f32 0.0, %v4333
        %v4335 = vpop.f32.mrb[0].mxu0
        %v4336 = vpop.f32.mrb[0].mxu0
        %v4337 = vadd.f32 0.0, %v4336
        %v4338 = vpop.f32.mrb[0].mxu0
        %4339 = vmatprep.mubr.bf16.mxu0 %v4215
        %4340 = vmatmul.mubr.bf16.gmra.mrb[0].mxu0 %v4052
        %v4341 = vpop.f32.mrb[0].mxu0
        %v4342 = vadd.f32 0.0, %v4341
        %v4343 = vpop.f32.mrb[0].mxu0
        %v4344 = vpop.f32.mrb[0].mxu0
        %v4345 = vadd.f32 0.0, %v4344
        %v4346 = vpop.f32.mrb[0].mxu0
        %4347 = vmatprep.mubr.bf16.mxu0 %v4218
        %4348 = vmatmul.mubr.bf16.gmra.mrb[0].mxu0 %v4054
        %v4349 = vpop.f32.mrb[0].mxu0
        %v4350 = vadd.f32 0.0, %v4349
        %v4351 = vpop.f32.mrb[0].mxu0
        %v4352 = vpop.f32.mrb[0].mxu0
        %v4353 = vadd.f32 0.0, %v4352
        %v4354 = vpop.f32.mrb[0].mxu0
        %4355 = vmatprep.mubr.bf16.mxu0 %v4221
        %4356 = vmatmul.mubr.bf16.gmra.mrb[0].mxu0 %v4056
        %v4357 = vpop.f32.mrb[0].mxu0
        %v4358 = vadd.f32 0.0, %v4357
        %v4359 = vpop.f32.mrb[0].mxu0
        %v4360 = vpop.f32.mrb[0].mxu0
        %v4361 = vadd.f32 0.0, %v4360
        %v4362 = vpop.f32.mrb[0].mxu0
        %4363 = vmatprep.mubr.bf16.mxu0 %v4224
        %4364 = vmatmul.mubr.bf16.gmra.mrb[0].mxu0 %v4058
        %v4365 = vpop.f32.mrb[0].mxu0
        %v4366 = vadd.f32 0.0, %v4365
        %v4367 = vpop.f32.mrb[0].mxu0
        %v4368 = vpop.f32.mrb[0].mxu0
        %v4369 = vadd.f32 0.0, %v4368
        %v4370 = vpop.f32.mrb[0].mxu0
        %4371 = vmatprep.mubr.bf16.mxu0 %v4227
        %4372 = vmatmul.mubr.bf16.gmra.mrb[0].mxu0 %v4060
        %v4373 = vpop.f32.mrb[0].mxu0
        %v4374 = vadd.f32 0.0, %v4373
        %v4375 = vpop.f32.mrb[0].mxu0
        %v4376 = vpop.f32.mrb[0].mxu0
        %v4377 = vadd.f32 0.0, %v4376
        %v4378 = vpop.f32.mrb[0].mxu0
        %4379 = vmatprep.mubr.bf16.mxu0 %v4230
        %4380 = vmatmul.mubr.bf16.gmra.mrb[0].mxu0 %v4062
        %v4381 = vpop.f32.mrb[0].mxu0
        %v4382 = vadd.f32 0.0, %v4381
        %v4383 = vpop.f32.mrb[0].mxu0
        %v4384 = vpop.f32.mrb[0].mxu0
        %v4385 = vadd.f32 0.0, %v4384
        %v4386 = vpop.f32.mrb[0].mxu0
        %4387 = vmatprep.mubr.bf16.mxu0 %v4233
        %4388 = vmatmul.mubr.bf16.gmra.mrb[0].mxu0 %v4064
        %v4389 = vpop.f32.mrb[0].mxu0
        %v4390 = vadd.f32 0.0, %v4389
        %v4391 = vpop.f32.mrb[0].mxu0
        %v4392 = vpop.f32.mrb[0].mxu0
        %v4393 = vadd.f32 0.0, %v4392
        %v4394 = vpop.f32.mrb[0].mxu0
        %4395 = vdwg.mxu0
        %v4396 = vadd.f32 %v4001, %v4270
        %v4397 = vadd.f32 %v4002, %v4273
        %v4398 = vadd.f32 %v4003, %v4278
        %v4399 = vadd.f32 %v4004, %v4281
        %v4400 = vadd.f32 %v4005, %v4286
        %v4401 = vadd.f32 %v4006, %v4289
        %v4402 = vadd.f32 %v4007, %v4294
        %v4403 = vadd.f32 %v4008, %v4297
        %v4404 = vadd.f32 %v4009, %v4302
        %v4405 = vadd.f32 %v4010, %v4305
        %v4406 = vadd.f32 %v4011, %v4310
        %v4407 = vadd.f32 %v4012, %v4313
        %v4408 = vadd.f32 %v4013, %v4318
        %v4409 = vadd.f32 %v4014, %v4321
        %v4410 = vadd.f32 %v4015, %v4326
        %v4411 = vadd.f32 %v4016, %v4329
        %v4412 = vadd.f32 %v4017, %v4334
        %v4413 = vadd.f32 %v4018, %v4337
        %v4414 = vadd.f32 %v4019, %v4342
        %v4415 = vadd.f32 %v4020, %v4345
        %v4416 = vadd.f32 %v4021, %v4350
        %v4417 = vadd.f32 %v4022, %v4353
        %v4418 = vadd.f32 %v4023, %v4358
        %v4419 = vadd.f32 %v4024, %v4361
        %v4420 = vadd.f32 %v4025, %v4366
        %v4421 = vadd.f32 %v4026, %v4369
        %v4422 = vadd.f32 %v4027, %v4374
        %v4423 = vadd.f32 %v4028, %v4377
        %v4424 = vadd.f32 %v4029, %v4382
        %v4425 = vadd.f32 %v4030, %v4385
        %v4426 = vadd.f32 %v4031, %v4390
        %v4427 = vadd.f32 %v4032, %v4393
        %v4428 = vld [vmem:[%s3] sm:$0x1]
        %v4430 = vlaneseq
        %v4431 = vshrl.u32 %v4430, 7
        %v4432 = vsub.s32 0, %v4431
        %v4433 = vrot.slane %v4428, %v4432
        %v4435 = vadd.f32 %v4396, %v4433
        %v4436 = vadd.f32 %v4397, %v4433
        %v4437 = vadd.f32 %v4398, %v4433
        %v4438 = vadd.f32 %v4399, %v4433
        %v4439 = vadd.f32 %v4400, %v4433
        %v4440 = vadd.f32 %v4401, %v4433
        %v4441 = vadd.f32 %v4402, %v4433
        %v4442 = vadd.f32 %v4403, %v4433
        %v4443 = vadd.f32 %v4404, %v4433
        %v4444 = vadd.f32 %v4405, %v4433
        %v4445 = vadd.f32 %v4406, %v4433
        %v4446 = vadd.f32 %v4407, %v4433
        %v4447 = vadd.f32 %v4408, %v4433
        %v4448 = vadd.f32 %v4409, %v4433
        %v4449 = vadd.f32 %v4410, %v4433
        %v4450 = vadd.f32 %v4411, %v4433
        %v4451 = vadd.f32 %v4412, %v4433
        %v4452 = vadd.f32 %v4413, %v4433
        %v4453 = vadd.f32 %v4414, %v4433
        %v4454 = vadd.f32 %v4415, %v4433
        %v4455 = vadd.f32 %v4416, %v4433
        %v4456 = vadd.f32 %v4417, %v4433
        %v4457 = vadd.f32 %v4418, %v4433
        %v4458 = vadd.f32 %v4419, %v4433
        %v4459 = vadd.f32 %v4420, %v4433
        %v4460 = vadd.f32 %v4421, %v4433
        %v4461 = vadd.f32 %v4422, %v4433
        %v4462 = vadd.f32 %v4423, %v4433
        %v4463 = vadd.f32 %v4424, %v4433
        %v4464 = vadd.f32 %v4425, %v4433
        %v4465 = vadd.f32 %v4426, %v4433
        %v4466 = vadd.f32 %v4427, %v4433
        %vm4467 = vcmp.ge.f32.partialorder %v4435, 0.0
        %vm4468 = vcmp.ge.f32.partialorder %v4436, 0.0
        %vm4469 = vcmp.ge.f32.partialorder %v4437, 0.0
        %vm4470 = vcmp.ge.f32.partialorder %v4438, 0.0
        %vm4471 = vcmp.ge.f32.partialorder %v4439, 0.0
        %vm4472 = vcmp.ge.f32.partialorder %v4440, 0.0
        %vm4473 = vcmp.ge.f32.partialorder %v4441, 0.0
        %vm4474 = vcmp.ge.f32.partialorder %v4442, 0.0
        %vm4475 = vcmp.ge.f32.partialorder %v4443, 0.0
        %vm4476 = vcmp.ge.f32.partialorder %v4444, 0.0
        %vm4477 = vcmp.ge.f32.partialorder %v4445, 0.0
        %vm4478 = vcmp.ge.f32.partialorder %v4446, 0.0
        %vm4479 = vcmp.ge.f32.partialorder %v4447, 0.0
        %vm4480 = vcmp.ge.f32.partialorder %v4448, 0.0
        %vm4481 = vcmp.ge.f32.partialorder %v4449, 0.0
        %vm4482 = vcmp.ge.f32.partialorder %v4450, 0.0
        %vm4483 = vcmp.ge.f32.partialorder %v4451, 0.0
        %vm4484 = vcmp.ge.f32.partialorder %v4452, 0.0
        %vm4485 = vcmp.ge.f32.partialorder %v4453, 0.0
        %vm4486 = vcmp.ge.f32.partialorder %v4454, 0.0
        %vm4487 = vcmp.ge.f32.partialorder %v4455, 0.0
        %vm4488 = vcmp.ge.f32.partialorder %v4456, 0.0
        %vm4489 = vcmp.ge.f32.partialorder %v4457, 0.0
        %vm4490 = vcmp.ge.f32.partialorder %v4458, 0.0
        %vm4491 = vcmp.ge.f32.partialorder %v4459, 0.0
        %vm4492 = vcmp.ge.f32.partialorder %v4460, 0.0
        %vm4493 = vcmp.ge.f32.partialorder %v4461, 0.0
        %vm4494 = vcmp.ge.f32.partialorder %v4462, 0.0
        %vm4495 = vcmp.ge.f32.partialorder %v4463, 0.0
        %vm4496 = vcmp.ge.f32.partialorder %v4464, 0.0
        %vm4497 = vcmp.ge.f32.partialorder %v4465, 0.0
        %vm4498 = vcmp.ge.f32.partialorder %v4466, 0.0
        %v4499 = vld [vmem:[%s4] sm:$0x1]
        %v4501 = vlaneseq
        %v4502 = vshrl.u32 %v4501, 7
        %v4503 = vsub.s32 0, %v4502
        %v4504 = vrot.slane %v4499, %v4503
        %v4506 = vmul.f32 %v4504, %v4435
        %v4507 = vmul.f32 %v4504, %v4436
        %v4508 = vmul.f32 %v4504, %v4437
        %v4509 = vmul.f32 %v4504, %v4438
        %v4510 = vmul.f32 %v4504, %v4439
        %v4511 = vmul.f32 %v4504, %v4440
        %v4512 = vmul.f32 %v4504, %v4441
        %v4513 = vmul.f32 %v4504, %v4442
        %v4514 = vmul.f32 %v4504, %v4443
        %v4515 = vmul.f32 %v4504, %v4444
        %v4516 = vmul.f32 %v4504, %v4445
        %v4517 = vmul.f32 %v4504, %v4446
        %v4518 = vmul.f32 %v4504, %v4447
        %v4519 = vmul.f32 %v4504, %v4448
        %v4520 = vmul.f32 %v4504, %v4449
        %v4521 = vmul.f32 %v4504, %v4450
        %v4522 = vmul.f32 %v4504, %v4451
        %v4523 = vmul.f32 %v4504, %v4452
        %v4524 = vmul.f32 %v4504, %v4453
        %v4525 = vmul.f32 %v4504, %v4454
        %v4526 = vmul.f32 %v4504, %v4455
        %v4527 = vmul.f32 %v4504, %v4456
        %v4528 = vmul.f32 %v4504, %v4457
        %v4529 = vmul.f32 %v4504, %v4458
        %v4530 = vmul.f32 %v4504, %v4459
        %v4531 = vmul.f32 %v4504, %v4460
        %v4532 = vmul.f32 %v4504, %v4461
        %v4533 = vmul.f32 %v4504, %v4462
        %v4534 = vmul.f32 %v4504, %v4463
        %v4535 = vmul.f32 %v4504, %v4464
        %v4536 = vmul.f32 %v4504, %v4465
        %v4537 = vmul.f32 %v4504, %v4466
        %v4538 = vsel %vm4467, %v4435, %v4506
        %v4539 = vsel %vm4468, %v4436, %v4507
        %v4540 = vsel %vm4469, %v4437, %v4508
        %v4541 = vsel %vm4470, %v4438, %v4509
        %v4542 = vsel %vm4471, %v4439, %v4510
        %v4543 = vsel %vm4472, %v4440, %v4511
        %v4544 = vsel %vm4473, %v4441, %v4512
        %v4545 = vsel %vm4474, %v4442, %v4513
        %v4546 = vsel %vm4475, %v4443, %v4514
        %v4547 = vsel %vm4476, %v4444, %v4515
        %v4548 = vsel %vm4477, %v4445, %v4516
        %v4549 = vsel %vm4478, %v4446, %v4517
        %v4550 = vsel %vm4479, %v4447, %v4518
        %v4551 = vsel %vm4480, %v4448, %v4519
        %v4552 = vsel %vm4481, %v4449, %v4520
        %v4553 = vsel %vm4482, %v4450, %v4521
        %v4554 = vsel %vm4483, %v4451, %v4522
        %v4555 = vsel %vm4484, %v4452, %v4523
        %v4556 = vsel %vm4485, %v4453, %v4524
        %v4557 = vsel %vm4486, %v4454, %v4525
        %v4558 = vsel %vm4487, %v4455, %v4526
        %v4559 = vsel %vm4488, %v4456, %v4527
        %v4560 = vsel %vm4489, %v4457, %v4528
        %v4561 = vsel %vm4490, %v4458, %v4529
        %v4562 = vsel %vm4491, %v4459, %v4530
        %v4563 = vsel %vm4492, %v4460, %v4531
        %v4564 = vsel %vm4493, %v4461, %v4532
        %v4565 = vsel %vm4494, %v4462, %v4533
        %v4566 = vsel %vm4495, %v4463, %v4534
        %v4567 = vsel %vm4496, %v4464, %v4535
        %v4568 = vsel %vm4497, %v4465, %v4536
        %v4569 = vsel %vm4498, %v4466, %v4537
        %4570 = vst.msk [vmem:[#allocation3] sm:$0xff] %vm585, 0.0
        %4571 = vst.msk [vmem:[#allocation3 + $0x8] sm:$0xff] %vm585, 0.0
        %vm4572 = vcmask 257024
        %4573 = vst.msk [vmem:[#allocation3 + $0x10] sm:$0xf] %vm4572, 0.0
        %4574 = vst.msk [vmem:[#allocation3 + $0x18] sm:$0xff] %vm585, 0.0
        %4575 = vst.msk [vmem:[#allocation3 + $0x20] sm:$0xff] %vm585, 0.0
        %4576 = vst.msk [vmem:[#allocation3 + $0x28] sm:$0xf] %vm4572, 0.0
        %4577 = vst.msk [vmem:[#allocation3 + $0x30] sm:$0xff] %vm585, 0.0
        %4578 = vst.msk [vmem:[#allocation3 + $0x38] sm:$0xff] %vm585, 0.0
        %4579 = vst.msk [vmem:[#allocation3 + $0x40] sm:$0xf] %vm4572, 0.0
        %4580 = vst.msk [vmem:[#allocation3 + $0x48] sm:$0xff] %vm585, 0.0
        %4581 = vst.msk [vmem:[#allocation3 + $0x50] sm:$0xff] %vm585, 0.0
        %4582 = vst.msk [vmem:[#allocation3 + $0x58] sm:$0xf] %vm4572, 0.0
        %4583 = vst.msk [vmem:[#allocation3 + $0x60] sm:$0xff] %vm585, 0.0
        %4584 = vst.msk [vmem:[#allocation3 + $0x68] sm:$0xff] %vm585, 0.0
        %4585 = vst.msk [vmem:[#allocation3 + $0x70] sm:$0xf] %vm4572, 0.0
        %4586 = vst.msk [vmem:[#allocation3 + $0x78] sm:$0xff] %vm585, 0.0
        %4587 = vst.msk [vmem:[#allocation3 + $0x80] sm:$0xff] %vm585, 0.0
        %4588 = vst.msk [vmem:[#allocation3 + $0x88] sm:$0xf] %vm4572, 0.0
        %4589 = vst.msk [vmem:[#allocation3 + $0x90] sm:$0xff] %vm585, 0.0
        %4590 = vst.msk [vmem:[#allocation3 + $0x98] sm:$0xff] %vm585, 0.0
        %4591 = vst.msk [vmem:[#allocation3 + $0xa0] sm:$0xf] %vm4572, 0.0
        %4592 = vst.msk [vmem:[#allocation3 + $0xa8] sm:$0xff] %vm585, 0.0
        %4593 = vst.msk [vmem:[#allocation3 + $0xb0] sm:$0xff] %vm585, 0.0
        %4594 = vst.msk [vmem:[#allocation3 + $0xb8] sm:$0xf] %vm4572, 0.0
        %4595 = vst.msk [vmem:[#allocation3 + $0xc0] sm:$0xff] %vm585, 0.0
        %4596 = vst.msk [vmem:[#allocation3 + $0xc8] sm:$0xff] %vm585, 0.0
        %4597 = vst.msk [vmem:[#allocation3 + $0xd0] sm:$0xf] %vm4572, 0.0
        %4598 = vst.msk [vmem:[#allocation3 + $0xd8] sm:$0xff] %vm585, 0.0
        %4599 = vst.msk [vmem:[#allocation3 + $0xe0] sm:$0xff] %vm585, 0.0
        %4600 = vst.msk [vmem:[#allocation3 + $0xe8] sm:$0xf] %vm4572, 0.0
        %4601 = vst.msk [vmem:[#allocation3 + $0xf0] sm:$0xff] %vm585, 0.0
        %4602 = vst.msk [vmem:[#allocation3 + $0xf8] sm:$0xff] %vm585, 0.0
        %4603 = vst.msk [vmem:[#allocation3 + $0x100] sm:$0xf] %vm4572, 0.0
        %4604 = vst.msk [vmem:[#allocation3 + $0x108] sm:$0xff] %vm585, 0.0
        %4605 = vst.msk [vmem:[#allocation3 + $0x110] sm:$0xff] %vm585, 0.0
        %4606 = vst.msk [vmem:[#allocation3 + $0x118] sm:$0xf] %vm4572, 0.0
        %4607 = vst.msk [vmem:[#allocation3 + $0x120] sm:$0xff] %vm585, 0.0
        %4608 = vst.msk [vmem:[#allocation3 + $0x128] sm:$0xff] %vm585, 0.0
        %4609 = vst.msk [vmem:[#allocation3 + $0x130] sm:$0xf] %vm4572, 0.0
        %4610 = vst.msk [vmem:[#allocation3 + $0x138] sm:$0xff] %vm585, 0.0
        %4611 = vst.msk [vmem:[#allocation3 + $0x140] sm:$0xff] %vm585, 0.0
        %4612 = vst.msk [vmem:[#allocation3 + $0x148] sm:$0xf] %vm4572, 0.0
        %4613 = vst.msk [vmem:[#allocation3 + $0x150] sm:$0xff] %vm585, 0.0
        %4614 = vst.msk [vmem:[#allocation3 + $0x158] sm:$0xff] %vm585, 0.0
        %4615 = vst.msk [vmem:[#allocation3 + $0x160] sm:$0xf] %vm4572, 0.0
        %4616 = vst.msk [vmem:[#allocation3 + $0x168] sm:$0xff] %vm585, 0.0
        %4617 = vst.msk [vmem:[#allocation3 + $0x170] sm:$0xff] %vm585, 0.0
        %4618 = vst.msk [vmem:[#allocation3 + $0x178] sm:$0xf] %vm4572, 0.0
        %4619 = vst.msk [vmem:[#allocation3 + $0x180] sm:$0xff] %vm585, 0.0
        %4620 = vst.msk [vmem:[#allocation3 + $0x188] sm:$0xff] %vm585, 0.0
        %4621 = vst.msk [vmem:[#allocation3 + $0x190] sm:$0xf] %vm4572, 0.0
        %4622 = vst.msk [vmem:[#allocation3 + $0x198] sm:$0xff] %vm585, 0.0
        %4623 = vst.msk [vmem:[#allocation3 + $0x1a0] sm:$0xff] %vm585, 0.0
        %4624 = vst.msk [vmem:[#allocation3 + $0x1a8] sm:$0xf] %vm4572, 0.0
        %4625 = vst.msk [vmem:[#allocation3 + $0x1b0] sm:$0xff] %vm585, 0.0
        %4626 = vst.msk [vmem:[#allocation3 + $0x1b8] sm:$0xff] %vm585, 0.0
        %4627 = vst.msk [vmem:[#allocation3 + $0x1c0] sm:$0xf] %vm4572, 0.0
        %4628 = vst.msk [vmem:[#allocation3 + $0x1c8] sm:$0xff] %vm585, 0.0
        %4629 = vst.msk [vmem:[#allocation3 + $0x1d0] sm:$0xff] %vm585, 0.0
        %4630 = vst.msk [vmem:[#allocation3 + $0x1d8] sm:$0xf] %vm4572, 0.0
        %s4631 = scalar_lea.vmem [#allocation3], 48
        %4632 = vst.msk [vmem:[%s4631 + $0x2] sm:$0xff] %vm585, %v4538
        %4633 = vst.msk [vmem:[%s4631 + $0xa] sm:$0xff] %vm585, %v4539
        %4634 = vst.msk [vmem:[%s4631 + $0x1a] sm:$0xff] %vm585, %v4540
        %4635 = vst.msk [vmem:[%s4631 + $0x22] sm:$0xff] %vm585, %v4541
        %4636 = vst.msk [vmem:[%s4631 + $0x32] sm:$0xff] %vm585, %v4542
        %4637 = vst.msk [vmem:[%s4631 + $0x3a] sm:$0xff] %vm585, %v4543
        %4638 = vst.msk [vmem:[%s4631 + $0x4a] sm:$0xff] %vm585, %v4544
        %4639 = vst.msk [vmem:[%s4631 + $0x52] sm:$0xff] %vm585, %v4545
        %4640 = vst.msk [vmem:[%s4631 + $0x62] sm:$0xff] %vm585, %v4546
        %4641 = vst.msk [vmem:[%s4631 + $0x6a] sm:$0xff] %vm585, %v4547
        %4642 = vst.msk [vmem:[%s4631 + $0x7a] sm:$0xff] %vm585, %v4548
        %4643 = vst.msk [vmem:[%s4631 + $0x82] sm:$0xff] %vm585, %v4549
        %4644 = vst.msk [vmem:[%s4631 + $0x92] sm:$0xff] %vm585, %v4550
        %4645 = vst.msk [vmem:[%s4631 + $0x9a] sm:$0xff] %vm585, %v4551
        %4646 = vst.msk [vmem:[%s4631 + $0xaa] sm:$0xff] %vm585, %v4552
        %4647 = vst.msk [vmem:[%s4631 + $0xb2] sm:$0xff] %vm585, %v4553
        %4648 = vst.msk [vmem:[%s4631 + $0xc2] sm:$0xff] %vm585, %v4554
        %4649 = vst.msk [vmem:[%s4631 + $0xca] sm:$0xff] %vm585, %v4555
        %4650 = vst.msk [vmem:[%s4631 + $0xda] sm:$0xff] %vm585, %v4556
        %4651 = vst.msk [vmem:[%s4631 + $0xe2] sm:$0xff] %vm585, %v4557
        %4652 = vst.msk [vmem:[%s4631 + $0xf2] sm:$0xff] %vm585, %v4558
        %4653 = vst.msk [vmem:[%s4631 + $0xfa] sm:$0xff] %vm585, %v4559
        %4654 = vst.msk [vmem:[%s4631 + $0x10a] sm:$0xff] %vm585, %v4560
        %4655 = vst.msk [vmem:[%s4631 + $0x112] sm:$0xff] %vm585, %v4561
        %4656 = vst.msk [vmem:[%s4631 + $0x122] sm:$0xff] %vm585, %v4562
        %4657 = vst.msk [vmem:[%s4631 + $0x12a] sm:$0xff] %vm585, %v4563
        %4658 = vst.msk [vmem:[%s4631 + $0x13a] sm:$0xff] %vm585, %v4564
        %4659 = vst.msk [vmem:[%s4631 + $0x142] sm:$0xff] %vm585, %v4565
        %4660 = vst.msk [vmem:[%s4631 + $0x152] sm:$0xff] %vm585, %v4566
        %4661 = vst.msk [vmem:[%s4631 + $0x15a] sm:$0xff] %vm585, %v4567
        %4662 = vst.msk [vmem:[%s4631 + $0x16a] sm:$0xff] %vm585, %v4568
        %4663 = vst.msk [vmem:[%s4631 + $0x172] sm:$0xff] %vm585, %v4569
        %v4664 = vld [vmem:[#allocation3] sm:$0xff]
        %v4665 = vld [vmem:[#allocation3 + $0x8] sm:$0xff]
        %v4666 = vld [vmem:[#allocation3 + $0x10] sm:$0xf]
        %v4667 = vld [vmem:[#allocation3 + $0x18] sm:$0xff]
        %v4668 = vld [vmem:[#allocation3 + $0x20] sm:$0xff]
        %v4669 = vld [vmem:[#allocation3 + $0x28] sm:$0xf]
        %v4670 = vld [vmem:[#allocation3 + $0x30] sm:$0xff]
        %v4671 = vld [vmem:[#allocation3 + $0x38] sm:$0xff]
        %v4672 = vld [vmem:[#allocation3 + $0x40] sm:$0xf]
        %v4673 = vld [vmem:[#allocation3 + $0x48] sm:$0xff]
        %v4674 = vld [vmem:[#allocation3 + $0x50] sm:$0xff]
        %v4675 = vld [vmem:[#allocation3 + $0x58] sm:$0xf]
        %v4676 = vld [vmem:[#allocation3 + $0x60] sm:$0xff]
        %v4677 = vld [vmem:[#allocation3 + $0x68] sm:$0xff]
        %v4678 = vld [vmem:[#allocation3 + $0x70] sm:$0xf]
        %v4679 = vld [vmem:[#allocation3 + $0x78] sm:$0xff]
        %v4680 = vld [vmem:[#allocation3 + $0x80] sm:$0xff]
        %v4681 = vld [vmem:[#allocation3 + $0x88] sm:$0xf]
        %v4682 = vld [vmem:[#allocation3 + $0x90] sm:$0xff]
        %v4683 = vld [vmem:[#allocation3 + $0x98] sm:$0xff]
        %v4684 = vld [vmem:[#allocation3 + $0xa0] sm:$0xf]
        %v4685 = vld [vmem:[#allocation3 + $0xa8] sm:$0xff]
        %v4686 = vld [vmem:[#allocation3 + $0xb0] sm:$0xff]
        %v4687 = vld [vmem:[#allocation3 + $0xb8] sm:$0xf]
        %v4688 = vld [vmem:[#allocation3 + $0xc0] sm:$0xff]
        %v4689 = vld [vmem:[#allocation3 + $0xc8] sm:$0xff]
        %v4690 = vld [vmem:[#allocation3 + $0xd0] sm:$0xf]
        %v4691 = vld [vmem:[#allocation3 + $0xd8] sm:$0xff]
        %v4692 = vld [vmem:[#allocation3 + $0xe0] sm:$0xff]
        %v4693 = vld [vmem:[#allocation3 + $0xe8] sm:$0xf]
        %v4694 = vld [vmem:[#allocation3 + $0xf0] sm:$0xff]
        %v4695 = vld [vmem:[#allocation3 + $0xf8] sm:$0xff]
        %v4696 = vld [vmem:[#allocation3 + $0x100] sm:$0xf]
        %v4697 = vld [vmem:[#allocation3 + $0x108] sm:$0xff]
        %v4698 = vld [vmem:[#allocation3 + $0x110] sm:$0xff]
        %v4699 = vld [vmem:[#allocation3 + $0x118] sm:$0xf]
        %v4700 = vld [vmem:[#allocation3 + $0x120] sm:$0xff]
        %v4701 = vld [vmem:[#allocation3 + $0x128] sm:$0xff]
        %v4702 = vld [vmem:[#allocation3 + $0x130] sm:$0xf]
        %v4703 = vld [vmem:[#allocation3 + $0x138] sm:$0xff]
        %v4704 = vld [vmem:[#allocation3 + $0x140] sm:$0xff]
        %v4705 = vld [vmem:[#allocation3 + $0x148] sm:$0xf]
        %v4706 = vld [vmem:[#allocation3 + $0x150] sm:$0xff]
        %v4707 = vld [vmem:[#allocation3 + $0x158] sm:$0xff]
        %v4708 = vld [vmem:[#allocation3 + $0x160] sm:$0xf]
        %v4709 = vld [vmem:[#allocation3 + $0x168] sm:$0xff]
        %v4710 = vld [vmem:[#allocation3 + $0x170] sm:$0xff]
        %v4711 = vld [vmem:[#allocation3 + $0x178] sm:$0xf]
        %v4712 = vld [vmem:[#allocation3 + $0x180] sm:$0xff]
        %v4713 = vld [vmem:[#allocation3 + $0x188] sm:$0xff]
        %v4714 = vld [vmem:[#allocation3 + $0x190] sm:$0xf]
        %v4715 = vld [vmem:[#allocation3 + $0x198] sm:$0xff]
        %v4716 = vld [vmem:[#allocation3 + $0x1a0] sm:$0xff]
        %v4717 = vld [vmem:[#allocation3 + $0x1a8] sm:$0xf]
        %v4718 = vld [vmem:[#allocation3 + $0x1b0] sm:$0xff]
        %v4719 = vld [vmem:[#allocation3 + $0x1b8] sm:$0xff]
        %v4720 = vld [vmem:[#allocation3 + $0x1c0] sm:$0xf]
        %v4721 = vld [vmem:[#allocation3 + $0x1c8] sm:$0xff]
        %v4722 = vld [vmem:[#allocation3 + $0x1d0] sm:$0xff]
        %v4723 = vld [vmem:[#allocation3 + $0x1d8] sm:$0xf]
        %v4724 = vpack.c.bf16 %v4665, %v4664
        %v4725 = vpack.c.bf16 %v4668, %v4667
        %v4726 = vpack.c.bf16 %v4671, %v4670
        %v4727 = vpack.c.bf16 %v4674, %v4673
        %v4728 = vpack.c.bf16 %v4677, %v4676
        %v4729 = vpack.c.bf16 %v4680, %v4679
        %v4730 = vpack.c.bf16 %v4683, %v4682
        %v4731 = vpack.c.bf16 %v4686, %v4685
        %v4732 = vpack.c.bf16 %v4689, %v4688
        %v4733 = vpack.c.bf16 %v4692, %v4691
        %v4734 = vpack.c.bf16 %v4695, %v4694
        %v4735 = vpack.c.bf16 %v4698, %v4697
        %v4736 = vpack.c.bf16 %v4701, %v4700
        %v4737 = vpack.c.bf16 %v4704, %v4703
        %v4738 = vpack.c.bf16 %v4707, %v4706
        %v4739 = vpack.c.bf16 %v4710, %v4709
        %v4740 = vpack.c.bf16 %v4713, %v4712
        %v4741 = vpack.c.bf16 %v4716, %v4715
        %v4742 = vpack.c.bf16 %v4719, %v4718
        %v4743 = vpack.c.bf16 %v4722, %v4721
        %4744 = vst.msk [vmem:[#allocation2] sm:$0xff] %vm585, %v4724
        %4745 = vst.msk [vmem:[#allocation2 + $0x10] sm:$0xff] %vm585, %v4725
        %4746 = vst.msk [vmem:[#allocation2 + $0x20] sm:$0xff] %vm585, %v4726
        %4747 = vst.msk [vmem:[#allocation2 + $0x30] sm:$0xff] %vm585, %v4727
        %4748 = vst.msk [vmem:[#allocation2 + $0x40] sm:$0xff] %vm585, %v4728
        %4749 = vst.msk [vmem:[#allocation2 + $0x50] sm:$0xff] %vm585, %v4729
        %4750 = vst.msk [vmem:[#allocation2 + $0x60] sm:$0xff] %vm585, %v4730
        %4751 = vst.msk [vmem:[#allocation2 + $0x70] sm:$0xff] %vm585, %v4731
        %4752 = vst.msk [vmem:[#allocation2 + $0x80] sm:$0xff] %vm585, %v4732
        %4753 = vst.msk [vmem:[#allocation2 + $0x90] sm:$0xff] %vm585, %v4733
        %4754 = vst.msk [vmem:[#allocation2 + $0xa0] sm:$0xff] %vm585, %v4734
        %4755 = vst.msk [vmem:[#allocation2 + $0xb0] sm:$0xff] %vm585, %v4735
        %4756 = vst.msk [vmem:[#allocation2 + $0xc0] sm:$0xff] %vm585, %v4736
        %4757 = vst.msk [vmem:[#allocation2 + $0xd0] sm:$0xff] %vm585, %v4737
        %4758 = vst.msk [vmem:[#allocation2 + $0xe0] sm:$0xff] %vm585, %v4738
        %4759 = vst.msk [vmem:[#allocation2 + $0xf0] sm:$0xff] %vm585, %v4739
        %4760 = vst.msk [vmem:[#allocation2 + $0x100] sm:$0xff] %vm585, %v4740
        %4761 = vst.msk [vmem:[#allocation2 + $0x110] sm:$0xff] %vm585, %v4741
        %4762 = vst.msk [vmem:[#allocation2 + $0x120] sm:$0xff] %vm585, %v4742
        %4763 = vst.msk [vmem:[#allocation2 + $0x130] sm:$0xff] %vm585, %v4743
        %v4764 = vpack.c.bf16 %v4666, %v4666
        %v4765 = vpack.c.bf16 %v4669, %v4669
        %v4766 = vpack.c.bf16 %v4672, %v4672
        %v4767 = vpack.c.bf16 %v4675, %v4675
        %v4768 = vpack.c.bf16 %v4678, %v4678
        %v4769 = vpack.c.bf16 %v4681, %v4681
        %v4770 = vpack.c.bf16 %v4684, %v4684
        %v4771 = vpack.c.bf16 %v4687, %v4687
        %v4772 = vpack.c.bf16 %v4690, %v4690
        %v4773 = vpack.c.bf16 %v4693, %v4693
        %v4774 = vpack.c.bf16 %v4696, %v4696
        %v4775 = vpack.c.bf16 %v4699, %v4699
        %v4776 = vpack.c.bf16 %v4702, %v4702
        %v4777 = vpack.c.bf16 %v4705, %v4705
        %v4778 = vpack.c.bf16 %v4708, %v4708
        %v4779 = vpack.c.bf16 %v4711, %v4711
        %v4780 = vpack.c.bf16 %v4714, %v4714
        %v4781 = vpack.c.bf16 %v4717, %v4717
        %v4782 = vpack.c.bf16 %v4720, %v4720
        %v4783 = vpack.c.bf16 %v4723, %v4723
        %v4785 = vshrl.u32 %v4724, 16
        %v4787 = vshll.u32 %v4724, 16
        %v4789 = vrot.slane %v4787, 1
        %v4790 = vor.u32 %v4785, %v4789
        %v4792 = vshll.u32 %v4764, 16
        %v4794 = vrot.slane %v4792, 1
        %v4795 = vsel %vm626, %v4790, %v4794
        %v4797 = vshrl.u32 %v4725, 16
        %v4799 = vshll.u32 %v4725, 16
        %v4801 = vrot.slane %v4799, 1
        %v4802 = vor.u32 %v4797, %v4801
        %v4804 = vshll.u32 %v4765, 16
        %v4806 = vrot.slane %v4804, 1
        %v4807 = vsel %vm626, %v4802, %v4806
        %v4809 = vshrl.u32 %v4726, 16
        %v4811 = vshll.u32 %v4726, 16
        %v4813 = vrot.slane %v4811, 1
        %v4814 = vor.u32 %v4809, %v4813
        %v4816 = vshll.u32 %v4766, 16
        %v4818 = vrot.slane %v4816, 1
        %v4819 = vsel %vm626, %v4814, %v4818
        %v4821 = vshrl.u32 %v4727, 16
        %v4823 = vshll.u32 %v4727, 16
        %v4825 = vrot.slane %v4823, 1
        %v4826 = vor.u32 %v4821, %v4825
        %v4828 = vshll.u32 %v4767, 16
        %v4830 = vrot.slane %v4828, 1
        %v4831 = vsel %vm626, %v4826, %v4830
        %v4833 = vshrl.u32 %v4728, 16
        %v4835 = vshll.u32 %v4728, 16
        %v4837 = vrot.slane %v4835, 1
        %v4838 = vor.u32 %v4833, %v4837
        %v4840 = vshll.u32 %v4768, 16
        %v4842 = vrot.slane %v4840, 1
        %v4843 = vsel %vm626, %v4838, %v4842
        %v4845 = vshrl.u32 %v4729, 16
        %v4847 = vshll.u32 %v4729, 16
        %v4849 = vrot.slane %v4847, 1
        %v4850 = vor.u32 %v4845, %v4849
        %v4852 = vshll.u32 %v4769, 16
        %v4854 = vrot.slane %v4852, 1
        %v4855 = vsel %vm626, %v4850, %v4854
        %v4857 = vshrl.u32 %v4730, 16
        %v4859 = vshll.u32 %v4730, 16
        %v4861 = vrot.slane %v4859, 1
        %v4862 = vor.u32 %v4857, %v4861
        %v4864 = vshll.u32 %v4770, 16
        %v4866 = vrot.slane %v4864, 1
        %v4867 = vsel %vm626, %v4862, %v4866
        %v4869 = vshrl.u32 %v4731, 16
        %v4871 = vshll.u32 %v4731, 16
        %v4873 = vrot.slane %v4871, 1
        %v4874 = vor.u32 %v4869, %v4873
        %v4876 = vshll.u32 %v4771, 16
        %v4878 = vrot.slane %v4876, 1
        %v4879 = vsel %vm626, %v4874, %v4878
        %v4881 = vshrl.u32 %v4732, 16
        %v4883 = vshll.u32 %v4732, 16
        %v4885 = vrot.slane %v4883, 1
        %v4886 = vor.u32 %v4881, %v4885
        %v4888 = vshll.u32 %v4772, 16
        %v4890 = vrot.slane %v4888, 1
        %v4891 = vsel %vm626, %v4886, %v4890
        %v4893 = vshrl.u32 %v4733, 16
        %v4895 = vshll.u32 %v4733, 16
        %v4897 = vrot.slane %v4895, 1
        %v4898 = vor.u32 %v4893, %v4897
        %v4900 = vshll.u32 %v4773, 16
        %v4902 = vrot.slane %v4900, 1
        %v4903 = vsel %vm626, %v4898, %v4902
        %v4905 = vshrl.u32 %v4734, 16
        %v4907 = vshll.u32 %v4734, 16
        %v4909 = vrot.slane %v4907, 1
        %v4910 = vor.u32 %v4905, %v4909
        %v4912 = vshll.u32 %v4774, 16
        %v4914 = vrot.slane %v4912, 1
        %v4915 = vsel %vm626, %v4910, %v4914
        %v4917 = vshrl.u32 %v4735, 16
        %v4919 = vshll.u32 %v4735, 16
        %v4921 = vrot.slane %v4919, 1
        %v4922 = vor.u32 %v4917, %v4921
        %v4924 = vshll.u32 %v4775, 16
        %v4926 = vrot.slane %v4924, 1
        %v4927 = vsel %vm626, %v4922, %v4926
        %v4929 = vshrl.u32 %v4736, 16
        %v4931 = vshll.u32 %v4736, 16
        %v4933 = vrot.slane %v4931, 1
        %v4934 = vor.u32 %v4929, %v4933
        %v4936 = vshll.u32 %v4776, 16
        %v4938 = vrot.slane %v4936, 1
        %v4939 = vsel %vm626, %v4934, %v4938
        %v4941 = vshrl.u32 %v4737, 16
        %v4943 = vshll.u32 %v4737, 16
        %v4945 = vrot.slane %v4943, 1
        %v4946 = vor.u32 %v4941, %v4945
        %v4948 = vshll.u32 %v4777, 16
        %v4950 = vrot.slane %v4948, 1
        %v4951 = vsel %vm626, %v4946, %v4950
        %v4953 = vshrl.u32 %v4738, 16
        %v4955 = vshll.u32 %v4738, 16
        %v4957 = vrot.slane %v4955, 1
        %v4958 = vor.u32 %v4953, %v4957
        %v4960 = vshll.u32 %v4778, 16
        %v4962 = vrot.slane %v4960, 1
        %v4963 = vsel %vm626, %v4958, %v4962
        %v4965 = vshrl.u32 %v4739, 16
        %v4967 = vshll.u32 %v4739, 16
        %v4969 = vrot.slane %v4967, 1
        %v4970 = vor.u32 %v4965, %v4969
        %v4972 = vshll.u32 %v4779, 16
        %v4974 = vrot.slane %v4972, 1
        %v4975 = vsel %vm626, %v4970, %v4974
        %v4977 = vshrl.u32 %v4740, 16
        %v4979 = vshll.u32 %v4740, 16
        %v4981 = vrot.slane %v4979, 1
        %v4982 = vor.u32 %v4977, %v4981
        %v4984 = vshll.u32 %v4780, 16
        %v4986 = vrot.slane %v4984, 1
        %v4987 = vsel %vm626, %v4982, %v4986
        %v4989 = vshrl.u32 %v4741, 16
        %v4991 = vshll.u32 %v4741, 16
        %v4993 = vrot.slane %v4991, 1
        %v4994 = vor.u32 %v4989, %v4993
        %v4996 = vshll.u32 %v4781, 16
        %v4998 = vrot.slane %v4996, 1
        %v4999 = vsel %vm626, %v4994, %v4998
        %v5001 = vshrl.u32 %v4742, 16
        %v5003 = vshll.u32 %v4742, 16
        %v5005 = vrot.slane %v5003, 1
        %v5006 = vor.u32 %v5001, %v5005
        %v5008 = vshll.u32 %v4782, 16
        %v5010 = vrot.slane %v5008, 1
        %v5011 = vsel %vm626, %v5006, %v5010
        %v5013 = vshrl.u32 %v4743, 16
        %v5015 = vshll.u32 %v4743, 16
        %v5017 = vrot.slane %v5015, 1
        %v5018 = vor.u32 %v5013, %v5017
        %v5020 = vshll.u32 %v4783, 16
        %v5022 = vrot.slane %v5020, 1
        %v5023 = vsel %vm626, %v5018, %v5022
        %5024 = vrot.lane.b32.xlu0 %v4795, 32
        %v5025 = vpop.permute.xlu0 %5024
        %5026 = vrot.lane.b32.xlu0 %v4807, 32
        %v5027 = vpop.permute.xlu0 %5026
        %5028 = vrot.lane.b32.xlu0 %v4819, 32
        %v5029 = vpop.permute.xlu0 %5028
        %5030 = vrot.lane.b32.xlu0 %v4831, 32
        %v5031 = vpop.permute.xlu0 %5030
        %5032 = vrot.lane.b32.xlu0 %v4843, 32
        %v5033 = vpop.permute.xlu0 %5032
        %5034 = vrot.lane.b32.xlu0 %v4855, 32
        %v5035 = vpop.permute.xlu0 %5034
        %5036 = vrot.lane.b32.xlu0 %v4867, 32
        %v5037 = vpop.permute.xlu0 %5036
        %5038 = vrot.lane.b32.xlu0 %v4879, 32
        %v5039 = vpop.permute.xlu0 %5038
        %5040 = vrot.lane.b32.xlu0 %v4891, 32
        %v5041 = vpop.permute.xlu0 %5040
        %5042 = vrot.lane.b32.xlu0 %v4903, 32
        %v5043 = vpop.permute.xlu0 %5042
        %5044 = vrot.lane.b32.xlu0 %v4915, 32
        %v5045 = vpop.permute.xlu0 %5044
        %5046 = vrot.lane.b32.xlu0 %v4927, 32
        %v5047 = vpop.permute.xlu0 %5046
        %5048 = vrot.lane.b32.xlu0 %v4939, 32
        %v5049 = vpop.permute.xlu0 %5048
        %5050 = vrot.lane.b32.xlu0 %v4951, 32
        %v5051 = vpop.permute.xlu0 %5050
        %5052 = vrot.lane.b32.xlu0 %v4963, 32
        %v5053 = vpop.permute.xlu0 %5052
        %5054 = vrot.lane.b32.xlu0 %v4975, 32
        %v5055 = vpop.permute.xlu0 %5054
        %5056 = vrot.lane.b32.xlu0 %v4987, 32
        %v5057 = vpop.permute.xlu0 %5056
        %5058 = vrot.lane.b32.xlu0 %v4999, 32
        %v5059 = vpop.permute.xlu0 %5058
        %5060 = vrot.lane.b32.xlu0 %v5011, 32
        %v5061 = vpop.permute.xlu0 %5060
        %5062 = vrot.lane.b32.xlu0 %v5023, 32
        %v5063 = vpop.permute.xlu0 %5062
        %5084 = vst.msk [vmem:[#allocation2] sm:$0xff] %vm927, %v5025
        %5085 = vst.msk [vmem:[#allocation2 + $0x10] sm:$0xff] %vm927, %v5027
        %5086 = vst.msk [vmem:[#allocation2 + $0x20] sm:$0xff] %vm927, %v5029
        %5087 = vst.msk [vmem:[#allocation2 + $0x30] sm:$0xff] %vm927, %v5031
        %5088 = vst.msk [vmem:[#allocation2 + $0x40] sm:$0xff] %vm927, %v5033
        %5089 = vst.msk [vmem:[#allocation2 + $0x50] sm:$0xff] %vm927, %v5035
        %5090 = vst.msk [vmem:[#allocation2 + $0x60] sm:$0xff] %vm927, %v5037
        %5091 = vst.msk [vmem:[#allocation2 + $0x70] sm:$0xff] %vm927, %v5039
        %5092 = vst.msk [vmem:[#allocation2 + $0x80] sm:$0xff] %vm927, %v5041
        %5093 = vst.msk [vmem:[#allocation2 + $0x90] sm:$0xff] %vm927, %v5043
        %5094 = vst.msk [vmem:[#allocation2 + $0xa0] sm:$0xff] %vm927, %v5045
        %5095 = vst.msk [vmem:[#allocation2 + $0xb0] sm:$0xff] %vm927, %v5047
        %5096 = vst.msk [vmem:[#allocation2 + $0xc0] sm:$0xff] %vm927, %v5049
        %5097 = vst.msk [vmem:[#allocation2 + $0xd0] sm:$0xff] %vm927, %v5051
        %5098 = vst.msk [vmem:[#allocation2 + $0xe0] sm:$0xff] %vm927, %v5053
        %5099 = vst.msk [vmem:[#allocation2 + $0xf0] sm:$0xff] %vm927, %v5055
        %5100 = vst.msk [vmem:[#allocation2 + $0x100] sm:$0xff] %vm927, %v5057
        %5101 = vst.msk [vmem:[#allocation2 + $0x110] sm:$0xff] %vm927, %v5059
        %5102 = vst.msk [vmem:[#allocation2 + $0x120] sm:$0xff] %vm927, %v5061
        %5103 = vst.msk [vmem:[#allocation2 + $0x130] sm:$0xff] %vm927, %v5063
        %v5144 = vrot.slane %v4724, 1
        %v5145 = vrot.slane %v4764, 1
        %v5146 = vsel %vm988, %v5144, %v5145
        %v5147 = vrot.slane %v4725, 1
        %v5148 = vrot.slane %v4765, 1
        %v5149 = vsel %vm988, %v5147, %v5148
        %v5150 = vrot.slane %v4726, 1
        %v5151 = vrot.slane %v4766, 1
        %v5152 = vsel %vm988, %v5150, %v5151
        %v5153 = vrot.slane %v4727, 1
        %v5154 = vrot.slane %v4767, 1
        %v5155 = vsel %vm988, %v5153, %v5154
        %v5156 = vrot.slane %v4728, 1
        %v5157 = vrot.slane %v4768, 1
        %v5158 = vsel %vm988, %v5156, %v5157
        %v5159 = vrot.slane %v4729, 1
        %v5160 = vrot.slane %v4769, 1
        %v5161 = vsel %vm988, %v5159, %v5160
        %v5162 = vrot.slane %v4730, 1
        %v5163 = vrot.slane %v4770, 1
        %v5164 = vsel %vm988, %v5162, %v5163
        %v5165 = vrot.slane %v4731, 1
        %v5166 = vrot.slane %v4771, 1
        %v5167 = vsel %vm988, %v5165, %v5166
        %v5168 = vrot.slane %v4732, 1
        %v5169 = vrot.slane %v4772, 1
        %v5170 = vsel %vm988, %v5168, %v5169
        %v5171 = vrot.slane %v4733, 1
        %v5172 = vrot.slane %v4773, 1
        %v5173 = vsel %vm988, %v5171, %v5172
        %v5174 = vrot.slane %v4734, 1
        %v5175 = vrot.slane %v4774, 1
        %v5176 = vsel %vm988, %v5174, %v5175
        %v5177 = vrot.slane %v4735, 1
        %v5178 = vrot.slane %v4775, 1
        %v5179 = vsel %vm988, %v5177, %v5178
        %v5180 = vrot.slane %v4736, 1
        %v5181 = vrot.slane %v4776, 1
        %v5182 = vsel %vm988, %v5180, %v5181
        %v5183 = vrot.slane %v4737, 1
        %v5184 = vrot.slane %v4777, 1
        %v5185 = vsel %vm988, %v5183, %v5184
        %v5186 = vrot.slane %v4738, 1
        %v5187 = vrot.slane %v4778, 1
        %v5188 = vsel %vm988, %v5186, %v5187
        %v5189 = vrot.slane %v4739, 1
        %v5190 = vrot.slane %v4779, 1
        %v5191 = vsel %vm988, %v5189, %v5190
        %v5192 = vrot.slane %v4740, 1
        %v5193 = vrot.slane %v4780, 1
        %v5194 = vsel %vm988, %v5192, %v5193
        %v5195 = vrot.slane %v4741, 1
        %v5196 = vrot.slane %v4781, 1
        %v5197 = vsel %vm988, %v5195, %v5196
        %v5198 = vrot.slane %v4742, 1
        %v5199 = vrot.slane %v4782, 1
        %v5200 = vsel %vm988, %v5198, %v5199
        %v5201 = vrot.slane %v4743, 1
        %v5202 = vrot.slane %v4783, 1
        %v5203 = vsel %vm988, %v5201, %v5202
        %5204 = vrot.lane.b32.xlu0 %v5146, 64
        %v5205 = vpop.permute.xlu0 %5204
        %5206 = vrot.lane.b32.xlu0 %v5149, 64
        %v5207 = vpop.permute.xlu0 %5206
        %5208 = vrot.lane.b32.xlu0 %v5152, 64
        %v5209 = vpop.permute.xlu0 %5208
        %5210 = vrot.lane.b32.xlu0 %v5155, 64
        %v5211 = vpop.permute.xlu0 %5210
        %5212 = vrot.lane.b32.xlu0 %v5158, 64
        %v5213 = vpop.permute.xlu0 %5212
        %5214 = vrot.lane.b32.xlu0 %v5161, 64
        %v5215 = vpop.permute.xlu0 %5214
        %5216 = vrot.lane.b32.xlu0 %v5164, 64
        %v5217 = vpop.permute.xlu0 %5216
        %5218 = vrot.lane.b32.xlu0 %v5167, 64
        %v5219 = vpop.permute.xlu0 %5218
        %5220 = vrot.lane.b32.xlu0 %v5170, 64
        %v5221 = vpop.permute.xlu0 %5220
        %5222 = vrot.lane.b32.xlu0 %v5173, 64
        %v5223 = vpop.permute.xlu0 %5222
        %5224 = vrot.lane.b32.xlu0 %v5176, 64
        %v5225 = vpop.permute.xlu0 %5224
        %5226 = vrot.lane.b32.xlu0 %v5179, 64
        %v5227 = vpop.permute.xlu0 %5226
        %5228 = vrot.lane.b32.xlu0 %v5182, 64
        %v5229 = vpop.permute.xlu0 %5228
        %5230 = vrot.lane.b32.xlu0 %v5185, 64
        %v5231 = vpop.permute.xlu0 %5230
        %5232 = vrot.lane.b32.xlu0 %v5188, 64
        %v5233 = vpop.permute.xlu0 %5232
        %5234 = vrot.lane.b32.xlu0 %v5191, 64
        %v5235 = vpop.permute.xlu0 %5234
        %5236 = vrot.lane.b32.xlu0 %v5194, 64
        %v5237 = vpop.permute.xlu0 %5236
        %5238 = vrot.lane.b32.xlu0 %v5197, 64
        %v5239 = vpop.permute.xlu0 %5238
        %5240 = vrot.lane.b32.xlu0 %v5200, 64
        %v5241 = vpop.permute.xlu0 %5240
        %5242 = vrot.lane.b32.xlu0 %v5203, 64
        %v5243 = vpop.permute.xlu0 %5242
        %5264 = vst.msk [vmem:[#allocation2] sm:$0xff] %vm1109, %v5205
        %5265 = vst.msk [vmem:[#allocation2 + $0x10] sm:$0xff] %vm1109, %v5207
        %5266 = vst.msk [vmem:[#allocation2 + $0x20] sm:$0xff] %vm1109, %v5209
        %5267 = vst.msk [vmem:[#allocation2 + $0x30] sm:$0xff] %vm1109, %v5211
        %5268 = vst.msk [vmem:[#allocation2 + $0x40] sm:$0xff] %vm1109, %v5213
        %5269 = vst.msk [vmem:[#allocation2 + $0x50] sm:$0xff] %vm1109, %v5215
        %5270 = vst.msk [vmem:[#allocation2 + $0x60] sm:$0xff] %vm1109, %v5217
        %5271 = vst.msk [vmem:[#allocation2 + $0x70] sm:$0xff] %vm1109, %v5219
        %5272 = vst.msk [vmem:[#allocation2 + $0x80] sm:$0xff] %vm1109, %v5221
        %5273 = vst.msk [vmem:[#allocation2 + $0x90] sm:$0xff] %vm1109, %v5223
        %5274 = vst.msk [vmem:[#allocation2 + $0xa0] sm:$0xff] %vm1109, %v5225
        %5275 = vst.msk [vmem:[#allocation2 + $0xb0] sm:$0xff] %vm1109, %v5227
        %5276 = vst.msk [vmem:[#allocation2 + $0xc0] sm:$0xff] %vm1109, %v5229
        %5277 = vst.msk [vmem:[#allocation2 + $0xd0] sm:$0xff] %vm1109, %v5231
        %5278 = vst.msk [vmem:[#allocation2 + $0xe0] sm:$0xff] %vm1109, %v5233
        %5279 = vst.msk [vmem:[#allocation2 + $0xf0] sm:$0xff] %vm1109, %v5235
        %5280 = vst.msk [vmem:[#allocation2 + $0x100] sm:$0xff] %vm1109, %v5237
        %5281 = vst.msk [vmem:[#allocation2 + $0x110] sm:$0xff] %vm1109, %v5239
        %5282 = vst.msk [vmem:[#allocation2 + $0x120] sm:$0xff] %vm1109, %v5241
        %5283 = vst.msk [vmem:[#allocation2 + $0x130] sm:$0xff] %vm1109, %v5243
        %v5284 = vrot.slane %v4785, 1
        %v5285 = vrot.slane %v4787, 2
        %v5286 = vor.u32 %v5284, %v5285
        %v5287 = vshrl.u32 %v4764, 16
        %v5289 = vrot.slane %v5287, 1
        %v5290 = vrot.slane %v4792, 2
        %v5291 = vor.u32 %v5289, %v5290
        %v5292 = vsel %vm1130, %v5286, %v5291
        %v5293 = vrot.slane %v4797, 1
        %v5294 = vrot.slane %v4799, 2
        %v5295 = vor.u32 %v5293, %v5294
        %v5296 = vshrl.u32 %v4765, 16
        %v5298 = vrot.slane %v5296, 1
        %v5299 = vrot.slane %v4804, 2
        %v5300 = vor.u32 %v5298, %v5299
        %v5301 = vsel %vm1130, %v5295, %v5300
        %v5302 = vrot.slane %v4809, 1
        %v5303 = vrot.slane %v4811, 2
        %v5304 = vor.u32 %v5302, %v5303
        %v5305 = vshrl.u32 %v4766, 16
        %v5307 = vrot.slane %v5305, 1
        %v5308 = vrot.slane %v4816, 2
        %v5309 = vor.u32 %v5307, %v5308
        %v5310 = vsel %vm1130, %v5304, %v5309
        %v5311 = vrot.slane %v4821, 1
        %v5312 = vrot.slane %v4823, 2
        %v5313 = vor.u32 %v5311, %v5312
        %v5314 = vshrl.u32 %v4767, 16
        %v5316 = vrot.slane %v5314, 1
        %v5317 = vrot.slane %v4828, 2
        %v5318 = vor.u32 %v5316, %v5317
        %v5319 = vsel %vm1130, %v5313, %v5318
        %v5320 = vrot.slane %v4833, 1
        %v5321 = vrot.slane %v4835, 2
        %v5322 = vor.u32 %v5320, %v5321
        %v5323 = vshrl.u32 %v4768, 16
        %v5325 = vrot.slane %v5323, 1
        %v5326 = vrot.slane %v4840, 2
        %v5327 = vor.u32 %v5325, %v5326
        %v5328 = vsel %vm1130, %v5322, %v5327
        %v5329 = vrot.slane %v4845, 1
        %v5330 = vrot.slane %v4847, 2
        %v5331 = vor.u32 %v5329, %v5330
        %v5332 = vshrl.u32 %v4769, 16
        %v5334 = vrot.slane %v5332, 1
        %v5335 = vrot.slane %v4852, 2
        %v5336 = vor.u32 %v5334, %v5335
        %v5337 = vsel %vm1130, %v5331, %v5336
        %v5338 = vrot.slane %v4857, 1
        %v5339 = vrot.slane %v4859, 2
        %v5340 = vor.u32 %v5338, %v5339
        %v5341 = vshrl.u32 %v4770, 16
        %v5343 = vrot.slane %v5341, 1
        %v5344 = vrot.slane %v4864, 2
        %v5345 = vor.u32 %v5343, %v5344
        %v5346 = vsel %vm1130, %v5340, %v5345
        %v5347 = vrot.slane %v4869, 1
        %v5348 = vrot.slane %v4871, 2
        %v5349 = vor.u32 %v5347, %v5348
        %v5350 = vshrl.u32 %v4771, 16
        %v5352 = vrot.slane %v5350, 1
        %v5353 = vrot.slane %v4876, 2
        %v5354 = vor.u32 %v5352, %v5353
        %v5355 = vsel %vm1130, %v5349, %v5354
        %v5356 = vrot.slane %v4881, 1
        %v5357 = vrot.slane %v4883, 2
        %v5358 = vor.u32 %v5356, %v5357
        %v5359 = vshrl.u32 %v4772, 16
        %v5361 = vrot.slane %v5359, 1
        %v5362 = vrot.slane %v4888, 2
        %v5363 = vor.u32 %v5361, %v5362
        %v5364 = vsel %vm1130, %v5358, %v5363
        %v5365 = vrot.slane %v4893, 1
        %v5366 = vrot.slane %v4895, 2
        %v5367 = vor.u32 %v5365, %v5366
        %v5368 = vshrl.u32 %v4773, 16
        %v5370 = vrot.slane %v5368, 1
        %v5371 = vrot.slane %v4900, 2
        %v5372 = vor.u32 %v5370, %v5371
        %v5373 = vsel %vm1130, %v5367, %v5372
        %v5374 = vrot.slane %v4905, 1
        %v5375 = vrot.slane %v4907, 2
        %v5376 = vor.u32 %v5374, %v5375
        %v5377 = vshrl.u32 %v4774, 16
        %v5379 = vrot.slane %v5377, 1
        %v5380 = vrot.slane %v4912, 2
        %v5381 = vor.u32 %v5379, %v5380
        %v5382 = vsel %vm1130, %v5376, %v5381
        %v5383 = vrot.slane %v4917, 1
        %v5384 = vrot.slane %v4919, 2
        %v5385 = vor.u32 %v5383, %v5384
        %v5386 = vshrl.u32 %v4775, 16
        %v5388 = vrot.slane %v5386, 1
        %v5389 = vrot.slane %v4924, 2
        %v5390 = vor.u32 %v5388, %v5389
        %v5391 = vsel %vm1130, %v5385, %v5390
        %v5392 = vrot.slane %v4929, 1
        %v5393 = vrot.slane %v4931, 2
        %v5394 = vor.u32 %v5392, %v5393
        %v5395 = vshrl.u32 %v4776, 16
        %v5397 = vrot.slane %v5395, 1
        %v5398 = vrot.slane %v4936, 2
        %v5399 = vor.u32 %v5397, %v5398
        %v5400 = vsel %vm1130, %v5394, %v5399
        %v5401 = vrot.slane %v4941, 1
        %v5402 = vrot.slane %v4943, 2
        %v5403 = vor.u32 %v5401, %v5402
        %v5404 = vshrl.u32 %v4777, 16
        %v5406 = vrot.slane %v5404, 1
        %v5407 = vrot.slane %v4948, 2
        %v5408 = vor.u32 %v5406, %v5407
        %v5409 = vsel %vm1130, %v5403, %v5408
        %v5410 = vrot.slane %v4953, 1
        %v5411 = vrot.slane %v4955, 2
        %v5412 = vor.u32 %v5410, %v5411
        %v5413 = vshrl.u32 %v4778, 16
        %v5415 = vrot.slane %v5413, 1
        %v5416 = vrot.slane %v4960, 2
        %v5417 = vor.u32 %v5415, %v5416
        %v5418 = vsel %vm1130, %v5412, %v5417
        %v5419 = vrot.slane %v4965, 1
        %v5420 = vrot.slane %v4967, 2
        %v5421 = vor.u32 %v5419, %v5420
        %v5422 = vshrl.u32 %v4779, 16
        %v5424 = vrot.slane %v5422, 1
        %v5425 = vrot.slane %v4972, 2
        %v5426 = vor.u32 %v5424, %v5425
        %v5427 = vsel %vm1130, %v5421, %v5426
        %v5428 = vrot.slane %v4977, 1
        %v5429 = vrot.slane %v4979, 2
        %v5430 = vor.u32 %v5428, %v5429
        %v5431 = vshrl.u32 %v4780, 16
        %v5433 = vrot.slane %v5431, 1
        %v5434 = vrot.slane %v4984, 2
        %v5435 = vor.u32 %v5433, %v5434
        %v5436 = vsel %vm1130, %v5430, %v5435
        %v5437 = vrot.slane %v4989, 1
        %v5438 = vrot.slane %v4991, 2
        %v5439 = vor.u32 %v5437, %v5438
        %v5440 = vshrl.u32 %v4781, 16
        %v5442 = vrot.slane %v5440, 1
        %v5443 = vrot.slane %v4996, 2
        %v5444 = vor.u32 %v5442, %v5443
        %v5445 = vsel %vm1130, %v5439, %v5444
        %v5446 = vrot.slane %v5001, 1
        %v5447 = vrot.slane %v5003, 2
        %v5448 = vor.u32 %v5446, %v5447
        %v5449 = vshrl.u32 %v4782, 16
        %v5451 = vrot.slane %v5449, 1
        %v5452 = vrot.slane %v5008, 2
        %v5453 = vor.u32 %v5451, %v5452
        %v5454 = vsel %vm1130, %v5448, %v5453
        %v5455 = vrot.slane %v5013, 1
        %v5456 = vrot.slane %v5015, 2
        %v5457 = vor.u32 %v5455, %v5456
        %v5458 = vshrl.u32 %v4783, 16
        %v5460 = vrot.slane %v5458, 1
        %v5461 = vrot.slane %v5020, 2
        %v5462 = vor.u32 %v5460, %v5461
        %v5463 = vsel %vm1130, %v5457, %v5462
        %5464 = vrot.lane.b32.xlu0 %v5292, 96
        %v5465 = vpop.permute.xlu0 %5464
        %5466 = vrot.lane.b32.xlu0 %v5301, 96
        %v5467 = vpop.permute.xlu0 %5466
        %5468 = vrot.lane.b32.xlu0 %v5310, 96
        %v5469 = vpop.permute.xlu0 %5468
        %5470 = vrot.lane.b32.xlu0 %v5319, 96
        %v5471 = vpop.permute.xlu0 %5470
        %5472 = vrot.lane.b32.xlu0 %v5328, 96
        %v5473 = vpop.permute.xlu0 %5472
        %5474 = vrot.lane.b32.xlu0 %v5337, 96
        %v5475 = vpop.permute.xlu0 %5474
        %5476 = vrot.lane.b32.xlu0 %v5346, 96
        %v5477 = vpop.permute.xlu0 %5476
        %5478 = vrot.lane.b32.xlu0 %v5355, 96
        %v5479 = vpop.permute.xlu0 %5478
        %5480 = vrot.lane.b32.xlu0 %v5364, 96
        %v5481 = vpop.permute.xlu0 %5480
        %5482 = vrot.lane.b32.xlu0 %v5373, 96
        %v5483 = vpop.permute.xlu0 %5482
        %5484 = vrot.lane.b32.xlu0 %v5382, 96
        %v5485 = vpop.permute.xlu0 %5484
        %5486 = vrot.lane.b32.xlu0 %v5391, 96
        %v5487 = vpop.permute.xlu0 %5486
        %5488 = vrot.lane.b32.xlu0 %v5400, 96
        %v5489 = vpop.permute.xlu0 %5488
        %5490 = vrot.lane.b32.xlu0 %v5409, 96
        %v5491 = vpop.permute.xlu0 %5490
        %5492 = vrot.lane.b32.xlu0 %v5418, 96
        %v5493 = vpop.permute.xlu0 %5492
        %5494 = vrot.lane.b32.xlu0 %v5427, 96
        %v5495 = vpop.permute.xlu0 %5494
        %5496 = vrot.lane.b32.xlu0 %v5436, 96
        %v5497 = vpop.permute.xlu0 %5496
        %5498 = vrot.lane.b32.xlu0 %v5445, 96
        %v5499 = vpop.permute.xlu0 %5498
        %5500 = vrot.lane.b32.xlu0 %v5454, 96
        %v5501 = vpop.permute.xlu0 %5500
        %5502 = vrot.lane.b32.xlu0 %v5463, 96
        %v5503 = vpop.permute.xlu0 %5502
        %5524 = vst.msk [vmem:[#allocation2] sm:$0xff] %vm1371, %v5465
        %5525 = vst.msk [vmem:[#allocation2 + $0x10] sm:$0xff] %vm1371, %v5467
        %5526 = vst.msk [vmem:[#allocation2 + $0x20] sm:$0xff] %vm1371, %v5469
        %5527 = vst.msk [vmem:[#allocation2 + $0x30] sm:$0xff] %vm1371, %v5471
        %5528 = vst.msk [vmem:[#allocation2 + $0x40] sm:$0xff] %vm1371, %v5473
        %5529 = vst.msk [vmem:[#allocation2 + $0x50] sm:$0xff] %vm1371, %v5475
        %5530 = vst.msk [vmem:[#allocation2 + $0x60] sm:$0xff] %vm1371, %v5477
        %5531 = vst.msk [vmem:[#allocation2 + $0x70] sm:$0xff] %vm1371, %v5479
        %5532 = vst.msk [vmem:[#allocation2 + $0x80] sm:$0xff] %vm1371, %v5481
        %5533 = vst.msk [vmem:[#allocation2 + $0x90] sm:$0xff] %vm1371, %v5483
        %5534 = vst.msk [vmem:[#allocation2 + $0xa0] sm:$0xff] %vm1371, %v5485
        %5535 = vst.msk [vmem:[#allocation2 + $0xb0] sm:$0xff] %vm1371, %v5487
        %5536 = vst.msk [vmem:[#allocation2 + $0xc0] sm:$0xff] %vm1371, %v5489
        %5537 = vst.msk [vmem:[#allocation2 + $0xd0] sm:$0xff] %vm1371, %v5491
        %5538 = vst.msk [vmem:[#allocation2 + $0xe0] sm:$0xff] %vm1371, %v5493
        %5539 = vst.msk [vmem:[#allocation2 + $0xf0] sm:$0xff] %vm1371, %v5495
        %5540 = vst.msk [vmem:[#allocation2 + $0x100] sm:$0xff] %vm1371, %v5497
        %5541 = vst.msk [vmem:[#allocation2 + $0x110] sm:$0xff] %vm1371, %v5499
        %5542 = vst.msk [vmem:[#allocation2 + $0x120] sm:$0xff] %vm1371, %v5501
        %5543 = vst.msk [vmem:[#allocation2 + $0x130] sm:$0xff] %vm1371, %v5503
        %v5544 = vrot.slane %v4724, 2
        %v5545 = vrot.slane %v4764, 2
        %v5546 = vsel %vm1392, %v5544, %v5545
        %v5547 = vrot.slane %v4725, 2
        %v5548 = vrot.slane %v4765, 2
        %v5549 = vsel %vm1392, %v5547, %v5548
        %v5550 = vrot.slane %v4726, 2
        %v5551 = vrot.slane %v4766, 2
        %v5552 = vsel %vm1392, %v5550, %v5551
        %v5553 = vrot.slane %v4727, 2
        %v5554 = vrot.slane %v4767, 2
        %v5555 = vsel %vm1392, %v5553, %v5554
        %v5556 = vrot.slane %v4728, 2
        %v5557 = vrot.slane %v4768, 2
        %v5558 = vsel %vm1392, %v5556, %v5557
        %v5559 = vrot.slane %v4729, 2
        %v5560 = vrot.slane %v4769, 2
        %v5561 = vsel %vm1392, %v5559, %v5560
        %v5562 = vrot.slane %v4730, 2
        %v5563 = vrot.slane %v4770, 2
        %v5564 = vsel %vm1392, %v5562, %v5563
        %v5565 = vrot.slane %v4731, 2
        %v5566 = vrot.slane %v4771, 2
        %v5567 = vsel %vm1392, %v5565, %v5566
        %v5568 = vrot.slane %v4732, 2
        %v5569 = vrot.slane %v4772, 2
        %v5570 = vsel %vm1392, %v5568, %v5569
        %v5571 = vrot.slane %v4733, 2
        %v5572 = vrot.slane %v4773, 2
        %v5573 = vsel %vm1392, %v5571, %v5572
        %v5574 = vrot.slane %v4734, 2
        %v5575 = vrot.slane %v4774, 2
        %v5576 = vsel %vm1392, %v5574, %v5575
        %v5577 = vrot.slane %v4735, 2
        %v5578 = vrot.slane %v4775, 2
        %v5579 = vsel %vm1392, %v5577, %v5578
        %v5580 = vrot.slane %v4736, 2
        %v5581 = vrot.slane %v4776, 2
        %v5582 = vsel %vm1392, %v5580, %v5581
        %v5583 = vrot.slane %v4737, 2
        %v5584 = vrot.slane %v4777, 2
        %v5585 = vsel %vm1392, %v5583, %v5584
        %v5586 = vrot.slane %v4738, 2
        %v5587 = vrot.slane %v4778, 2
        %v5588 = vsel %vm1392, %v5586, %v5587
        %v5589 = vrot.slane %v4739, 2
        %v5590 = vrot.slane %v4779, 2
        %v5591 = vsel %vm1392, %v5589, %v5590
        %v5592 = vrot.slane %v4740, 2
        %v5593 = vrot.slane %v4780, 2
        %v5594 = vsel %vm1392, %v5592, %v5593
        %v5595 = vrot.slane %v4741, 2
        %v5596 = vrot.slane %v4781, 2
        %v5597 = vsel %vm1392, %v5595, %v5596
        %v5598 = vrot.slane %v4742, 2
        %v5599 = vrot.slane %v4782, 2
        %v5600 = vsel %vm1392, %v5598, %v5599
        %v5601 = vrot.slane %v4743, 2
        %v5602 = vrot.slane %v4783, 2
        %v5603 = vsel %vm1392, %v5601, %v5602
        %5624 = vst.msk [vmem:[#allocation2 + $0x8] sm:$0xff] %vm585, %v5546
        %5625 = vst.msk [vmem:[#allocation2 + $0x18] sm:$0xff] %vm585, %v5549
        %5626 = vst.msk [vmem:[#allocation2 + $0x28] sm:$0xff] %vm585, %v5552
        %5627 = vst.msk [vmem:[#allocation2 + $0x38] sm:$0xff] %vm585, %v5555
        %5628 = vst.msk [vmem:[#allocation2 + $0x48] sm:$0xff] %vm585, %v5558
        %5629 = vst.msk [vmem:[#allocation2 + $0x58] sm:$0xff] %vm585, %v5561
        %5630 = vst.msk [vmem:[#allocation2 + $0x68] sm:$0xff] %vm585, %v5564
        %5631 = vst.msk [vmem:[#allocation2 + $0x78] sm:$0xff] %vm585, %v5567
        %5632 = vst.msk [vmem:[#allocation2 + $0x88] sm:$0xff] %vm585, %v5570
        %5633 = vst.msk [vmem:[#allocation2 + $0x98] sm:$0xff] %vm585, %v5573
        %5634 = vst.msk [vmem:[#allocation2 + $0xa8] sm:$0xff] %vm585, %v5576
        %5635 = vst.msk [vmem:[#allocation2 + $0xb8] sm:$0xff] %vm585, %v5579
        %5636 = vst.msk [vmem:[#allocation2 + $0xc8] sm:$0xff] %vm585, %v5582
        %5637 = vst.msk [vmem:[#allocation2 + $0xd8] sm:$0xff] %vm585, %v5585
        %5638 = vst.msk [vmem:[#allocation2 + $0xe8] sm:$0xff] %vm585, %v5588
        %5639 = vst.msk [vmem:[#allocation2 + $0xf8] sm:$0xff] %vm585, %v5591
        %5640 = vst.msk [vmem:[#allocation2 + $0x108] sm:$0xff] %vm585, %v5594
        %5641 = vst.msk [vmem:[#allocation2 + $0x118] sm:$0xff] %vm585, %v5597
        %5642 = vst.msk [vmem:[#allocation2 + $0x128] sm:$0xff] %vm585, %v5600
        %5643 = vst.msk [vmem:[#allocation2 + $0x138] sm:$0xff] %vm585, %v5603
        %v5644 = vld [vmem:[#allocation2] sm:$0xff]
        %v5645 = vld [vmem:[#allocation2 + $0x8] sm:$0xff]
        %v5646 = vld [vmem:[#allocation2 + $0x10] sm:$0xff]
        %v5647 = vld [vmem:[#allocation2 + $0x18] sm:$0xff]
        %v5648 = vld [vmem:[#allocation2 + $0x20] sm:$0xff]
        %v5649 = vld [vmem:[#allocation2 + $0x28] sm:$0xff]
        %v5650 = vld [vmem:[#allocation2 + $0x30] sm:$0xff]
        %v5651 = vld [vmem:[#allocation2 + $0x38] sm:$0xff]
        %v5652 = vld [vmem:[#allocation2 + $0x40] sm:$0xff]
        %v5653 = vld [vmem:[#allocation2 + $0x48] sm:$0xff]
        %v5654 = vld [vmem:[#allocation2 + $0x50] sm:$0xff]
        %v5655 = vld [vmem:[#allocation2 + $0x58] sm:$0xff]
        %v5656 = vld [vmem:[#allocation2 + $0x60] sm:$0xff]
        %v5657 = vld [vmem:[#allocation2 + $0x68] sm:$0xff]
        %v5658 = vld [vmem:[#allocation2 + $0x70] sm:$0xff]
        %v5659 = vld [vmem:[#allocation2 + $0x78] sm:$0xff]
        %v5660 = vld [vmem:[#allocation2 + $0x80] sm:$0xff]
        %v5661 = vld [vmem:[#allocation2 + $0x88] sm:$0xff]
        %v5662 = vld [vmem:[#allocation2 + $0x90] sm:$0xff]
        %v5663 = vld [vmem:[#allocation2 + $0x98] sm:$0xff]
        %v5664 = vld [vmem:[#allocation2 + $0xa0] sm:$0xff]
        %v5665 = vld [vmem:[#allocation2 + $0xa8] sm:$0xff]
        %v5666 = vld [vmem:[#allocation2 + $0xb0] sm:$0xff]
        %v5667 = vld [vmem:[#allocation2 + $0xb8] sm:$0xff]
        %v5668 = vld [vmem:[#allocation2 + $0xc0] sm:$0xff]
        %v5669 = vld [vmem:[#allocation2 + $0xc8] sm:$0xff]
        %v5670 = vld [vmem:[#allocation2 + $0xd0] sm:$0xff]
        %v5671 = vld [vmem:[#allocation2 + $0xd8] sm:$0xff]
        %v5672 = vld [vmem:[#allocation2 + $0xe0] sm:$0xff]
        %v5673 = vld [vmem:[#allocation2 + $0xe8] sm:$0xff]
        %v5674 = vld [vmem:[#allocation2 + $0xf0] sm:$0xff]
        %v5675 = vld [vmem:[#allocation2 + $0xf8] sm:$0xff]
        %v5676 = vld [vmem:[%s5] sm:$0xf]
        %v5677 = vld [vmem:[%s5 + $0x4] sm:$0xf]
        %v5678 = vld [vmem:[%s5 + $0x8] sm:$0xf]
        %v5679 = vld [vmem:[%s5 + $0xc] sm:$0xf]
        %v5680 = vld [vmem:[%s5 + $0x10] sm:$0xf]
        %v5681 = vld [vmem:[%s5 + $0x14] sm:$0xf]
        %v5682 = vld [vmem:[%s5 + $0x18] sm:$0xf]
        %v5683 = vld [vmem:[%s5 + $0x1c] sm:$0xf]
        %v5684 = vld [vmem:[%s5 + $0x20] sm:$0xf]
        %v5685 = vld [vmem:[%s5 + $0x24] sm:$0xf]
        %v5686 = vld [vmem:[%s5 + $0x28] sm:$0xf]
        %v5687 = vld [vmem:[%s5 + $0x2c] sm:$0xf]
        %v5688 = vld [vmem:[%s5 + $0x30] sm:$0xf]
        %v5689 = vld [vmem:[%s5 + $0x34] sm:$0xf]
        %v5690 = vld [vmem:[%s5 + $0x38] sm:$0xf]
        %v5691 = vld [vmem:[%s5 + $0x3c] sm:$0xf]
        %v5692 = vld [vmem:[%s5 + $0x40] sm:$0xf]
        %v5693 = vld [vmem:[%s5 + $0x44] sm:$0xf]
        %v5694 = vld [vmem:[%s5 + $0x48] sm:$0xf]
        %v5695 = vld [vmem:[%s5 + $0x4c] sm:$0xf]
        %v5696 = vld [vmem:[%s2580] sm:$0xff]
        %v5697 = vld [vmem:[%s2580 + $0x8] sm:$0xff]
        %v5698 = vld [vmem:[%s2580 + $0x10] sm:$0xff]
        %v5699 = vld [vmem:[%s2580 + $0x18] sm:$0xff]
        %v5700 = vld [vmem:[%s2580 + $0x20] sm:$0xff]
        %v5701 = vld [vmem:[%s2580 + $0x28] sm:$0xff]
        %v5702 = vld [vmem:[%s2580 + $0x30] sm:$0xff]
        %v5703 = vld [vmem:[%s2580 + $0x38] sm:$0xff]
        %v5704 = vld [vmem:[%s2580 + $0x40] sm:$0xff]
        %v5705 = vld [vmem:[%s2580 + $0x48] sm:$0xff]
        %v5706 = vld [vmem:[%s2580 + $0x50] sm:$0xff]
        %v5707 = vld [vmem:[%s2580 + $0x58] sm:$0xff]
        %v5708 = vld [vmem:[%s2580 + $0x60] sm:$0xff]
        %v5709 = vld [vmem:[%s2580 + $0x68] sm:$0xff]
        %v5710 = vld [vmem:[%s2580 + $0x70] sm:$0xff]
        %v5711 = vld [vmem:[%s2580 + $0x78] sm:$0xff]
        %v5712 = vld [vmem:[%s2580 + $0x80] sm:$0xff]
        %v5713 = vld [vmem:[%s2580 + $0x88] sm:$0xff]
        %v5714 = vld [vmem:[%s2580 + $0x90] sm:$0xff]
        %v5715 = vld [vmem:[%s2580 + $0x98] sm:$0xff]
        %v5716 = vld [vmem:[%s2580 + $0xa0] sm:$0xff]
        %v5717 = vld [vmem:[%s2580 + $0xa8] sm:$0xff]
        %v5718 = vld [vmem:[%s2580 + $0xb0] sm:$0xff]
        %v5719 = vld [vmem:[%s2580 + $0xb8] sm:$0xff]
        %v5720 = vld [vmem:[%s2580 + $0xc0] sm:$0xff]
        %v5721 = vld [vmem:[%s2580 + $0xc8] sm:$0xff]
        %v5722 = vld [vmem:[%s2580 + $0xd0] sm:$0xff]
        %v5723 = vld [vmem:[%s2580 + $0xd8] sm:$0xff]
        %v5724 = vld [vmem:[%s2580 + $0xe0] sm:$0xff]
        %v5725 = vld [vmem:[%s2580 + $0xe8] sm:$0xff]
        %v5726 = vld [vmem:[%s2580 + $0xf0] sm:$0xff]
        %v5727 = vld [vmem:[%s2580 + $0xf8] sm:$0xff]
        %s5728 = scalar_lea.vmem %s5, 80
        %v5729 = vld [vmem:[%s5728] sm:$0xf]
        %v5730 = vld [vmem:[%s5728 + $0x4] sm:$0xf]
        %v5731 = vld [vmem:[%s5728 + $0x8] sm:$0xf]
        %v5732 = vld [vmem:[%s5728 + $0xc] sm:$0xf]
        %v5733 = vld [vmem:[%s5728 + $0x10] sm:$0xf]
        %v5734 = vld [vmem:[%s5728 + $0x14] sm:$0xf]
        %v5735 = vld [vmem:[%s5728 + $0x18] sm:$0xf]
        %v5736 = vld [vmem:[%s5728 + $0x1c] sm:$0xf]
        %v5737 = vld [vmem:[%s5728 + $0x20] sm:$0xf]
        %v5738 = vld [vmem:[%s5728 + $0x24] sm:$0xf]
        %v5739 = vld [vmem:[%s5728 + $0x28] sm:$0xf]
        %v5740 = vld [vmem:[%s5728 + $0x2c] sm:$0xf]
        %v5741 = vld [vmem:[%s5728 + $0x30] sm:$0xf]
        %v5742 = vld [vmem:[%s5728 + $0x34] sm:$0xf]
        %v5743 = vld [vmem:[%s5728 + $0x38] sm:$0xf]
        %v5744 = vld [vmem:[%s5728 + $0x3c] sm:$0xf]
        %v5745 = vld [vmem:[%s5728 + $0x40] sm:$0xf]
        %v5746 = vld [vmem:[%s5728 + $0x44] sm:$0xf]
        %v5747 = vld [vmem:[%s5728 + $0x48] sm:$0xf]
        %v5748 = vld [vmem:[%s5728 + $0x4c] sm:$0xf]
        %v5769 = vunpack.c.l.b16 %v5729
        %v5770 = vunpack.c.l.b16 %v5730
        %v5771 = vunpack.c.l.b16 %v5731
        %v5772 = vunpack.c.l.b16 %v5732
        %v5773 = vunpack.c.l.b16 %v5733
        %v5774 = vunpack.c.l.b16 %v5734
        %v5775 = vunpack.c.l.b16 %v5735
        %v5776 = vunpack.c.l.b16 %v5736
        %v5777 = vunpack.c.l.b16 %v5737
        %v5778 = vunpack.c.l.b16 %v5738
        %v5779 = vunpack.c.l.b16 %v5739
        %v5780 = vunpack.c.l.b16 %v5740
        %v5781 = vunpack.c.l.b16 %v5741
        %v5782 = vunpack.c.l.b16 %v5742
        %v5783 = vunpack.c.l.b16 %v5743
        %v5784 = vunpack.c.l.b16 %v5744
        %v5785 = vunpack.c.l.b16 %v5745
        %v5786 = vunpack.c.l.b16 %v5746
        %v5787 = vunpack.c.l.b16 %v5747
        %v5788 = vunpack.c.l.b16 %v5748
        %v5789 = vpack.c.b16 %v5770, %v5769
        %v5790 = vpack.c.b16 %v5772, %v5771
        %v5791 = vpack.c.b16 %v5774, %v5773
        %v5792 = vpack.c.b16 %v5776, %v5775
        %v5793 = vpack.c.b16 %v5778, %v5777
        %v5794 = vpack.c.b16 %v5780, %v5779
        %v5795 = vpack.c.b16 %v5782, %v5781
        %v5796 = vpack.c.b16 %v5784, %v5783
        %v5797 = vpack.c.b16 %v5786, %v5785
        %v5798 = vpack.c.b16 %v5788, %v5787
        %v5810 = vsel %vm585, %v5697, 0
        %v5813 = vsel %vm585, %v5699, 0
        %v5816 = vsel %vm585, %v5701, 0
        %v5819 = vsel %vm585, %v5703, 0
        %v5822 = vsel %vm585, %v5705, 0
        %v5825 = vsel %vm585, %v5707, 0
        %v5828 = vsel %vm585, %v5709, 0
        %v5831 = vsel %vm585, %v5711, 0
        %v5834 = vsel %vm585, %v5713, 0
        %v5837 = vsel %vm585, %v5715, 0
        %v5840 = vsel %vm585, %v5717, 0
        %v5843 = vsel %vm585, %v5719, 0
        %v5846 = vsel %vm585, %v5721, 0
        %v5849 = vsel %vm585, %v5723, 0
        %v5852 = vsel %vm585, %v5725, 0
        %v5855 = vsel %vm585, %v5727, 0
        %5857 = vmatprep.subr.bf16.mxu0 0
        %5858 = vmatpush1.bf16.msra.mxu0 %v5789
        %5859 = vmatprep.subr.bf16.mxu0 0
        %5860 = vmatpush1.bf16.msra.mxu0 %v5790
        %5861 = vmatprep.subr.bf16.mxu0 0
        %5862 = vmatpush1.bf16.msra.mxu0 %v5791
        %5863 = vmatprep.subr.bf16.mxu0 0
        %5864 = vmatpush1.bf16.msra.mxu0 %v5792
        %5865 = vmatprep.subr.bf16.mxu0 0
        %5866 = vmatpush1.bf16.msra.mxu0 %v5793
        %5867 = vmatprep.subr.bf16.mxu0 0
        %5868 = vmatpush1.bf16.msra.mxu0 %v5794
        %5869 = vmatprep.subr.bf16.mxu0 0
        %5870 = vmatpush1.bf16.msra.mxu0 %v5795
        %5871 = vmatprep.subr.bf16.mxu0 0
        %5872 = vmatpush1.bf16.msra.mxu0 %v5796
        %5873 = vmatprep.subr.bf16.mxu0 0
        %5874 = vmatpush1.bf16.msra.mxu0 %v5797
        %5875 = vmatprep.subr.bf16.mxu0 0
        %5876 = vmatpush1.bf16.msra.mxu0 %v5798
        %5877 = vmatprep.subr.bf16.mxu0 0
        %5878 = vmatpush1.bf16.msra.mxu0 0
        %5879 = vmatprep.subr.bf16.mxu0 0
        %5880 = vmatpush1.bf16.msra.mxu0 0
        %5881 = vmatprep.subr.bf16.mxu0 0
        %5882 = vmatpush1.bf16.msra.mxu0 0
        %5883 = vmatprep.subr.bf16.mxu0 0
        %5884 = vmatpush1.bf16.msra.mxu0 0
        %5885 = vmatprep.subr.bf16.mxu0 0
        %5886 = vmatpush1.bf16.msra.mxu0 0
        %5887 = vmatprep.subr.bf16.mxu0 0
        %5888 = vmatpush1.bf16.msra.mxu0 0
        %5889 = vmatprep.mubr.bf16.mxu0 %v5810
        %5890 = vmatmul.mubr.bf16.gmra.mrb[0].mxu0 %v5696
        %v5891 = vpop.f32.mrb[0].mxu0
        %v5892 = vadd.f32 0.0, %v5891
        %v5893 = vpop.f32.mrb[0].mxu0
        %v5894 = vpop.f32.mrb[0].mxu0
        %v5895 = vadd.f32 0.0, %v5894
        %v5896 = vpop.f32.mrb[0].mxu0
        %5897 = vmatprep.mubr.bf16.mxu0 %v5813
        %5898 = vmatmul.mubr.bf16.gmra.mrb[0].mxu0 %v5698
        %v5899 = vpop.f32.mrb[0].mxu0
        %v5900 = vadd.f32 0.0, %v5899
        %v5901 = vpop.f32.mrb[0].mxu0
        %v5902 = vpop.f32.mrb[0].mxu0
        %v5903 = vadd.f32 0.0, %v5902
        %v5904 = vpop.f32.mrb[0].mxu0
        %5905 = vmatprep.mubr.bf16.mxu0 %v5816
        %5906 = vmatmul.mubr.bf16.gmra.mrb[0].mxu0 %v5700
        %v5907 = vpop.f32.mrb[0].mxu0
        %v5908 = vadd.f32 0.0, %v5907
        %v5909 = vpop.f32.mrb[0].mxu0
        %v5910 = vpop.f32.mrb[0].mxu0
        %v5911 = vadd.f32 0.0, %v5910
        %v5912 = vpop.f32.mrb[0].mxu0
        %5913 = vmatprep.mubr.bf16.mxu0 %v5819
        %5914 = vmatmul.mubr.bf16.gmra.mrb[0].mxu0 %v5702
        %v5915 = vpop.f32.mrb[0].mxu0
        %v5916 = vadd.f32 0.0, %v5915
        %v5917 = vpop.f32.mrb[0].mxu0
        %v5918 = vpop.f32.mrb[0].mxu0
        %v5919 = vadd.f32 0.0, %v5918
        %v5920 = vpop.f32.mrb[0].mxu0
        %5921 = vmatprep.mubr.bf16.mxu0 %v5822
        %5922 = vmatmul.mubr.bf16.gmra.mrb[0].mxu0 %v5704
        %v5923 = vpop.f32.mrb[0].mxu0
        %v5924 = vadd.f32 0.0, %v5923
        %v5925 = vpop.f32.mrb[0].mxu0
        %v5926 = vpop.f32.mrb[0].mxu0
        %v5927 = vadd.f32 0.0, %v5926
        %v5928 = vpop.f32.mrb[0].mxu0
        %5929 = vmatprep.mubr.bf16.mxu0 %v5825
        %5930 = vmatmul.mubr.bf16.gmra.mrb[0].mxu0 %v5706
        %v5931 = vpop.f32.mrb[0].mxu0
        %v5932 = vadd.f32 0.0, %v5931
        %v5933 = vpop.f32.mrb[0].mxu0
        %v5934 = vpop.f32.mrb[0].mxu0
        %v5935 = vadd.f32 0.0, %v5934
        %v5936 = vpop.f32.mrb[0].mxu0
        %5937 = vmatprep.mubr.bf16.mxu0 %v5828
        %5938 = vmatmul.mubr.bf16.gmra.mrb[0].mxu0 %v5708
        %v5939 = vpop.f32.mrb[0].mxu0
        %v5940 = vadd.f32 0.0, %v5939
        %v5941 = vpop.f32.mrb[0].mxu0
        %v5942 = vpop.f32.mrb[0].mxu0
        %v5943 = vadd.f32 0.0, %v5942
        %v5944 = vpop.f32.mrb[0].mxu0
        %5945 = vmatprep.mubr.bf16.mxu0 %v5831
        %5946 = vmatmul.mubr.bf16.gmra.mrb[0].mxu0 %v5710
        %v5947 = vpop.f32.mrb[0].mxu0
        %v5948 = vadd.f32 0.0, %v5947
        %v5949 = vpop.f32.mrb[0].mxu0
        %v5950 = vpop.f32.mrb[0].mxu0
        %v5951 = vadd.f32 0.0, %v5950
        %v5952 = vpop.f32.mrb[0].mxu0
        %5953 = vmatprep.mubr.bf16.mxu0 %v5834
        %5954 = vmatmul.mubr.bf16.gmra.mrb[0].mxu0 %v5712
        %v5955 = vpop.f32.mrb[0].mxu0
        %v5956 = vadd.f32 0.0, %v5955
        %v5957 = vpop.f32.mrb[0].mxu0
        %v5958 = vpop.f32.mrb[0].mxu0
        %v5959 = vadd.f32 0.0, %v5958
        %v5960 = vpop.f32.mrb[0].mxu0
        %5961 = vmatprep.mubr.bf16.mxu0 %v5837
        %5962 = vmatmul.mubr.bf16.gmra.mrb[0].mxu0 %v5714
        %v5963 = vpop.f32.mrb[0].mxu0
        %v5964 = vadd.f32 0.0, %v5963
        %v5965 = vpop.f32.mrb[0].mxu0
        %v5966 = vpop.f32.mrb[0].mxu0
        %v5967 = vadd.f32 0.0, %v5966
        %v5968 = vpop.f32.mrb[0].mxu0
        %5969 = vmatprep.mubr.bf16.mxu0 %v5840
        %5970 = vmatmul.mubr.bf16.gmra.mrb[0].mxu0 %v5716
        %v5971 = vpop.f32.mrb[0].mxu0
        %v5972 = vadd.f32 0.0, %v5971
        %v5973 = vpop.f32.mrb[0].mxu0
        %v5974 = vpop.f32.mrb[0].mxu0
        %v5975 = vadd.f32 0.0, %v5974
        %v5976 = vpop.f32.mrb[0].mxu0
        %5977 = vmatprep.mubr.bf16.mxu0 %v5843
        %5978 = vmatmul.mubr.bf16.gmra.mrb[0].mxu0 %v5718
        %v5979 = vpop.f32.mrb[0].mxu0
        %v5980 = vadd.f32 0.0, %v5979
        %v5981 = vpop.f32.mrb[0].mxu0
        %v5982 = vpop.f32.mrb[0].mxu0
        %v5983 = vadd.f32 0.0, %v5982
        %v5984 = vpop.f32.mrb[0].mxu0
        %5985 = vmatprep.mubr.bf16.mxu0 %v5846
        %5986 = vmatmul.mubr.bf16.gmra.mrb[0].mxu0 %v5720
        %v5987 = vpop.f32.mrb[0].mxu0
        %v5988 = vadd.f32 0.0, %v5987
        %v5989 = vpop.f32.mrb[0].mxu0
        %v5990 = vpop.f32.mrb[0].mxu0
        %v5991 = vadd.f32 0.0, %v5990
        %v5992 = vpop.f32.mrb[0].mxu0
        %5993 = vmatprep.mubr.bf16.mxu0 %v5849
        %5994 = vmatmul.mubr.bf16.gmra.mrb[0].mxu0 %v5722
        %v5995 = vpop.f32.mrb[0].mxu0
        %v5996 = vadd.f32 0.0, %v5995
        %v5997 = vpop.f32.mrb[0].mxu0
        %v5998 = vpop.f32.mrb[0].mxu0
        %v5999 = vadd.f32 0.0, %v5998
        %v6000 = vpop.f32.mrb[0].mxu0
        %6001 = vmatprep.mubr.bf16.mxu0 %v5852
        %6002 = vmatmul.mubr.bf16.gmra.mrb[0].mxu0 %v5724
        %v6003 = vpop.f32.mrb[0].mxu0
        %v6004 = vadd.f32 0.0, %v6003
        %v6005 = vpop.f32.mrb[0].mxu0
        %v6006 = vpop.f32.mrb[0].mxu0
        %v6007 = vadd.f32 0.0, %v6006
        %v6008 = vpop.f32.mrb[0].mxu0
        %6009 = vmatprep.mubr.bf16.mxu0 %v5855
        %6010 = vmatmul.mubr.bf16.gmra.mrb[0].mxu0 %v5726
        %v6011 = vpop.f32.mrb[0].mxu0
        %v6012 = vadd.f32 0.0, %v6011
        %v6013 = vpop.f32.mrb[0].mxu0
        %v6014 = vpop.f32.mrb[0].mxu0
        %v6015 = vadd.f32 0.0, %v6014
        %v6016 = vpop.f32.mrb[0].mxu0
        %6017 = vdwg.mxu0
        %v6038 = vunpack.c.l.b16 %v5676
        %v6039 = vunpack.c.l.b16 %v5677
        %v6040 = vunpack.c.l.b16 %v5678
        %v6041 = vunpack.c.l.b16 %v5679
        %v6042 = vunpack.c.l.b16 %v5680
        %v6043 = vunpack.c.l.b16 %v5681
        %v6044 = vunpack.c.l.b16 %v5682
        %v6045 = vunpack.c.l.b16 %v5683
        %v6046 = vunpack.c.l.b16 %v5684
        %v6047 = vunpack.c.l.b16 %v5685
        %v6048 = vunpack.c.l.b16 %v5686
        %v6049 = vunpack.c.l.b16 %v5687
        %v6050 = vunpack.c.l.b16 %v5688
        %v6051 = vunpack.c.l.b16 %v5689
        %v6052 = vunpack.c.l.b16 %v5690
        %v6053 = vunpack.c.l.b16 %v5691
        %v6054 = vunpack.c.l.b16 %v5692
        %v6055 = vunpack.c.l.b16 %v5693
        %v6056 = vunpack.c.l.b16 %v5694
        %v6057 = vunpack.c.l.b16 %v5695
        %v6058 = vpack.c.b16 %v6039, %v6038
        %v6059 = vpack.c.b16 %v6041, %v6040
        %v6060 = vpack.c.b16 %v6043, %v6042
        %v6061 = vpack.c.b16 %v6045, %v6044
        %v6062 = vpack.c.b16 %v6047, %v6046
        %v6063 = vpack.c.b16 %v6049, %v6048
        %v6064 = vpack.c.b16 %v6051, %v6050
        %v6065 = vpack.c.b16 %v6053, %v6052
        %v6066 = vpack.c.b16 %v6055, %v6054
        %v6067 = vpack.c.b16 %v6057, %v6056
        %v6079 = vsel %vm585, %v5645, 0
        %v6082 = vsel %vm585, %v5647, 0
        %v6085 = vsel %vm585, %v5649, 0
        %v6088 = vsel %vm585, %v5651, 0
        %v6091 = vsel %vm585, %v5653, 0
        %v6094 = vsel %vm585, %v5655, 0
        %v6097 = vsel %vm585, %v5657, 0
        %v6100 = vsel %vm585, %v5659, 0
        %v6103 = vsel %vm585, %v5661, 0
        %v6106 = vsel %vm585, %v5663, 0
        %v6109 = vsel %vm585, %v5665, 0
        %v6112 = vsel %vm585, %v5667, 0
        %v6115 = vsel %vm585, %v5669, 0
        %v6118 = vsel %vm585, %v5671, 0
        %v6121 = vsel %vm585, %v5673, 0
        %v6124 = vsel %vm585, %v5675, 0
        %6126 = vmatprep.subr.bf16.mxu0 0
        %6127 = vmatpush1.bf16.msra.mxu0 %v6058
        %6128 = vmatprep.subr.bf16.mxu0 0
        %6129 = vmatpush1.bf16.msra.mxu0 %v6059
        %6130 = vmatprep.subr.bf16.mxu0 0
        %6131 = vmatpush1.bf16.msra.mxu0 %v6060
        %6132 = vmatprep.subr.bf16.mxu0 0
        %6133 = vmatpush1.bf16.msra.mxu0 %v6061
        %6134 = vmatprep.subr.bf16.mxu0 0
        %6135 = vmatpush1.bf16.msra.mxu0 %v6062
        %6136 = vmatprep.subr.bf16.mxu0 0
        %6137 = vmatpush1.bf16.msra.mxu0 %v6063
        %6138 = vmatprep.subr.bf16.mxu0 0
        %6139 = vmatpush1.bf16.msra.mxu0 %v6064
        %6140 = vmatprep.subr.bf16.mxu0 0
        %6141 = vmatpush1.bf16.msra.mxu0 %v6065
        %6142 = vmatprep.subr.bf16.mxu0 0
        %6143 = vmatpush1.bf16.msra.mxu0 %v6066
        %6144 = vmatprep.subr.bf16.mxu0 0
        %6145 = vmatpush1.bf16.msra.mxu0 %v6067
        %6146 = vmatprep.subr.bf16.mxu0 0
        %6147 = vmatpush1.bf16.msra.mxu0 0
        %6148 = vmatprep.subr.bf16.mxu0 0
        %6149 = vmatpush1.bf16.msra.mxu0 0
        %6150 = vmatprep.subr.bf16.mxu0 0
        %6151 = vmatpush1.bf16.msra.mxu0 0
        %6152 = vmatprep.subr.bf16.mxu0 0
        %6153 = vmatpush1.bf16.msra.mxu0 0
        %6154 = vmatprep.subr.bf16.mxu0 0
        %6155 = vmatpush1.bf16.msra.mxu0 0
        %6156 = vmatprep.subr.bf16.mxu0 0
        %6157 = vmatpush1.bf16.msra.mxu0 0
        %6158 = vmatprep.mubr.bf16.mxu0 %v6079
        %6159 = vmatmul.mubr.bf16.gmra.mrb[0].mxu0 %v5644
        %v6160 = vpop.f32.mrb[0].mxu0
        %v6161 = vadd.f32 %v5892, %v6160
        %v6162 = vpop.f32.mrb[0].mxu0
        %v6163 = vpop.f32.mrb[0].mxu0
        %v6164 = vadd.f32 %v5895, %v6163
        %v6165 = vpop.f32.mrb[0].mxu0
        %6166 = vmatprep.mubr.bf16.mxu0 %v6082
        %6167 = vmatmul.mubr.bf16.gmra.mrb[0].mxu0 %v5646
        %v6168 = vpop.f32.mrb[0].mxu0
        %v6169 = vadd.f32 %v5900, %v6168
        %v6170 = vpop.f32.mrb[0].mxu0
        %v6171 = vpop.f32.mrb[0].mxu0
        %v6172 = vadd.f32 %v5903, %v6171
        %v6173 = vpop.f32.mrb[0].mxu0
        %6174 = vmatprep.mubr.bf16.mxu0 %v6085
        %6175 = vmatmul.mubr.bf16.gmra.mrb[0].mxu0 %v5648
        %v6176 = vpop.f32.mrb[0].mxu0
        %v6177 = vadd.f32 %v5908, %v6176
        %v6178 = vpop.f32.mrb[0].mxu0
        %v6179 = vpop.f32.mrb[0].mxu0
        %v6180 = vadd.f32 %v5911, %v6179
        %v6181 = vpop.f32.mrb[0].mxu0
        %6182 = vmatprep.mubr.bf16.mxu0 %v6088
        %6183 = vmatmul.mubr.bf16.gmra.mrb[0].mxu0 %v5650
        %v6184 = vpop.f32.mrb[0].mxu0
        %v6185 = vadd.f32 %v5916, %v6184
        %v6186 = vpop.f32.mrb[0].mxu0
        %v6187 = vpop.f32.mrb[0].mxu0
        %v6188 = vadd.f32 %v5919, %v6187
        %v6189 = vpop.f32.mrb[0].mxu0
        %6190 = vmatprep.mubr.bf16.mxu0 %v6091
        %6191 = vmatmul.mubr.bf16.gmra.mrb[0].mxu0 %v5652
        %v6192 = vpop.f32.mrb[0].mxu0
        %v6193 = vadd.f32 %v5924, %v6192
        %v6194 = vpop.f32.mrb[0].mxu0
        %v6195 = vpop.f32.mrb[0].mxu0
        %v6196 = vadd.f32 %v5927, %v6195
        %v6197 = vpop.f32.mrb[0].mxu0
        %6198 = vmatprep.mubr.bf16.mxu0 %v6094
        %6199 = vmatmul.mubr.bf16.gmra.mrb[0].mxu0 %v5654
        %v6200 = vpop.f32.mrb[0].mxu0
        %v6201 = vadd.f32 %v5932, %v6200
        %v6202 = vpop.f32.mrb[0].mxu0
        %v6203 = vpop.f32.mrb[0].mxu0
        %v6204 = vadd.f32 %v5935, %v6203
        %v6205 = vpop.f32.mrb[0].mxu0
        %6206 = vmatprep.mubr.bf16.mxu0 %v6097
        %6207 = vmatmul.mubr.bf16.gmra.mrb[0].mxu0 %v5656
        %v6208 = vpop.f32.mrb[0].mxu0
        %v6209 = vadd.f32 %v5940, %v6208
        %v6210 = vpop.f32.mrb[0].mxu0
        %v6211 = vpop.f32.mrb[0].mxu0
        %v6212 = vadd.f32 %v5943, %v6211
        %v6213 = vpop.f32.mrb[0].mxu0
        %6214 = vmatprep.mubr.bf16.mxu0 %v6100
        %6215 = vmatmul.mubr.bf16.gmra.mrb[0].mxu0 %v5658
        %v6216 = vpop.f32.mrb[0].mxu0
        %v6217 = vadd.f32 %v5948, %v6216
        %v6218 = vpop.f32.mrb[0].mxu0
        %v6219 = vpop.f32.mrb[0].mxu0
        %v6220 = vadd.f32 %v5951, %v6219
        %v6221 = vpop.f32.mrb[0].mxu0
        %6222 = vmatprep.mubr.bf16.mxu0 %v6103
        %6223 = vmatmul.mubr.bf16.gmra.mrb[0].mxu0 %v5660
        %v6224 = vpop.f32.mrb[0].mxu0
        %v6225 = vadd.f32 %v5956, %v6224
        %v6226 = vpop.f32.mrb[0].mxu0
        %v6227 = vpop.f32.mrb[0].mxu0
        %v6228 = vadd.f32 %v5959, %v6227
        %v6229 = vpop.f32.mrb[0].mxu0
        %6230 = vmatprep.mubr.bf16.mxu0 %v6106
        %6231 = vmatmul.mubr.bf16.gmra.mrb[0].mxu0 %v5662
        %v6232 = vpop.f32.mrb[0].mxu0
        %v6233 = vadd.f32 %v5964, %v6232
        %v6234 = vpop.f32.mrb[0].mxu0
        %v6235 = vpop.f32.mrb[0].mxu0
        %v6236 = vadd.f32 %v5967, %v6235
        %v6237 = vpop.f32.mrb[0].mxu0
        %6238 = vmatprep.mubr.bf16.mxu0 %v6109
        %6239 = vmatmul.mubr.bf16.gmra.mrb[0].mxu0 %v5664
        %v6240 = vpop.f32.mrb[0].mxu0
        %v6241 = vadd.f32 %v5972, %v6240
        %v6242 = vpop.f32.mrb[0].mxu0
        %v6243 = vpop.f32.mrb[0].mxu0
        %v6244 = vadd.f32 %v5975, %v6243
        %v6245 = vpop.f32.mrb[0].mxu0
        %6246 = vmatprep.mubr.bf16.mxu0 %v6112
        %6247 = vmatmul.mubr.bf16.gmra.mrb[0].mxu0 %v5666
        %v6248 = vpop.f32.mrb[0].mxu0
        %v6249 = vadd.f32 %v5980, %v6248
        %v6250 = vpop.f32.mrb[0].mxu0
        %v6251 = vpop.f32.mrb[0].mxu0
        %v6252 = vadd.f32 %v5983, %v6251
        %v6253 = vpop.f32.mrb[0].mxu0
        %6254 = vmatprep.mubr.bf16.mxu0 %v6115
        %6255 = vmatmul.mubr.bf16.gmra.mrb[0].mxu0 %v5668
        %v6256 = vpop.f32.mrb[0].mxu0
        %v6257 = vadd.f32 %v5988, %v6256
        %v6258 = vpop.f32.mrb[0].mxu0
        %v6259 = vpop.f32.mrb[0].mxu0
        %v6260 = vadd.f32 %v5991, %v6259
        %v6261 = vpop.f32.mrb[0].mxu0
        %6262 = vmatprep.mubr.bf16.mxu0 %v6118
        %6263 = vmatmul.mubr.bf16.gmra.mrb[0].mxu0 %v5670
        %v6264 = vpop.f32.mrb[0].mxu0
        %v6265 = vadd.f32 %v5996, %v6264
        %v6266 = vpop.f32.mrb[0].mxu0
        %v6267 = vpop.f32.mrb[0].mxu0
        %v6268 = vadd.f32 %v5999, %v6267
        %v6269 = vpop.f32.mrb[0].mxu0
        %6270 = vmatprep.mubr.bf16.mxu0 %v6121
        %6271 = vmatmul.mubr.bf16.gmra.mrb[0].mxu0 %v5672
        %v6272 = vpop.f32.mrb[0].mxu0
        %v6273 = vadd.f32 %v6004, %v6272
        %v6274 = vpop.f32.mrb[0].mxu0
        %v6275 = vpop.f32.mrb[0].mxu0
        %v6276 = vadd.f32 %v6007, %v6275
        %v6277 = vpop.f32.mrb[0].mxu0
        %6278 = vmatprep.mubr.bf16.mxu0 %v6124
        %6279 = vmatmul.mubr.bf16.gmra.mrb[0].mxu0 %v5674
        %v6280 = vpop.f32.mrb[0].mxu0
        %v6281 = vadd.f32 %v6012, %v6280
        %v6282 = vpop.f32.mrb[0].mxu0
        %v6283 = vpop.f32.mrb[0].mxu0
        %v6284 = vadd.f32 %v6015, %v6283
        %v6285 = vpop.f32.mrb[0].mxu0
        %6286 = vdwg.mxu0
        %v6287 = vld [vmem:[%s3243] sm:$0xff]
        %v6288 = vld [vmem:[%s3243 + $0x8] sm:$0xff]
        %v6289 = vld [vmem:[%s3243 + $0x10] sm:$0xff]
        %v6290 = vld [vmem:[%s3243 + $0x18] sm:$0xff]
        %v6291 = vld [vmem:[%s3243 + $0x20] sm:$0xff]
        %v6292 = vld [vmem:[%s3243 + $0x28] sm:$0xff]
        %v6293 = vld [vmem:[%s3243 + $0x30] sm:$0xff]
        %v6294 = vld [vmem:[%s3243 + $0x38] sm:$0xff]
        %v6295 = vld [vmem:[%s3243 + $0x40] sm:$0xff]
        %v6296 = vld [vmem:[%s3243 + $0x48] sm:$0xff]
        %v6297 = vld [vmem:[%s3243 + $0x50] sm:$0xff]
        %v6298 = vld [vmem:[%s3243 + $0x58] sm:$0xff]
        %v6299 = vld [vmem:[%s3243 + $0x60] sm:$0xff]
        %v6300 = vld [vmem:[%s3243 + $0x68] sm:$0xff]
        %v6301 = vld [vmem:[%s3243 + $0x70] sm:$0xff]
        %v6302 = vld [vmem:[%s3243 + $0x78] sm:$0xff]
        %v6303 = vld [vmem:[%s3243 + $0x80] sm:$0xff]
        %v6304 = vld [vmem:[%s3243 + $0x88] sm:$0xff]
        %v6305 = vld [vmem:[%s3243 + $0x90] sm:$0xff]
        %v6306 = vld [vmem:[%s3243 + $0x98] sm:$0xff]
        %v6307 = vld [vmem:[%s3243 + $0xa0] sm:$0xff]
        %v6308 = vld [vmem:[%s3243 + $0xa8] sm:$0xff]
        %v6309 = vld [vmem:[%s3243 + $0xb0] sm:$0xff]
        %v6310 = vld [vmem:[%s3243 + $0xb8] sm:$0xff]
        %v6311 = vld [vmem:[%s3243 + $0xc0] sm:$0xff]
        %v6312 = vld [vmem:[%s3243 + $0xc8] sm:$0xff]
        %v6313 = vld [vmem:[%s3243 + $0xd0] sm:$0xff]
        %v6314 = vld [vmem:[%s3243 + $0xd8] sm:$0xff]
        %v6315 = vld [vmem:[%s3243 + $0xe0] sm:$0xff]
        %v6316 = vld [vmem:[%s3243 + $0xe8] sm:$0xff]
        %v6317 = vld [vmem:[%s3243 + $0xf0] sm:$0xff]
        %v6318 = vld [vmem:[%s3243 + $0xf8] sm:$0xff]
        %s6319 = scalar_lea.vmem %s5, 160
        %v6320 = vld [vmem:[%s6319] sm:$0xf]
        %v6321 = vld [vmem:[%s6319 + $0x4] sm:$0xf]
        %v6322 = vld [vmem:[%s6319 + $0x8] sm:$0xf]
        %v6323 = vld [vmem:[%s6319 + $0xc] sm:$0xf]
        %v6324 = vld [vmem:[%s6319 + $0x10] sm:$0xf]
        %v6325 = vld [vmem:[%s6319 + $0x14] sm:$0xf]
        %v6326 = vld [vmem:[%s6319 + $0x18] sm:$0xf]
        %v6327 = vld [vmem:[%s6319 + $0x1c] sm:$0xf]
        %v6328 = vld [vmem:[%s6319 + $0x20] sm:$0xf]
        %v6329 = vld [vmem:[%s6319 + $0x24] sm:$0xf]
        %v6330 = vld [vmem:[%s6319 + $0x28] sm:$0xf]
        %v6331 = vld [vmem:[%s6319 + $0x2c] sm:$0xf]
        %v6332 = vld [vmem:[%s6319 + $0x30] sm:$0xf]
        %v6333 = vld [vmem:[%s6319 + $0x34] sm:$0xf]
        %v6334 = vld [vmem:[%s6319 + $0x38] sm:$0xf]
        %v6335 = vld [vmem:[%s6319 + $0x3c] sm:$0xf]
        %v6336 = vld [vmem:[%s6319 + $0x40] sm:$0xf]
        %v6337 = vld [vmem:[%s6319 + $0x44] sm:$0xf]
        %v6338 = vld [vmem:[%s6319 + $0x48] sm:$0xf]
        %v6339 = vld [vmem:[%s6319 + $0x4c] sm:$0xf]
        %v6360 = vunpack.c.l.b16 %v6320
        %v6361 = vunpack.c.l.b16 %v6321
        %v6362 = vunpack.c.l.b16 %v6322
        %v6363 = vunpack.c.l.b16 %v6323
        %v6364 = vunpack.c.l.b16 %v6324
        %v6365 = vunpack.c.l.b16 %v6325
        %v6366 = vunpack.c.l.b16 %v6326
        %v6367 = vunpack.c.l.b16 %v6327
        %v6368 = vunpack.c.l.b16 %v6328
        %v6369 = vunpack.c.l.b16 %v6329
        %v6370 = vunpack.c.l.b16 %v6330
        %v6371 = vunpack.c.l.b16 %v6331
        %v6372 = vunpack.c.l.b16 %v6332
        %v6373 = vunpack.c.l.b16 %v6333
        %v6374 = vunpack.c.l.b16 %v6334
        %v6375 = vunpack.c.l.b16 %v6335
        %v6376 = vunpack.c.l.b16 %v6336
        %v6377 = vunpack.c.l.b16 %v6337
        %v6378 = vunpack.c.l.b16 %v6338
        %v6379 = vunpack.c.l.b16 %v6339
        %v6380 = vpack.c.b16 %v6361, %v6360
        %v6381 = vpack.c.b16 %v6363, %v6362
        %v6382 = vpack.c.b16 %v6365, %v6364
        %v6383 = vpack.c.b16 %v6367, %v6366
        %v6384 = vpack.c.b16 %v6369, %v6368
        %v6385 = vpack.c.b16 %v6371, %v6370
        %v6386 = vpack.c.b16 %v6373, %v6372
        %v6387 = vpack.c.b16 %v6375, %v6374
        %v6388 = vpack.c.b16 %v6377, %v6376
        %v6389 = vpack.c.b16 %v6379, %v6378
        %v6401 = vsel %vm585, %v6288, 0
        %v6404 = vsel %vm585, %v6290, 0
        %v6407 = vsel %vm585, %v6292, 0
        %v6410 = vsel %vm585, %v6294, 0
        %v6413 = vsel %vm585, %v6296, 0
        %v6416 = vsel %vm585, %v6298, 0
        %v6419 = vsel %vm585, %v6300, 0
        %v6422 = vsel %vm585, %v6302, 0
        %v6425 = vsel %vm585, %v6304, 0
        %v6428 = vsel %vm585, %v6306, 0
        %v6431 = vsel %vm585, %v6308, 0
        %v6434 = vsel %vm585, %v6310, 0
        %v6437 = vsel %vm585, %v6312, 0
        %v6440 = vsel %vm585, %v6314, 0
        %v6443 = vsel %vm585, %v6316, 0
        %v6446 = vsel %vm585, %v6318, 0
        %6448 = vmatprep.subr.bf16.mxu0 0
        %6449 = vmatpush1.bf16.msra.mxu0 %v6380
        %6450 = vmatprep.subr.bf16.mxu0 0
        %6451 = vmatpush1.bf16.msra.mxu0 %v6381
        %6452 = vmatprep.subr.bf16.mxu0 0
        %6453 = vmatpush1.bf16.msra.mxu0 %v6382
        %6454 = vmatprep.subr.bf16.mxu0 0
        %6455 = vmatpush1.bf16.msra.mxu0 %v6383
        %6456 = vmatprep.subr.bf16.mxu0 0
        %6457 = vmatpush1.bf16.msra.mxu0 %v6384
        %6458 = vmatprep.subr.bf16.mxu0 0
        %6459 = vmatpush1.bf16.msra.mxu0 %v6385
        %6460 = vmatprep.subr.bf16.mxu0 0
        %6461 = vmatpush1.bf16.msra.mxu0 %v6386
        %6462 = vmatprep.subr.bf16.mxu0 0
        %6463 = vmatpush1.bf16.msra.mxu0 %v6387
        %6464 = vmatprep.subr.bf16.mxu0 0
        %6465 = vmatpush1.bf16.msra.mxu0 %v6388
        %6466 = vmatprep.subr.bf16.mxu0 0
        %6467 = vmatpush1.bf16.msra.mxu0 %v6389
        %6468 = vmatprep.subr.bf16.mxu0 0
        %6469 = vmatpush1.bf16.msra.mxu0 0
        %6470 = vmatprep.subr.bf16.mxu0 0
        %6471 = vmatpush1.bf16.msra.mxu0 0
        %6472 = vmatprep.subr.bf16.mxu0 0
        %6473 = vmatpush1.bf16.msra.mxu0 0
        %6474 = vmatprep.subr.bf16.mxu0 0
        %6475 = vmatpush1.bf16.msra.mxu0 0
        %6476 = vmatprep.subr.bf16.mxu0 0
        %6477 = vmatpush1.bf16.msra.mxu0 0
        %6478 = vmatprep.subr.bf16.mxu0 0
        %6479 = vmatpush1.bf16.msra.mxu0 0
        %6480 = vmatprep.mubr.bf16.mxu0 %v6401
        %6481 = vmatmul.mubr.bf16.gmra.mrb[0].mxu0 %v6287
        %v6482 = vpop.f32.mrb[0].mxu0
        %v6483 = vadd.f32 0.0, %v6482
        %v6484 = vpop.f32.mrb[0].mxu0
        %v6485 = vpop.f32.mrb[0].mxu0
        %v6486 = vadd.f32 0.0, %v6485
        %v6487 = vpop.f32.mrb[0].mxu0
        %6488 = vmatprep.mubr.bf16.mxu0 %v6404
        %6489 = vmatmul.mubr.bf16.gmra.mrb[0].mxu0 %v6289
        %v6490 = vpop.f32.mrb[0].mxu0
        %v6491 = vadd.f32 0.0, %v6490
        %v6492 = vpop.f32.mrb[0].mxu0
        %v6493 = vpop.f32.mrb[0].mxu0
        %v6494 = vadd.f32 0.0, %v6493
        %v6495 = vpop.f32.mrb[0].mxu0
        %6496 = vmatprep.mubr.bf16.mxu0 %v6407
        %6497 = vmatmul.mubr.bf16.gmra.mrb[0].mxu0 %v6291
        %v6498 = vpop.f32.mrb[0].mxu0
        %v6499 = vadd.f32 0.0, %v6498
        %v6500 = vpop.f32.mrb[0].mxu0
        %v6501 = vpop.f32.mrb[0].mxu0
        %v6502 = vadd.f32 0.0, %v6501
        %v6503 = vpop.f32.mrb[0].mxu0
        %6504 = vmatprep.mubr.bf16.mxu0 %v6410
        %6505 = vmatmul.mubr.bf16.gmra.mrb[0].mxu0 %v6293
        %v6506 = vpop.f32.mrb[0].mxu0
        %v6507 = vadd.f32 0.0, %v6506
        %v6508 = vpop.f32.mrb[0].mxu0
        %v6509 = vpop.f32.mrb[0].mxu0
        %v6510 = vadd.f32 0.0, %v6509
        %v6511 = vpop.f32.mrb[0].mxu0
        %6512 = vmatprep.mubr.bf16.mxu0 %v6413
        %6513 = vmatmul.mubr.bf16.gmra.mrb[0].mxu0 %v6295
        %v6514 = vpop.f32.mrb[0].mxu0
        %v6515 = vadd.f32 0.0, %v6514
        %v6516 = vpop.f32.mrb[0].mxu0
        %v6517 = vpop.f32.mrb[0].mxu0
        %v6518 = vadd.f32 0.0, %v6517
        %v6519 = vpop.f32.mrb[0].mxu0
        %6520 = vmatprep.mubr.bf16.mxu0 %v6416
        %6521 = vmatmul.mubr.bf16.gmra.mrb[0].mxu0 %v6297
        %v6522 = vpop.f32.mrb[0].mxu0
        %v6523 = vadd.f32 0.0, %v6522
        %v6524 = vpop.f32.mrb[0].mxu0
        %v6525 = vpop.f32.mrb[0].mxu0
        %v6526 = vadd.f32 0.0, %v6525
        %v6527 = vpop.f32.mrb[0].mxu0
        %6528 = vmatprep.mubr.bf16.mxu0 %v6419
        %6529 = vmatmul.mubr.bf16.gmra.mrb[0].mxu0 %v6299
        %v6530 = vpop.f32.mrb[0].mxu0
        %v6531 = vadd.f32 0.0, %v6530
        %v6532 = vpop.f32.mrb[0].mxu0
        %v6533 = vpop.f32.mrb[0].mxu0
        %v6534 = vadd.f32 0.0, %v6533
        %v6535 = vpop.f32.mrb[0].mxu0
        %6536 = vmatprep.mubr.bf16.mxu0 %v6422
        %6537 = vmatmul.mubr.bf16.gmra.mrb[0].mxu0 %v6301
        %v6538 = vpop.f32.mrb[0].mxu0
        %v6539 = vadd.f32 0.0, %v6538
        %v6540 = vpop.f32.mrb[0].mxu0
        %v6541 = vpop.f32.mrb[0].mxu0
        %v6542 = vadd.f32 0.0, %v6541
        %v6543 = vpop.f32.mrb[0].mxu0
        %6544 = vmatprep.mubr.bf16.mxu0 %v6425
        %6545 = vmatmul.mubr.bf16.gmra.mrb[0].mxu0 %v6303
        %v6546 = vpop.f32.mrb[0].mxu0
        %v6547 = vadd.f32 0.0, %v6546
        %v6548 = vpop.f32.mrb[0].mxu0
        %v6549 = vpop.f32.mrb[0].mxu0
        %v6550 = vadd.f32 0.0, %v6549
        %v6551 = vpop.f32.mrb[0].mxu0
        %6552 = vmatprep.mubr.bf16.mxu0 %v6428
        %6553 = vmatmul.mubr.bf16.gmra.mrb[0].mxu0 %v6305
        %v6554 = vpop.f32.mrb[0].mxu0
        %v6555 = vadd.f32 0.0, %v6554
        %v6556 = vpop.f32.mrb[0].mxu0
        %v6557 = vpop.f32.mrb[0].mxu0
        %v6558 = vadd.f32 0.0, %v6557
        %v6559 = vpop.f32.mrb[0].mxu0
        %6560 = vmatprep.mubr.bf16.mxu0 %v6431
        %6561 = vmatmul.mubr.bf16.gmra.mrb[0].mxu0 %v6307
        %v6562 = vpop.f32.mrb[0].mxu0
        %v6563 = vadd.f32 0.0, %v6562
        %v6564 = vpop.f32.mrb[0].mxu0
        %v6565 = vpop.f32.mrb[0].mxu0
        %v6566 = vadd.f32 0.0, %v6565
        %v6567 = vpop.f32.mrb[0].mxu0
        %6568 = vmatprep.mubr.bf16.mxu0 %v6434
        %6569 = vmatmul.mubr.bf16.gmra.mrb[0].mxu0 %v6309
        %v6570 = vpop.f32.mrb[0].mxu0
        %v6571 = vadd.f32 0.0, %v6570
        %v6572 = vpop.f32.mrb[0].mxu0
        %v6573 = vpop.f32.mrb[0].mxu0
        %v6574 = vadd.f32 0.0, %v6573
        %v6575 = vpop.f32.mrb[0].mxu0
        %6576 = vmatprep.mubr.bf16.mxu0 %v6437
        %6577 = vmatmul.mubr.bf16.gmra.mrb[0].mxu0 %v6311
        %v6578 = vpop.f32.mrb[0].mxu0
        %v6579 = vadd.f32 0.0, %v6578
        %v6580 = vpop.f32.mrb[0].mxu0
        %v6581 = vpop.f32.mrb[0].mxu0
        %v6582 = vadd.f32 0.0, %v6581
        %v6583 = vpop.f32.mrb[0].mxu0
        %6584 = vmatprep.mubr.bf16.mxu0 %v6440
        %6585 = vmatmul.mubr.bf16.gmra.mrb[0].mxu0 %v6313
        %v6586 = vpop.f32.mrb[0].mxu0
        %v6587 = vadd.f32 0.0, %v6586
        %v6588 = vpop.f32.mrb[0].mxu0
        %v6589 = vpop.f32.mrb[0].mxu0
        %v6590 = vadd.f32 0.0, %v6589
        %v6591 = vpop.f32.mrb[0].mxu0
        %6592 = vmatprep.mubr.bf16.mxu0 %v6443
        %6593 = vmatmul.mubr.bf16.gmra.mrb[0].mxu0 %v6315
        %v6594 = vpop.f32.mrb[0].mxu0
        %v6595 = vadd.f32 0.0, %v6594
        %v6596 = vpop.f32.mrb[0].mxu0
        %v6597 = vpop.f32.mrb[0].mxu0
        %v6598 = vadd.f32 0.0, %v6597
        %v6599 = vpop.f32.mrb[0].mxu0
        %6600 = vmatprep.mubr.bf16.mxu0 %v6446
        %6601 = vmatmul.mubr.bf16.gmra.mrb[0].mxu0 %v6317
        %v6602 = vpop.f32.mrb[0].mxu0
        %v6603 = vadd.f32 0.0, %v6602
        %v6604 = vpop.f32.mrb[0].mxu0
        %v6605 = vpop.f32.mrb[0].mxu0
        %v6606 = vadd.f32 0.0, %v6605
        %v6607 = vpop.f32.mrb[0].mxu0
        %6608 = vdwg.mxu0
        %v6609 = vadd.f32 %v6161, %v6483
        %v6610 = vadd.f32 %v6164, %v6486
        %v6611 = vadd.f32 %v6169, %v6491
        %v6612 = vadd.f32 %v6172, %v6494
        %v6613 = vadd.f32 %v6177, %v6499
        %v6614 = vadd.f32 %v6180, %v6502
        %v6615 = vadd.f32 %v6185, %v6507
        %v6616 = vadd.f32 %v6188, %v6510
        %v6617 = vadd.f32 %v6193, %v6515
        %v6618 = vadd.f32 %v6196, %v6518
        %v6619 = vadd.f32 %v6201, %v6523
        %v6620 = vadd.f32 %v6204, %v6526
        %v6621 = vadd.f32 %v6209, %v6531
        %v6622 = vadd.f32 %v6212, %v6534
        %v6623 = vadd.f32 %v6217, %v6539
        %v6624 = vadd.f32 %v6220, %v6542
        %v6625 = vadd.f32 %v6225, %v6547
        %v6626 = vadd.f32 %v6228, %v6550
        %v6627 = vadd.f32 %v6233, %v6555
        %v6628 = vadd.f32 %v6236, %v6558
        %v6629 = vadd.f32 %v6241, %v6563
        %v6630 = vadd.f32 %v6244, %v6566
        %v6631 = vadd.f32 %v6249, %v6571
        %v6632 = vadd.f32 %v6252, %v6574
        %v6633 = vadd.f32 %v6257, %v6579
        %v6634 = vadd.f32 %v6260, %v6582
        %v6635 = vadd.f32 %v6265, %v6587
        %v6636 = vadd.f32 %v6268, %v6590
        %v6637 = vadd.f32 %v6273, %v6595
        %v6638 = vadd.f32 %v6276, %v6598
        %v6639 = vadd.f32 %v6281, %v6603
        %v6640 = vadd.f32 %v6284, %v6606
        %v6641 = vld [vmem:[%s3638] sm:$0xff]
        %v6642 = vld [vmem:[%s3638 + $0x8] sm:$0xff]
        %v6643 = vld [vmem:[%s3638 + $0x10] sm:$0xff]
        %v6644 = vld [vmem:[%s3638 + $0x18] sm:$0xff]
        %v6645 = vld [vmem:[%s3638 + $0x20] sm:$0xff]
        %v6646 = vld [vmem:[%s3638 + $0x28] sm:$0xff]
        %v6647 = vld [vmem:[%s3638 + $0x30] sm:$0xff]
        %v6648 = vld [vmem:[%s3638 + $0x38] sm:$0xff]
        %v6649 = vld [vmem:[%s3638 + $0x40] sm:$0xff]
        %v6650 = vld [vmem:[%s3638 + $0x48] sm:$0xff]
        %v6651 = vld [vmem:[%s3638 + $0x50] sm:$0xff]
        %v6652 = vld [vmem:[%s3638 + $0x58] sm:$0xff]
        %v6653 = vld [vmem:[%s3638 + $0x60] sm:$0xff]
        %v6654 = vld [vmem:[%s3638 + $0x68] sm:$0xff]
        %v6655 = vld [vmem:[%s3638 + $0x70] sm:$0xff]
        %v6656 = vld [vmem:[%s3638 + $0x78] sm:$0xff]
        %v6657 = vld [vmem:[%s3638 + $0x80] sm:$0xff]
        %v6658 = vld [vmem:[%s3638 + $0x88] sm:$0xff]
        %v6659 = vld [vmem:[%s3638 + $0x90] sm:$0xff]
        %v6660 = vld [vmem:[%s3638 + $0x98] sm:$0xff]
        %v6661 = vld [vmem:[%s3638 + $0xa0] sm:$0xff]
        %v6662 = vld [vmem:[%s3638 + $0xa8] sm:$0xff]
        %v6663 = vld [vmem:[%s3638 + $0xb0] sm:$0xff]
        %v6664 = vld [vmem:[%s3638 + $0xb8] sm:$0xff]
        %v6665 = vld [vmem:[%s3638 + $0xc0] sm:$0xff]
        %v6666 = vld [vmem:[%s3638 + $0xc8] sm:$0xff]
        %v6667 = vld [vmem:[%s3638 + $0xd0] sm:$0xff]
        %v6668 = vld [vmem:[%s3638 + $0xd8] sm:$0xff]
        %v6669 = vld [vmem:[%s3638 + $0xe0] sm:$0xff]
        %v6670 = vld [vmem:[%s3638 + $0xe8] sm:$0xff]
        %v6671 = vld [vmem:[%s3638 + $0xf0] sm:$0xff]
        %v6672 = vld [vmem:[%s3638 + $0xf8] sm:$0xff]
        %s6673 = scalar_lea.vmem %s5, 240
        %v6674 = vld [vmem:[%s6673] sm:$0xf]
        %v6675 = vld [vmem:[%s6673 + $0x4] sm:$0xf]
        %v6676 = vld [vmem:[%s6673 + $0x8] sm:$0xf]
        %v6677 = vld [vmem:[%s6673 + $0xc] sm:$0xf]
        %v6678 = vld [vmem:[%s6673 + $0x10] sm:$0xf]
        %v6679 = vld [vmem:[%s6673 + $0x14] sm:$0xf]
        %v6680 = vld [vmem:[%s6673 + $0x18] sm:$0xf]
        %v6681 = vld [vmem:[%s6673 + $0x1c] sm:$0xf]
        %v6682 = vld [vmem:[%s6673 + $0x20] sm:$0xf]
        %v6683 = vld [vmem:[%s6673 + $0x24] sm:$0xf]
        %v6684 = vld [vmem:[%s6673 + $0x28] sm:$0xf]
        %v6685 = vld [vmem:[%s6673 + $0x2c] sm:$0xf]
        %v6686 = vld [vmem:[%s6673 + $0x30] sm:$0xf]
        %v6687 = vld [vmem:[%s6673 + $0x34] sm:$0xf]
        %v6688 = vld [vmem:[%s6673 + $0x38] sm:$0xf]
        %v6689 = vld [vmem:[%s6673 + $0x3c] sm:$0xf]
        %v6690 = vld [vmem:[%s6673 + $0x40] sm:$0xf]
        %v6691 = vld [vmem:[%s6673 + $0x44] sm:$0xf]
        %v6692 = vld [vmem:[%s6673 + $0x48] sm:$0xf]
        %v6693 = vld [vmem:[%s6673 + $0x4c] sm:$0xf]
        %v6714 = vunpack.c.l.b16 %v6674
        %v6715 = vunpack.c.l.b16 %v6675
        %v6716 = vunpack.c.l.b16 %v6676
        %v6717 = vunpack.c.l.b16 %v6677
        %v6718 = vunpack.c.l.b16 %v6678
        %v6719 = vunpack.c.l.b16 %v6679
        %v6720 = vunpack.c.l.b16 %v6680
        %v6721 = vunpack.c.l.b16 %v6681
        %v6722 = vunpack.c.l.b16 %v6682
        %v6723 = vunpack.c.l.b16 %v6683
        %v6724 = vunpack.c.l.b16 %v6684
        %v6725 = vunpack.c.l.b16 %v6685
        %v6726 = vunpack.c.l.b16 %v6686
        %v6727 = vunpack.c.l.b16 %v6687
        %v6728 = vunpack.c.l.b16 %v6688
        %v6729 = vunpack.c.l.b16 %v6689
        %v6730 = vunpack.c.l.b16 %v6690
        %v6731 = vunpack.c.l.b16 %v6691
        %v6732 = vunpack.c.l.b16 %v6692
        %v6733 = vunpack.c.l.b16 %v6693
        %v6734 = vpack.c.b16 %v6715, %v6714
        %v6735 = vpack.c.b16 %v6717, %v6716
        %v6736 = vpack.c.b16 %v6719, %v6718
        %v6737 = vpack.c.b16 %v6721, %v6720
        %v6738 = vpack.c.b16 %v6723, %v6722
        %v6739 = vpack.c.b16 %v6725, %v6724
        %v6740 = vpack.c.b16 %v6727, %v6726
        %v6741 = vpack.c.b16 %v6729, %v6728
        %v6742 = vpack.c.b16 %v6731, %v6730
        %v6743 = vpack.c.b16 %v6733, %v6732
        %v6755 = vsel %vm585, %v6642, 0
        %v6758 = vsel %vm585, %v6644, 0
        %v6761 = vsel %vm585, %v6646, 0
        %v6764 = vsel %vm585, %v6648, 0
        %v6767 = vsel %vm585, %v6650, 0
        %v6770 = vsel %vm585, %v6652, 0
        %v6773 = vsel %vm585, %v6654, 0
        %v6776 = vsel %vm585, %v6656, 0
        %v6779 = vsel %vm585, %v6658, 0
        %v6782 = vsel %vm585, %v6660, 0
        %v6785 = vsel %vm585, %v6662, 0
        %v6788 = vsel %vm585, %v6664, 0
        %v6791 = vsel %vm585, %v6666, 0
        %v6794 = vsel %vm585, %v6668, 0
        %v6797 = vsel %vm585, %v6670, 0
        %v6800 = vsel %vm585, %v6672, 0
        %6802 = vmatprep.subr.bf16.mxu0 0
        %6803 = vmatpush1.bf16.msra.mxu0 %v6734
        %6804 = vmatprep.subr.bf16.mxu0 0
        %6805 = vmatpush1.bf16.msra.mxu0 %v6735
        %6806 = vmatprep.subr.bf16.mxu0 0
        %6807 = vmatpush1.bf16.msra.mxu0 %v6736
        %6808 = vmatprep.subr.bf16.mxu0 0
        %6809 = vmatpush1.bf16.msra.mxu0 %v6737
        %6810 = vmatprep.subr.bf16.mxu0 0
        %6811 = vmatpush1.bf16.msra.mxu0 %v6738
        %6812 = vmatprep.subr.bf16.mxu0 0
        %6813 = vmatpush1.bf16.msra.mxu0 %v6739
        %6814 = vmatprep.subr.bf16.mxu0 0
        %6815 = vmatpush1.bf16.msra.mxu0 %v6740
        %6816 = vmatprep.subr.bf16.mxu0 0
        %6817 = vmatpush1.bf16.msra.mxu0 %v6741
        %6818 = vmatprep.subr.bf16.mxu0 0
        %6819 = vmatpush1.bf16.msra.mxu0 %v6742
        %6820 = vmatprep.subr.bf16.mxu0 0
        %6821 = vmatpush1.bf16.msra.mxu0 %v6743
        %6822 = vmatprep.subr.bf16.mxu0 0
        %6823 = vmatpush1.bf16.msra.mxu0 0
        %6824 = vmatprep.subr.bf16.mxu0 0
        %6825 = vmatpush1.bf16.msra.mxu0 0
        %6826 = vmatprep.subr.bf16.mxu0 0
        %6827 = vmatpush1.bf16.msra.mxu0 0
        %6828 = vmatprep.subr.bf16.mxu0 0
        %6829 = vmatpush1.bf16.msra.mxu0 0
        %6830 = vmatprep.subr.bf16.mxu0 0
        %6831 = vmatpush1.bf16.msra.mxu0 0
        %6832 = vmatprep.subr.bf16.mxu0 0
        %6833 = vmatpush1.bf16.msra.mxu0 0
        %6834 = vmatprep.mubr.bf16.mxu0 %v6755
        %6835 = vmatmul.mubr.bf16.gmra.mrb[0].mxu0 %v6641
        %v6836 = vpop.f32.mrb[0].mxu0
        %v6837 = vadd.f32 0.0, %v6836
        %v6838 = vpop.f32.mrb[0].mxu0
        %v6839 = vpop.f32.mrb[0].mxu0
        %v6840 = vadd.f32 0.0, %v6839
        %v6841 = vpop.f32.mrb[0].mxu0
        %6842 = vmatprep.mubr.bf16.mxu0 %v6758
        %6843 = vmatmul.mubr.bf16.gmra.mrb[0].mxu0 %v6643
        %v6844 = vpop.f32.mrb[0].mxu0
        %v6845 = vadd.f32 0.0, %v6844
        %v6846 = vpop.f32.mrb[0].mxu0
        %v6847 = vpop.f32.mrb[0].mxu0
        %v6848 = vadd.f32 0.0, %v6847
        %v6849 = vpop.f32.mrb[0].mxu0
        %6850 = vmatprep.mubr.bf16.mxu0 %v6761
        %6851 = vmatmul.mubr.bf16.gmra.mrb[0].mxu0 %v6645
        %v6852 = vpop.f32.mrb[0].mxu0
        %v6853 = vadd.f32 0.0, %v6852
        %v6854 = vpop.f32.mrb[0].mxu0
        %v6855 = vpop.f32.mrb[0].mxu0
        %v6856 = vadd.f32 0.0, %v6855
        %v6857 = vpop.f32.mrb[0].mxu0
        %6858 = vmatprep.mubr.bf16.mxu0 %v6764
        %6859 = vmatmul.mubr.bf16.gmra.mrb[0].mxu0 %v6647
        %v6860 = vpop.f32.mrb[0].mxu0
        %v6861 = vadd.f32 0.0, %v6860
        %v6862 = vpop.f32.mrb[0].mxu0
        %v6863 = vpop.f32.mrb[0].mxu0
        %v6864 = vadd.f32 0.0, %v6863
        %v6865 = vpop.f32.mrb[0].mxu0
        %6866 = vmatprep.mubr.bf16.mxu0 %v6767
        %6867 = vmatmul.mubr.bf16.gmra.mrb[0].mxu0 %v6649
        %v6868 = vpop.f32.mrb[0].mxu0
        %v6869 = vadd.f32 0.0, %v6868
        %v6870 = vpop.f32.mrb[0].mxu0
        %v6871 = vpop.f32.mrb[0].mxu0
        %v6872 = vadd.f32 0.0, %v6871
        %v6873 = vpop.f32.mrb[0].mxu0
        %6874 = vmatprep.mubr.bf16.mxu0 %v6770
        %6875 = vmatmul.mubr.bf16.gmra.mrb[0].mxu0 %v6651
        %v6876 = vpop.f32.mrb[0].mxu0
        %v6877 = vadd.f32 0.0, %v6876
        %v6878 = vpop.f32.mrb[0].mxu0
        %v6879 = vpop.f32.mrb[0].mxu0
        %v6880 = vadd.f32 0.0, %v6879
        %v6881 = vpop.f32.mrb[0].mxu0
        %6882 = vmatprep.mubr.bf16.mxu0 %v6773
        %6883 = vmatmul.mubr.bf16.gmra.mrb[0].mxu0 %v6653
        %v6884 = vpop.f32.mrb[0].mxu0
        %v6885 = vadd.f32 0.0, %v6884
        %v6886 = vpop.f32.mrb[0].mxu0
        %v6887 = vpop.f32.mrb[0].mxu0
        %v6888 = vadd.f32 0.0, %v6887
        %v6889 = vpop.f32.mrb[0].mxu0
        %6890 = vmatprep.mubr.bf16.mxu0 %v6776
        %6891 = vmatmul.mubr.bf16.gmra.mrb[0].mxu0 %v6655
        %v6892 = vpop.f32.mrb[0].mxu0
        %v6893 = vadd.f32 0.0, %v6892
        %v6894 = vpop.f32.mrb[0].mxu0
        %v6895 = vpop.f32.mrb[0].mxu0
        %v6896 = vadd.f32 0.0, %v6895
        %v6897 = vpop.f32.mrb[0].mxu0
        %6898 = vmatprep.mubr.bf16.mxu0 %v6779
        %6899 = vmatmul.mubr.bf16.gmra.mrb[0].mxu0 %v6657
        %v6900 = vpop.f32.mrb[0].mxu0
        %v6901 = vadd.f32 0.0, %v6900
        %v6902 = vpop.f32.mrb[0].mxu0
        %v6903 = vpop.f32.mrb[0].mxu0
        %v6904 = vadd.f32 0.0, %v6903
        %v6905 = vpop.f32.mrb[0].mxu0
        %6906 = vmatprep.mubr.bf16.mxu0 %v6782
        %6907 = vmatmul.mubr.bf16.gmra.mrb[0].mxu0 %v6659
        %v6908 = vpop.f32.mrb[0].mxu0
        %v6909 = vadd.f32 0.0, %v6908
        %v6910 = vpop.f32.mrb[0].mxu0
        %v6911 = vpop.f32.mrb[0].mxu0
        %v6912 = vadd.f32 0.0, %v6911
        %v6913 = vpop.f32.mrb[0].mxu0
        %6914 = vmatprep.mubr.bf16.mxu0 %v6785
        %6915 = vmatmul.mubr.bf16.gmra.mrb[0].mxu0 %v6661
        %v6916 = vpop.f32.mrb[0].mxu0
        %v6917 = vadd.f32 0.0, %v6916
        %v6918 = vpop.f32.mrb[0].mxu0
        %v6919 = vpop.f32.mrb[0].mxu0
        %v6920 = vadd.f32 0.0, %v6919
        %v6921 = vpop.f32.mrb[0].mxu0
        %6922 = vmatprep.mubr.bf16.mxu0 %v6788
        %6923 = vmatmul.mubr.bf16.gmra.mrb[0].mxu0 %v6663
        %v6924 = vpop.f32.mrb[0].mxu0
        %v6925 = vadd.f32 0.0, %v6924
        %v6926 = vpop.f32.mrb[0].mxu0
        %v6927 = vpop.f32.mrb[0].mxu0
        %v6928 = vadd.f32 0.0, %v6927
        %v6929 = vpop.f32.mrb[0].mxu0
        %6930 = vmatprep.mubr.bf16.mxu0 %v6791
        %6931 = vmatmul.mubr.bf16.gmra.mrb[0].mxu0 %v6665
        %v6932 = vpop.f32.mrb[0].mxu0
        %v6933 = vadd.f32 0.0, %v6932
        %v6934 = vpop.f32.mrb[0].mxu0
        %v6935 = vpop.f32.mrb[0].mxu0
        %v6936 = vadd.f32 0.0, %v6935
        %v6937 = vpop.f32.mrb[0].mxu0
        %6938 = vmatprep.mubr.bf16.mxu0 %v6794
        %6939 = vmatmul.mubr.bf16.gmra.mrb[0].mxu0 %v6667
        %v6940 = vpop.f32.mrb[0].mxu0
        %v6941 = vadd.f32 0.0, %v6940
        %v6942 = vpop.f32.mrb[0].mxu0
        %v6943 = vpop.f32.mrb[0].mxu0
        %v6944 = vadd.f32 0.0, %v6943
        %v6945 = vpop.f32.mrb[0].mxu0
        %6946 = vmatprep.mubr.bf16.mxu0 %v6797
        %6947 = vmatmul.mubr.bf16.gmra.mrb[0].mxu0 %v6669
        %v6948 = vpop.f32.mrb[0].mxu0
        %v6949 = vadd.f32 0.0, %v6948
        %v6950 = vpop.f32.mrb[0].mxu0
        %v6951 = vpop.f32.mrb[0].mxu0
        %v6952 = vadd.f32 0.0, %v6951
        %v6953 = vpop.f32.mrb[0].mxu0
        %6954 = vmatprep.mubr.bf16.mxu0 %v6800
        %6955 = vmatmul.mubr.bf16.gmra.mrb[0].mxu0 %v6671
        %v6956 = vpop.f32.mrb[0].mxu0
        %v6957 = vadd.f32 0.0, %v6956
        %v6958 = vpop.f32.mrb[0].mxu0
        %v6959 = vpop.f32.mrb[0].mxu0
        %v6960 = vadd.f32 0.0, %v6959
        %v6961 = vpop.f32.mrb[0].mxu0
        %6962 = vdwg.mxu0
        %v6963 = vadd.f32 %v6609, %v6837
        %v6964 = vadd.f32 %v6610, %v6840
        %v6965 = vadd.f32 %v6611, %v6845
        %v6966 = vadd.f32 %v6612, %v6848
        %v6967 = vadd.f32 %v6613, %v6853
        %v6968 = vadd.f32 %v6614, %v6856
        %v6969 = vadd.f32 %v6615, %v6861
        %v6970 = vadd.f32 %v6616, %v6864
        %v6971 = vadd.f32 %v6617, %v6869
        %v6972 = vadd.f32 %v6618, %v6872
        %v6973 = vadd.f32 %v6619, %v6877
        %v6974 = vadd.f32 %v6620, %v6880
        %v6975 = vadd.f32 %v6621, %v6885
        %v6976 = vadd.f32 %v6622, %v6888
        %v6977 = vadd.f32 %v6623, %v6893
        %v6978 = vadd.f32 %v6624, %v6896
        %v6979 = vadd.f32 %v6625, %v6901
        %v6980 = vadd.f32 %v6626, %v6904
        %v6981 = vadd.f32 %v6627, %v6909
        %v6982 = vadd.f32 %v6628, %v6912
        %v6983 = vadd.f32 %v6629, %v6917
        %v6984 = vadd.f32 %v6630, %v6920
        %v6985 = vadd.f32 %v6631, %v6925
        %v6986 = vadd.f32 %v6632, %v6928
        %v6987 = vadd.f32 %v6633, %v6933
        %v6988 = vadd.f32 %v6634, %v6936
        %v6989 = vadd.f32 %v6635, %v6941
        %v6990 = vadd.f32 %v6636, %v6944
        %v6991 = vadd.f32 %v6637, %v6949
        %v6992 = vadd.f32 %v6638, %v6952
        %v6993 = vadd.f32 %v6639, %v6957
        %v6994 = vadd.f32 %v6640, %v6960
        %v6995 = vld [vmem:[%s4033] sm:$0xff]
        %v6996 = vld [vmem:[%s4033 + $0x8] sm:$0xff]
        %v6997 = vld [vmem:[%s4033 + $0x10] sm:$0xff]
        %v6998 = vld [vmem:[%s4033 + $0x18] sm:$0xff]
        %v6999 = vld [vmem:[%s4033 + $0x20] sm:$0xff]
        %v7000 = vld [vmem:[%s4033 + $0x28] sm:$0xff]
        %v7001 = vld [vmem:[%s4033 + $0x30] sm:$0xff]
        %v7002 = vld [vmem:[%s4033 + $0x38] sm:$0xff]
        %v7003 = vld [vmem:[%s4033 + $0x40] sm:$0xff]
        %v7004 = vld [vmem:[%s4033 + $0x48] sm:$0xff]
        %v7005 = vld [vmem:[%s4033 + $0x50] sm:$0xff]
        %v7006 = vld [vmem:[%s4033 + $0x58] sm:$0xff]
        %v7007 = vld [vmem:[%s4033 + $0x60] sm:$0xff]
        %v7008 = vld [vmem:[%s4033 + $0x68] sm:$0xff]
        %v7009 = vld [vmem:[%s4033 + $0x70] sm:$0xff]
        %v7010 = vld [vmem:[%s4033 + $0x78] sm:$0xff]
        %v7011 = vld [vmem:[%s4033 + $0x80] sm:$0xff]
        %v7012 = vld [vmem:[%s4033 + $0x88] sm:$0xff]
        %v7013 = vld [vmem:[%s4033 + $0x90] sm:$0xff]
        %v7014 = vld [vmem:[%s4033 + $0x98] sm:$0xff]
        %v7015 = vld [vmem:[%s4033 + $0xa0] sm:$0xff]
        %v7016 = vld [vmem:[%s4033 + $0xa8] sm:$0xff]
        %v7017 = vld [vmem:[%s4033 + $0xb0] sm:$0xff]
        %v7018 = vld [vmem:[%s4033 + $0xb8] sm:$0xff]
        %v7019 = vld [vmem:[%s4033 + $0xc0] sm:$0xff]
        %v7020 = vld [vmem:[%s4033 + $0xc8] sm:$0xff]
        %v7021 = vld [vmem:[%s4033 + $0xd0] sm:$0xff]
        %v7022 = vld [vmem:[%s4033 + $0xd8] sm:$0xff]
        %v7023 = vld [vmem:[%s4033 + $0xe0] sm:$0xff]
        %v7024 = vld [vmem:[%s4033 + $0xe8] sm:$0xff]
        %v7025 = vld [vmem:[%s4033 + $0xf0] sm:$0xff]
        %v7026 = vld [vmem:[%s4033 + $0xf8] sm:$0xff]
        %s7027 = scalar_lea.vmem %s5, 320
        %v7028 = vld [vmem:[%s7027] sm:$0xf]
        %v7029 = vld [vmem:[%s7027 + $0x4] sm:$0xf]
        %v7030 = vld [vmem:[%s7027 + $0x8] sm:$0xf]
        %v7031 = vld [vmem:[%s7027 + $0xc] sm:$0xf]
        %v7032 = vld [vmem:[%s7027 + $0x10] sm:$0xf]
        %v7033 = vld [vmem:[%s7027 + $0x14] sm:$0xf]
        %v7034 = vld [vmem:[%s7027 + $0x18] sm:$0xf]
        %v7035 = vld [vmem:[%s7027 + $0x1c] sm:$0xf]
        %v7036 = vld [vmem:[%s7027 + $0x20] sm:$0xf]
        %v7037 = vld [vmem:[%s7027 + $0x24] sm:$0xf]
        %v7038 = vld [vmem:[%s7027 + $0x28] sm:$0xf]
        %v7039 = vld [vmem:[%s7027 + $0x2c] sm:$0xf]
        %v7040 = vld [vmem:[%s7027 + $0x30] sm:$0xf]
        %v7041 = vld [vmem:[%s7027 + $0x34] sm:$0xf]
        %v7042 = vld [vmem:[%s7027 + $0x38] sm:$0xf]
        %v7043 = vld [vmem:[%s7027 + $0x3c] sm:$0xf]
        %v7044 = vld [vmem:[%s7027 + $0x40] sm:$0xf]
        %v7045 = vld [vmem:[%s7027 + $0x44] sm:$0xf]
        %v7046 = vld [vmem:[%s7027 + $0x48] sm:$0xf]
        %v7047 = vld [vmem:[%s7027 + $0x4c] sm:$0xf]
        %v7068 = vunpack.c.l.b16 %v7028
        %v7069 = vunpack.c.l.b16 %v7029
        %v7070 = vunpack.c.l.b16 %v7030
        %v7071 = vunpack.c.l.b16 %v7031
        %v7072 = vunpack.c.l.b16 %v7032
        %v7073 = vunpack.c.l.b16 %v7033
        %v7074 = vunpack.c.l.b16 %v7034
        %v7075 = vunpack.c.l.b16 %v7035
        %v7076 = vunpack.c.l.b16 %v7036
        %v7077 = vunpack.c.l.b16 %v7037
        %v7078 = vunpack.c.l.b16 %v7038
        %v7079 = vunpack.c.l.b16 %v7039
        %v7080 = vunpack.c.l.b16 %v7040
        %v7081 = vunpack.c.l.b16 %v7041
        %v7082 = vunpack.c.l.b16 %v7042
        %v7083 = vunpack.c.l.b16 %v7043
        %v7084 = vunpack.c.l.b16 %v7044
        %v7085 = vunpack.c.l.b16 %v7045
        %v7086 = vunpack.c.l.b16 %v7046
        %v7087 = vunpack.c.l.b16 %v7047
        %v7088 = vpack.c.b16 %v7069, %v7068
        %v7089 = vpack.c.b16 %v7071, %v7070
        %v7090 = vpack.c.b16 %v7073, %v7072
        %v7091 = vpack.c.b16 %v7075, %v7074
        %v7092 = vpack.c.b16 %v7077, %v7076
        %v7093 = vpack.c.b16 %v7079, %v7078
        %v7094 = vpack.c.b16 %v7081, %v7080
        %v7095 = vpack.c.b16 %v7083, %v7082
        %v7096 = vpack.c.b16 %v7085, %v7084
        %v7097 = vpack.c.b16 %v7087, %v7086
        %v7109 = vsel %vm585, %v6996, 0
        %v7112 = vsel %vm585, %v6998, 0
        %v7115 = vsel %vm585, %v7000, 0
        %v7118 = vsel %vm585, %v7002, 0
        %v7121 = vsel %vm585, %v7004, 0
        %v7124 = vsel %vm585, %v7006, 0
        %v7127 = vsel %vm585, %v7008, 0
        %v7130 = vsel %vm585, %v7010, 0
        %v7133 = vsel %vm585, %v7012, 0
        %v7136 = vsel %vm585, %v7014, 0
        %v7139 = vsel %vm585, %v7016, 0
        %v7142 = vsel %vm585, %v7018, 0
        %v7145 = vsel %vm585, %v7020, 0
        %v7148 = vsel %vm585, %v7022, 0
        %v7151 = vsel %vm585, %v7024, 0
        %v7154 = vsel %vm585, %v7026, 0
        %7156 = vmatprep.subr.bf16.mxu0 0
        %7157 = vmatpush1.bf16.msra.mxu0 %v7088
        %7158 = vmatprep.subr.bf16.mxu0 0
        %7159 = vmatpush1.bf16.msra.mxu0 %v7089
        %7160 = vmatprep.subr.bf16.mxu0 0
        %7161 = vmatpush1.bf16.msra.mxu0 %v7090
        %7162 = vmatprep.subr.bf16.mxu0 0
        %7163 = vmatpush1.bf16.msra.mxu0 %v7091
        %7164 = vmatprep.subr.bf16.mxu0 0
        %7165 = vmatpush1.bf16.msra.mxu0 %v7092
        %7166 = vmatprep.subr.bf16.mxu0 0
        %7167 = vmatpush1.bf16.msra.mxu0 %v7093
        %7168 = vmatprep.subr.bf16.mxu0 0
        %7169 = vmatpush1.bf16.msra.mxu0 %v7094
        %7170 = vmatprep.subr.bf16.mxu0 0
        %7171 = vmatpush1.bf16.msra.mxu0 %v7095
        %7172 = vmatprep.subr.bf16.mxu0 0
        %7173 = vmatpush1.bf16.msra.mxu0 %v7096
        %7174 = vmatprep.subr.bf16.mxu0 0
        %7175 = vmatpush1.bf16.msra.mxu0 %v7097
        %7176 = vmatprep.subr.bf16.mxu0 0
        %7177 = vmatpush1.bf16.msra.mxu0 0
        %7178 = vmatprep.subr.bf16.mxu0 0
        %7179 = vmatpush1.bf16.msra.mxu0 0
        %7180 = vmatprep.subr.bf16.mxu0 0
        %7181 = vmatpush1.bf16.msra.mxu0 0
        %7182 = vmatprep.subr.bf16.mxu0 0
        %7183 = vmatpush1.bf16.msra.mxu0 0
        %7184 = vmatprep.subr.bf16.mxu0 0
        %7185 = vmatpush1.bf16.msra.mxu0 0
        %7186 = vmatprep.subr.bf16.mxu0 0
        %7187 = vmatpush1.bf16.msra.mxu0 0
        %7188 = vmatprep.mubr.bf16.mxu0 %v7109
        %7189 = vmatmul.mubr.bf16.gmra.mrb[0].mxu0 %v6995
        %v7190 = vpop.f32.mrb[0].mxu0
        %v7191 = vadd.f32 0.0, %v7190
        %v7192 = vpop.f32.mrb[0].mxu0
        %v7193 = vpop.f32.mrb[0].mxu0
        %v7194 = vadd.f32 0.0, %v7193
        %v7195 = vpop.f32.mrb[0].mxu0
        %7196 = vmatprep.mubr.bf16.mxu0 %v7112
        %7197 = vmatmul.mubr.bf16.gmra.mrb[0].mxu0 %v6997
        %v7198 = vpop.f32.mrb[0].mxu0
        %v7199 = vadd.f32 0.0, %v7198
        %v7200 = vpop.f32.mrb[0].mxu0
        %v7201 = vpop.f32.mrb[0].mxu0
        %v7202 = vadd.f32 0.0, %v7201
        %v7203 = vpop.f32.mrb[0].mxu0
        %7204 = vmatprep.mubr.bf16.mxu0 %v7115
        %7205 = vmatmul.mubr.bf16.gmra.mrb[0].mxu0 %v6999
        %v7206 = vpop.f32.mrb[0].mxu0
        %v7207 = vadd.f32 0.0, %v7206
        %v7208 = vpop.f32.mrb[0].mxu0
        %v7209 = vpop.f32.mrb[0].mxu0
        %v7210 = vadd.f32 0.0, %v7209
        %v7211 = vpop.f32.mrb[0].mxu0
        %7212 = vmatprep.mubr.bf16.mxu0 %v7118
        %7213 = vmatmul.mubr.bf16.gmra.mrb[0].mxu0 %v7001
        %v7214 = vpop.f32.mrb[0].mxu0
        %v7215 = vadd.f32 0.0, %v7214
        %v7216 = vpop.f32.mrb[0].mxu0
        %v7217 = vpop.f32.mrb[0].mxu0
        %v7218 = vadd.f32 0.0, %v7217
        %v7219 = vpop.f32.mrb[0].mxu0
        %7220 = vmatprep.mubr.bf16.mxu0 %v7121
        %7221 = vmatmul.mubr.bf16.gmra.mrb[0].mxu0 %v7003
        %v7222 = vpop.f32.mrb[0].mxu0
        %v7223 = vadd.f32 0.0, %v7222
        %v7224 = vpop.f32.mrb[0].mxu0
        %v7225 = vpop.f32.mrb[0].mxu0
        %v7226 = vadd.f32 0.0, %v7225
        %v7227 = vpop.f32.mrb[0].mxu0
        %7228 = vmatprep.mubr.bf16.mxu0 %v7124
        %7229 = vmatmul.mubr.bf16.gmra.mrb[0].mxu0 %v7005
        %v7230 = vpop.f32.mrb[0].mxu0
        %v7231 = vadd.f32 0.0, %v7230
        %v7232 = vpop.f32.mrb[0].mxu0
        %v7233 = vpop.f32.mrb[0].mxu0
        %v7234 = vadd.f32 0.0, %v7233
        %v7235 = vpop.f32.mrb[0].mxu0
        %7236 = vmatprep.mubr.bf16.mxu0 %v7127
        %7237 = vmatmul.mubr.bf16.gmra.mrb[0].mxu0 %v7007
        %v7238 = vpop.f32.mrb[0].mxu0
        %v7239 = vadd.f32 0.0, %v7238
        %v7240 = vpop.f32.mrb[0].mxu0
        %v7241 = vpop.f32.mrb[0].mxu0
        %v7242 = vadd.f32 0.0, %v7241
        %v7243 = vpop.f32.mrb[0].mxu0
        %7244 = vmatprep.mubr.bf16.mxu0 %v7130
        %7245 = vmatmul.mubr.bf16.gmra.mrb[0].mxu0 %v7009
        %v7246 = vpop.f32.mrb[0].mxu0
        %v7247 = vadd.f32 0.0, %v7246
        %v7248 = vpop.f32.mrb[0].mxu0
        %v7249 = vpop.f32.mrb[0].mxu0
        %v7250 = vadd.f32 0.0, %v7249
        %v7251 = vpop.f32.mrb[0].mxu0
        %7252 = vmatprep.mubr.bf16.mxu0 %v7133
        %7253 = vmatmul.mubr.bf16.gmra.mrb[0].mxu0 %v7011
        %v7254 = vpop.f32.mrb[0].mxu0
        %v7255 = vadd.f32 0.0, %v7254
        %v7256 = vpop.f32.mrb[0].mxu0
        %v7257 = vpop.f32.mrb[0].mxu0
        %v7258 = vadd.f32 0.0, %v7257
        %v7259 = vpop.f32.mrb[0].mxu0
        %7260 = vmatprep.mubr.bf16.mxu0 %v7136
        %7261 = vmatmul.mubr.bf16.gmra.mrb[0].mxu0 %v7013
        %v7262 = vpop.f32.mrb[0].mxu0
        %v7263 = vadd.f32 0.0, %v7262
        %v7264 = vpop.f32.mrb[0].mxu0
        %v7265 = vpop.f32.mrb[0].mxu0
        %v7266 = vadd.f32 0.0, %v7265
        %v7267 = vpop.f32.mrb[0].mxu0
        %7268 = vmatprep.mubr.bf16.mxu0 %v7139
        %7269 = vmatmul.mubr.bf16.gmra.mrb[0].mxu0 %v7015
        %v7270 = vpop.f32.mrb[0].mxu0
        %v7271 = vadd.f32 0.0, %v7270
        %v7272 = vpop.f32.mrb[0].mxu0
        %v7273 = vpop.f32.mrb[0].mxu0
        %v7274 = vadd.f32 0.0, %v7273
        %v7275 = vpop.f32.mrb[0].mxu0
        %7276 = vmatprep.mubr.bf16.mxu0 %v7142
        %7277 = vmatmul.mubr.bf16.gmra.mrb[0].mxu0 %v7017
        %v7278 = vpop.f32.mrb[0].mxu0
        %v7279 = vadd.f32 0.0, %v7278
        %v7280 = vpop.f32.mrb[0].mxu0
        %v7281 = vpop.f32.mrb[0].mxu0
        %v7282 = vadd.f32 0.0, %v7281
        %v7283 = vpop.f32.mrb[0].mxu0
        %7284 = vmatprep.mubr.bf16.mxu0 %v7145
        %7285 = vmatmul.mubr.bf16.gmra.mrb[0].mxu0 %v7019
        %v7286 = vpop.f32.mrb[0].mxu0
        %v7287 = vadd.f32 0.0, %v7286
        %v7288 = vpop.f32.mrb[0].mxu0
        %v7289 = vpop.f32.mrb[0].mxu0
        %v7290 = vadd.f32 0.0, %v7289
        %v7291 = vpop.f32.mrb[0].mxu0
        %7292 = vmatprep.mubr.bf16.mxu0 %v7148
        %7293 = vmatmul.mubr.bf16.gmra.mrb[0].mxu0 %v7021
        %v7294 = vpop.f32.mrb[0].mxu0
        %v7295 = vadd.f32 0.0, %v7294
        %v7296 = vpop.f32.mrb[0].mxu0
        %v7297 = vpop.f32.mrb[0].mxu0
        %v7298 = vadd.f32 0.0, %v7297
        %v7299 = vpop.f32.mrb[0].mxu0
        %7300 = vmatprep.mubr.bf16.mxu0 %v7151
        %7301 = vmatmul.mubr.bf16.gmra.mrb[0].mxu0 %v7023
        %v7302 = vpop.f32.mrb[0].mxu0
        %v7303 = vadd.f32 0.0, %v7302
        %v7304 = vpop.f32.mrb[0].mxu0
        %v7305 = vpop.f32.mrb[0].mxu0
        %v7306 = vadd.f32 0.0, %v7305
        %v7307 = vpop.f32.mrb[0].mxu0
        %7308 = vmatprep.mubr.bf16.mxu0 %v7154
        %7309 = vmatmul.mubr.bf16.gmra.mrb[0].mxu0 %v7025
        %v7310 = vpop.f32.mrb[0].mxu0
        %v7311 = vadd.f32 0.0, %v7310
        %v7312 = vpop.f32.mrb[0].mxu0
        %v7313 = vpop.f32.mrb[0].mxu0
        %v7314 = vadd.f32 0.0, %v7313
        %v7315 = vpop.f32.mrb[0].mxu0
        %7316 = vdwg.mxu0
        %v7317 = vadd.f32 %v6963, %v7191
        %v7318 = vadd.f32 %v6964, %v7194
        %v7319 = vadd.f32 %v6965, %v7199
        %v7320 = vadd.f32 %v6966, %v7202
        %v7321 = vadd.f32 %v6967, %v7207
        %v7322 = vadd.f32 %v6968, %v7210
        %v7323 = vadd.f32 %v6969, %v7215
        %v7324 = vadd.f32 %v6970, %v7218
        %v7325 = vadd.f32 %v6971, %v7223
        %v7326 = vadd.f32 %v6972, %v7226
        %v7327 = vadd.f32 %v6973, %v7231
        %v7328 = vadd.f32 %v6974, %v7234
        %v7329 = vadd.f32 %v6975, %v7239
        %v7330 = vadd.f32 %v6976, %v7242
        %v7331 = vadd.f32 %v6977, %v7247
        %v7332 = vadd.f32 %v6978, %v7250
        %v7333 = vadd.f32 %v6979, %v7255
        %v7334 = vadd.f32 %v6980, %v7258
        %v7335 = vadd.f32 %v6981, %v7263
        %v7336 = vadd.f32 %v6982, %v7266
        %v7337 = vadd.f32 %v6983, %v7271
        %v7338 = vadd.f32 %v6984, %v7274
        %v7339 = vadd.f32 %v6985, %v7279
        %v7340 = vadd.f32 %v6986, %v7282
        %v7341 = vadd.f32 %v6987, %v7287
        %v7342 = vadd.f32 %v6988, %v7290
        %v7343 = vadd.f32 %v6989, %v7295
        %v7344 = vadd.f32 %v6990, %v7298
        %v7345 = vadd.f32 %v6991, %v7303
        %v7346 = vadd.f32 %v6992, %v7306
        %v7347 = vadd.f32 %v6993, %v7311
        %v7348 = vadd.f32 %v6994, %v7314
        %v7349 = vld [vmem:[%s6] sm:$0x1]
        %v7351 = vlaneseq
        %v7352 = vshrl.u32 %v7351, 7
        %v7353 = vsub.s32 0, %v7352
        %v7354 = vrot.slane %v7349, %v7353
        %v7356 = vadd.f32 %v7317, %v7354
        %v7357 = vadd.f32 %v7318, %v7354
        %v7358 = vadd.f32 %v7319, %v7354
        %v7359 = vadd.f32 %v7320, %v7354
        %v7360 = vadd.f32 %v7321, %v7354
        %v7361 = vadd.f32 %v7322, %v7354
        %v7362 = vadd.f32 %v7323, %v7354
        %v7363 = vadd.f32 %v7324, %v7354
        %v7364 = vadd.f32 %v7325, %v7354
        %v7365 = vadd.f32 %v7326, %v7354
        %v7366 = vadd.f32 %v7327, %v7354
        %v7367 = vadd.f32 %v7328, %v7354
        %v7368 = vadd.f32 %v7329, %v7354
        %v7369 = vadd.f32 %v7330, %v7354
        %v7370 = vadd.f32 %v7331, %v7354
        %v7371 = vadd.f32 %v7332, %v7354
        %v7372 = vadd.f32 %v7333, %v7354
        %v7373 = vadd.f32 %v7334, %v7354
        %v7374 = vadd.f32 %v7335, %v7354
        %v7375 = vadd.f32 %v7336, %v7354
        %v7376 = vadd.f32 %v7337, %v7354
        %v7377 = vadd.f32 %v7338, %v7354
        %v7378 = vadd.f32 %v7339, %v7354
        %v7379 = vadd.f32 %v7340, %v7354
        %v7380 = vadd.f32 %v7341, %v7354
        %v7381 = vadd.f32 %v7342, %v7354
        %v7382 = vadd.f32 %v7343, %v7354
        %v7383 = vadd.f32 %v7344, %v7354
        %v7384 = vadd.f32 %v7345, %v7354
        %v7385 = vadd.f32 %v7346, %v7354
        %v7386 = vadd.f32 %v7347, %v7354
        %v7387 = vadd.f32 %v7348, %v7354
        %vm7388 = vcmp.ge.f32.partialorder %v7356, 0.0
        %vm7389 = vcmp.ge.f32.partialorder %v7357, 0.0
        %vm7390 = vcmp.ge.f32.partialorder %v7358, 0.0
        %vm7391 = vcmp.ge.f32.partialorder %v7359, 0.0
        %vm7392 = vcmp.ge.f32.partialorder %v7360, 0.0
        %vm7393 = vcmp.ge.f32.partialorder %v7361, 0.0
        %vm7394 = vcmp.ge.f32.partialorder %v7362, 0.0
        %vm7395 = vcmp.ge.f32.partialorder %v7363, 0.0
        %vm7396 = vcmp.ge.f32.partialorder %v7364, 0.0
        %vm7397 = vcmp.ge.f32.partialorder %v7365, 0.0
        %vm7398 = vcmp.ge.f32.partialorder %v7366, 0.0
        %vm7399 = vcmp.ge.f32.partialorder %v7367, 0.0
        %vm7400 = vcmp.ge.f32.partialorder %v7368, 0.0
        %vm7401 = vcmp.ge.f32.partialorder %v7369, 0.0
        %vm7402 = vcmp.ge.f32.partialorder %v7370, 0.0
        %vm7403 = vcmp.ge.f32.partialorder %v7371, 0.0
        %vm7404 = vcmp.ge.f32.partialorder %v7372, 0.0
        %vm7405 = vcmp.ge.f32.partialorder %v7373, 0.0
        %vm7406 = vcmp.ge.f32.partialorder %v7374, 0.0
        %vm7407 = vcmp.ge.f32.partialorder %v7375, 0.0
        %vm7408 = vcmp.ge.f32.partialorder %v7376, 0.0
        %vm7409 = vcmp.ge.f32.partialorder %v7377, 0.0
        %vm7410 = vcmp.ge.f32.partialorder %v7378, 0.0
        %vm7411 = vcmp.ge.f32.partialorder %v7379, 0.0
        %vm7412 = vcmp.ge.f32.partialorder %v7380, 0.0
        %vm7413 = vcmp.ge.f32.partialorder %v7381, 0.0
        %vm7414 = vcmp.ge.f32.partialorder %v7382, 0.0
        %vm7415 = vcmp.ge.f32.partialorder %v7383, 0.0
        %vm7416 = vcmp.ge.f32.partialorder %v7384, 0.0
        %vm7417 = vcmp.ge.f32.partialorder %v7385, 0.0
        %vm7418 = vcmp.ge.f32.partialorder %v7386, 0.0
        %vm7419 = vcmp.ge.f32.partialorder %v7387, 0.0
        %v7420 = vld [vmem:[%s7] sm:$0x1]
        %v7422 = vlaneseq
        %v7423 = vshrl.u32 %v7422, 7
        %v7424 = vsub.s32 0, %v7423
        %v7425 = vrot.slane %v7420, %v7424
        %v7427 = vmul.f32 %v7425, %v7356
        %v7428 = vmul.f32 %v7425, %v7357
        %v7429 = vmul.f32 %v7425, %v7358
        %v7430 = vmul.f32 %v7425, %v7359
        %v7431 = vmul.f32 %v7425, %v7360
        %v7432 = vmul.f32 %v7425, %v7361
        %v7433 = vmul.f32 %v7425, %v7362
        %v7434 = vmul.f32 %v7425, %v7363
        %v7435 = vmul.f32 %v7425, %v7364
        %v7436 = vmul.f32 %v7425, %v7365
        %v7437 = vmul.f32 %v7425, %v7366
        %v7438 = vmul.f32 %v7425, %v7367
        %v7439 = vmul.f32 %v7425, %v7368
        %v7440 = vmul.f32 %v7425, %v7369
        %v7441 = vmul.f32 %v7425, %v7370
        %v7442 = vmul.f32 %v7425, %v7371
        %v7443 = vmul.f32 %v7425, %v7372
        %v7444 = vmul.f32 %v7425, %v7373
        %v7445 = vmul.f32 %v7425, %v7374
        %v7446 = vmul.f32 %v7425, %v7375
        %v7447 = vmul.f32 %v7425, %v7376
        %v7448 = vmul.f32 %v7425, %v7377
        %v7449 = vmul.f32 %v7425, %v7378
        %v7450 = vmul.f32 %v7425, %v7379
        %v7451 = vmul.f32 %v7425, %v7380
        %v7452 = vmul.f32 %v7425, %v7381
        %v7453 = vmul.f32 %v7425, %v7382
        %v7454 = vmul.f32 %v7425, %v7383
        %v7455 = vmul.f32 %v7425, %v7384
        %v7456 = vmul.f32 %v7425, %v7385
        %v7457 = vmul.f32 %v7425, %v7386
        %v7458 = vmul.f32 %v7425, %v7387
        %v7459 = vsel %vm7388, %v7356, %v7427
        %v7460 = vsel %vm7389, %v7357, %v7428
        %v7461 = vsel %vm7390, %v7358, %v7429
        %v7462 = vsel %vm7391, %v7359, %v7430
        %v7463 = vsel %vm7392, %v7360, %v7431
        %v7464 = vsel %vm7393, %v7361, %v7432
        %v7465 = vsel %vm7394, %v7362, %v7433
        %v7466 = vsel %vm7395, %v7363, %v7434
        %v7467 = vsel %vm7396, %v7364, %v7435
        %v7468 = vsel %vm7397, %v7365, %v7436
        %v7469 = vsel %vm7398, %v7366, %v7437
        %v7470 = vsel %vm7399, %v7367, %v7438
        %v7471 = vsel %vm7400, %v7368, %v7439
        %v7472 = vsel %vm7401, %v7369, %v7440
        %v7473 = vsel %vm7402, %v7370, %v7441
        %v7474 = vsel %vm7403, %v7371, %v7442
        %v7475 = vsel %vm7404, %v7372, %v7443
        %v7476 = vsel %vm7405, %v7373, %v7444
        %v7477 = vsel %vm7406, %v7374, %v7445
        %v7478 = vsel %vm7407, %v7375, %v7446
        %v7479 = vsel %vm7408, %v7376, %v7447
        %v7480 = vsel %vm7409, %v7377, %v7448
        %v7481 = vsel %vm7410, %v7378, %v7449
        %v7482 = vsel %vm7411, %v7379, %v7450
        %v7483 = vsel %vm7412, %v7380, %v7451
        %v7484 = vsel %vm7413, %v7381, %v7452
        %v7485 = vsel %vm7414, %v7382, %v7453
        %v7486 = vsel %vm7415, %v7383, %v7454
        %v7487 = vsel %vm7416, %v7384, %v7455
        %v7488 = vsel %vm7417, %v7385, %v7456
        %v7489 = vsel %vm7418, %v7386, %v7457
        %v7490 = vsel %vm7419, %v7387, %v7458
        %vm7539 = vcmask 1045504
        %v7540 = vrot.slane %v391, 2
        %v7541 = vrot.slane %v392, 2
        %v7542 = vsel %vm7539, %v7540, %v7541
        %v7543 = vrot.slane %v393, 2
        %v7544 = vsel %vm7539, %v7541, %v7543
        %v7545 = vrot.slane %v394, 2
        %v7546 = vrot.slane %v395, 2
        %v7547 = vsel %vm7539, %v7545, %v7546
        %v7548 = vrot.slane %v396, 2
        %v7549 = vsel %vm7539, %v7546, %v7548
        %v7550 = vrot.slane %v397, 2
        %v7551 = vrot.slane %v398, 2
        %v7552 = vsel %vm7539, %v7550, %v7551
        %v7553 = vrot.slane %v399, 2
        %v7554 = vsel %vm7539, %v7551, %v7553
        %v7555 = vrot.slane %v400, 2
        %v7556 = vrot.slane %v401, 2
        %v7557 = vsel %vm7539, %v7555, %v7556
        %v7558 = vrot.slane %v402, 2
        %v7559 = vsel %vm7539, %v7556, %v7558
        %v7560 = vrot.slane %v403, 2
        %v7561 = vrot.slane %v404, 2
        %v7562 = vsel %vm7539, %v7560, %v7561
        %v7563 = vrot.slane %v405, 2
        %v7564 = vsel %vm7539, %v7561, %v7563
        %v7565 = vrot.slane %v406, 2
        %v7566 = vrot.slane %v407, 2
        %v7567 = vsel %vm7539, %v7565, %v7566
        %v7568 = vrot.slane %v408, 2
        %v7569 = vsel %vm7539, %v7566, %v7568
        %v7570 = vrot.slane %v409, 2
        %v7571 = vrot.slane %v410, 2
        %v7572 = vsel %vm7539, %v7570, %v7571
        %v7573 = vrot.slane %v411, 2
        %v7574 = vsel %vm7539, %v7571, %v7573
        %v7575 = vrot.slane %v412, 2
        %v7576 = vrot.slane %v413, 2
        %v7577 = vsel %vm7539, %v7575, %v7576
        %v7578 = vrot.slane %v414, 2
        %v7579 = vsel %vm7539, %v7576, %v7578
        %v7580 = vrot.slane %v415, 2
        %v7581 = vrot.slane %v416, 2
        %v7582 = vsel %vm7539, %v7580, %v7581
        %v7583 = vrot.slane %v417, 2
        %v7584 = vsel %vm7539, %v7581, %v7583
        %v7585 = vrot.slane %v418, 2
        %v7586 = vrot.slane %v419, 2
        %v7587 = vsel %vm7539, %v7585, %v7586
        %v7588 = vrot.slane %v420, 2
        %v7589 = vsel %vm7539, %v7586, %v7588
        %v7590 = vrot.slane %v421, 2
        %v7591 = vrot.slane %v422, 2
        %v7592 = vsel %vm7539, %v7590, %v7591
        %v7593 = vrot.slane %v423, 2
        %v7594 = vsel %vm7539, %v7591, %v7593
        %v7595 = vrot.slane %v424, 2
        %v7596 = vrot.slane %v425, 2
        %v7597 = vsel %vm7539, %v7595, %v7596
        %v7598 = vrot.slane %v426, 2
        %v7599 = vsel %vm7539, %v7596, %v7598
        %v7600 = vrot.slane %v427, 2
        %v7601 = vrot.slane %v428, 2
        %v7602 = vsel %vm7539, %v7600, %v7601
        %v7603 = vrot.slane %v429, 2
        %v7604 = vsel %vm7539, %v7601, %v7603
        %v7605 = vrot.slane %v430, 2
        %v7606 = vrot.slane %v431, 2
        %v7607 = vsel %vm7539, %v7605, %v7606
        %v7608 = vrot.slane %v432, 2
        %v7609 = vsel %vm7539, %v7606, %v7608
        %v7610 = vrot.slane %v433, 2
        %v7611 = vrot.slane %v434, 2
        %v7612 = vsel %vm7539, %v7610, %v7611
        %v7613 = vrot.slane %v435, 2
        %v7614 = vsel %vm7539, %v7611, %v7613
        %v7615 = vrot.slane %v436, 2
        %v7616 = vrot.slane %v437, 2
        %v7617 = vsel %vm7539, %v7615, %v7616
        %v7618 = vrot.slane %v438, 2
        %v7619 = vsel %vm7539, %v7616, %v7618
        %v7652 = vadd.f32 %v7459, %v7542
        %v7653 = vadd.f32 %v7460, %v7544
        %v7654 = vadd.f32 %v7461, %v7547
        %v7655 = vadd.f32 %v7462, %v7549
        %v7656 = vadd.f32 %v7463, %v7552
        %v7657 = vadd.f32 %v7464, %v7554
        %v7658 = vadd.f32 %v7465, %v7557
        %v7659 = vadd.f32 %v7466, %v7559
        %v7660 = vadd.f32 %v7467, %v7562
        %v7661 = vadd.f32 %v7468, %v7564
        %v7662 = vadd.f32 %v7469, %v7567
        %v7663 = vadd.f32 %v7470, %v7569
        %v7664 = vadd.f32 %v7471, %v7572
        %v7665 = vadd.f32 %v7472, %v7574
        %v7666 = vadd.f32 %v7473, %v7577
        %v7667 = vadd.f32 %v7474, %v7579
        %v7668 = vadd.f32 %v7475, %v7582
        %v7669 = vadd.f32 %v7476, %v7584
        %v7670 = vadd.f32 %v7477, %v7587
        %v7671 = vadd.f32 %v7478, %v7589
        %v7672 = vadd.f32 %v7479, %v7592
        %v7673 = vadd.f32 %v7480, %v7594
        %v7674 = vadd.f32 %v7481, %v7597
        %v7675 = vadd.f32 %v7482, %v7599
        %v7676 = vadd.f32 %v7483, %v7602
        %v7677 = vadd.f32 %v7484, %v7604
        %v7678 = vadd.f32 %v7485, %v7607
        %v7679 = vadd.f32 %v7486, %v7609
        %v7680 = vadd.f32 %v7487, %v7612
        %v7681 = vadd.f32 %v7488, %v7614
        %v7682 = vadd.f32 %v7489, %v7617
        %v7683 = vadd.f32 %v7490, %v7619
        %7684 = vst.msk [vmem:[%s313] sm:$0xff] %vm585, %v7652
        %7685 = vst.msk [vmem:[%s313 + $0x8] sm:$0xff] %vm585, %v7653
        %7686 = vst.msk [vmem:[%s313 + $0x10] sm:$0xff] %vm585, %v7654
        %7687 = vst.msk [vmem:[%s313 + $0x18] sm:$0xff] %vm585, %v7655
        %7688 = vst.msk [vmem:[%s313 + $0x20] sm:$0xff] %vm585, %v7656
        %7689 = vst.msk [vmem:[%s313 + $0x28] sm:$0xff] %vm585, %v7657
        %7690 = vst.msk [vmem:[%s313 + $0x30] sm:$0xff] %vm585, %v7658
        %7691 = vst.msk [vmem:[%s313 + $0x38] sm:$0xff] %vm585, %v7659
        %7692 = vst.msk [vmem:[%s313 + $0x40] sm:$0xff] %vm585, %v7660
        %7693 = vst.msk [vmem:[%s313 + $0x48] sm:$0xff] %vm585, %v7661
        %7694 = vst.msk [vmem:[%s313 + $0x50] sm:$0xff] %vm585, %v7662
        %7695 = vst.msk [vmem:[%s313 + $0x58] sm:$0xff] %vm585, %v7663
        %7696 = vst.msk [vmem:[%s313 + $0x60] sm:$0xff] %vm585, %v7664
        %7697 = vst.msk [vmem:[%s313 + $0x68] sm:$0xff] %vm585, %v7665
        %7698 = vst.msk [vmem:[%s313 + $0x70] sm:$0xff] %vm585, %v7666
        %7699 = vst.msk [vmem:[%s313 + $0x78] sm:$0xff] %vm585, %v7667
        %7700 = vst.msk [vmem:[%s313 + $0x80] sm:$0xff] %vm585, %v7668
        %7701 = vst.msk [vmem:[%s313 + $0x88] sm:$0xff] %vm585, %v7669
        %7702 = vst.msk [vmem:[%s313 + $0x90] sm:$0xff] %vm585, %v7670
        %7703 = vst.msk [vmem:[%s313 + $0x98] sm:$0xff] %vm585, %v7671
        %7704 = vst.msk [vmem:[%s313 + $0xa0] sm:$0xff] %vm585, %v7672
        %7705 = vst.msk [vmem:[%s313 + $0xa8] sm:$0xff] %vm585, %v7673
        %7706 = vst.msk [vmem:[%s313 + $0xb0] sm:$0xff] %vm585, %v7674
        %7707 = vst.msk [vmem:[%s313 + $0xb8] sm:$0xff] %vm585, %v7675
        %7708 = vst.msk [vmem:[%s313 + $0xc0] sm:$0xff] %vm585, %v7676
        %7709 = vst.msk [vmem:[%s313 + $0xc8] sm:$0xff] %vm585, %v7677
        %7710 = vst.msk [vmem:[%s313 + $0xd0] sm:$0xff] %vm585, %v7678
        %7711 = vst.msk [vmem:[%s313 + $0xd8] sm:$0xff] %vm585, %v7679
        %7712 = vst.msk [vmem:[%s313 + $0xe0] sm:$0xff] %vm585, %v7680
        %7713 = vst.msk [vmem:[%s313 + $0xe8] sm:$0xff] %vm585, %v7681
        %7714 = vst.msk [vmem:[%s313 + $0xf0] sm:$0xff] %vm585, %v7682
        %7715 = vst.msk [vmem:[%s313 + $0xf8] sm:$0xff] %vm585, %v7683
        %s7716 = sand.u32 %s208, 1
        %s7717 = scalar_lea.sflag [#allocation5], %s7716
        %s7718 = sand.u32 %s208, 1
        %s7719 = smul.addr %s7718, 256
        %s7720 = scalar_lea.vmem [#allocation4], %s7719
        // Predicated region
        $region53: #{vnet_up_block_forward.3} parent=51 // pred_check
          %p7721 = pneg %p218
        $region54: #{vnet_up_block_forward.3} parent=51 // pred_check_branch
          %7723 = sbr.rel (%p7721) target = $region56
        $region55: #{vnet_up_block_forward.3} parent=51 // pred_region
          %s7725 = ssub.s32 4096, 4096
          %7726 = vsyncadd %s7717, %s7725
          %s7727 = smul.addr %s22, 32
          %s7728 = smul.addr %s7727, 128
          %s7729 = scalar_lea.hbm %s8, %s7728
          %s7730 = sshll.u32 %s7720, 4
          %s7731 = int_to_ptr.vmem [resolvable:$true] %s7730
          %7736 = dma.vmem_to_hbm [thread:$0]  %s7731, 4096, %s7729, %s7717, 128, 128, 8
        $region56: #{vnet_up_block_forward.3} parent=51 // pred_fallthru
          _
      $region52: #{vnet_up_block_forward.3} parent=5 // pred_fallthru
        _
      %p7737 = scmp.le.s32.totalorder 2, %s17
      // Predicated region
      $region57: #{vnet_up_block_forward.3} parent=5 // pred_check
        %p7738 = pneg %p7737
      $region58: #{vnet_up_block_forward.3} parent=5 // pred_check_branch
        %7740 = sbr.rel (%p7738) target = $region60
      $region59: #{vnet_up_block_forward.3} parent=5 // pred_region
        %s7741 = ssub.s32 %s17, 2
        // Predicated region
        $region61: #{vnet_up_block_forward.3} parent=59 // pred_check
          %p7742 = pneg %p224
        $region62: #{vnet_up_block_forward.3} parent=59 // pred_check_branch
          %7744 = sbr.rel (%p7742) target = $region64
        $region63: #{vnet_up_block_forward.3} parent=59 // pred_region
          %s7745 = sand.u32 %s209, 1
          %s7746 = scalar_lea.sflag [#allocation5], %s7745
          %s7747 = sand.u32 %s209, 1
          %s7748 = smul.addr %s7747, 256
          %s7749 = scalar_lea.vmem [#allocation4], %s7748
          %7750 = dma.done %s7746, 4096
        $region64: #{vnet_up_block_forward.3} parent=59 // pred_fallthru
          _
      $region60: #{vnet_up_block_forward.3} parent=5 // pred_fallthru
        _
    $region6: #{vnet_up_block_forward.3} parent=1 // loop_footer
      %s21 = sadd.s32 1, %s17
    $region7: #{vnet_up_block_forward.3} parent=1 // loop_footer_branch
      %16 = sbr.rel target = $region3
    $region8: #{vnet_up_block_forward.3} parent=1 // loop_exit
      _
    %7751 = vsyncpa [#allocation5], 1
    %s7752 = scalar_lea.sflag [#allocation5], 1
    %7753 = vsyncpa %s7752, 1

</llo_original>
